<compile_context>
chip_gen: v6e
topology: v6e:2x2x1
jax: 0.10.0
libtpu: 0.0.40
codegen_flags: <defaults>
</compile_context>

<pallas_src>
from functools import partial

import jax
import jax.numpy as jnp
import numpy as np
from jax.experimental import pallas as pl
from jax.experimental.pallas import tpu as pltpu


# ----------------------------- Pallas kernel -----------------------------

def _cnn_fused_kernel(x_ref, w1_ref, b1_ref, w2_ref, b2_ref,
                      wf1_ref, bf1_ref, wf2_ref, bf2_ref, o_ref):
    f32, bf16 = jnp.float32, jnp.bfloat16
    bt = x_ref.shape[1]                     # batch tile; rows are H-major: oh*bt + b

    def mm(a, b):
        return jnp.dot(a, b, preferred_element_type=f32)

    # ---- conv1 (1->32, 5x5 valid): single K-stacked banded matmul, K = 5*28 = 140.
    # x_ref: (24, bt, 140) bf16, last dim = kh*28 + wi (taps pre-stacked on the host).
    lhs1 = x_ref[...].reshape(24 * bt, 140)
    z1 = jnp.maximum(mm(lhs1, w1_ref[...]) + b1_ref[...], 0.0)      # (24*bt, 768) f32
    # cols of z1: (ow%2)*384 + oc*12 + ow//2  -> column pooling is a half-split max.

    # ---- 2x2 max-pool #1 (pure VPU).
    z1 = z1.reshape(12, 2 * bt, 768)                                # row pairs = bt-slabs
    zr1 = jnp.maximum(z1[:, :bt, :], z1[:, bt:, :])                 # (12, bt, 768)
    p1 = jnp.maximum(zr1[:, :, :384], zr1[:, :, 384:]).astype(bf16)  # (12, bt, 384)
    # p1[ph, b, ci*12 + wi] == pool1 output [b, ci, ph, wi]

    # ---- conv2 (32->64, 5x5 valid): K-stack 5 contiguous leading-dim taps -> K = 1920.
    lhs2 = jnp.concatenate([p1[kh:kh + 8] for kh in range(5)], axis=-1)  # (8, bt, 1920)
    z2 = jnp.maximum(mm(lhs2.reshape(8 * bt, 1920), w2_ref[...]) + b2_ref[...], 0.0)
    # cols of z2: (ow%2)*256 + oc*4 + ow//2

    # ---- 2x2 max-pool #2 (pure VPU).
    z2 = z2.reshape(4, 2 * bt, 512)
    zr2 = jnp.maximum(z2[:, :bt, :], z2[:, bt:, :])                 # (4, bt, 512)
    p2 = jnp.maximum(zr2[:, :, :256], zr2[:, :, 256:]).astype(bf16)  # (4, bt, 256)
    # p2[i, b, oc*4 + j] == pool2 output [b, oc, i, j]

    # ---- fc1 + ReLU: flatten to (bt, 1024) with col = i*256 + oc*4 + j (fold matches
    # the host-side wf1 layout, which absorbs PyTorch's (C,H,W) flatten).
    flat = jnp.concatenate([p2[i] for i in range(4)], axis=-1)      # (bt, 1024) bf16
    h = jnp.maximum(mm(flat, wf1_ref[...]) + bf1_ref[...], 0.0)     # (bt, 512) f32

    # ---- fc2 + log-softmax over 128 padded lanes (padded bias = -1e30 masks them).
    logits = mm(h.astype(bf16), wf2_ref[...]) + bf2_ref[...]        # (bt, 128) f32
    m = jnp.max(logits, axis=-1, keepdims=True)
    lse = m + jnp.log(jnp.sum(jnp.exp(logits - m), axis=-1, keepdims=True))
    o_ref[...] = (logits - lse).astype(o_ref.dtype)


# ------------------------- host-side weight prep -------------------------

def init_params(key):
    ks = jax.random.split(key, 8)

    def u(k, shape, fan_in):
        bound = 1.0 / jnp.sqrt(float(fan_in))
        return jax.random.uniform(k, shape, jnp.float32, -bound, bound)

    return {
        "conv1_w": u(ks[0], (32, 1, 5, 5), 1 * 5 * 5),
        "conv1_b": u(ks[1], (32,), 1 * 5 * 5),
        "conv2_w": u(ks[2], (64, 32, 5, 5), 32 * 5 * 5),
        "conv2_b": u(ks[3], (64,), 32 * 5 * 5),
        "fc1_w": u(ks[4], (512, 1024), 1024),          # PyTorch Linear: (out, in)
        "fc1_b": u(ks[5], (512,), 1024),
        "fc2_w": u(ks[6], (10, 512), 512),
        "fc2_b": u(ks[7], (10,), 512),
    }


def prepare_params(params):
    """One-time re-layout of PyTorch-style parameters into kernel operands.

    Conv weights become K-stacked band matrices whose columns are parity-split so
    that 2x2 pooling in the kernel is a pure VPU max.  No batch-tile dependence.
    """
    w1 = np.asarray(params["conv1_w"], np.float32)      # (32, 1, 5, 5)
    b1 = np.asarray(params["conv1_b"], np.float32)
    w2 = np.asarray(params["conv2_w"], np.float32)      # (64, 32, 5, 5)
    b2 = np.asarray(params["conv2_b"], np.float32)
    fc1_w = np.asarray(params["fc1_w"], np.float32)     # (512, 1024)
    fc1_b = np.asarray(params["fc1_b"], np.float32)
    fc2_w = np.asarray(params["fc2_w"], np.float32)     # (10, 512)
    fc2_b = np.asarray(params["fc2_b"], np.float32)

    # conv1 band: band1[kh, wi, oc, ow] = w1[oc, 0, kh, wi-ow] for 0 <= wi-ow < 5.
    w1_t = np.transpose(w1[:, 0], (1, 0, 2))            # (5, 32, 5)  [kh, oc, kw]
    band1 = np.zeros((5, 28, 32, 24), np.float32)
    for kw in range(5):
        for ow in range(24):
            band1[:, ow + kw, :, ow] = w1_t[:, :, kw]
    # reorder cols to (par, oc, pw) with ow = 2*pw + par, then K-stack (kh, wi) as rows.
    band1 = band1.reshape(5, 28, 32, 12, 2)             # [kh, wi, oc, pw, par]
    band1 = np.transpose(band1, (0, 1, 4, 2, 3))        # [kh, wi, par, oc, pw]
    w1_k = band1.reshape(5 * 28, 2 * 32 * 12)           # (140, 768)
    b1_arr = np.tile(np.repeat(b1, 12), 2).reshape(1, 768)

    # conv2 band: band2[kh, ci, wi, oc, ow] = w2[oc, ci, kh, wi-ow] for 0 <= wi-ow < 5.
    w2_t = np.transpose(w2, (2, 1, 0, 3))               # (5, 32, 64, 5)  [kh, ci, oc, kw]
    band2 = np.zeros((5, 32, 12, 64, 8), np.float32)
    for kw in range(5):
        for ow in range(8):
            band2[:, :, ow + kw, :, ow] = w2_t[:, :, :, kw]
    band2 = band2.reshape(5, 32, 12, 64, 4, 2)          # [kh, ci, wi, oc, pw, par]
    band2 = np.transpose(band2, (0, 1, 2, 5, 3, 4))     # [kh, ci, wi, par, oc, pw]
    w2_k = band2.reshape(5 * 32 * 12, 2 * 64 * 4)       # (1920, 512)
    b2_arr = np.tile(np.repeat(b2, 4), 2).reshape(1, 512)

    # fc1: fold PyTorch (C,H,W) flatten into our (i, oc*4+j) activation layout.
    wf1 = fc1_w.reshape(512, 64, 4, 4)                  # [u, oc, i, j]
    wf1 = np.transpose(wf1, (2, 1, 3, 0)).reshape(1024, 512)   # rows = i*256 + oc*4 + j

    # fc2: transpose + pad to 128 lanes; padded bias = -1e30 keeps log-softmax exact.
    wf2 = np.zeros((512, 128), np.float32)
    wf2[:, :10] = fc2_w.T
    bf2 = np.full((1, 128), -1e30, np.float32)
    bf2[0, :10] = fc2_b

    jb = lambda a: jnp.asarray(a, jnp.bfloat16)
    jf = lambda a: jnp.asarray(a, jnp.float32)
    return {
        "w1": jb(w1_k), "b1": jf(b1_arr),
        "w2": jb(w2_k), "b2": jf(b2_arr),
        "wf1": jb(wf1), "bf1": jf(fc1_b.reshape(1, 512)),
        "wf2": jb(wf2), "bf2": jf(bf2),
    }


# ------------------------------ forward pass ------------------------------

_WEIGHT_ORDER = ["w1", "b1", "w2", "b2", "wf1", "bf1", "wf2", "bf2"]


@partial(jax.jit, static_argnames=("bt",))
def cnn_forward(x_nchw, prep, bt=None):
    # x_nchw: (B, 1, 28, 28) float32, same convention as the PyTorch module.
    assert x_nchw.shape[1:] == (1, 28, 28), x_nchw.shape
    b = x_nchw.shape[0]
    if bt is None:
        bt = min(128, ((b + 7) // 8) * 8)   # fill MXU rows for big batches
    assert bt % 8 == 0 and bt > 0
    b_pad = ((b + bt - 1) // bt) * bt

    # H-major, bf16 input; pre-stack the 5 conv1 H-taps along K (cheap XLA concat).
    x = x_nchw.reshape(b, 28, 28).astype(jnp.bfloat16)
    xt = jnp.transpose(x, (1, 0, 2))                    # (28, B, 28)
    if b_pad != b:
        xt = jnp.pad(xt, ((0, 0), (0, b_pad - b), (0, 0)))
    x_stk = jnp.concatenate([xt[kh:kh + 24] for kh in range(5)], axis=-1)  # (24, b_pad, 140)

    weights = [prep[k] for k in _WEIGHT_ORDER]

    def const_spec(a):
        nd = a.ndim
        return pl.BlockSpec(a.shape, lambda i, _n=nd: (0,) * _n)

    in_specs = [pl.BlockSpec((24, bt, 140), lambda i: (0, i, 0))]
    in_specs += [const_spec(w) for w in weights]

    out = pl.pallas_call(
        _cnn_fused_kernel,
        out_shape=jax.ShapeDtypeStruct((b_pad, 128), jnp.float32),
        grid=(b_pad // bt,),
        in_specs=in_specs,
        out_specs=pl.BlockSpec((bt, 128), lambda i: (i, 0)),
        compiler_params=pltpu.CompilerParams(
            dimension_semantics=("parallel",),
            vmem_limit_bytes=48 * 1024 * 1024,
        ),
    )(x_stk, *weights)
    return out[:b, :10]


# -------------------------- pure-JAX reference ---------------------------

def reference_forward(x_nchw, params):
    hp = jax.lax.Precision.HIGHEST
    dn = ("NCHW", "OIHW", "NCHW")
    x = jax.lax.conv_general_dilated(x_nchw, params["conv1_w"], (1, 1), "VALID",
                                     dimension_numbers=dn, precision=hp)
    x = jax.nn.relu(x + params["conv1_b"][None, :, None, None])
    x = jax.lax.reduce_window(x, -jnp.inf, jax.lax.max, (1, 1, 2, 2), (1, 1, 2, 2), "VALID")
    x = jax.lax.conv_general_dilated(x, params["conv2_w"], (1, 1), "VALID",
                                     dimension_numbers=dn, precision=hp)
    x = jax.nn.relu(x + params["conv2_b"][None, :, None, None])
    x = jax.lax.reduce_window(x, -jnp.inf, jax.lax.max, (1, 1, 2, 2), (1, 1, 2, 2), "VALID")
    x = x.reshape(x.shape[0], -1)
    x = jax.nn.relu(jnp.dot(x, params["fc1_w"].T, precision=hp) + params["fc1_b"])
    logits = jnp.dot(x, params["fc2_w"].T, precision=hp) + params["fc2_b"]
    return jax.nn.log_softmax(logits, axis=-1)


if __name__ == "__main__":
    key = jax.random.PRNGKey(0)
    k_x, k_p, k_x2 = jax.random.split(key, 3)
    params = init_params(k_p)
    prep = prepare_params(params)

    # --- small check (batch=2): single grid step, exercises batch padding.
    x = jax.random.normal(k_x, (2, 1, 28, 28), jnp.float32)
    out = jax.block_until_ready(cnn_forward(x, prep))
    assert out.shape == (2, 10), out.shape
    # log-softmax sanity: exp of each row must sum to 1 (padded lanes are masked).
    assert bool(jnp.allclose(jnp.exp(out).sum(axis=1), 1.0, atol=1e-4))
    ref = jax.block_until_ready(reference_forward(x, params))
    err = float(jnp.max(jnp.abs(out - ref)))
    assert err < 0.12, f"mismatch vs reference: {err}"

    # --- larger batch with an explicit smaller tile: multi-step grid / pipeline path.
    x2 = jax.random.normal(k_x2, (48, 1, 28, 28), jnp.float32)
    out2 = jax.block_until_ready(cnn_forward(x2, prep, bt=16))
    ref2 = jax.block_until_ready(reference_forward(x2, params))
    err2 = float(jnp.max(jnp.abs(out2 - ref2)))
    assert err2 < 0.12, f"mismatch vs reference (batch=48): {err2}"

    print("KERNEL_OK")
</pallas_src>

<mosaic_0001>
module attributes {stable_mosaic.version = 11 : i64} {
  func.func @_cnn_fused_kernel(%arg0: i32, %arg1: memref<24x8x140xbf16, #tpu.memory_space<vmem>>, %arg2: memref<140x768xbf16, #tpu.memory_space<vmem>>, %arg3: memref<1x768xf32, #tpu.memory_space<vmem>>, %arg4: memref<1920x512xbf16, #tpu.memory_space<vmem>>, %arg5: memref<1x512xf32, #tpu.memory_space<vmem>>, %arg6: memref<1024x512xbf16, #tpu.memory_space<vmem>>, %arg7: memref<1x512xf32, #tpu.memory_space<vmem>>, %arg8: memref<512x128xbf16, #tpu.memory_space<vmem>>, %arg9: memref<1x128xf32, #tpu.memory_space<vmem>>, %arg10: memref<8x128xf32, #tpu.memory_space<vmem>>) attributes {dimension_semantics = [#tpu.dimension_semantics<parallel>], iteration_bounds = array<i64: 1>, scalar_prefetch = 0 : i64, scratch_operands = 0 : i64, tpu.core_type = #tpu.core_type<tc>, window_params = [{transform_indices = @transform_0, window_bounds = array<i64: 24, 8, 140>}, {pipeline_mode = #tpu.pipeline_mode<synchronous>, transform_indices = @transform_1, window_bounds = array<i64: 140, 768>}, {pipeline_mode = #tpu.pipeline_mode<synchronous>, transform_indices = @transform_2, window_bounds = array<i64: 1, 768>}, {pipeline_mode = #tpu.pipeline_mode<synchronous>, transform_indices = @transform_3, window_bounds = array<i64: 1920, 512>}, {pipeline_mode = #tpu.pipeline_mode<synchronous>, transform_indices = @transform_4, window_bounds = array<i64: 1, 512>}, {pipeline_mode = #tpu.pipeline_mode<synchronous>, transform_indices = @transform_5, window_bounds = array<i64: 1024, 512>}, {pipeline_mode = #tpu.pipeline_mode<synchronous>, transform_indices = @transform_6, window_bounds = array<i64: 1, 512>}, {pipeline_mode = #tpu.pipeline_mode<synchronous>, transform_indices = @transform_7, window_bounds = array<i64: 512, 128>}, {pipeline_mode = #tpu.pipeline_mode<synchronous>, transform_indices = @transform_8, window_bounds = array<i64: 1, 128>}, {transform_indices = @transform_9, window_bounds = array<i64: 8, 128>}]} {
    %c0 = arith.constant 0 : index
    %c0_0 = arith.constant 0 : index
    %c0_1 = arith.constant 0 : index
    %0 = vector.load %arg1[%c0, %c0_0, %c0_1] : memref<24x8x140xbf16, #tpu.memory_space<vmem>>, vector<24x8x140xbf16>
    %1 = vector.shape_cast %0 : vector<24x8x140xbf16> to vector<192x140xbf16>
    %c0_2 = arith.constant 0 : index
    %c0_3 = arith.constant 0 : index
    %2 = vector.load %arg2[%c0_2, %c0_3] : memref<140x768xbf16, #tpu.memory_space<vmem>>, vector<140x768xbf16>
    %cst = arith.constant dense<0.000000e+00> : vector<192x768xf32>
    %3 = tpu.matmul %1, %2, %cst {dimension_numbers = #tpu.dot_dimension_numbers<[1], [0], [0], [1], [0, 0, 1, 1], [], []>} : vector<192x140xbf16>, vector<140x768xbf16>, vector<192x768xf32> -> vector<192x768xf32>
    %c0_4 = arith.constant 0 : index
    %c0_5 = arith.constant 0 : index
    %4 = vector.load %arg3[%c0_4, %c0_5] : memref<1x768xf32, #tpu.memory_space<vmem>>, vector<1x768xf32>
    %5 = vector.broadcast %4 : vector<1x768xf32> to vector<192x768xf32>
    %6 = arith.addf %3, %5 : vector<192x768xf32>
    %cst_6 = arith.constant 0.000000e+00 : f32
    %7 = vector.broadcast %cst_6 : f32 to vector<192x768xf32>
    %8 = arith.maximumf %6, %7 : vector<192x768xf32>
    %9 = vector.shape_cast %8 : vector<192x768xf32> to vector<12x16x768xf32>
    %10 = vector.extract_strided_slice %9 {offsets = [0, 0, 0], sizes = [12, 8, 768], strides = [1, 1, 1]} : vector<12x16x768xf32> to vector<12x8x768xf32>
    %11 = vector.extract_strided_slice %9 {offsets = [0, 8, 0], sizes = [12, 8, 768], strides = [1, 1, 1]} : vector<12x16x768xf32> to vector<12x8x768xf32>
    %12 = arith.maximumf %10, %11 : vector<12x8x768xf32>
    %13 = vector.extract_strided_slice %12 {offsets = [0, 0, 0], sizes = [12, 8, 384], strides = [1, 1, 1]} : vector<12x8x768xf32> to vector<12x8x384xf32>
    %14 = vector.extract_strided_slice %12 {offsets = [0, 0, 384], sizes = [12, 8, 384], strides = [1, 1, 1]} : vector<12x8x768xf32> to vector<12x8x384xf32>
    %15 = arith.maximumf %13, %14 : vector<12x8x384xf32>
    %16 = arith.truncf %15 : vector<12x8x384xf32> to vector<12x8x384xbf16>
    %17 = vector.extract_strided_slice %16 {offsets = [0, 0, 0], sizes = [8, 8, 384], strides = [1, 1, 1]} : vector<12x8x384xbf16> to vector<8x8x384xbf16>
    %18 = vector.extract_strided_slice %16 {offsets = [1, 0, 0], sizes = [8, 8, 384], strides = [1, 1, 1]} : vector<12x8x384xbf16> to vector<8x8x384xbf16>
    %19 = vector.extract_strided_slice %16 {offsets = [2, 0, 0], sizes = [8, 8, 384], strides = [1, 1, 1]} : vector<12x8x384xbf16> to vector<8x8x384xbf16>
    %20 = vector.extract_strided_slice %16 {offsets = [3, 0, 0], sizes = [8, 8, 384], strides = [1, 1, 1]} : vector<12x8x384xbf16> to vector<8x8x384xbf16>
    %21 = vector.extract_strided_slice %16 {offsets = [4, 0, 0], sizes = [8, 8, 384], strides = [1, 1, 1]} : vector<12x8x384xbf16> to vector<8x8x384xbf16>
    %22 = tpu.concatenate %17, %18, %19, %20, %21 in 2 : vector<8x8x384xbf16>, vector<8x8x384xbf16>, vector<8x8x384xbf16>, vector<8x8x384xbf16>, vector<8x8x384xbf16> -> vector<8x8x1920xbf16>
    %23 = vector.shape_cast %22 : vector<8x8x1920xbf16> to vector<64x1920xbf16>
    %c0_7 = arith.constant 0 : index
    %c0_8 = arith.constant 0 : index
    %24 = vector.load %arg4[%c0_7, %c0_8] : memref<1920x512xbf16, #tpu.memory_space<vmem>>, vector<1920x512xbf16>
    %cst_9 = arith.constant dense<0.000000e+00> : vector<64x512xf32>
    %25 = tpu.matmul %23, %24, %cst_9 {dimension_numbers = #tpu.dot_dimension_numbers<[1], [0], [0], [1], [0, 0, 1, 1], [], []>} : vector<64x1920xbf16>, vector<1920x512xbf16>, vector<64x512xf32> -> vector<64x512xf32>
    %c0_10 = arith.constant 0 : index
    %c0_11 = arith.constant 0 : index
    %26 = vector.load %arg5[%c0_10, %c0_11] : memref<1x512xf32, #tpu.memory_space<vmem>>, vector<1x512xf32>
    %27 = vector.broadcast %26 : vector<1x512xf32> to vector<64x512xf32>
    %28 = arith.addf %25, %27 : vector<64x512xf32>
    %cst_12 = arith.constant 0.000000e+00 : f32
    %29 = vector.broadcast %cst_12 : f32 to vector<64x512xf32>
    %30 = arith.maximumf %28, %29 : vector<64x512xf32>
    %31 = vector.shape_cast %30 : vector<64x512xf32> to vector<4x16x512xf32>
    %32 = vector.extract_strided_slice %31 {offsets = [0, 0, 0], sizes = [4, 8, 512], strides = [1, 1, 1]} : vector<4x16x512xf32> to vector<4x8x512xf32>
    %33 = vector.extract_strided_slice %31 {offsets = [0, 8, 0], sizes = [4, 8, 512], strides = [1, 1, 1]} : vector<4x16x512xf32> to vector<4x8x512xf32>
    %34 = arith.maximumf %32, %33 : vector<4x8x512xf32>
    %35 = vector.extract_strided_slice %34 {offsets = [0, 0, 0], sizes = [4, 8, 256], strides = [1, 1, 1]} : vector<4x8x512xf32> to vector<4x8x256xf32>
    %36 = vector.extract_strided_slice %34 {offsets = [0, 0, 256], sizes = [4, 8, 256], strides = [1, 1, 1]} : vector<4x8x512xf32> to vector<4x8x256xf32>
    %37 = arith.maximumf %35, %36 : vector<4x8x256xf32>
    %38 = arith.truncf %37 : vector<4x8x256xf32> to vector<4x8x256xbf16>
    %39 = vector.extract_strided_slice %38 {offsets = [0, 0, 0], sizes = [1, 8, 256], strides = [1, 1, 1]} : vector<4x8x256xbf16> to vector<1x8x256xbf16>
    %40 = vector.shape_cast %39 : vector<1x8x256xbf16> to vector<8x256xbf16>
    %41 = vector.extract_strided_slice %38 {offsets = [1, 0, 0], sizes = [1, 8, 256], strides = [1, 1, 1]} : vector<4x8x256xbf16> to vector<1x8x256xbf16>
    %42 = vector.shape_cast %41 : vector<1x8x256xbf16> to vector<8x256xbf16>
    %43 = vector.extract_strided_slice %38 {offsets = [2, 0, 0], sizes = [1, 8, 256], strides = [1, 1, 1]} : vector<4x8x256xbf16> to vector<1x8x256xbf16>
    %44 = vector.shape_cast %43 : vector<1x8x256xbf16> to vector<8x256xbf16>
    %45 = vector.extract_strided_slice %38 {offsets = [3, 0, 0], sizes = [1, 8, 256], strides = [1, 1, 1]} : vector<4x8x256xbf16> to vector<1x8x256xbf16>
    %46 = vector.shape_cast %45 : vector<1x8x256xbf16> to vector<8x256xbf16>
    %47 = tpu.concatenate %40, %42, %44, %46 in 1 : vector<8x256xbf16>, vector<8x256xbf16>, vector<8x256xbf16>, vector<8x256xbf16> -> vector<8x1024xbf16>
    %c0_13 = arith.constant 0 : index
    %c0_14 = arith.constant 0 : index
    %48 = vector.load %arg6[%c0_13, %c0_14] : memref<1024x512xbf16, #tpu.memory_space<vmem>>, vector<1024x512xbf16>
    %cst_15 = arith.constant dense<0.000000e+00> : vector<8x512xf32>
    %49 = tpu.matmul %47, %48, %cst_15 {dimension_numbers = #tpu.dot_dimension_numbers<[1], [0], [0], [1], [0, 0, 1, 1], [], []>} : vector<8x1024xbf16>, vector<1024x512xbf16>, vector<8x512xf32> -> vector<8x512xf32>
    %c0_16 = arith.constant 0 : index
    %c0_17 = arith.constant 0 : index
    %50 = vector.load %arg7[%c0_16, %c0_17] : memref<1x512xf32, #tpu.memory_space<vmem>>, vector<1x512xf32>
    %51 = vector.broadcast %50 : vector<1x512xf32> to vector<8x512xf32>
    %52 = arith.addf %49, %51 : vector<8x512xf32>
    %cst_18 = arith.constant 0.000000e+00 : f32
    %53 = vector.broadcast %cst_18 : f32 to vector<8x512xf32>
    %54 = arith.maximumf %52, %53 : vector<8x512xf32>
    %55 = arith.truncf %54 : vector<8x512xf32> to vector<8x512xbf16>
    %c0_19 = arith.constant 0 : index
    %c0_20 = arith.constant 0 : index
    %56 = vector.load %arg8[%c0_19, %c0_20] : memref<512x128xbf16, #tpu.memory_space<vmem>>, vector<512x128xbf16>
    %cst_21 = arith.constant dense<0.000000e+00> : vector<8x128xf32>
    %57 = tpu.matmul %55, %56, %cst_21 {dimension_numbers = #tpu.dot_dimension_numbers<[1], [0], [0], [1], [0, 0, 1, 1], [], []>} : vector<8x512xbf16>, vector<512x128xbf16>, vector<8x128xf32> -> vector<8x128xf32>
    %c0_22 = arith.constant 0 : index
    %c0_23 = arith.constant 0 : index
    %58 = vector.load %arg9[%c0_22, %c0_23] : memref<1x128xf32, #tpu.memory_space<vmem>>, vector<1x128xf32>
    %59 = vector.broadcast %58 : vector<1x128xf32> to vector<8x128xf32>
    %60 = arith.addf %57, %59 : vector<8x128xf32>
    %cst_24 = arith.constant dense<0xFF800000> : vector<8xf32>
    %61 = vector.multi_reduction <maximumf>, %60, %cst_24 [1] : vector<8x128xf32> to vector<8xf32>
    %62 = vector.shape_cast %61 : vector<8xf32> to vector<8x1xf32>
    %63 = vector.broadcast %62 : vector<8x1xf32> to vector<8x128xf32>
    %64 = arith.subf %60, %63 : vector<8x128xf32>
    %65 = math.exp %64 : vector<8x128xf32>
    %cst_25 = arith.constant dense<0.000000e+00> : vector<8xf32>
    %66 = vector.multi_reduction <add>, %65, %cst_25 [1] : vector<8x128xf32> to vector<8xf32>
    %67 = vector.shape_cast %66 : vector<8xf32> to vector<8x1xf32>
    %68 = math.log %67 : vector<8x1xf32>
    %69 = arith.addf %62, %68 : vector<8x1xf32>
    %70 = vector.broadcast %69 : vector<8x1xf32> to vector<8x128xf32>
    %71 = arith.subf %60, %70 : vector<8x128xf32>
    %c0_26 = arith.constant 0 : index
    %c0_27 = arith.constant 0 : index
    %72 = vector.load %arg10[%c0_26, %c0_27] : memref<8x128xf32, #tpu.memory_space<vmem>>, vector<8x128xf32>
    tpu.vector_store %arg10[%c0_26, %c0_27], %71 {strides = array<i32>} : memref<8x128xf32, #tpu.memory_space<vmem>>, vector<8x128xf32>,
    return
  }
  func.func @transform_0(%arg0: i32) -> (i32, i32, i32) {
    %c0_i32 = arith.constant 0 : i32
    %c0_i32_0 = arith.constant 0 : i32
    %c0_i32_1 = arith.constant 0 : i32
    return %c0_i32, %arg0, %c0_i32_0 : i32, i32, i32
  }
  func.func @transform_1(%arg0: i32) -> (i32, i32) {
    %c0_i32 = arith.constant 0 : i32
    %c0_i32_0 = arith.constant 0 : i32
    %c0_i32_1 = arith.constant 0 : i32
    return %c0_i32, %c0_i32_0 : i32, i32
  }
  func.func @transform_2(%arg0: i32) -> (i32, i32) {
    %c0_i32 = arith.constant 0 : i32
    %c0_i32_0 = arith.constant 0 : i32
    %c0_i32_1 = arith.constant 0 : i32
    return %c0_i32, %c0_i32_0 : i32, i32
  }
  func.func @transform_3(%arg0: i32) -> (i32, i32) {
    %c0_i32 = arith.constant 0 : i32
    %c0_i32_0 = arith.constant 0 : i32
    %c0_i32_1 = arith.constant 0 : i32
    return %c0_i32, %c0_i32_0 : i32, i32
  }
  func.func @transform_4(%arg0: i32) -> (i32, i32) {
    %c0_i32 = arith.constant 0 : i32
    %c0_i32_0 = arith.constant 0 : i32
    %c0_i32_1 = arith.constant 0 : i32
    return %c0_i32, %c0_i32_0 : i32, i32
  }
  func.func @transform_5(%arg0: i32) -> (i32, i32) {
    %c0_i32 = arith.constant 0 : i32
    %c0_i32_0 = arith.constant 0 : i32
    %c0_i32_1 = arith.constant 0 : i32
    return %c0_i32, %c0_i32_0 : i32, i32
  }
  func.func @transform_6(%arg0: i32) -> (i32, i32) {
    %c0_i32 = arith.constant 0 : i32
    %c0_i32_0 = arith.constant 0 : i32
    %c0_i32_1 = arith.constant 0 : i32
    return %c0_i32, %c0_i32_0 : i32, i32
  }
  func.func @transform_7(%arg0: i32) -> (i32, i32) {
    %c0_i32 = arith.constant 0 : i32
    %c0_i32_0 = arith.constant 0 : i32
    %c0_i32_1 = arith.constant 0 : i32
    return %c0_i32, %c0_i32_0 : i32, i32
  }
  func.func @transform_8(%arg0: i32) -> (i32, i32) {
    %c0_i32 = arith.constant 0 : i32
    %c0_i32_0 = arith.constant 0 : i32
    %c0_i32_1 = arith.constant 0 : i32
    return %c0_i32, %c0_i32_0 : i32, i32
  }
  func.func @transform_9(%arg0: i32) -> (i32, i32) {
    %c0_i32 = arith.constant 0 : i32
    %c0_i32_0 = arith.constant 0 : i32
    return %arg0, %c0_i32 : i32, i32
  }
}

</mosaic_0001>

<llo_original>
// kernel: cnn_forward.1
$region0: #{cnn_forward.1}
  #allocation0 [shape = 'u32[]', space=smem, size = 0x4, offset = 0x4, fixed_abs, tag = 'smem constant byte address 0x4 - core index']
  #allocation1 [shape = 'u32[144,128]{1,0:T(1,128)}', space=vmem, size = 0x12000, scoped, tag = 'internal scratch']
  %s0 = inlined_call_operand.vmem [shape: bf16[24,8,140], index: 0, kind: input, shape index: {}]
  %s1 = inlined_call_operand.hbm [shape: bf16[140,768], index: 1, kind: input, shape index: {}]
  %s2 = inlined_call_operand.hbm [shape: f32[1,768], index: 2, kind: input, shape index: {}]
  %s3 = inlined_call_operand.hbm [shape: bf16[1920,512], index: 3, kind: input, shape index: {}]
  %s4 = inlined_call_operand.hbm [shape: f32[1,512], index: 4, kind: input, shape index: {}]
  %s5 = inlined_call_operand.hbm [shape: bf16[1024,512], index: 5, kind: input, shape index: {}]
  %s6 = inlined_call_operand.hbm [shape: f32[1,512], index: 6, kind: input, shape index: {}]
  %s7 = inlined_call_operand.hbm [shape: bf16[512,128], index: 7, kind: input, shape index: {}]
  %s8 = inlined_call_operand.hbm [shape: f32[1,128], index: 8, kind: input, shape index: {}]
  %s9 = inlined_call_operand.vmem [shape: f32[8,128], index: 9, kind: output, shape index: {}]
  %s10 = sld [smem:[#allocation0]]
  $region78: #{cnn_forward.1} parent=0
    _
  %s12 = ssub.s32 1, %s10
  %s13 = scalar_select 0, %s12, %s10
  $region1: #{cnn_forward.1} parent=0
    #allocation2 [shape = 'u8[221184]{0}', space=vmem, size = 0x36000, scoped, tag = 'input window, operand 1, single buffered']
    #allocation3 [shape = 's32[1]{0}', space=sflag, size = 0x4, scoped, tag = 'scoped memory for cnn_forward.1']
    #allocation4 [shape = 'u8[3072]{0}', space=vmem, size = 0xc00, scoped, tag = 'input window, operand 2, single buffered']
    #allocation5 [shape = 's32[1]{0}', space=sflag, size = 0x4, scoped, tag = 'scoped memory for cnn_forward.1']
    #allocation6 [shape = 'u8[1966080]{0}', space=vmem, size = 0x1e0000, scoped, tag = 'input window, operand 3, single buffered']
    #allocation7 [shape = 'u8[2048]{0}', space=vmem, size = 0x800, scoped, tag = 'input window, operand 4, single buffered']
    #allocation8 [shape = 's32[1]{0}', space=sflag, size = 0x4, scoped, tag = 'scoped memory for cnn_forward.1']
    #allocation9 [shape = 'u8[1048576]{0}', space=vmem, size = 0x100000, scoped, tag = 'input window, operand 5, single buffered']
    #allocation10 [shape = 'u8[2048]{0}', space=vmem, size = 0x800, scoped, tag = 'input window, operand 6, single buffered']
    #allocation11 [shape = 's32[1]{0}', space=sflag, size = 0x4, scoped, tag = 'scoped memory for cnn_forward.1']
    #allocation12 [shape = 'u8[131072]{0}', space=vmem, size = 0x20000, scoped, tag = 'input window, operand 7, single buffered']
    #allocation13 [shape = 'u8[512]{0}', space=vmem, size = 0x400, scoped, tag = 'input window, operand 8, single buffered']
    #allocation14 [shape = 's32[1]{0}', space=sflag, size = 0x4, scoped, tag = 'scoped memory for cnn_forward.1']
    %14 = vsyncpa [#allocation3], 0
    %15 = vsyncpa [#allocation5], 0
    %16 = vsyncpa [#allocation8], 0
    %17 = vsyncpa [#allocation11], 0
    %18 = vsyncpa [#allocation14], 0
    // Predicated region
    $region2: #{cnn_forward.1} parent=1 // pred_check
      _
    $region3: #{cnn_forward.1} parent=1 // pred_check_branch
      %20 = sbr.rel (0) target = $region5
    $region4: #{cnn_forward.1} parent=1 // pred_region
      _
    $region5: #{cnn_forward.1} parent=1 // pred_fallthru
      _
    // Predicated region
    $region6: #{cnn_forward.1} parent=1 // pred_check
      _
    $region7: #{cnn_forward.1} parent=1 // pred_check_branch
      %22 = sbr.rel (0) target = $region9
    $region8: #{cnn_forward.1} parent=1 // pred_region
      %s24 = ssub.s32 6912, 6912
      %25 = vsyncadd [#allocation3], %s24
      %s26 = sshll.u32 [#allocation2], 4
      %s27 = int_to_ptr.vmem [resolvable:$true] %s26
      %32 = dma.hbm_to_vmem [thread:$0]  %s1, 6912, %s27, [#allocation3], 384, 384, 24
    $region9: #{cnn_forward.1} parent=1 // pred_fallthru
      _
    // Predicated region
    $region10: #{cnn_forward.1} parent=1 // pred_check
      _
    $region11: #{cnn_forward.1} parent=1 // pred_check_branch
      %34 = sbr.rel (0) target = $region13
    $region12: #{cnn_forward.1} parent=1 // pred_region
      %s36 = ssub.s32 96, 96
      %37 = vsyncadd [#allocation5], %s36
      %s39 = sshll.u32 [#allocation4], 4
      %s40 = int_to_ptr.vmem [resolvable:$true] %s39
      %42 = dma.hbm_to_vmem [thread:$0]  %s2, 96, %s40, [#allocation5]
    $region13: #{cnn_forward.1} parent=1 // pred_fallthru
      _
    // Predicated region
    $region14: #{cnn_forward.1} parent=1 // pred_check
      _
    $region15: #{cnn_forward.1} parent=1 // pred_check_branch
      %44 = sbr.rel (0) target = $region17
    $region16: #{cnn_forward.1} parent=1 // pred_region
      %s46 = ssub.s32 61440, 61440
      %47 = vsyncadd [#allocation5], %s46
      %s48 = sshll.u32 [#allocation6], 4
      %s49 = int_to_ptr.vmem [resolvable:$true] %s48
      %54 = dma.hbm_to_vmem [thread:$0]  %s3, 61440, %s49, [#allocation5], 256, 256, 16
    $region17: #{cnn_forward.1} parent=1 // pred_fallthru
      _
    // Predicated region
    $region18: #{cnn_forward.1} parent=1 // pred_check
      _
    $region19: #{cnn_forward.1} parent=1 // pred_check_branch
      %56 = sbr.rel (0) target = $region21
    $region20: #{cnn_forward.1} parent=1 // pred_region
      %s58 = ssub.s32 64, 64
      %59 = vsyncadd [#allocation8], %s58
      %s61 = sshll.u32 [#allocation7], 4
      %s62 = int_to_ptr.vmem [resolvable:$true] %s61
      %64 = dma.hbm_to_vmem [thread:$0]  %s4, 64, %s62, [#allocation8]
    $region21: #{cnn_forward.1} parent=1 // pred_fallthru
      _
    // Predicated region
    $region22: #{cnn_forward.1} parent=1 // pred_check
      _
    $region23: #{cnn_forward.1} parent=1 // pred_check_branch
      %66 = sbr.rel (0) target = $region25
    $region24: #{cnn_forward.1} parent=1 // pred_region
      %s68 = ssub.s32 32768, 32768
      %69 = vsyncadd [#allocation8], %s68
      %s70 = sshll.u32 [#allocation9], 4
      %s71 = int_to_ptr.vmem [resolvable:$true] %s70
      %76 = dma.hbm_to_vmem [thread:$0]  %s5, 32768, %s71, [#allocation8], 256, 256, 16
    $region25: #{cnn_forward.1} parent=1 // pred_fallthru
      _
    // Predicated region
    $region26: #{cnn_forward.1} parent=1 // pred_check
      _
    $region27: #{cnn_forward.1} parent=1 // pred_check_branch
      %78 = sbr.rel (0) target = $region29
    $region28: #{cnn_forward.1} parent=1 // pred_region
      %s80 = ssub.s32 64, 64
      %81 = vsyncadd [#allocation11], %s80
      %s83 = sshll.u32 [#allocation10], 4
      %s84 = int_to_ptr.vmem [resolvable:$true] %s83
      %86 = dma.hbm_to_vmem [thread:$0]  %s6, 64, %s84, [#allocation11]
    $region29: #{cnn_forward.1} parent=1 // pred_fallthru
      _
    // Predicated region
    $region30: #{cnn_forward.1} parent=1 // pred_check
      _
    $region31: #{cnn_forward.1} parent=1 // pred_check_branch
      %88 = sbr.rel (0) target = $region33
    $region32: #{cnn_forward.1} parent=1 // pred_region
      %s90 = ssub.s32 4096, 4096
      %91 = vsyncadd [#allocation11], %s90
      %s92 = sshll.u32 [#allocation12], 4
      %s93 = int_to_ptr.vmem [resolvable:$true] %s92
      %98 = dma.hbm_to_vmem [thread:$0]  %s7, 4096, %s93, [#allocation11], 64, 64, 4
    $region33: #{cnn_forward.1} parent=1 // pred_fallthru
      _
    // Predicated region
    $region34: #{cnn_forward.1} parent=1 // pred_check
      _
    $region35: #{cnn_forward.1} parent=1 // pred_check_branch
      %100 = sbr.rel (0) target = $region37
    $region36: #{cnn_forward.1} parent=1 // pred_region
      %s102 = ssub.s32 16, 16
      %103 = vsyncadd [#allocation14], %s102
      %s105 = sshll.u32 [#allocation13], 4
      %s106 = int_to_ptr.vmem [resolvable:$true] %s105
      %108 = dma.hbm_to_vmem [thread:$0]  %s8, 16, %s106, [#allocation14]
    $region37: #{cnn_forward.1} parent=1 // pred_fallthru
      _
    // Predicated region
    $region38: #{cnn_forward.1} parent=1 // pred_check
      _
    $region39: #{cnn_forward.1} parent=1 // pred_check_branch
      %110 = sbr.rel (0) target = $region41
    $region40: #{cnn_forward.1} parent=1 // pred_region
      %111 = dma.done [#allocation3], 6912
    $region41: #{cnn_forward.1} parent=1 // pred_fallthru
      _
    // Predicated region
    $region42: #{cnn_forward.1} parent=1 // pred_check
      _
    $region43: #{cnn_forward.1} parent=1 // pred_check_branch
      %113 = sbr.rel (0) target = $region45
    $region44: #{cnn_forward.1} parent=1 // pred_region
      %114 = dma.done [#allocation5], 96
    $region45: #{cnn_forward.1} parent=1 // pred_fallthru
      _
    // Predicated region
    $region46: #{cnn_forward.1} parent=1 // pred_check
      _
    $region47: #{cnn_forward.1} parent=1 // pred_check_branch
      %116 = sbr.rel (0) target = $region49
    $region48: #{cnn_forward.1} parent=1 // pred_region
      %117 = dma.done [#allocation5], 61440
    $region49: #{cnn_forward.1} parent=1 // pred_fallthru
      _
    // Predicated region
    $region50: #{cnn_forward.1} parent=1 // pred_check
      _
    $region51: #{cnn_forward.1} parent=1 // pred_check_branch
      %119 = sbr.rel (0) target = $region53
    $region52: #{cnn_forward.1} parent=1 // pred_region
      %120 = dma.done [#allocation8], 64
    $region53: #{cnn_forward.1} parent=1 // pred_fallthru
      _
    // Predicated region
    $region54: #{cnn_forward.1} parent=1 // pred_check
      _
    $region55: #{cnn_forward.1} parent=1 // pred_check_branch
      %122 = sbr.rel (0) target = $region57
    $region56: #{cnn_forward.1} parent=1 // pred_region
      %123 = dma.done [#allocation8], 32768
    $region57: #{cnn_forward.1} parent=1 // pred_fallthru
      _
    // Predicated region
    $region58: #{cnn_forward.1} parent=1 // pred_check
      _
    $region59: #{cnn_forward.1} parent=1 // pred_check_branch
      %125 = sbr.rel (0) target = $region61
    $region60: #{cnn_forward.1} parent=1 // pred_region
      %126 = dma.done [#allocation11], 64
    $region61: #{cnn_forward.1} parent=1 // pred_fallthru
      _
    // Predicated region
    $region62: #{cnn_forward.1} parent=1 // pred_check
      _
    $region63: #{cnn_forward.1} parent=1 // pred_check_branch
      %128 = sbr.rel (0) target = $region65
    $region64: #{cnn_forward.1} parent=1 // pred_region
      %129 = dma.done [#allocation11], 4096
    $region65: #{cnn_forward.1} parent=1 // pred_fallthru
      _
    // Predicated region
    $region66: #{cnn_forward.1} parent=1 // pred_check
      _
    $region67: #{cnn_forward.1} parent=1 // pred_check_branch
      %131 = sbr.rel (0) target = $region69
    $region68: #{cnn_forward.1} parent=1 // pred_region
      %132 = dma.done [#allocation14], 16
    $region69: #{cnn_forward.1} parent=1 // pred_fallthru
      _
    %v134 = vld [vmem:[%s0] sm:$0xff]
    %v135 = vld [vmem:[%s0 + $0x8] sm:$0xff]
    %v136 = vld [vmem:[%s0 + $0x10] sm:$0xff]
    %v137 = vld [vmem:[%s0 + $0x18] sm:$0xff]
    %v138 = vld [vmem:[%s0 + $0x20] sm:$0xff]
    %v139 = vld [vmem:[%s0 + $0x28] sm:$0xff]
    %v140 = vld [vmem:[%s0 + $0x30] sm:$0xff]
    %v141 = vld [vmem:[%s0 + $0x38] sm:$0xff]
    %v142 = vld [vmem:[%s0 + $0x40] sm:$0xff]
    %v143 = vld [vmem:[%s0 + $0x48] sm:$0xff]
    %v144 = vld [vmem:[%s0 + $0x50] sm:$0xff]
    %v145 = vld [vmem:[%s0 + $0x58] sm:$0xff]
    %v146 = vld [vmem:[%s0 + $0x60] sm:$0xff]
    %v147 = vld [vmem:[%s0 + $0x68] sm:$0xff]
    %v148 = vld [vmem:[%s0 + $0x70] sm:$0xff]
    %v149 = vld [vmem:[%s0 + $0x78] sm:$0xff]
    %v150 = vld [vmem:[%s0 + $0x80] sm:$0xff]
    %v151 = vld [vmem:[%s0 + $0x88] sm:$0xff]
    %v152 = vld [vmem:[%s0 + $0x90] sm:$0xff]
    %v153 = vld [vmem:[%s0 + $0x98] sm:$0xff]
    %v154 = vld [vmem:[%s0 + $0xa0] sm:$0xff]
    %v155 = vld [vmem:[%s0 + $0xa8] sm:$0xff]
    %v156 = vld [vmem:[%s0 + $0xb0] sm:$0xff]
    %v157 = vld [vmem:[%s0 + $0xb8] sm:$0xff]
    %v158 = vld [vmem:[#allocation2] sm:$0xff]
    %v159 = vld [vmem:[#allocation2 + $0x8] sm:$0xff]
    %v160 = vld [vmem:[#allocation2 + $0x10] sm:$0xff]
    %v161 = vld [vmem:[#allocation2 + $0x18] sm:$0xff]
    %v162 = vld [vmem:[#allocation2 + $0x20] sm:$0xff]
    %v163 = vld [vmem:[#allocation2 + $0x28] sm:$0xff]
    %v164 = vld [vmem:[#allocation2 + $0x30] sm:$0xff]
    %v165 = vld [vmem:[#allocation2 + $0x38] sm:$0xff]
    %v166 = vld [vmem:[#allocation2 + $0x40] sm:$0xff]
    %v167 = vld [vmem:[#allocation2 + $0x48] sm:$0xff]
    %v168 = vld [vmem:[#allocation2 + $0x50] sm:$0xff]
    %v169 = vld [vmem:[#allocation2 + $0x58] sm:$0xff]
    %v170 = vld [vmem:[#allocation2 + $0x60] sm:$0xff]
    %v171 = vld [vmem:[#allocation2 + $0x68] sm:$0xff]
    %v172 = vld [vmem:[#allocation2 + $0x70] sm:$0xff]
    %v173 = vld [vmem:[#allocation2 + $0x78] sm:$0xff]
    %v174 = vld [vmem:[#allocation2 + $0x80] sm:$0xff]
    %v175 = vld [vmem:[#allocation2 + $0x88] sm:$0xff]
    %v176 = vld [vmem:[#allocation2 + $0x90] sm:$0xff]
    %v177 = vld [vmem:[#allocation2 + $0x98] sm:$0xff]
    %v178 = vld [vmem:[#allocation2 + $0xa0] sm:$0xff]
    %v179 = vld [vmem:[#allocation2 + $0xa8] sm:$0xff]
    %v180 = vld [vmem:[#allocation2 + $0xb0] sm:$0xff]
    %v181 = vld [vmem:[#allocation2 + $0xb8] sm:$0xff]
    %v182 = vld [vmem:[#allocation2 + $0xc0] sm:$0xff]
    %v183 = vld [vmem:[#allocation2 + $0xc8] sm:$0xff]
    %v184 = vld [vmem:[#allocation2 + $0xd0] sm:$0xff]
    %v185 = vld [vmem:[#allocation2 + $0xd8] sm:$0xff]
    %v186 = vld [vmem:[#allocation2 + $0xe0] sm:$0xff]
    %v187 = vld [vmem:[#allocation2 + $0xe8] sm:$0xff]
    %v188 = vld [vmem:[#allocation2 + $0xf0] sm:$0xff]
    %v189 = vld [vmem:[#allocation2 + $0xf8] sm:$0xff]
    %v190 = vld [vmem:[#allocation2 + $0x100] sm:$0xff]
    %v191 = vld [vmem:[#allocation2 + $0x108] sm:$0xff]
    %v192 = vld [vmem:[#allocation2 + $0x110] sm:$0xff]
    %v193 = vld [vmem:[#allocation2 + $0x118] sm:$0xff]
    %v194 = vld [vmem:[#allocation2 + $0x120] sm:$0xff]
    %v195 = vld [vmem:[#allocation2 + $0x128] sm:$0xff]
    %v196 = vld [vmem:[#allocation2 + $0x130] sm:$0xff]
    %v197 = vld [vmem:[#allocation2 + $0x138] sm:$0xff]
    %v198 = vld [vmem:[#allocation2 + $0x140] sm:$0xff]
    %v199 = vld [vmem:[#allocation2 + $0x148] sm:$0xff]
    %v200 = vld [vmem:[#allocation2 + $0x150] sm:$0xff]
    %v201 = vld [vmem:[#allocation2 + $0x158] sm:$0xff]
    %v202 = vld [vmem:[#allocation2 + $0x160] sm:$0xff]
    %v203 = vld [vmem:[#allocation2 + $0x168] sm:$0xff]
    %v204 = vld [vmem:[#allocation2 + $0x170] sm:$0xff]
    %v205 = vld [vmem:[#allocation2 + $0x178] sm:$0xff]
    %v206 = vld [vmem:[#allocation2 + $0x180] sm:$0xff]
    %v207 = vld [vmem:[#allocation2 + $0x188] sm:$0xff]
    %v208 = vld [vmem:[#allocation2 + $0x190] sm:$0xff]
    %v209 = vld [vmem:[#allocation2 + $0x198] sm:$0x33]
    %v210 = vld [vmem:[#allocation2 + $0x1a0] sm:$0x33]
    %v211 = vld [vmem:[#allocation2 + $0x1a8] sm:$0x33]
    %v212 = vld [vmem:[#allocation4] sm:$0x3f]
    %v214 = vlaneseq
    %v215 = vshrl.u32 %v214, 7
    %v216 = vsub.s32 0, %v215
    %v217 = vrot.slane %v212, %v216
    %v218 = vlaneseq
    %v219 = vshrl.u32 %v218, 7
    %v220 = vsub.s32 1, %v219
    %v221 = vrot.slane %v212, %v220
    %v222 = vlaneseq
    %v223 = vshrl.u32 %v222, 7
    %v224 = vsub.s32 2, %v223
    %v225 = vrot.slane %v212, %v224
    %v226 = vlaneseq
    %v227 = vshrl.u32 %v226, 7
    %v228 = vsub.s32 3, %v227
    %v229 = vrot.slane %v212, %v228
    %v230 = vlaneseq
    %v231 = vshrl.u32 %v230, 7
    %v232 = vsub.s32 4, %v231
    %v233 = vrot.slane %v212, %v232
    %v234 = vlaneseq
    %v235 = vshrl.u32 %v234, 7
    %v236 = vsub.s32 5, %v235
    %v237 = vrot.slane %v212, %v236
    %v268 = vunpack.c.l.b16 %v134
    %v269 = vunpack.c.h.b16 %v134
    %v270 = vunpack.c.l.b16 %v135
    %v271 = vunpack.c.h.b16 %v135
    %v272 = vunpack.c.l.b16 %v136
    %v273 = vunpack.c.h.b16 %v136
    %v274 = vunpack.c.l.b16 %v137
    %v275 = vunpack.c.h.b16 %v137
    %v276 = vunpack.c.l.b16 %v138
    %v277 = vunpack.c.h.b16 %v138
    %v278 = vunpack.c.l.b16 %v139
    %v279 = vunpack.c.h.b16 %v139
    %v280 = vunpack.c.l.b16 %v140
    %v281 = vunpack.c.h.b16 %v140
    %v282 = vunpack.c.l.b16 %v141
    %v283 = vunpack.c.h.b16 %v141
    %v284 = vunpack.c.l.b16 %v142
    %v285 = vunpack.c.h.b16 %v142
    %v286 = vunpack.c.l.b16 %v143
    %v287 = vunpack.c.h.b16 %v143
    %v288 = vunpack.c.l.b16 %v144
    %v289 = vunpack.c.h.b16 %v144
    %v290 = vunpack.c.l.b16 %v145
    %v291 = vunpack.c.h.b16 %v145
    %v292 = vunpack.c.l.b16 %v146
    %v293 = vunpack.c.h.b16 %v146
    %v294 = vunpack.c.l.b16 %v147
    %v295 = vunpack.c.h.b16 %v147
    %v296 = vunpack.c.l.b16 %v148
    %v297 = vunpack.c.h.b16 %v148
    %v298 = vunpack.c.l.b16 %v149
    %v299 = vunpack.c.h.b16 %v149
    %v300 = vunpack.c.l.b16 %v150
    %v301 = vunpack.c.h.b16 %v150
    %v302 = vunpack.c.l.b16 %v151
    %v303 = vunpack.c.h.b16 %v151
    %v304 = vunpack.c.l.b16 %v152
    %v305 = vunpack.c.h.b16 %v152
    %v306 = vunpack.c.l.b16 %v153
    %v307 = vunpack.c.h.b16 %v153
    %v308 = vunpack.c.l.b16 %v154
    %v309 = vunpack.c.h.b16 %v154
    %v310 = vunpack.c.l.b16 %v155
    %v311 = vunpack.c.h.b16 %v155
    %v312 = vunpack.c.l.b16 %v156
    %v313 = vunpack.c.h.b16 %v156
    %v314 = vunpack.c.l.b16 %v157
    %v315 = vunpack.c.h.b16 %v157
    %v316 = vpack.c.b16 %v270, %v268
    %v317 = vpack.c.b16 %v271, %v269
    %v318 = vpack.c.b16 %v274, %v272
    %v319 = vpack.c.b16 %v275, %v273
    %v320 = vpack.c.b16 %v278, %v276
    %v321 = vpack.c.b16 %v279, %v277
    %v322 = vpack.c.b16 %v282, %v280
    %v323 = vpack.c.b16 %v283, %v281
    %v324 = vpack.c.b16 %v286, %v284
    %v325 = vpack.c.b16 %v287, %v285
    %v326 = vpack.c.b16 %v290, %v288
    %v327 = vpack.c.b16 %v291, %v289
    %v328 = vpack.c.b16 %v294, %v292
    %v329 = vpack.c.b16 %v295, %v293
    %v330 = vpack.c.b16 %v298, %v296
    %v331 = vpack.c.b16 %v299, %v297
    %v332 = vpack.c.b16 %v302, %v300
    %v333 = vpack.c.b16 %v303, %v301
    %v334 = vpack.c.b16 %v306, %v304
    %v335 = vpack.c.b16 %v307, %v305
    %v336 = vpack.c.b16 %v310, %v308
    %v337 = vpack.c.b16 %v311, %v309
    %v338 = vpack.c.b16 %v314, %v312
    %v339 = vpack.c.b16 %v315, %v313
    %v406 = vunpack.c.l.b16 %v158
    %v407 = vunpack.c.h.b16 %v158
    %v408 = vunpack.c.l.b16 %v159
    %v409 = vunpack.c.h.b16 %v159
    %v410 = vunpack.c.l.b16 %v160
    %v411 = vunpack.c.h.b16 %v160
    %v412 = vunpack.c.l.b16 %v161
    %v413 = vunpack.c.h.b16 %v161
    %v414 = vunpack.c.l.b16 %v162
    %v415 = vunpack.c.h.b16 %v162
    %v416 = vunpack.c.l.b16 %v163
    %v417 = vunpack.c.h.b16 %v163
    %v418 = vunpack.c.l.b16 %v164
    %v419 = vunpack.c.h.b16 %v164
    %v420 = vunpack.c.l.b16 %v165
    %v421 = vunpack.c.h.b16 %v165
    %v422 = vunpack.c.l.b16 %v166
    %v423 = vunpack.c.h.b16 %v166
    %v424 = vunpack.c.l.b16 %v167
    %v425 = vunpack.c.h.b16 %v167
    %v426 = vunpack.c.l.b16 %v168
    %v427 = vunpack.c.h.b16 %v168
    %v428 = vunpack.c.l.b16 %v169
    %v429 = vunpack.c.h.b16 %v169
    %v430 = vunpack.c.l.b16 %v170
    %v431 = vunpack.c.h.b16 %v170
    %v432 = vunpack.c.l.b16 %v171
    %v433 = vunpack.c.h.b16 %v171
    %v434 = vunpack.c.l.b16 %v172
    %v435 = vunpack.c.h.b16 %v172
    %v436 = vunpack.c.l.b16 %v173
    %v437 = vunpack.c.h.b16 %v173
    %v438 = vunpack.c.l.b16 %v174
    %v439 = vunpack.c.h.b16 %v174
    %v440 = vunpack.c.l.b16 %v175
    %v441 = vunpack.c.h.b16 %v175
    %v442 = vunpack.c.l.b16 %v176
    %v443 = vunpack.c.h.b16 %v176
    %v444 = vunpack.c.l.b16 %v177
    %v445 = vunpack.c.h.b16 %v177
    %v446 = vunpack.c.l.b16 %v178
    %v447 = vunpack.c.h.b16 %v178
    %v448 = vunpack.c.l.b16 %v179
    %v449 = vunpack.c.h.b16 %v179
    %v450 = vunpack.c.l.b16 %v180
    %v451 = vunpack.c.h.b16 %v180
    %v452 = vunpack.c.l.b16 %v181
    %v453 = vunpack.c.h.b16 %v181
    %v454 = vunpack.c.l.b16 %v182
    %v455 = vunpack.c.h.b16 %v182
    %v456 = vunpack.c.l.b16 %v183
    %v457 = vunpack.c.h.b16 %v183
    %v458 = vunpack.c.l.b16 %v184
    %v459 = vunpack.c.h.b16 %v184
    %v460 = vunpack.c.l.b16 %v185
    %v461 = vunpack.c.h.b16 %v185
    %v462 = vunpack.c.l.b16 %v186
    %v463 = vunpack.c.h.b16 %v186
    %v464 = vunpack.c.l.b16 %v187
    %v465 = vunpack.c.h.b16 %v187
    %v466 = vunpack.c.l.b16 %v188
    %v467 = vunpack.c.h.b16 %v188
    %v468 = vunpack.c.l.b16 %v189
    %v469 = vunpack.c.h.b16 %v189
    %v470 = vunpack.c.l.b16 %v190
    %v471 = vunpack.c.h.b16 %v190
    %v472 = vunpack.c.l.b16 %v191
    %v473 = vunpack.c.h.b16 %v191
    %v474 = vunpack.c.l.b16 %v192
    %v475 = vunpack.c.h.b16 %v192
    %v476 = vunpack.c.l.b16 %v193
    %v477 = vunpack.c.h.b16 %v193
    %v478 = vunpack.c.l.b16 %v194
    %v479 = vunpack.c.h.b16 %v194
    %v480 = vunpack.c.l.b16 %v195
    %v481 = vunpack.c.h.b16 %v195
    %v482 = vunpack.c.l.b16 %v196
    %v483 = vunpack.c.h.b16 %v196
    %v484 = vunpack.c.l.b16 %v197
    %v485 = vunpack.c.h.b16 %v197
    %v486 = vunpack.c.l.b16 %v198
    %v487 = vunpack.c.h.b16 %v198
    %v488 = vunpack.c.l.b16 %v199
    %v489 = vunpack.c.h.b16 %v199
    %v490 = vunpack.c.l.b16 %v200
    %v491 = vunpack.c.h.b16 %v200
    %v492 = vunpack.c.l.b16 %v201
    %v493 = vunpack.c.h.b16 %v201
    %v494 = vunpack.c.l.b16 %v202
    %v495 = vunpack.c.h.b16 %v202
    %v496 = vunpack.c.l.b16 %v203
    %v497 = vunpack.c.h.b16 %v203
    %v498 = vunpack.c.l.b16 %v204
    %v499 = vunpack.c.h.b16 %v204
    %v500 = vunpack.c.l.b16 %v205
    %v501 = vunpack.c.h.b16 %v205
    %v502 = vunpack.c.l.b16 %v206
    %v503 = vunpack.c.h.b16 %v206
    %v504 = vunpack.c.l.b16 %v207
    %v505 = vunpack.c.h.b16 %v207
    %v506 = vunpack.c.l.b16 %v208
    %v507 = vunpack.c.h.b16 %v208
    %v508 = vunpack.c.l.b16 %v209
    %v509 = vunpack.c.h.b16 %v209
    %v510 = vunpack.c.l.b16 %v210
    %v511 = vunpack.c.h.b16 %v210
    %v512 = vunpack.c.l.b16 %v211
    %v513 = vunpack.c.h.b16 %v211
    %v514 = vpack.c.b16 %v412, %v406
    %v515 = vpack.c.b16 %v413, %v407
    %v516 = vpack.c.b16 %v414, %v408
    %v517 = vpack.c.b16 %v415, %v409
    %v518 = vpack.c.b16 %v416, %v410
    %v519 = vpack.c.b16 %v417, %v411
    %v520 = vpack.c.b16 %v424, %v418
    %v521 = vpack.c.b16 %v425, %v419
    %v522 = vpack.c.b16 %v426, %v420
    %v523 = vpack.c.b16 %v427, %v421
    %v524 = vpack.c.b16 %v428, %v422
    %v525 = vpack.c.b16 %v429, %v423
    %v526 = vpack.c.b16 %v436, %v430
    %v527 = vpack.c.b16 %v437, %v431
    %v528 = vpack.c.b16 %v438, %v432
    %v529 = vpack.c.b16 %v439, %v433
    %v530 = vpack.c.b16 %v440, %v434
    %v531 = vpack.c.b16 %v441, %v435
    %v532 = vpack.c.b16 %v448, %v442
    %v533 = vpack.c.b16 %v449, %v443
    %v534 = vpack.c.b16 %v450, %v444
    %v535 = vpack.c.b16 %v451, %v445
    %v536 = vpack.c.b16 %v452, %v446
    %v537 = vpack.c.b16 %v453, %v447
    %v538 = vpack.c.b16 %v460, %v454
    %v539 = vpack.c.b16 %v461, %v455
    %v540 = vpack.c.b16 %v462, %v456
    %v541 = vpack.c.b16 %v463, %v457
    %v542 = vpack.c.b16 %v464, %v458
    %v543 = vpack.c.b16 %v465, %v459
    %v544 = vpack.c.b16 %v472, %v466
    %v545 = vpack.c.b16 %v473, %v467
    %v546 = vpack.c.b16 %v474, %v468
    %v547 = vpack.c.b16 %v475, %v469
    %v548 = vpack.c.b16 %v476, %v470
    %v549 = vpack.c.b16 %v477, %v471
    %v550 = vpack.c.b16 %v484, %v478
    %v551 = vpack.c.b16 %v485, %v479
    %v552 = vpack.c.b16 %v486, %v480
    %v553 = vpack.c.b16 %v487, %v481
    %v554 = vpack.c.b16 %v488, %v482
    %v555 = vpack.c.b16 %v489, %v483
    %v556 = vpack.c.b16 %v496, %v490
    %v557 = vpack.c.b16 %v497, %v491
    %v558 = vpack.c.b16 %v498, %v492
    %v559 = vpack.c.b16 %v499, %v493
    %v560 = vpack.c.b16 %v500, %v494
    %v561 = vpack.c.b16 %v501, %v495
    %v562 = vpack.c.b16 %v508, %v502
    %v563 = vpack.c.b16 %v509, %v503
    %v564 = vpack.c.b16 %v510, %v504
    %v565 = vpack.c.b16 %v511, %v505
    %v566 = vpack.c.b16 %v512, %v506
    %v567 = vpack.c.b16 %v513, %v507
    %vm616 = vcmask 97280
    %v618 = vsel %vm616, %v317, 0
    %v621 = vsel %vm616, %v319, 0
    %v624 = vsel %vm616, %v321, 0
    %v627 = vsel %vm616, %v323, 0
    %v630 = vsel %vm616, %v325, 0
    %v633 = vsel %vm616, %v327, 0
    %v636 = vsel %vm616, %v329, 0
    %v639 = vsel %vm616, %v331, 0
    %v642 = vsel %vm616, %v333, 0
    %v645 = vsel %vm616, %v335, 0
    %v648 = vsel %vm616, %v337, 0
    %v651 = vsel %vm616, %v339, 0
    %vm653 = vcmask 1045504
    %v655 = vsel %vm653, %v562, 0
    %v658 = vsel %vm653, %v563, 0
    %v661 = vsel %vm653, %v564, 0
    %v664 = vsel %vm653, %v565, 0
    %v667 = vsel %vm653, %v566, 0
    %v670 = vsel %vm653, %v567, 0
    %672 = vmatprep.subr.bf16.mxu0 %v557
    %673 = vmatpush1.bf16.msra.mxu0 %v556
    %674 = vmatprep.subr.bf16.mxu0 %v551
    %675 = vmatpush1.bf16.msra.mxu0 %v550
    %676 = vmatprep.subr.bf16.mxu0 %v545
    %677 = vmatpush1.bf16.msra.mxu0 %v544
    %678 = vmatprep.subr.bf16.mxu0 %v539
    %679 = vmatpush1.bf16.msra.mxu0 %v538
    %680 = vmatprep.subr.bf16.mxu0 %v533
    %681 = vmatpush1.bf16.msra.mxu0 %v532
    %682 = vmatprep.subr.bf16.mxu0 %v527
    %683 = vmatpush1.bf16.msra.mxu0 %v526
    %684 = vmatprep.subr.bf16.mxu0 %v521
    %685 = vmatpush1.bf16.msra.mxu0 %v520
    %686 = vmatprep.subr.bf16.mxu0 %v515
    %687 = vmatpush1.bf16.msra.mxu0 %v514
    %688 = vmatprep.subr.bf16.mxu0 0
    %689 = vmatpush2.bf16.msra.mxu0 0
    %690 = vmatprep.subr.bf16.mxu0 0
    %691 = vmatpush2.bf16.msra.mxu0 0
    %692 = vmatprep.subr.bf16.mxu0 0
    %693 = vmatpush2.bf16.msra.mxu0 0
    %694 = vmatprep.subr.bf16.mxu0 0
    %695 = vmatpush2.bf16.msra.mxu0 0
    %696 = vmatprep.subr.bf16.mxu0 0
    %697 = vmatpush2.bf16.msra.mxu0 0
    %698 = vmatprep.subr.bf16.mxu0 0
    %699 = vmatpush2.bf16.msra.mxu0 0
    %700 = vmatprep.subr.bf16.mxu0 0
    %701 = vmatpush2.bf16.msra.mxu0 0
    %702 = vmatprep.subr.bf16.mxu0 %v658
    %703 = vmatpush2.bf16.msra.mxu0 %v655
    %704 = vmatprep.mubr.bf16.mxu0 %v618
    %705 = vmatmul.mubr.bf16.gmra.mxu0 %v316
    %v706 = vpop.f32.mrf.mxu0
    %v707 = vadd.f32 %v217, %v706
    %v708 = vpop.f32.mrf.mxu0
    %v709 = vadd.f32 %v221, %v708
    %v710 = vpop.f32.mrf.mxu0
    %v711 = vadd.f32 %v217, %v710
    %v712 = vpop.f32.mrf.mxu0
    %v713 = vadd.f32 %v221, %v712
    %714 = vmatprep.mubr.bf16.mxu0 %v621
    %715 = vmatmul.mubr.bf16.gmra.mxu0 %v318
    %v716 = vpop.f32.mrf.mxu0
    %v717 = vadd.f32 %v217, %v716
    %v718 = vpop.f32.mrf.mxu0
    %v719 = vadd.f32 %v221, %v718
    %v720 = vpop.f32.mrf.mxu0
    %v721 = vadd.f32 %v217, %v720
    %v722 = vpop.f32.mrf.mxu0
    %v723 = vadd.f32 %v221, %v722
    %724 = vmatprep.mubr.bf16.mxu0 %v624
    %725 = vmatmul.mubr.bf16.gmra.mxu0 %v320
    %v726 = vpop.f32.mrf.mxu0
    %v727 = vadd.f32 %v217, %v726
    %v728 = vpop.f32.mrf.mxu0
    %v729 = vadd.f32 %v221, %v728
    %v730 = vpop.f32.mrf.mxu0
    %v731 = vadd.f32 %v217, %v730
    %v732 = vpop.f32.mrf.mxu0
    %v733 = vadd.f32 %v221, %v732
    %734 = vmatprep.mubr.bf16.mxu0 %v627
    %735 = vmatmul.mubr.bf16.gmra.mxu0 %v322
    %v736 = vpop.f32.mrf.mxu0
    %v737 = vadd.f32 %v217, %v736
    %v738 = vpop.f32.mrf.mxu0
    %v739 = vadd.f32 %v221, %v738
    %v740 = vpop.f32.mrf.mxu0
    %v741 = vadd.f32 %v217, %v740
    %v742 = vpop.f32.mrf.mxu0
    %v743 = vadd.f32 %v221, %v742
    %744 = vmatprep.mubr.bf16.mxu0 %v630
    %745 = vmatmul.mubr.bf16.gmra.mxu0 %v324
    %v746 = vpop.f32.mrf.mxu0
    %v747 = vadd.f32 %v217, %v746
    %v748 = vpop.f32.mrf.mxu0
    %v749 = vadd.f32 %v221, %v748
    %v750 = vpop.f32.mrf.mxu0
    %v751 = vadd.f32 %v217, %v750
    %v752 = vpop.f32.mrf.mxu0
    %v753 = vadd.f32 %v221, %v752
    %754 = vmatprep.mubr.bf16.mxu0 %v633
    %755 = vmatmul.mubr.bf16.gmra.mxu0 %v326
    %v756 = vpop.f32.mrf.mxu0
    %v757 = vadd.f32 %v217, %v756
    %v758 = vpop.f32.mrf.mxu0
    %v759 = vadd.f32 %v221, %v758
    %v760 = vpop.f32.mrf.mxu0
    %v761 = vadd.f32 %v217, %v760
    %v762 = vpop.f32.mrf.mxu0
    %v763 = vadd.f32 %v221, %v762
    %764 = vmatprep.mubr.bf16.mxu0 %v636
    %765 = vmatmul.mubr.bf16.gmra.mxu0 %v328
    %v766 = vpop.f32.mrf.mxu0
    %v767 = vadd.f32 %v217, %v766
    %v768 = vpop.f32.mrf.mxu0
    %v769 = vadd.f32 %v221, %v768
    %v770 = vpop.f32.mrf.mxu0
    %v771 = vadd.f32 %v217, %v770
    %v772 = vpop.f32.mrf.mxu0
    %v773 = vadd.f32 %v221, %v772
    %774 = vmatprep.mubr.bf16.mxu0 %v639
    %775 = vmatmul.mubr.bf16.gmra.mxu0 %v330
    %v776 = vpop.f32.mrf.mxu0
    %v777 = vadd.f32 %v217, %v776
    %v778 = vpop.f32.mrf.mxu0
    %v779 = vadd.f32 %v221, %v778
    %v780 = vpop.f32.mrf.mxu0
    %v781 = vadd.f32 %v217, %v780
    %v782 = vpop.f32.mrf.mxu0
    %v783 = vadd.f32 %v221, %v782
    %784 = vmatprep.mubr.bf16.mxu0 %v642
    %785 = vmatmul.mubr.bf16.gmra.mxu0 %v332
    %v786 = vpop.f32.mrf.mxu0
    %v787 = vadd.f32 %v217, %v786
    %v788 = vpop.f32.mrf.mxu0
    %v789 = vadd.f32 %v221, %v788
    %v790 = vpop.f32.mrf.mxu0
    %v791 = vadd.f32 %v217, %v790
    %v792 = vpop.f32.mrf.mxu0
    %v793 = vadd.f32 %v221, %v792
    %794 = vmatprep.mubr.bf16.mxu0 %v645
    %795 = vmatmul.mubr.bf16.gmra.mxu0 %v334
    %v796 = vpop.f32.mrf.mxu0
    %v797 = vadd.f32 %v217, %v796
    %v798 = vpop.f32.mrf.mxu0
    %v799 = vadd.f32 %v221, %v798
    %v800 = vpop.f32.mrf.mxu0
    %v801 = vadd.f32 %v217, %v800
    %v802 = vpop.f32.mrf.mxu0
    %v803 = vadd.f32 %v221, %v802
    %804 = vmatprep.mubr.bf16.mxu0 %v648
    %805 = vmatmul.mubr.bf16.gmra.mxu0 %v336
    %v806 = vpop.f32.mrf.mxu0
    %v807 = vadd.f32 %v217, %v806
    %v808 = vpop.f32.mrf.mxu0
    %v809 = vadd.f32 %v221, %v808
    %v810 = vpop.f32.mrf.mxu0
    %v811 = vadd.f32 %v217, %v810
    %v812 = vpop.f32.mrf.mxu0
    %v813 = vadd.f32 %v221, %v812
    %814 = vmatprep.mubr.bf16.mxu0 %v651
    %815 = vmatmul.mubr.bf16.gmra.mxu0 %v338
    %v816 = vpop.f32.mrf.mxu0
    %v817 = vadd.f32 %v217, %v816
    %v818 = vpop.f32.mrf.mxu0
    %v819 = vadd.f32 %v221, %v818
    %v820 = vpop.f32.mrf.mxu0
    %v821 = vadd.f32 %v217, %v820
    %v822 = vpop.f32.mrf.mxu0
    %v823 = vadd.f32 %v221, %v822
    %824 = vdwg.mxu0
    %825 = vmatprep.subr.bf16.mxu0 %v559
    %826 = vmatpush1.bf16.msra.mxu0 %v558
    %827 = vmatprep.subr.bf16.mxu0 %v553
    %828 = vmatpush1.bf16.msra.mxu0 %v552
    %829 = vmatprep.subr.bf16.mxu0 %v547
    %830 = vmatpush1.bf16.msra.mxu0 %v546
    %831 = vmatprep.subr.bf16.mxu0 %v541
    %832 = vmatpush1.bf16.msra.mxu0 %v540
    %833 = vmatprep.subr.bf16.mxu0 %v535
    %834 = vmatpush1.bf16.msra.mxu0 %v534
    %835 = vmatprep.subr.bf16.mxu0 %v529
    %836 = vmatpush1.bf16.msra.mxu0 %v528
    %837 = vmatprep.subr.bf16.mxu0 %v523
    %838 = vmatpush1.bf16.msra.mxu0 %v522
    %839 = vmatprep.subr.bf16.mxu0 %v517
    %840 = vmatpush1.bf16.msra.mxu0 %v516
    %841 = vmatprep.subr.bf16.mxu0 0
    %842 = vmatpush2.bf16.msra.mxu0 0
    %843 = vmatprep.subr.bf16.mxu0 0
    %844 = vmatpush2.bf16.msra.mxu0 0
    %845 = vmatprep.subr.bf16.mxu0 0
    %846 = vmatpush2.bf16.msra.mxu0 0
    %847 = vmatprep.subr.bf16.mxu0 0
    %848 = vmatpush2.bf16.msra.mxu0 0
    %849 = vmatprep.subr.bf16.mxu0 0
    %850 = vmatpush2.bf16.msra.mxu0 0
    %851 = vmatprep.subr.bf16.mxu0 0
    %852 = vmatpush2.bf16.msra.mxu0 0
    %853 = vmatprep.subr.bf16.mxu0 0
    %854 = vmatpush2.bf16.msra.mxu0 0
    %855 = vmatprep.subr.bf16.mxu0 %v664
    %856 = vmatpush2.bf16.msra.mxu0 %v661
    %857 = vmatprep.mubr.bf16.mxu0 %v618
    %858 = vmatmul.mubr.bf16.gmra.mxu0 %v316
    %v859 = vpop.f32.mrf.mxu0
    %v860 = vadd.f32 %v225, %v859
    %v861 = vpop.f32.mrf.mxu0
    %v862 = vadd.f32 %v229, %v861
    %v863 = vpop.f32.mrf.mxu0
    %v864 = vadd.f32 %v225, %v863
    %v865 = vpop.f32.mrf.mxu0
    %v866 = vadd.f32 %v229, %v865
    %867 = vmatprep.mubr.bf16.mxu0 %v621
    %868 = vmatmul.mubr.bf16.gmra.mxu0 %v318
    %v869 = vpop.f32.mrf.mxu0
    %v870 = vadd.f32 %v225, %v869
    %v871 = vpop.f32.mrf.mxu0
    %v872 = vadd.f32 %v229, %v871
    %v873 = vpop.f32.mrf.mxu0
    %v874 = vadd.f32 %v225, %v873
    %v875 = vpop.f32.mrf.mxu0
    %v876 = vadd.f32 %v229, %v875
    %877 = vmatprep.mubr.bf16.mxu0 %v624
    %878 = vmatmul.mubr.bf16.gmra.mxu0 %v320
    %v879 = vpop.f32.mrf.mxu0
    %v880 = vadd.f32 %v225, %v879
    %v881 = vpop.f32.mrf.mxu0
    %v882 = vadd.f32 %v229, %v881
    %v883 = vpop.f32.mrf.mxu0
    %v884 = vadd.f32 %v225, %v883
    %v885 = vpop.f32.mrf.mxu0
    %v886 = vadd.f32 %v229, %v885
    %887 = vmatprep.mubr.bf16.mxu0 %v627
    %888 = vmatmul.mubr.bf16.gmra.mxu0 %v322
    %v889 = vpop.f32.mrf.mxu0
    %v890 = vadd.f32 %v225, %v889
    %v891 = vpop.f32.mrf.mxu0
    %v892 = vadd.f32 %v229, %v891
    %v893 = vpop.f32.mrf.mxu0
    %v894 = vadd.f32 %v225, %v893
    %v895 = vpop.f32.mrf.mxu0
    %v896 = vadd.f32 %v229, %v895
    %897 = vmatprep.mubr.bf16.mxu0 %v630
    %898 = vmatmul.mubr.bf16.gmra.mxu0 %v324
    %v899 = vpop.f32.mrf.mxu0
    %v900 = vadd.f32 %v225, %v899
    %v901 = vpop.f32.mrf.mxu0
    %v902 = vadd.f32 %v229, %v901
    %v903 = vpop.f32.mrf.mxu0
    %v904 = vadd.f32 %v225, %v903
    %v905 = vpop.f32.mrf.mxu0
    %v906 = vadd.f32 %v229, %v905
    %907 = vmatprep.mubr.bf16.mxu0 %v633
    %908 = vmatmul.mubr.bf16.gmra.mxu0 %v326
    %v909 = vpop.f32.mrf.mxu0
    %v910 = vadd.f32 %v225, %v909
    %v911 = vpop.f32.mrf.mxu0
    %v912 = vadd.f32 %v229, %v911
    %v913 = vpop.f32.mrf.mxu0
    %v914 = vadd.f32 %v225, %v913
    %v915 = vpop.f32.mrf.mxu0
    %v916 = vadd.f32 %v229, %v915
    %917 = vmatprep.mubr.bf16.mxu0 %v636
    %918 = vmatmul.mubr.bf16.gmra.mxu0 %v328
    %v919 = vpop.f32.mrf.mxu0
    %v920 = vadd.f32 %v225, %v919
    %v921 = vpop.f32.mrf.mxu0
    %v922 = vadd.f32 %v229, %v921
    %v923 = vpop.f32.mrf.mxu0
    %v924 = vadd.f32 %v225, %v923
    %v925 = vpop.f32.mrf.mxu0
    %v926 = vadd.f32 %v229, %v925
    %927 = vmatprep.mubr.bf16.mxu0 %v639
    %928 = vmatmul.mubr.bf16.gmra.mxu0 %v330
    %v929 = vpop.f32.mrf.mxu0
    %v930 = vadd.f32 %v225, %v929
    %v931 = vpop.f32.mrf.mxu0
    %v932 = vadd.f32 %v229, %v931
    %v933 = vpop.f32.mrf.mxu0
    %v934 = vadd.f32 %v225, %v933
    %v935 = vpop.f32.mrf.mxu0
    %v936 = vadd.f32 %v229, %v935
    %937 = vmatprep.mubr.bf16.mxu0 %v642
    %938 = vmatmul.mubr.bf16.gmra.mxu0 %v332
    %v939 = vpop.f32.mrf.mxu0
    %v940 = vadd.f32 %v225, %v939
    %v941 = vpop.f32.mrf.mxu0
    %v942 = vadd.f32 %v229, %v941
    %v943 = vpop.f32.mrf.mxu0
    %v944 = vadd.f32 %v225, %v943
    %v945 = vpop.f32.mrf.mxu0
    %v946 = vadd.f32 %v229, %v945
    %947 = vmatprep.mubr.bf16.mxu0 %v645
    %948 = vmatmul.mubr.bf16.gmra.mxu0 %v334
    %v949 = vpop.f32.mrf.mxu0
    %v950 = vadd.f32 %v225, %v949
    %v951 = vpop.f32.mrf.mxu0
    %v952 = vadd.f32 %v229, %v951
    %v953 = vpop.f32.mrf.mxu0
    %v954 = vadd.f32 %v225, %v953
    %v955 = vpop.f32.mrf.mxu0
    %v956 = vadd.f32 %v229, %v955
    %957 = vmatprep.mubr.bf16.mxu0 %v648
    %958 = vmatmul.mubr.bf16.gmra.mxu0 %v336
    %v959 = vpop.f32.mrf.mxu0
    %v960 = vadd.f32 %v225, %v959
    %v961 = vpop.f32.mrf.mxu0
    %v962 = vadd.f32 %v229, %v961
    %v963 = vpop.f32.mrf.mxu0
    %v964 = vadd.f32 %v225, %v963
    %v965 = vpop.f32.mrf.mxu0
    %v966 = vadd.f32 %v229, %v965
    %967 = vmatprep.mubr.bf16.mxu0 %v651
    %968 = vmatmul.mubr.bf16.gmra.mxu0 %v338
    %v969 = vpop.f32.mrf.mxu0
    %v970 = vadd.f32 %v225, %v969
    %v971 = vpop.f32.mrf.mxu0
    %v972 = vadd.f32 %v229, %v971
    %v973 = vpop.f32.mrf.mxu0
    %v974 = vadd.f32 %v225, %v973
    %v975 = vpop.f32.mrf.mxu0
    %v976 = vadd.f32 %v229, %v975
    %977 = vdwg.mxu0
    %978 = vmatprep.subr.bf16.mxu0 %v561
    %979 = vmatpush1.bf16.msra.mxu0 %v560
    %980 = vmatprep.subr.bf16.mxu0 %v555
    %981 = vmatpush1.bf16.msra.mxu0 %v554
    %982 = vmatprep.subr.bf16.mxu0 %v549
    %983 = vmatpush1.bf16.msra.mxu0 %v548
    %984 = vmatprep.subr.bf16.mxu0 %v543
    %985 = vmatpush1.bf16.msra.mxu0 %v542
    %986 = vmatprep.subr.bf16.mxu0 %v537
    %987 = vmatpush1.bf16.msra.mxu0 %v536
    %988 = vmatprep.subr.bf16.mxu0 %v531
    %989 = vmatpush1.bf16.msra.mxu0 %v530
    %990 = vmatprep.subr.bf16.mxu0 %v525
    %991 = vmatpush1.bf16.msra.mxu0 %v524
    %992 = vmatprep.subr.bf16.mxu0 %v519
    %993 = vmatpush1.bf16.msra.mxu0 %v518
    %994 = vmatprep.subr.bf16.mxu0 0
    %995 = vmatpush2.bf16.msra.mxu0 0
    %996 = vmatprep.subr.bf16.mxu0 0
    %997 = vmatpush2.bf16.msra.mxu0 0
    %998 = vmatprep.subr.bf16.mxu0 0
    %999 = vmatpush2.bf16.msra.mxu0 0
    %1000 = vmatprep.subr.bf16.mxu0 0
    %1001 = vmatpush2.bf16.msra.mxu0 0
    %1002 = vmatprep.subr.bf16.mxu0 0
    %1003 = vmatpush2.bf16.msra.mxu0 0
    %1004 = vmatprep.subr.bf16.mxu0 0
    %1005 = vmatpush2.bf16.msra.mxu0 0
    %1006 = vmatprep.subr.bf16.mxu0 0
    %1007 = vmatpush2.bf16.msra.mxu0 0
    %1008 = vmatprep.subr.bf16.mxu0 %v670
    %1009 = vmatpush2.bf16.msra.mxu0 %v667
    %1010 = vmatprep.mubr.bf16.mxu0 %v618
    %1011 = vmatmul.mubr.bf16.gmra.mxu0 %v316
    %v1012 = vpop.f32.mrf.mxu0
    %v1013 = vadd.f32 %v233, %v1012
    %v1014 = vpop.f32.mrf.mxu0
    %v1015 = vadd.f32 %v237, %v1014
    %v1016 = vpop.f32.mrf.mxu0
    %v1017 = vadd.f32 %v233, %v1016
    %v1018 = vpop.f32.mrf.mxu0
    %v1019 = vadd.f32 %v237, %v1018
    %1020 = vmatprep.mubr.bf16.mxu0 %v621
    %1021 = vmatmul.mubr.bf16.gmra.mxu0 %v318
    %v1022 = vpop.f32.mrf.mxu0
    %v1023 = vadd.f32 %v233, %v1022
    %v1024 = vpop.f32.mrf.mxu0
    %v1025 = vadd.f32 %v237, %v1024
    %v1026 = vpop.f32.mrf.mxu0
    %v1027 = vadd.f32 %v233, %v1026
    %v1028 = vpop.f32.mrf.mxu0
    %v1029 = vadd.f32 %v237, %v1028
    %1030 = vmatprep.mubr.bf16.mxu0 %v624
    %1031 = vmatmul.mubr.bf16.gmra.mxu0 %v320
    %v1032 = vpop.f32.mrf.mxu0
    %v1033 = vadd.f32 %v233, %v1032
    %v1034 = vpop.f32.mrf.mxu0
    %v1035 = vadd.f32 %v237, %v1034
    %v1036 = vpop.f32.mrf.mxu0
    %v1037 = vadd.f32 %v233, %v1036
    %v1038 = vpop.f32.mrf.mxu0
    %v1039 = vadd.f32 %v237, %v1038
    %1040 = vmatprep.mubr.bf16.mxu0 %v627
    %1041 = vmatmul.mubr.bf16.gmra.mxu0 %v322
    %v1042 = vpop.f32.mrf.mxu0
    %v1043 = vadd.f32 %v233, %v1042
    %v1044 = vpop.f32.mrf.mxu0
    %v1045 = vadd.f32 %v237, %v1044
    %v1046 = vpop.f32.mrf.mxu0
    %v1047 = vadd.f32 %v233, %v1046
    %v1048 = vpop.f32.mrf.mxu0
    %v1049 = vadd.f32 %v237, %v1048
    %1050 = vmatprep.mubr.bf16.mxu0 %v630
    %1051 = vmatmul.mubr.bf16.gmra.mxu0 %v324
    %v1052 = vpop.f32.mrf.mxu0
    %v1053 = vadd.f32 %v233, %v1052
    %v1054 = vpop.f32.mrf.mxu0
    %v1055 = vadd.f32 %v237, %v1054
    %v1056 = vpop.f32.mrf.mxu0
    %v1057 = vadd.f32 %v233, %v1056
    %v1058 = vpop.f32.mrf.mxu0
    %v1059 = vadd.f32 %v237, %v1058
    %1060 = vmatprep.mubr.bf16.mxu0 %v633
    %1061 = vmatmul.mubr.bf16.gmra.mxu0 %v326
    %v1062 = vpop.f32.mrf.mxu0
    %v1063 = vadd.f32 %v233, %v1062
    %v1064 = vpop.f32.mrf.mxu0
    %v1065 = vadd.f32 %v237, %v1064
    %v1066 = vpop.f32.mrf.mxu0
    %v1067 = vadd.f32 %v233, %v1066
    %v1068 = vpop.f32.mrf.mxu0
    %v1069 = vadd.f32 %v237, %v1068
    %1070 = vmatprep.mubr.bf16.mxu0 %v636
    %1071 = vmatmul.mubr.bf16.gmra.mxu0 %v328
    %v1072 = vpop.f32.mrf.mxu0
    %v1073 = vadd.f32 %v233, %v1072
    %v1074 = vpop.f32.mrf.mxu0
    %v1075 = vadd.f32 %v237, %v1074
    %v1076 = vpop.f32.mrf.mxu0
    %v1077 = vadd.f32 %v233, %v1076
    %v1078 = vpop.f32.mrf.mxu0
    %v1079 = vadd.f32 %v237, %v1078
    %1080 = vmatprep.mubr.bf16.mxu0 %v639
    %1081 = vmatmul.mubr.bf16.gmra.mxu0 %v330
    %v1082 = vpop.f32.mrf.mxu0
    %v1083 = vadd.f32 %v233, %v1082
    %v1084 = vpop.f32.mrf.mxu0
    %v1085 = vadd.f32 %v237, %v1084
    %v1086 = vpop.f32.mrf.mxu0
    %v1087 = vadd.f32 %v233, %v1086
    %v1088 = vpop.f32.mrf.mxu0
    %v1089 = vadd.f32 %v237, %v1088
    %1090 = vmatprep.mubr.bf16.mxu0 %v642
    %1091 = vmatmul.mubr.bf16.gmra.mxu0 %v332
    %v1092 = vpop.f32.mrf.mxu0
    %v1093 = vadd.f32 %v233, %v1092
    %v1094 = vpop.f32.mrf.mxu0
    %v1095 = vadd.f32 %v237, %v1094
    %v1096 = vpop.f32.mrf.mxu0
    %v1097 = vadd.f32 %v233, %v1096
    %v1098 = vpop.f32.mrf.mxu0
    %v1099 = vadd.f32 %v237, %v1098
    %1100 = vmatprep.mubr.bf16.mxu0 %v645
    %1101 = vmatmul.mubr.bf16.gmra.mxu0 %v334
    %v1102 = vpop.f32.mrf.mxu0
    %v1103 = vadd.f32 %v233, %v1102
    %v1104 = vpop.f32.mrf.mxu0
    %v1105 = vadd.f32 %v237, %v1104
    %v1106 = vpop.f32.mrf.mxu0
    %v1107 = vadd.f32 %v233, %v1106
    %v1108 = vpop.f32.mrf.mxu0
    %v1109 = vadd.f32 %v237, %v1108
    %1110 = vmatprep.mubr.bf16.mxu0 %v648
    %1111 = vmatmul.mubr.bf16.gmra.mxu0 %v336
    %v1112 = vpop.f32.mrf.mxu0
    %v1113 = vadd.f32 %v233, %v1112
    %v1114 = vpop.f32.mrf.mxu0
    %v1115 = vadd.f32 %v237, %v1114
    %v1116 = vpop.f32.mrf.mxu0
    %v1117 = vadd.f32 %v233, %v1116
    %v1118 = vpop.f32.mrf.mxu0
    %v1119 = vadd.f32 %v237, %v1118
    %1120 = vmatprep.mubr.bf16.mxu0 %v651
    %1121 = vmatmul.mubr.bf16.gmra.mxu0 %v338
    %v1122 = vpop.f32.mrf.mxu0
    %v1123 = vadd.f32 %v233, %v1122
    %v1124 = vpop.f32.mrf.mxu0
    %v1125 = vadd.f32 %v237, %v1124
    %v1126 = vpop.f32.mrf.mxu0
    %v1127 = vadd.f32 %v233, %v1126
    %v1128 = vpop.f32.mrf.mxu0
    %v1129 = vadd.f32 %v237, %v1128
    %1130 = vdwg.mxu0
    %v1131 = vmax.f32 %v707, 0.0
    %v1132 = vmax.f32 %v709, 0.0
    %v1133 = vmax.f32 %v860, 0.0
    %v1134 = vmax.f32 %v862, 0.0
    %v1135 = vmax.f32 %v1013, 0.0
    %v1136 = vmax.f32 %v1015, 0.0
    %v1137 = vmax.f32 %v711, 0.0
    %v1138 = vmax.f32 %v713, 0.0
    %v1139 = vmax.f32 %v864, 0.0
    %v1140 = vmax.f32 %v866, 0.0
    %v1141 = vmax.f32 %v1017, 0.0
    %v1142 = vmax.f32 %v1019, 0.0
    %v1143 = vmax.f32 %v717, 0.0
    %v1144 = vmax.f32 %v719, 0.0
    %v1145 = vmax.f32 %v870, 0.0
    %v1146 = vmax.f32 %v872, 0.0
    %v1147 = vmax.f32 %v1023, 0.0
    %v1148 = vmax.f32 %v1025, 0.0
    %v1149 = vmax.f32 %v721, 0.0
    %v1150 = vmax.f32 %v723, 0.0
    %v1151 = vmax.f32 %v874, 0.0
    %v1152 = vmax.f32 %v876, 0.0
    %v1153 = vmax.f32 %v1027, 0.0
    %v1154 = vmax.f32 %v1029, 0.0
    %v1155 = vmax.f32 %v727, 0.0
    %v1156 = vmax.f32 %v729, 0.0
    %v1157 = vmax.f32 %v880, 0.0
    %v1158 = vmax.f32 %v882, 0.0
    %v1159 = vmax.f32 %v1033, 0.0
    %v1160 = vmax.f32 %v1035, 0.0
    %v1161 = vmax.f32 %v731, 0.0
    %v1162 = vmax.f32 %v733, 0.0
    %v1163 = vmax.f32 %v884, 0.0
    %v1164 = vmax.f32 %v886, 0.0
    %v1165 = vmax.f32 %v1037, 0.0
    %v1166 = vmax.f32 %v1039, 0.0
    %v1167 = vmax.f32 %v737, 0.0
    %v1168 = vmax.f32 %v739, 0.0
    %v1169 = vmax.f32 %v890, 0.0
    %v1170 = vmax.f32 %v892, 0.0
    %v1171 = vmax.f32 %v1043, 0.0
    %v1172 = vmax.f32 %v1045, 0.0
    %v1173 = vmax.f32 %v741, 0.0
    %v1174 = vmax.f32 %v743, 0.0
    %v1175 = vmax.f32 %v894, 0.0
    %v1176 = vmax.f32 %v896, 0.0
    %v1177 = vmax.f32 %v1047, 0.0
    %v1178 = vmax.f32 %v1049, 0.0
    %v1179 = vmax.f32 %v747, 0.0
    %v1180 = vmax.f32 %v749, 0.0
    %v1181 = vmax.f32 %v900, 0.0
    %v1182 = vmax.f32 %v902, 0.0
    %v1183 = vmax.f32 %v1053, 0.0
    %v1184 = vmax.f32 %v1055, 0.0
    %v1185 = vmax.f32 %v751, 0.0
    %v1186 = vmax.f32 %v753, 0.0
    %v1187 = vmax.f32 %v904, 0.0
    %v1188 = vmax.f32 %v906, 0.0
    %v1189 = vmax.f32 %v1057, 0.0
    %v1190 = vmax.f32 %v1059, 0.0
    %v1191 = vmax.f32 %v757, 0.0
    %v1192 = vmax.f32 %v759, 0.0
    %v1193 = vmax.f32 %v910, 0.0
    %v1194 = vmax.f32 %v912, 0.0
    %v1195 = vmax.f32 %v1063, 0.0
    %v1196 = vmax.f32 %v1065, 0.0
    %v1197 = vmax.f32 %v761, 0.0
    %v1198 = vmax.f32 %v763, 0.0
    %v1199 = vmax.f32 %v914, 0.0
    %v1200 = vmax.f32 %v916, 0.0
    %v1201 = vmax.f32 %v1067, 0.0
    %v1202 = vmax.f32 %v1069, 0.0
    %v1203 = vmax.f32 %v767, 0.0
    %v1204 = vmax.f32 %v769, 0.0
    %v1205 = vmax.f32 %v920, 0.0
    %v1206 = vmax.f32 %v922, 0.0
    %v1207 = vmax.f32 %v1073, 0.0
    %v1208 = vmax.f32 %v1075, 0.0
    %v1209 = vmax.f32 %v771, 0.0
    %v1210 = vmax.f32 %v773, 0.0
    %v1211 = vmax.f32 %v924, 0.0
    %v1212 = vmax.f32 %v926, 0.0
    %v1213 = vmax.f32 %v1077, 0.0
    %v1214 = vmax.f32 %v1079, 0.0
    %v1215 = vmax.f32 %v777, 0.0
    %v1216 = vmax.f32 %v779, 0.0
    %v1217 = vmax.f32 %v930, 0.0
    %v1218 = vmax.f32 %v932, 0.0
    %v1219 = vmax.f32 %v1083, 0.0
    %v1220 = vmax.f32 %v1085, 0.0
    %v1221 = vmax.f32 %v781, 0.0
    %v1222 = vmax.f32 %v783, 0.0
    %v1223 = vmax.f32 %v934, 0.0
    %v1224 = vmax.f32 %v936, 0.0
    %v1225 = vmax.f32 %v1087, 0.0
    %v1226 = vmax.f32 %v1089, 0.0
    %v1227 = vmax.f32 %v787, 0.0
    %v1228 = vmax.f32 %v789, 0.0
    %v1229 = vmax.f32 %v940, 0.0
    %v1230 = vmax.f32 %v942, 0.0
    %v1231 = vmax.f32 %v1093, 0.0
    %v1232 = vmax.f32 %v1095, 0.0
    %v1233 = vmax.f32 %v791, 0.0
    %v1234 = vmax.f32 %v793, 0.0
    %v1235 = vmax.f32 %v944, 0.0
    %v1236 = vmax.f32 %v946, 0.0
    %v1237 = vmax.f32 %v1097, 0.0
    %v1238 = vmax.f32 %v1099, 0.0
    %v1239 = vmax.f32 %v797, 0.0
    %v1240 = vmax.f32 %v799, 0.0
    %v1241 = vmax.f32 %v950, 0.0
    %v1242 = vmax.f32 %v952, 0.0
    %v1243 = vmax.f32 %v1103, 0.0
    %v1244 = vmax.f32 %v1105, 0.0
    %v1245 = vmax.f32 %v801, 0.0
    %v1246 = vmax.f32 %v803, 0.0
    %v1247 = vmax.f32 %v954, 0.0
    %v1248 = vmax.f32 %v956, 0.0
    %v1249 = vmax.f32 %v1107, 0.0
    %v1250 = vmax.f32 %v1109, 0.0
    %v1251 = vmax.f32 %v807, 0.0
    %v1252 = vmax.f32 %v809, 0.0
    %v1253 = vmax.f32 %v960, 0.0
    %v1254 = vmax.f32 %v962, 0.0
    %v1255 = vmax.f32 %v1113, 0.0
    %v1256 = vmax.f32 %v1115, 0.0
    %v1257 = vmax.f32 %v811, 0.0
    %v1258 = vmax.f32 %v813, 0.0
    %v1259 = vmax.f32 %v964, 0.0
    %v1260 = vmax.f32 %v966, 0.0
    %v1261 = vmax.f32 %v1117, 0.0
    %v1262 = vmax.f32 %v1119, 0.0
    %v1263 = vmax.f32 %v817, 0.0
    %v1264 = vmax.f32 %v819, 0.0
    %v1265 = vmax.f32 %v970, 0.0
    %v1266 = vmax.f32 %v972, 0.0
    %v1267 = vmax.f32 %v1123, 0.0
    %v1268 = vmax.f32 %v1125, 0.0
    %v1269 = vmax.f32 %v821, 0.0
    %v1270 = vmax.f32 %v823, 0.0
    %v1271 = vmax.f32 %v974, 0.0
    %v1272 = vmax.f32 %v976, 0.0
    %v1273 = vmax.f32 %v1127, 0.0
    %v1274 = vmax.f32 %v1129, 0.0
    %v1275 = vmax.f32 %v1131, %v1137
    %v1276 = vmax.f32 %v1132, %v1138
    %v1277 = vmax.f32 %v1133, %v1139
    %v1278 = vmax.f32 %v1134, %v1140
    %v1279 = vmax.f32 %v1135, %v1141
    %v1280 = vmax.f32 %v1136, %v1142
    %v1281 = vmax.f32 %v1143, %v1149
    %v1282 = vmax.f32 %v1144, %v1150
    %v1283 = vmax.f32 %v1145, %v1151
    %v1284 = vmax.f32 %v1146, %v1152
    %v1285 = vmax.f32 %v1147, %v1153
    %v1286 = vmax.f32 %v1148, %v1154
    %v1287 = vmax.f32 %v1155, %v1161
    %v1288 = vmax.f32 %v1156, %v1162
    %v1289 = vmax.f32 %v1157, %v1163
    %v1290 = vmax.f32 %v1158, %v1164
    %v1291 = vmax.f32 %v1159, %v1165
    %v1292 = vmax.f32 %v1160, %v1166
    %v1293 = vmax.f32 %v1167, %v1173
    %v1294 = vmax.f32 %v1168, %v1174
    %v1295 = vmax.f32 %v1169, %v1175
    %v1296 = vmax.f32 %v1170, %v1176
    %v1297 = vmax.f32 %v1171, %v1177
    %v1298 = vmax.f32 %v1172, %v1178
    %v1299 = vmax.f32 %v1179, %v1185
    %v1300 = vmax.f32 %v1180, %v1186
    %v1301 = vmax.f32 %v1181, %v1187
    %v1302 = vmax.f32 %v1182, %v1188
    %v1303 = vmax.f32 %v1183, %v1189
    %v1304 = vmax.f32 %v1184, %v1190
    %v1305 = vmax.f32 %v1191, %v1197
    %v1306 = vmax.f32 %v1192, %v1198
    %v1307 = vmax.f32 %v1193, %v1199
    %v1308 = vmax.f32 %v1194, %v1200
    %v1309 = vmax.f32 %v1195, %v1201
    %v1310 = vmax.f32 %v1196, %v1202
    %v1311 = vmax.f32 %v1203, %v1209
    %v1312 = vmax.f32 %v1204, %v1210
    %v1313 = vmax.f32 %v1205, %v1211
    %v1314 = vmax.f32 %v1206, %v1212
    %v1315 = vmax.f32 %v1207, %v1213
    %v1316 = vmax.f32 %v1208, %v1214
    %v1317 = vmax.f32 %v1215, %v1221
    %v1318 = vmax.f32 %v1216, %v1222
    %v1319 = vmax.f32 %v1217, %v1223
    %v1320 = vmax.f32 %v1218, %v1224
    %v1321 = vmax.f32 %v1219, %v1225
    %v1322 = vmax.f32 %v1220, %v1226
    %v1323 = vmax.f32 %v1227, %v1233
    %v1324 = vmax.f32 %v1228, %v1234
    %v1325 = vmax.f32 %v1229, %v1235
    %v1326 = vmax.f32 %v1230, %v1236
    %v1327 = vmax.f32 %v1231, %v1237
    %v1328 = vmax.f32 %v1232, %v1238
    %v1329 = vmax.f32 %v1239, %v1245
    %v1330 = vmax.f32 %v1240, %v1246
    %v1331 = vmax.f32 %v1241, %v1247
    %v1332 = vmax.f32 %v1242, %v1248
    %v1333 = vmax.f32 %v1243, %v1249
    %v1334 = vmax.f32 %v1244, %v1250
    %v1335 = vmax.f32 %v1251, %v1257
    %v1336 = vmax.f32 %v1252, %v1258
    %v1337 = vmax.f32 %v1253, %v1259
    %v1338 = vmax.f32 %v1254, %v1260
    %v1339 = vmax.f32 %v1255, %v1261
    %v1340 = vmax.f32 %v1256, %v1262
    %v1341 = vmax.f32 %v1263, %v1269
    %v1342 = vmax.f32 %v1264, %v1270
    %v1343 = vmax.f32 %v1265, %v1271
    %v1344 = vmax.f32 %v1266, %v1272
    %v1345 = vmax.f32 %v1267, %v1273
    %v1346 = vmax.f32 %v1268, %v1274
    %v1347 = vmax.f32 %v1275, %v1278
    %v1348 = vmax.f32 %v1276, %v1279
    %v1349 = vmax.f32 %v1277, %v1280
    %v1350 = vmax.f32 %v1281, %v1284
    %v1351 = vmax.f32 %v1282, %v1285
    %v1352 = vmax.f32 %v1283, %v1286
    %v1353 = vmax.f32 %v1287, %v1290
    %v1354 = vmax.f32 %v1288, %v1291
    %v1355 = vmax.f32 %v1289, %v1292
    %v1356 = vmax.f32 %v1293, %v1296
    %v1357 = vmax.f32 %v1294, %v1297
    %v1358 = vmax.f32 %v1295, %v1298
    %v1359 = vmax.f32 %v1299, %v1302
    %v1360 = vmax.f32 %v1300, %v1303
    %v1361 = vmax.f32 %v1301, %v1304
    %v1362 = vmax.f32 %v1305, %v1308
    %v1363 = vmax.f32 %v1306, %v1309
    %v1364 = vmax.f32 %v1307, %v1310
    %v1365 = vmax.f32 %v1311, %v1314
    %v1366 = vmax.f32 %v1312, %v1315
    %v1367 = vmax.f32 %v1313, %v1316
    %v1368 = vmax.f32 %v1317, %v1320
    %v1369 = vmax.f32 %v1318, %v1321
    %v1370 = vmax.f32 %v1319, %v1322
    %v1371 = vmax.f32 %v1323, %v1326
    %v1372 = vmax.f32 %v1324, %v1327
    %v1373 = vmax.f32 %v1325, %v1328
    %v1374 = vmax.f32 %v1329, %v1332
    %v1375 = vmax.f32 %v1330, %v1333
    %v1376 = vmax.f32 %v1331, %v1334
    %v1377 = vmax.f32 %v1335, %v1338
    %v1378 = vmax.f32 %v1336, %v1339
    %v1379 = vmax.f32 %v1337, %v1340
    %v1380 = vmax.f32 %v1341, %v1344
    %v1381 = vmax.f32 %v1342, %v1345
    %v1382 = vmax.f32 %v1343, %v1346
    %v1383 = vpack.c.bf16 %v1347, %v1347
    %v1384 = vpack.c.bf16 %v1348, %v1348
    %v1385 = vpack.c.bf16 %v1349, %v1349
    %v1386 = vpack.c.bf16 %v1350, %v1350
    %v1387 = vpack.c.bf16 %v1351, %v1351
    %v1388 = vpack.c.bf16 %v1352, %v1352
    %v1389 = vpack.c.bf16 %v1353, %v1353
    %v1390 = vpack.c.bf16 %v1354, %v1354
    %v1391 = vpack.c.bf16 %v1355, %v1355
    %v1392 = vpack.c.bf16 %v1356, %v1356
    %v1393 = vpack.c.bf16 %v1357, %v1357
    %v1394 = vpack.c.bf16 %v1358, %v1358
    %v1395 = vpack.c.bf16 %v1359, %v1359
    %v1396 = vpack.c.bf16 %v1360, %v1360
    %v1397 = vpack.c.bf16 %v1361, %v1361
    %v1398 = vpack.c.bf16 %v1362, %v1362
    %v1399 = vpack.c.bf16 %v1363, %v1363
    %v1400 = vpack.c.bf16 %v1364, %v1364
    %v1401 = vpack.c.bf16 %v1365, %v1365
    %v1402 = vpack.c.bf16 %v1366, %v1366
    %v1403 = vpack.c.bf16 %v1367, %v1367
    %v1404 = vpack.c.bf16 %v1368, %v1368
    %v1405 = vpack.c.bf16 %v1369, %v1369
    %v1406 = vpack.c.bf16 %v1370, %v1370
    %v1407 = vpack.c.bf16 %v1371, %v1371
    %v1408 = vpack.c.bf16 %v1372, %v1372
    %v1409 = vpack.c.bf16 %v1373, %v1373
    %v1410 = vpack.c.bf16 %v1374, %v1374
    %v1411 = vpack.c.bf16 %v1375, %v1375
    %v1412 = vpack.c.bf16 %v1376, %v1376
    %v1413 = vpack.c.bf16 %v1377, %v1377
    %v1414 = vpack.c.bf16 %v1378, %v1378
    %v1415 = vpack.c.bf16 %v1379, %v1379
    %v1416 = vpack.c.bf16 %v1380, %v1380
    %v1417 = vpack.c.bf16 %v1381, %v1381
    %v1418 = vpack.c.bf16 %v1382, %v1382
    %v1455 = vunpack.c.l.b16 %v1383
    %v1456 = vunpack.c.l.b16 %v1384
    %v1457 = vunpack.c.l.b16 %v1385
    %v1458 = vunpack.c.l.b16 %v1386
    %v1459 = vunpack.c.l.b16 %v1387
    %v1460 = vunpack.c.l.b16 %v1388
    %v1461 = vunpack.c.l.b16 %v1389
    %v1462 = vunpack.c.l.b16 %v1390
    %v1463 = vunpack.c.l.b16 %v1391
    %v1464 = vunpack.c.l.b16 %v1392
    %v1465 = vunpack.c.l.b16 %v1393
    %v1466 = vunpack.c.l.b16 %v1394
    %v1467 = vunpack.c.l.b16 %v1395
    %v1468 = vunpack.c.l.b16 %v1396
    %v1469 = vunpack.c.l.b16 %v1397
    %v1470 = vunpack.c.l.b16 %v1398
    %v1471 = vunpack.c.l.b16 %v1399
    %v1472 = vunpack.c.l.b16 %v1400
    %v1473 = vunpack.c.l.b16 %v1401
    %v1474 = vunpack.c.l.b16 %v1402
    %v1475 = vunpack.c.l.b16 %v1403
    %v1476 = vunpack.c.l.b16 %v1404
    %v1477 = vunpack.c.l.b16 %v1405
    %v1478 = vunpack.c.l.b16 %v1406
    %v1479 = vunpack.c.l.b16 %v1407
    %v1480 = vunpack.c.l.b16 %v1408
    %v1481 = vunpack.c.l.b16 %v1409
    %v1482 = vunpack.c.l.b16 %v1410
    %v1483 = vunpack.c.l.b16 %v1411
    %v1484 = vunpack.c.l.b16 %v1412
    %v1485 = vunpack.c.l.b16 %v1413
    %v1486 = vunpack.c.l.b16 %v1414
    %v1487 = vunpack.c.l.b16 %v1415
    %v1488 = vunpack.c.l.b16 %v1416
    %v1489 = vunpack.c.l.b16 %v1417
    %v1490 = vunpack.c.l.b16 %v1418
    %v1491 = vld [vmem:[#allocation6] sm:$0xff]
    %v1492 = vld [vmem:[#allocation6 + $0x8] sm:$0xff]
    %v1493 = vld [vmem:[#allocation6 + $0x10] sm:$0xff]
    %v1494 = vld [vmem:[#allocation6 + $0x18] sm:$0xff]
    %v1495 = vld [vmem:[#allocation6 + $0x20] sm:$0xff]
    %v1496 = vld [vmem:[#allocation6 + $0x28] sm:$0xff]
    %v1497 = vld [vmem:[#allocation6 + $0x30] sm:$0xff]
    %v1498 = vld [vmem:[#allocation6 + $0x38] sm:$0xff]
    %v1499 = vld [vmem:[#allocation6 + $0x40] sm:$0xff]
    %v1500 = vld [vmem:[#allocation6 + $0x48] sm:$0xff]
    %v1501 = vld [vmem:[#allocation6 + $0x50] sm:$0xff]
    %v1502 = vld [vmem:[#allocation6 + $0x58] sm:$0xff]
    %v1503 = vld [vmem:[#allocation6 + $0x60] sm:$0xff]
    %v1504 = vld [vmem:[#allocation6 + $0x68] sm:$0xff]
    %v1505 = vld [vmem:[#allocation6 + $0x70] sm:$0xff]
    %v1506 = vld [vmem:[#allocation6 + $0x78] sm:$0xff]
    %v1507 = vld [vmem:[#allocation6 + $0x80] sm:$0xff]
    %v1508 = vld [vmem:[#allocation6 + $0x88] sm:$0xff]
    %v1509 = vld [vmem:[#allocation6 + $0x90] sm:$0xff]
    %v1510 = vld [vmem:[#allocation6 + $0x98] sm:$0xff]
    %v1511 = vld [vmem:[#allocation6 + $0xa0] sm:$0xff]
    %v1512 = vld [vmem:[#allocation6 + $0xa8] sm:$0xff]
    %v1513 = vld [vmem:[#allocation6 + $0xb0] sm:$0xff]
    %v1514 = vld [vmem:[#allocation6 + $0xb8] sm:$0xff]
    %v1515 = vld [vmem:[#allocation6 + $0xc0] sm:$0xff]
    %v1516 = vld [vmem:[#allocation6 + $0xc8] sm:$0xff]
    %v1517 = vld [vmem:[#allocation6 + $0xd0] sm:$0xff]
    %v1518 = vld [vmem:[#allocation6 + $0xd8] sm:$0xff]
    %v1519 = vld [vmem:[#allocation6 + $0xe0] sm:$0xff]
    %v1520 = vld [vmem:[#allocation6 + $0xe8] sm:$0xff]
    %v1521 = vld [vmem:[#allocation6 + $0xf0] sm:$0xff]
    %v1522 = vld [vmem:[#allocation6 + $0xf8] sm:$0xff]
    %v1523 = vld [vmem:[#allocation6 + $0x100] sm:$0xff]
    %v1524 = vld [vmem:[#allocation6 + $0x108] sm:$0xff]
    %v1525 = vld [vmem:[#allocation6 + $0x110] sm:$0xff]
    %v1526 = vld [vmem:[#allocation6 + $0x118] sm:$0xff]
    %v1527 = vld [vmem:[#allocation6 + $0x120] sm:$0xff]
    %v1528 = vld [vmem:[#allocation6 + $0x128] sm:$0xff]
    %v1529 = vld [vmem:[#allocation6 + $0x130] sm:$0xff]
    %v1530 = vld [vmem:[#allocation6 + $0x138] sm:$0xff]
    %v1531 = vld [vmem:[#allocation6 + $0x140] sm:$0xff]
    %v1532 = vld [vmem:[#allocation6 + $0x148] sm:$0xff]
    %v1533 = vld [vmem:[#allocation6 + $0x150] sm:$0xff]
    %v1534 = vld [vmem:[#allocation6 + $0x158] sm:$0xff]
    %v1535 = vld [vmem:[#allocation6 + $0x160] sm:$0xff]
    %v1536 = vld [vmem:[#allocation6 + $0x168] sm:$0xff]
    %v1537 = vld [vmem:[#allocation6 + $0x170] sm:$0xff]
    %v1538 = vld [vmem:[#allocation6 + $0x178] sm:$0xff]
    %v1539 = vld [vmem:[#allocation6 + $0x180] sm:$0xff]
    %v1540 = vld [vmem:[#allocation6 + $0x188] sm:$0xff]
    %v1541 = vld [vmem:[#allocation6 + $0x190] sm:$0xff]
    %v1542 = vld [vmem:[#allocation6 + $0x198] sm:$0xff]
    %v1543 = vld [vmem:[#allocation6 + $0x1a0] sm:$0xff]
    %v1544 = vld [vmem:[#allocation6 + $0x1a8] sm:$0xff]
    %v1545 = vld [vmem:[#allocation6 + $0x1b0] sm:$0xff]
    %v1546 = vld [vmem:[#allocation6 + $0x1b8] sm:$0xff]
    %v1547 = vld [vmem:[#allocation6 + $0x1c0] sm:$0xff]
    %v1548 = vld [vmem:[#allocation6 + $0x1c8] sm:$0xff]
    %v1549 = vld [vmem:[#allocation6 + $0x1d0] sm:$0xff]
    %v1550 = vld [vmem:[#allocation6 + $0x1d8] sm:$0xff]
    %v1551 = vld [vmem:[#allocation6 + $0x1e0] sm:$0xff]
    %v1552 = vld [vmem:[#allocation6 + $0x1e8] sm:$0xff]
    %v1553 = vld [vmem:[#allocation6 + $0x1f0] sm:$0xff]
    %v1554 = vld [vmem:[#allocation6 + $0x1f8] sm:$0xff]
    %v1555 = vld [vmem:[#allocation6 + $0x200] sm:$0xff]
    %v1556 = vld [vmem:[#allocation6 + $0x208] sm:$0xff]
    %v1557 = vld [vmem:[#allocation6 + $0x210] sm:$0xff]
    %v1558 = vld [vmem:[#allocation6 + $0x218] sm:$0xff]
    %v1559 = vld [vmem:[#allocation6 + $0x220] sm:$0xff]
    %v1560 = vld [vmem:[#allocation6 + $0x228] sm:$0xff]
    %v1561 = vld [vmem:[#allocation6 + $0x230] sm:$0xff]
    %v1562 = vld [vmem:[#allocation6 + $0x238] sm:$0xff]
    %v1563 = vld [vmem:[#allocation6 + $0x240] sm:$0xff]
    %v1564 = vld [vmem:[#allocation6 + $0x248] sm:$0xff]
    %v1565 = vld [vmem:[#allocation6 + $0x250] sm:$0xff]
    %v1566 = vld [vmem:[#allocation6 + $0x258] sm:$0xff]
    %v1567 = vld [vmem:[#allocation6 + $0x260] sm:$0xff]
    %v1568 = vld [vmem:[#allocation6 + $0x268] sm:$0xff]
    %v1569 = vld [vmem:[#allocation6 + $0x270] sm:$0xff]
    %v1570 = vld [vmem:[#allocation6 + $0x278] sm:$0xff]
    %v1571 = vld [vmem:[#allocation6 + $0x280] sm:$0xff]
    %v1572 = vld [vmem:[#allocation6 + $0x288] sm:$0xff]
    %v1573 = vld [vmem:[#allocation6 + $0x290] sm:$0xff]
    %v1574 = vld [vmem:[#allocation6 + $0x298] sm:$0xff]
    %v1575 = vld [vmem:[#allocation6 + $0x2a0] sm:$0xff]
    %v1576 = vld [vmem:[#allocation6 + $0x2a8] sm:$0xff]
    %v1577 = vld [vmem:[#allocation6 + $0x2b0] sm:$0xff]
    %v1578 = vld [vmem:[#allocation6 + $0x2b8] sm:$0xff]
    %v1579 = vld [vmem:[#allocation6 + $0x2c0] sm:$0xff]
    %v1580 = vld [vmem:[#allocation6 + $0x2c8] sm:$0xff]
    %v1581 = vld [vmem:[#allocation6 + $0x2d0] sm:$0xff]
    %v1582 = vld [vmem:[#allocation6 + $0x2d8] sm:$0xff]
    %v1583 = vld [vmem:[#allocation6 + $0x2e0] sm:$0xff]
    %v1584 = vld [vmem:[#allocation6 + $0x2e8] sm:$0xff]
    %v1585 = vld [vmem:[#allocation6 + $0x2f0] sm:$0xff]
    %v1586 = vld [vmem:[#allocation6 + $0x2f8] sm:$0xff]
    %v1587 = vld [vmem:[#allocation6 + $0x300] sm:$0xff]
    %v1588 = vld [vmem:[#allocation6 + $0x308] sm:$0xff]
    %v1589 = vld [vmem:[#allocation6 + $0x310] sm:$0xff]
    %v1590 = vld [vmem:[#allocation6 + $0x318] sm:$0xff]
    %v1591 = vld [vmem:[#allocation6 + $0x320] sm:$0xff]
    %v1592 = vld [vmem:[#allocation6 + $0x328] sm:$0xff]
    %v1593 = vld [vmem:[#allocation6 + $0x330] sm:$0xff]
    %v1594 = vld [vmem:[#allocation6 + $0x338] sm:$0xff]
    %v1595 = vld [vmem:[#allocation6 + $0x340] sm:$0xff]
    %v1596 = vld [vmem:[#allocation6 + $0x348] sm:$0xff]
    %v1597 = vld [vmem:[#allocation6 + $0x350] sm:$0xff]
    %v1598 = vld [vmem:[#allocation6 + $0x358] sm:$0xff]
    %v1599 = vld [vmem:[#allocation6 + $0x360] sm:$0xff]
    %v1600 = vld [vmem:[#allocation6 + $0x368] sm:$0xff]
    %v1601 = vld [vmem:[#allocation6 + $0x370] sm:$0xff]
    %v1602 = vld [vmem:[#allocation6 + $0x378] sm:$0xff]
    %v1603 = vld [vmem:[#allocation6 + $0x380] sm:$0xff]
    %v1604 = vld [vmem:[#allocation6 + $0x388] sm:$0xff]
    %v1605 = vld [vmem:[#allocation6 + $0x390] sm:$0xff]
    %v1606 = vld [vmem:[#allocation6 + $0x398] sm:$0xff]
    %v1607 = vld [vmem:[#allocation6 + $0x3a0] sm:$0xff]
    %v1608 = vld [vmem:[#allocation6 + $0x3a8] sm:$0xff]
    %v1609 = vld [vmem:[#allocation6 + $0x3b0] sm:$0xff]
    %v1610 = vld [vmem:[#allocation6 + $0x3b8] sm:$0xff]
    %v1611 = vld [vmem:[#allocation6 + $0x3c0] sm:$0xff]
    %v1612 = vld [vmem:[#allocation6 + $0x3c8] sm:$0xff]
    %v1613 = vld [vmem:[#allocation6 + $0x3d0] sm:$0xff]
    %v1614 = vld [vmem:[#allocation6 + $0x3d8] sm:$0xff]
    %v1615 = vld [vmem:[#allocation6 + $0x3e0] sm:$0xff]
    %v1616 = vld [vmem:[#allocation6 + $0x3e8] sm:$0xff]
    %v1617 = vld [vmem:[#allocation6 + $0x3f0] sm:$0xff]
    %v1618 = vld [vmem:[#allocation6 + $0x3f8] sm:$0xff]
    %v1619 = vld [vmem:[#allocation6 + $0x400] sm:$0xff]
    %v1620 = vld [vmem:[#allocation6 + $0x408] sm:$0xff]
    %v1621 = vld [vmem:[#allocation6 + $0x410] sm:$0xff]
    %v1622 = vld [vmem:[#allocation6 + $0x418] sm:$0xff]
    %v1623 = vld [vmem:[#allocation6 + $0x420] sm:$0xff]
    %v1624 = vld [vmem:[#allocation6 + $0x428] sm:$0xff]
    %v1625 = vld [vmem:[#allocation6 + $0x430] sm:$0xff]
    %v1626 = vld [vmem:[#allocation6 + $0x438] sm:$0xff]
    %v1627 = vld [vmem:[#allocation6 + $0x440] sm:$0xff]
    %v1628 = vld [vmem:[#allocation6 + $0x448] sm:$0xff]
    %v1629 = vld [vmem:[#allocation6 + $0x450] sm:$0xff]
    %v1630 = vld [vmem:[#allocation6 + $0x458] sm:$0xff]
    %v1631 = vld [vmem:[#allocation6 + $0x460] sm:$0xff]
    %v1632 = vld [vmem:[#allocation6 + $0x468] sm:$0xff]
    %v1633 = vld [vmem:[#allocation6 + $0x470] sm:$0xff]
    %v1634 = vld [vmem:[#allocation6 + $0x478] sm:$0xff]
    %v1635 = vld [vmem:[#allocation6 + $0x480] sm:$0xff]
    %v1636 = vld [vmem:[#allocation6 + $0x488] sm:$0xff]
    %v1637 = vld [vmem:[#allocation6 + $0x490] sm:$0xff]
    %v1638 = vld [vmem:[#allocation6 + $0x498] sm:$0xff]
    %v1639 = vld [vmem:[#allocation6 + $0x4a0] sm:$0xff]
    %v1640 = vld [vmem:[#allocation6 + $0x4a8] sm:$0xff]
    %v1641 = vld [vmem:[#allocation6 + $0x4b0] sm:$0xff]
    %v1642 = vld [vmem:[#allocation6 + $0x4b8] sm:$0xff]
    %v1643 = vld [vmem:[#allocation6 + $0x4c0] sm:$0xff]
    %v1644 = vld [vmem:[#allocation6 + $0x4c8] sm:$0xff]
    %v1645 = vld [vmem:[#allocation6 + $0x4d0] sm:$0xff]
    %v1646 = vld [vmem:[#allocation6 + $0x4d8] sm:$0xff]
    %v1647 = vld [vmem:[#allocation6 + $0x4e0] sm:$0xff]
    %v1648 = vld [vmem:[#allocation6 + $0x4e8] sm:$0xff]
    %v1649 = vld [vmem:[#allocation6 + $0x4f0] sm:$0xff]
    %v1650 = vld [vmem:[#allocation6 + $0x4f8] sm:$0xff]
    %v1651 = vld [vmem:[#allocation6 + $0x500] sm:$0xff]
    %v1652 = vld [vmem:[#allocation6 + $0x508] sm:$0xff]
    %v1653 = vld [vmem:[#allocation6 + $0x510] sm:$0xff]
    %v1654 = vld [vmem:[#allocation6 + $0x518] sm:$0xff]
    %v1655 = vld [vmem:[#allocation6 + $0x520] sm:$0xff]
    %v1656 = vld [vmem:[#allocation6 + $0x528] sm:$0xff]
    %v1657 = vld [vmem:[#allocation6 + $0x530] sm:$0xff]
    %v1658 = vld [vmem:[#allocation6 + $0x538] sm:$0xff]
    %v1659 = vld [vmem:[#allocation6 + $0x540] sm:$0xff]
    %v1660 = vld [vmem:[#allocation6 + $0x548] sm:$0xff]
    %v1661 = vld [vmem:[#allocation6 + $0x550] sm:$0xff]
    %v1662 = vld [vmem:[#allocation6 + $0x558] sm:$0xff]
    %v1663 = vld [vmem:[#allocation6 + $0x560] sm:$0xff]
    %v1664 = vld [vmem:[#allocation6 + $0x568] sm:$0xff]
    %v1665 = vld [vmem:[#allocation6 + $0x570] sm:$0xff]
    %v1666 = vld [vmem:[#allocation6 + $0x578] sm:$0xff]
    %v1667 = vld [vmem:[#allocation6 + $0x580] sm:$0xff]
    %v1668 = vld [vmem:[#allocation6 + $0x588] sm:$0xff]
    %v1669 = vld [vmem:[#allocation6 + $0x590] sm:$0xff]
    %v1670 = vld [vmem:[#allocation6 + $0x598] sm:$0xff]
    %v1671 = vld [vmem:[#allocation6 + $0x5a0] sm:$0xff]
    %v1672 = vld [vmem:[#allocation6 + $0x5a8] sm:$0xff]
    %v1673 = vld [vmem:[#allocation6 + $0x5b0] sm:$0xff]
    %v1674 = vld [vmem:[#allocation6 + $0x5b8] sm:$0xff]
    %v1675 = vld [vmem:[#allocation6 + $0x5c0] sm:$0xff]
    %v1676 = vld [vmem:[#allocation6 + $0x5c8] sm:$0xff]
    %v1677 = vld [vmem:[#allocation6 + $0x5d0] sm:$0xff]
    %v1678 = vld [vmem:[#allocation6 + $0x5d8] sm:$0xff]
    %v1679 = vld [vmem:[#allocation6 + $0x5e0] sm:$0xff]
    %v1680 = vld [vmem:[#allocation6 + $0x5e8] sm:$0xff]
    %v1681 = vld [vmem:[#allocation6 + $0x5f0] sm:$0xff]
    %v1682 = vld [vmem:[#allocation6 + $0x5f8] sm:$0xff]
    %v1683 = vld [vmem:[#allocation6 + $0x600] sm:$0xff]
    %v1684 = vld [vmem:[#allocation6 + $0x608] sm:$0xff]
    %v1685 = vld [vmem:[#allocation6 + $0x610] sm:$0xff]
    %v1686 = vld [vmem:[#allocation6 + $0x618] sm:$0xff]
    %v1687 = vld [vmem:[#allocation6 + $0x620] sm:$0xff]
    %v1688 = vld [vmem:[#allocation6 + $0x628] sm:$0xff]
    %v1689 = vld [vmem:[#allocation6 + $0x630] sm:$0xff]
    %v1690 = vld [vmem:[#allocation6 + $0x638] sm:$0xff]
    %v1691 = vld [vmem:[#allocation6 + $0x640] sm:$0xff]
    %v1692 = vld [vmem:[#allocation6 + $0x648] sm:$0xff]
    %v1693 = vld [vmem:[#allocation6 + $0x650] sm:$0xff]
    %v1694 = vld [vmem:[#allocation6 + $0x658] sm:$0xff]
    %v1695 = vld [vmem:[#allocation6 + $0x660] sm:$0xff]
    %v1696 = vld [vmem:[#allocation6 + $0x668] sm:$0xff]
    %v1697 = vld [vmem:[#allocation6 + $0x670] sm:$0xff]
    %v1698 = vld [vmem:[#allocation6 + $0x678] sm:$0xff]
    %v1699 = vld [vmem:[#allocation6 + $0x680] sm:$0xff]
    %v1700 = vld [vmem:[#allocation6 + $0x688] sm:$0xff]
    %v1701 = vld [vmem:[#allocation6 + $0x690] sm:$0xff]
    %v1702 = vld [vmem:[#allocation6 + $0x698] sm:$0xff]
    %v1703 = vld [vmem:[#allocation6 + $0x6a0] sm:$0xff]
    %v1704 = vld [vmem:[#allocation6 + $0x6a8] sm:$0xff]
    %v1705 = vld [vmem:[#allocation6 + $0x6b0] sm:$0xff]
    %v1706 = vld [vmem:[#allocation6 + $0x6b8] sm:$0xff]
    %v1707 = vld [vmem:[#allocation6 + $0x6c0] sm:$0xff]
    %v1708 = vld [vmem:[#allocation6 + $0x6c8] sm:$0xff]
    %v1709 = vld [vmem:[#allocation6 + $0x6d0] sm:$0xff]
    %v1710 = vld [vmem:[#allocation6 + $0x6d8] sm:$0xff]
    %v1711 = vld [vmem:[#allocation6 + $0x6e0] sm:$0xff]
    %v1712 = vld [vmem:[#allocation6 + $0x6e8] sm:$0xff]
    %v1713 = vld [vmem:[#allocation6 + $0x6f0] sm:$0xff]
    %v1714 = vld [vmem:[#allocation6 + $0x6f8] sm:$0xff]
    %v1715 = vld [vmem:[#allocation6 + $0x700] sm:$0xff]
    %v1716 = vld [vmem:[#allocation6 + $0x708] sm:$0xff]
    %v1717 = vld [vmem:[#allocation6 + $0x710] sm:$0xff]
    %v1718 = vld [vmem:[#allocation6 + $0x718] sm:$0xff]
    %v1719 = vld [vmem:[#allocation6 + $0x720] sm:$0xff]
    %v1720 = vld [vmem:[#allocation6 + $0x728] sm:$0xff]
    %v1721 = vld [vmem:[#allocation6 + $0x730] sm:$0xff]
    %v1722 = vld [vmem:[#allocation6 + $0x738] sm:$0xff]
    %v1723 = vld [vmem:[#allocation6 + $0x740] sm:$0xff]
    %v1724 = vld [vmem:[#allocation6 + $0x748] sm:$0xff]
    %v1725 = vld [vmem:[#allocation6 + $0x750] sm:$0xff]
    %v1726 = vld [vmem:[#allocation6 + $0x758] sm:$0xff]
    %v1727 = vld [vmem:[#allocation6 + $0x760] sm:$0xff]
    %v1728 = vld [vmem:[#allocation6 + $0x768] sm:$0xff]
    %v1729 = vld [vmem:[#allocation6 + $0x770] sm:$0xff]
    %v1730 = vld [vmem:[#allocation6 + $0x778] sm:$0xff]
    %v1731 = vld [vmem:[#allocation6 + $0x780] sm:$0xff]
    %v1732 = vld [vmem:[#allocation6 + $0x788] sm:$0xff]
    %v1733 = vld [vmem:[#allocation6 + $0x790] sm:$0xff]
    %v1734 = vld [vmem:[#allocation6 + $0x798] sm:$0xff]
    %v1735 = vld [vmem:[#allocation6 + $0x7a0] sm:$0xff]
    %v1736 = vld [vmem:[#allocation6 + $0x7a8] sm:$0xff]
    %v1737 = vld [vmem:[#allocation6 + $0x7b0] sm:$0xff]
    %v1738 = vld [vmem:[#allocation6 + $0x7b8] sm:$0xff]
    %v1739 = vld [vmem:[#allocation6 + $0x7c0] sm:$0xff]
    %v1740 = vld [vmem:[#allocation6 + $0x7c8] sm:$0xff]
    %v1741 = vld [vmem:[#allocation6 + $0x7d0] sm:$0xff]
    %v1742 = vld [vmem:[#allocation6 + $0x7d8] sm:$0xff]
    %v1743 = vld [vmem:[#allocation6 + $0x7e0] sm:$0xff]
    %v1744 = vld [vmem:[#allocation6 + $0x7e8] sm:$0xff]
    %v1745 = vld [vmem:[#allocation6 + $0x7f0] sm:$0xff]
    %v1746 = vld [vmem:[#allocation6 + $0x7f8] sm:$0xff]
    %v1747 = vld [vmem:[#allocation6 + $0x800] sm:$0xff]
    %v1748 = vld [vmem:[#allocation6 + $0x808] sm:$0xff]
    %v1749 = vld [vmem:[#allocation6 + $0x810] sm:$0xff]
    %v1750 = vld [vmem:[#allocation6 + $0x818] sm:$0xff]
    %v1751 = vld [vmem:[#allocation6 + $0x820] sm:$0xff]
    %v1752 = vld [vmem:[#allocation6 + $0x828] sm:$0xff]
    %v1753 = vld [vmem:[#allocation6 + $0x830] sm:$0xff]
    %v1754 = vld [vmem:[#allocation6 + $0x838] sm:$0xff]
    %v1755 = vld [vmem:[#allocation6 + $0x840] sm:$0xff]
    %v1756 = vld [vmem:[#allocation6 + $0x848] sm:$0xff]
    %v1757 = vld [vmem:[#allocation6 + $0x850] sm:$0xff]
    %v1758 = vld [vmem:[#allocation6 + $0x858] sm:$0xff]
    %v1759 = vld [vmem:[#allocation6 + $0x860] sm:$0xff]
    %v1760 = vld [vmem:[#allocation6 + $0x868] sm:$0xff]
    %v1761 = vld [vmem:[#allocation6 + $0x870] sm:$0xff]
    %v1762 = vld [vmem:[#allocation6 + $0x878] sm:$0xff]
    %v1763 = vld [vmem:[#allocation6 + $0x880] sm:$0xff]
    %v1764 = vld [vmem:[#allocation6 + $0x888] sm:$0xff]
    %v1765 = vld [vmem:[#allocation6 + $0x890] sm:$0xff]
    %v1766 = vld [vmem:[#allocation6 + $0x898] sm:$0xff]
    %v1767 = vld [vmem:[#allocation6 + $0x8a0] sm:$0xff]
    %v1768 = vld [vmem:[#allocation6 + $0x8a8] sm:$0xff]
    %v1769 = vld [vmem:[#allocation6 + $0x8b0] sm:$0xff]
    %v1770 = vld [vmem:[#allocation6 + $0x8b8] sm:$0xff]
    %v1771 = vld [vmem:[#allocation6 + $0x8c0] sm:$0xff]
    %v1772 = vld [vmem:[#allocation6 + $0x8c8] sm:$0xff]
    %v1773 = vld [vmem:[#allocation6 + $0x8d0] sm:$0xff]
    %v1774 = vld [vmem:[#allocation6 + $0x8d8] sm:$0xff]
    %v1775 = vld [vmem:[#allocation6 + $0x8e0] sm:$0xff]
    %v1776 = vld [vmem:[#allocation6 + $0x8e8] sm:$0xff]
    %v1777 = vld [vmem:[#allocation6 + $0x8f0] sm:$0xff]
    %v1778 = vld [vmem:[#allocation6 + $0x8f8] sm:$0xff]
    %v1779 = vld [vmem:[#allocation6 + $0x900] sm:$0xff]
    %v1780 = vld [vmem:[#allocation6 + $0x908] sm:$0xff]
    %v1781 = vld [vmem:[#allocation6 + $0x910] sm:$0xff]
    %v1782 = vld [vmem:[#allocation6 + $0x918] sm:$0xff]
    %v1783 = vld [vmem:[#allocation6 + $0x920] sm:$0xff]
    %v1784 = vld [vmem:[#allocation6 + $0x928] sm:$0xff]
    %v1785 = vld [vmem:[#allocation6 + $0x930] sm:$0xff]
    %v1786 = vld [vmem:[#allocation6 + $0x938] sm:$0xff]
    %v1787 = vld [vmem:[#allocation6 + $0x940] sm:$0xff]
    %v1788 = vld [vmem:[#allocation6 + $0x948] sm:$0xff]
    %v1789 = vld [vmem:[#allocation6 + $0x950] sm:$0xff]
    %v1790 = vld [vmem:[#allocation6 + $0x958] sm:$0xff]
    %v1791 = vld [vmem:[#allocation6 + $0x960] sm:$0xff]
    %v1792 = vld [vmem:[#allocation6 + $0x968] sm:$0xff]
    %v1793 = vld [vmem:[#allocation6 + $0x970] sm:$0xff]
    %v1794 = vld [vmem:[#allocation6 + $0x978] sm:$0xff]
    %v1795 = vld [vmem:[#allocation6 + $0x980] sm:$0xff]
    %v1796 = vld [vmem:[#allocation6 + $0x988] sm:$0xff]
    %v1797 = vld [vmem:[#allocation6 + $0x990] sm:$0xff]
    %v1798 = vld [vmem:[#allocation6 + $0x998] sm:$0xff]
    %v1799 = vld [vmem:[#allocation6 + $0x9a0] sm:$0xff]
    %v1800 = vld [vmem:[#allocation6 + $0x9a8] sm:$0xff]
    %v1801 = vld [vmem:[#allocation6 + $0x9b0] sm:$0xff]
    %v1802 = vld [vmem:[#allocation6 + $0x9b8] sm:$0xff]
    %v1803 = vld [vmem:[#allocation6 + $0x9c0] sm:$0xff]
    %v1804 = vld [vmem:[#allocation6 + $0x9c8] sm:$0xff]
    %v1805 = vld [vmem:[#allocation6 + $0x9d0] sm:$0xff]
    %v1806 = vld [vmem:[#allocation6 + $0x9d8] sm:$0xff]
    %v1807 = vld [vmem:[#allocation6 + $0x9e0] sm:$0xff]
    %v1808 = vld [vmem:[#allocation6 + $0x9e8] sm:$0xff]
    %v1809 = vld [vmem:[#allocation6 + $0x9f0] sm:$0xff]
    %v1810 = vld [vmem:[#allocation6 + $0x9f8] sm:$0xff]
    %v1811 = vld [vmem:[#allocation6 + $0xa00] sm:$0xff]
    %v1812 = vld [vmem:[#allocation6 + $0xa08] sm:$0xff]
    %v1813 = vld [vmem:[#allocation6 + $0xa10] sm:$0xff]
    %v1814 = vld [vmem:[#allocation6 + $0xa18] sm:$0xff]
    %v1815 = vld [vmem:[#allocation6 + $0xa20] sm:$0xff]
    %v1816 = vld [vmem:[#allocation6 + $0xa28] sm:$0xff]
    %v1817 = vld [vmem:[#allocation6 + $0xa30] sm:$0xff]
    %v1818 = vld [vmem:[#allocation6 + $0xa38] sm:$0xff]
    %v1819 = vld [vmem:[#allocation6 + $0xa40] sm:$0xff]
    %v1820 = vld [vmem:[#allocation6 + $0xa48] sm:$0xff]
    %v1821 = vld [vmem:[#allocation6 + $0xa50] sm:$0xff]
    %v1822 = vld [vmem:[#allocation6 + $0xa58] sm:$0xff]
    %v1823 = vld [vmem:[#allocation6 + $0xa60] sm:$0xff]
    %v1824 = vld [vmem:[#allocation6 + $0xa68] sm:$0xff]
    %v1825 = vld [vmem:[#allocation6 + $0xa70] sm:$0xff]
    %v1826 = vld [vmem:[#allocation6 + $0xa78] sm:$0xff]
    %v1827 = vld [vmem:[#allocation6 + $0xa80] sm:$0xff]
    %v1828 = vld [vmem:[#allocation6 + $0xa88] sm:$0xff]
    %v1829 = vld [vmem:[#allocation6 + $0xa90] sm:$0xff]
    %v1830 = vld [vmem:[#allocation6 + $0xa98] sm:$0xff]
    %v1831 = vld [vmem:[#allocation6 + $0xaa0] sm:$0xff]
    %v1832 = vld [vmem:[#allocation6 + $0xaa8] sm:$0xff]
    %v1833 = vld [vmem:[#allocation6 + $0xab0] sm:$0xff]
    %v1834 = vld [vmem:[#allocation6 + $0xab8] sm:$0xff]
    %v1835 = vld [vmem:[#allocation6 + $0xac0] sm:$0xff]
    %v1836 = vld [vmem:[#allocation6 + $0xac8] sm:$0xff]
    %v1837 = vld [vmem:[#allocation6 + $0xad0] sm:$0xff]
    %v1838 = vld [vmem:[#allocation6 + $0xad8] sm:$0xff]
    %v1839 = vld [vmem:[#allocation6 + $0xae0] sm:$0xff]
    %v1840 = vld [vmem:[#allocation6 + $0xae8] sm:$0xff]
    %v1841 = vld [vmem:[#allocation6 + $0xaf0] sm:$0xff]
    %v1842 = vld [vmem:[#allocation6 + $0xaf8] sm:$0xff]
    %v1843 = vld [vmem:[#allocation6 + $0xb00] sm:$0xff]
    %v1844 = vld [vmem:[#allocation6 + $0xb08] sm:$0xff]
    %v1845 = vld [vmem:[#allocation6 + $0xb10] sm:$0xff]
    %v1846 = vld [vmem:[#allocation6 + $0xb18] sm:$0xff]
    %v1847 = vld [vmem:[#allocation6 + $0xb20] sm:$0xff]
    %v1848 = vld [vmem:[#allocation6 + $0xb28] sm:$0xff]
    %v1849 = vld [vmem:[#allocation6 + $0xb30] sm:$0xff]
    %v1850 = vld [vmem:[#allocation6 + $0xb38] sm:$0xff]
    %v1851 = vld [vmem:[#allocation6 + $0xb40] sm:$0xff]
    %v1852 = vld [vmem:[#allocation6 + $0xb48] sm:$0xff]
    %v1853 = vld [vmem:[#allocation6 + $0xb50] sm:$0xff]
    %v1854 = vld [vmem:[#allocation6 + $0xb58] sm:$0xff]
    %v1855 = vld [vmem:[#allocation6 + $0xb60] sm:$0xff]
    %v1856 = vld [vmem:[#allocation6 + $0xb68] sm:$0xff]
    %v1857 = vld [vmem:[#allocation6 + $0xb70] sm:$0xff]
    %v1858 = vld [vmem:[#allocation6 + $0xb78] sm:$0xff]
    %v1859 = vld [vmem:[#allocation6 + $0xb80] sm:$0xff]
    %v1860 = vld [vmem:[#allocation6 + $0xb88] sm:$0xff]
    %v1861 = vld [vmem:[#allocation6 + $0xb90] sm:$0xff]
    %v1862 = vld [vmem:[#allocation6 + $0xb98] sm:$0xff]
    %v1863 = vld [vmem:[#allocation6 + $0xba0] sm:$0xff]
    %v1864 = vld [vmem:[#allocation6 + $0xba8] sm:$0xff]
    %v1865 = vld [vmem:[#allocation6 + $0xbb0] sm:$0xff]
    %v1866 = vld [vmem:[#allocation6 + $0xbb8] sm:$0xff]
    %v1867 = vld [vmem:[#allocation6 + $0xbc0] sm:$0xff]
    %v1868 = vld [vmem:[#allocation6 + $0xbc8] sm:$0xff]
    %v1869 = vld [vmem:[#allocation6 + $0xbd0] sm:$0xff]
    %v1870 = vld [vmem:[#allocation6 + $0xbd8] sm:$0xff]
    %v1871 = vld [vmem:[#allocation6 + $0xbe0] sm:$0xff]
    %v1872 = vld [vmem:[#allocation6 + $0xbe8] sm:$0xff]
    %v1873 = vld [vmem:[#allocation6 + $0xbf0] sm:$0xff]
    %v1874 = vld [vmem:[#allocation6 + $0xbf8] sm:$0xff]
    %v1875 = vld [vmem:[#allocation6 + $0xc00] sm:$0xff]
    %v1876 = vld [vmem:[#allocation6 + $0xc08] sm:$0xff]
    %v1877 = vld [vmem:[#allocation6 + $0xc10] sm:$0xff]
    %v1878 = vld [vmem:[#allocation6 + $0xc18] sm:$0xff]
    %v1879 = vld [vmem:[#allocation6 + $0xc20] sm:$0xff]
    %v1880 = vld [vmem:[#allocation6 + $0xc28] sm:$0xff]
    %v1881 = vld [vmem:[#allocation6 + $0xc30] sm:$0xff]
    %v1882 = vld [vmem:[#allocation6 + $0xc38] sm:$0xff]
    %v1883 = vld [vmem:[#allocation6 + $0xc40] sm:$0xff]
    %v1884 = vld [vmem:[#allocation6 + $0xc48] sm:$0xff]
    %v1885 = vld [vmem:[#allocation6 + $0xc50] sm:$0xff]
    %v1886 = vld [vmem:[#allocation6 + $0xc58] sm:$0xff]
    %v1887 = vld [vmem:[#allocation6 + $0xc60] sm:$0xff]
    %v1888 = vld [vmem:[#allocation6 + $0xc68] sm:$0xff]
    %v1889 = vld [vmem:[#allocation6 + $0xc70] sm:$0xff]
    %v1890 = vld [vmem:[#allocation6 + $0xc78] sm:$0xff]
    %v1891 = vld [vmem:[#allocation6 + $0xc80] sm:$0xff]
    %v1892 = vld [vmem:[#allocation6 + $0xc88] sm:$0xff]
    %v1893 = vld [vmem:[#allocation6 + $0xc90] sm:$0xff]
    %v1894 = vld [vmem:[#allocation6 + $0xc98] sm:$0xff]
    %v1895 = vld [vmem:[#allocation6 + $0xca0] sm:$0xff]
    %v1896 = vld [vmem:[#allocation6 + $0xca8] sm:$0xff]
    %v1897 = vld [vmem:[#allocation6 + $0xcb0] sm:$0xff]
    %v1898 = vld [vmem:[#allocation6 + $0xcb8] sm:$0xff]
    %v1899 = vld [vmem:[#allocation6 + $0xcc0] sm:$0xff]
    %v1900 = vld [vmem:[#allocation6 + $0xcc8] sm:$0xff]
    %v1901 = vld [vmem:[#allocation6 + $0xcd0] sm:$0xff]
    %v1902 = vld [vmem:[#allocation6 + $0xcd8] sm:$0xff]
    %v1903 = vld [vmem:[#allocation6 + $0xce0] sm:$0xff]
    %v1904 = vld [vmem:[#allocation6 + $0xce8] sm:$0xff]
    %v1905 = vld [vmem:[#allocation6 + $0xcf0] sm:$0xff]
    %v1906 = vld [vmem:[#allocation6 + $0xcf8] sm:$0xff]
    %v1907 = vld [vmem:[#allocation6 + $0xd00] sm:$0xff]
    %v1908 = vld [vmem:[#allocation6 + $0xd08] sm:$0xff]
    %v1909 = vld [vmem:[#allocation6 + $0xd10] sm:$0xff]
    %v1910 = vld [vmem:[#allocation6 + $0xd18] sm:$0xff]
    %v1911 = vld [vmem:[#allocation6 + $0xd20] sm:$0xff]
    %v1912 = vld [vmem:[#allocation6 + $0xd28] sm:$0xff]
    %v1913 = vld [vmem:[#allocation6 + $0xd30] sm:$0xff]
    %v1914 = vld [vmem:[#allocation6 + $0xd38] sm:$0xff]
    %v1915 = vld [vmem:[#allocation6 + $0xd40] sm:$0xff]
    %v1916 = vld [vmem:[#allocation6 + $0xd48] sm:$0xff]
    %v1917 = vld [vmem:[#allocation6 + $0xd50] sm:$0xff]
    %v1918 = vld [vmem:[#allocation6 + $0xd58] sm:$0xff]
    %v1919 = vld [vmem:[#allocation6 + $0xd60] sm:$0xff]
    %v1920 = vld [vmem:[#allocation6 + $0xd68] sm:$0xff]
    %v1921 = vld [vmem:[#allocation6 + $0xd70] sm:$0xff]
    %v1922 = vld [vmem:[#allocation6 + $0xd78] sm:$0xff]
    %v1923 = vld [vmem:[#allocation6 + $0xd80] sm:$0xff]
    %v1924 = vld [vmem:[#allocation6 + $0xd88] sm:$0xff]
    %v1925 = vld [vmem:[#allocation6 + $0xd90] sm:$0xff]
    %v1926 = vld [vmem:[#allocation6 + $0xd98] sm:$0xff]
    %v1927 = vld [vmem:[#allocation6 + $0xda0] sm:$0xff]
    %v1928 = vld [vmem:[#allocation6 + $0xda8] sm:$0xff]
    %v1929 = vld [vmem:[#allocation6 + $0xdb0] sm:$0xff]
    %v1930 = vld [vmem:[#allocation6 + $0xdb8] sm:$0xff]
    %v1931 = vld [vmem:[#allocation6 + $0xdc0] sm:$0xff]
    %v1932 = vld [vmem:[#allocation6 + $0xdc8] sm:$0xff]
    %v1933 = vld [vmem:[#allocation6 + $0xdd0] sm:$0xff]
    %v1934 = vld [vmem:[#allocation6 + $0xdd8] sm:$0xff]
    %v1935 = vld [vmem:[#allocation6 + $0xde0] sm:$0xff]
    %v1936 = vld [vmem:[#allocation6 + $0xde8] sm:$0xff]
    %v1937 = vld [vmem:[#allocation6 + $0xdf0] sm:$0xff]
    %v1938 = vld [vmem:[#allocation6 + $0xdf8] sm:$0xff]
    %v1939 = vld [vmem:[#allocation6 + $0xe00] sm:$0xff]
    %v1940 = vld [vmem:[#allocation6 + $0xe08] sm:$0xff]
    %v1941 = vld [vmem:[#allocation6 + $0xe10] sm:$0xff]
    %v1942 = vld [vmem:[#allocation6 + $0xe18] sm:$0xff]
    %v1943 = vld [vmem:[#allocation6 + $0xe20] sm:$0xff]
    %v1944 = vld [vmem:[#allocation6 + $0xe28] sm:$0xff]
    %v1945 = vld [vmem:[#allocation6 + $0xe30] sm:$0xff]
    %v1946 = vld [vmem:[#allocation6 + $0xe38] sm:$0xff]
    %v1947 = vld [vmem:[#allocation6 + $0xe40] sm:$0xff]
    %v1948 = vld [vmem:[#allocation6 + $0xe48] sm:$0xff]
    %v1949 = vld [vmem:[#allocation6 + $0xe50] sm:$0xff]
    %v1950 = vld [vmem:[#allocation6 + $0xe58] sm:$0xff]
    %v1951 = vld [vmem:[#allocation6 + $0xe60] sm:$0xff]
    %v1952 = vld [vmem:[#allocation6 + $0xe68] sm:$0xff]
    %v1953 = vld [vmem:[#allocation6 + $0xe70] sm:$0xff]
    %v1954 = vld [vmem:[#allocation6 + $0xe78] sm:$0xff]
    %v1955 = vld [vmem:[#allocation6 + $0xe80] sm:$0xff]
    %v1956 = vld [vmem:[#allocation6 + $0xe88] sm:$0xff]
    %v1957 = vld [vmem:[#allocation6 + $0xe90] sm:$0xff]
    %v1958 = vld [vmem:[#allocation6 + $0xe98] sm:$0xff]
    %v1959 = vld [vmem:[#allocation6 + $0xea0] sm:$0xff]
    %v1960 = vld [vmem:[#allocation6 + $0xea8] sm:$0xff]
    %v1961 = vld [vmem:[#allocation6 + $0xeb0] sm:$0xff]
    %v1962 = vld [vmem:[#allocation6 + $0xeb8] sm:$0xff]
    %v1963 = vld [vmem:[#allocation6 + $0xec0] sm:$0xff]
    %v1964 = vld [vmem:[#allocation6 + $0xec8] sm:$0xff]
    %v1965 = vld [vmem:[#allocation6 + $0xed0] sm:$0xff]
    %v1966 = vld [vmem:[#allocation6 + $0xed8] sm:$0xff]
    %v1967 = vld [vmem:[#allocation6 + $0xee0] sm:$0xff]
    %v1968 = vld [vmem:[#allocation6 + $0xee8] sm:$0xff]
    %v1969 = vld [vmem:[#allocation6 + $0xef0] sm:$0xff]
    %v1970 = vld [vmem:[#allocation6 + $0xef8] sm:$0xff]
    %v1971 = vld [vmem:[#allocation7] sm:$0xf]
    %v1973 = vlaneseq
    %v1974 = vshrl.u32 %v1973, 7
    %v1975 = vsub.s32 0, %v1974
    %v1976 = vrot.slane %v1971, %v1975
    %v1977 = vlaneseq
    %v1978 = vshrl.u32 %v1977, 7
    %v1979 = vsub.s32 1, %v1978
    %v1980 = vrot.slane %v1971, %v1979
    %v1981 = vlaneseq
    %v1982 = vshrl.u32 %v1981, 7
    %v1983 = vsub.s32 2, %v1982
    %v1984 = vrot.slane %v1971, %v1983
    %v1985 = vlaneseq
    %v1986 = vshrl.u32 %v1985, 7
    %v1987 = vsub.s32 3, %v1986
    %v1988 = vrot.slane %v1971, %v1987
    %v1993 = vpack.c.b16 %v1458, %v1455
    %v1994 = vpack.c.b16 %v1459, %v1456
    %v1995 = vpack.c.b16 %v1460, %v1457
    %v1996 = vpack.c.b16 %v1461, %v1458
    %v1997 = vpack.c.b16 %v1462, %v1459
    %v1998 = vpack.c.b16 %v1463, %v1460
    %v1999 = vpack.c.b16 %v1464, %v1461
    %v2000 = vpack.c.b16 %v1465, %v1462
    %v2001 = vpack.c.b16 %v1466, %v1463
    %v2002 = vpack.c.b16 %v1467, %v1464
    %v2003 = vpack.c.b16 %v1468, %v1465
    %v2004 = vpack.c.b16 %v1469, %v1466
    %v2005 = vpack.c.b16 %v1470, %v1467
    %v2006 = vpack.c.b16 %v1471, %v1468
    %v2007 = vpack.c.b16 %v1472, %v1469
    %v2008 = vpack.c.b16 %v1473, %v1470
    %v2009 = vpack.c.b16 %v1474, %v1471
    %v2010 = vpack.c.b16 %v1475, %v1472
    %v2011 = vpack.c.b16 %v1476, %v1473
    %v2012 = vpack.c.b16 %v1477, %v1474
    %v2013 = vpack.c.b16 %v1478, %v1475
    %v2014 = vpack.c.b16 %v1479, %v1476
    %v2015 = vpack.c.b16 %v1480, %v1477
    %v2016 = vpack.c.b16 %v1481, %v1478
    %v2017 = vpack.c.b16 %v1482, %v1479
    %v2018 = vpack.c.b16 %v1483, %v1480
    %v2019 = vpack.c.b16 %v1484, %v1481
    %v2020 = vpack.c.b16 %v1485, %v1482
    %v2021 = vpack.c.b16 %v1486, %v1483
    %v2022 = vpack.c.b16 %v1487, %v1484
    %v2023 = vpack.c.b16 %v1488, %v1485
    %v2024 = vpack.c.b16 %v1489, %v1486
    %v2025 = vpack.c.b16 %v1490, %v1487
    %v2539 = vunpack.c.l.b16 %v1491
    %v2540 = vunpack.c.h.b16 %v1491
    %v2541 = vunpack.c.l.b16 %v1492
    %v2542 = vunpack.c.h.b16 %v1492
    %v2543 = vunpack.c.l.b16 %v1493
    %v2544 = vunpack.c.h.b16 %v1493
    %v2545 = vunpack.c.l.b16 %v1494
    %v2546 = vunpack.c.h.b16 %v1494
    %v2547 = vunpack.c.l.b16 %v1495
    %v2548 = vunpack.c.h.b16 %v1495
    %v2549 = vunpack.c.l.b16 %v1496
    %v2550 = vunpack.c.h.b16 %v1496
    %v2551 = vunpack.c.l.b16 %v1497
    %v2552 = vunpack.c.h.b16 %v1497
    %v2553 = vunpack.c.l.b16 %v1498
    %v2554 = vunpack.c.h.b16 %v1498
    %v2555 = vunpack.c.l.b16 %v1499
    %v2556 = vunpack.c.h.b16 %v1499
    %v2557 = vunpack.c.l.b16 %v1500
    %v2558 = vunpack.c.h.b16 %v1500
    %v2559 = vunpack.c.l.b16 %v1501
    %v2560 = vunpack.c.h.b16 %v1501
    %v2561 = vunpack.c.l.b16 %v1502
    %v2562 = vunpack.c.h.b16 %v1502
    %v2563 = vunpack.c.l.b16 %v1503
    %v2564 = vunpack.c.h.b16 %v1503
    %v2565 = vunpack.c.l.b16 %v1504
    %v2566 = vunpack.c.h.b16 %v1504
    %v2567 = vunpack.c.l.b16 %v1505
    %v2568 = vunpack.c.h.b16 %v1505
    %v2569 = vunpack.c.l.b16 %v1506
    %v2570 = vunpack.c.h.b16 %v1506
    %v2571 = vunpack.c.l.b16 %v1507
    %v2572 = vunpack.c.h.b16 %v1507
    %v2573 = vunpack.c.l.b16 %v1508
    %v2574 = vunpack.c.h.b16 %v1508
    %v2575 = vunpack.c.l.b16 %v1509
    %v2576 = vunpack.c.h.b16 %v1509
    %v2577 = vunpack.c.l.b16 %v1510
    %v2578 = vunpack.c.h.b16 %v1510
    %v2579 = vunpack.c.l.b16 %v1511
    %v2580 = vunpack.c.h.b16 %v1511
    %v2581 = vunpack.c.l.b16 %v1512
    %v2582 = vunpack.c.h.b16 %v1512
    %v2583 = vunpack.c.l.b16 %v1513
    %v2584 = vunpack.c.h.b16 %v1513
    %v2585 = vunpack.c.l.b16 %v1514
    %v2586 = vunpack.c.h.b16 %v1514
    %v2587 = vunpack.c.l.b16 %v1515
    %v2588 = vunpack.c.h.b16 %v1515
    %v2589 = vunpack.c.l.b16 %v1516
    %v2590 = vunpack.c.h.b16 %v1516
    %v2591 = vunpack.c.l.b16 %v1517
    %v2592 = vunpack.c.h.b16 %v1517
    %v2593 = vunpack.c.l.b16 %v1518
    %v2594 = vunpack.c.h.b16 %v1518
    %v2595 = vunpack.c.l.b16 %v1519
    %v2596 = vunpack.c.h.b16 %v1519
    %v2597 = vunpack.c.l.b16 %v1520
    %v2598 = vunpack.c.h.b16 %v1520
    %v2599 = vunpack.c.l.b16 %v1521
    %v2600 = vunpack.c.h.b16 %v1521
    %v2601 = vunpack.c.l.b16 %v1522
    %v2602 = vunpack.c.h.b16 %v1522
    %v2603 = vunpack.c.l.b16 %v1523
    %v2604 = vunpack.c.h.b16 %v1523
    %v2605 = vunpack.c.l.b16 %v1524
    %v2606 = vunpack.c.h.b16 %v1524
    %v2607 = vunpack.c.l.b16 %v1525
    %v2608 = vunpack.c.h.b16 %v1525
    %v2609 = vunpack.c.l.b16 %v1526
    %v2610 = vunpack.c.h.b16 %v1526
    %v2611 = vunpack.c.l.b16 %v1527
    %v2612 = vunpack.c.h.b16 %v1527
    %v2613 = vunpack.c.l.b16 %v1528
    %v2614 = vunpack.c.h.b16 %v1528
    %v2615 = vunpack.c.l.b16 %v1529
    %v2616 = vunpack.c.h.b16 %v1529
    %v2617 = vunpack.c.l.b16 %v1530
    %v2618 = vunpack.c.h.b16 %v1530
    %v2619 = vunpack.c.l.b16 %v1531
    %v2620 = vunpack.c.h.b16 %v1531
    %v2621 = vunpack.c.l.b16 %v1532
    %v2622 = vunpack.c.h.b16 %v1532
    %v2623 = vunpack.c.l.b16 %v1533
    %v2624 = vunpack.c.h.b16 %v1533
    %v2625 = vunpack.c.l.b16 %v1534
    %v2626 = vunpack.c.h.b16 %v1534
    %v2627 = vunpack.c.l.b16 %v1535
    %v2628 = vunpack.c.h.b16 %v1535
    %v2629 = vunpack.c.l.b16 %v1536
    %v2630 = vunpack.c.h.b16 %v1536
    %v2631 = vunpack.c.l.b16 %v1537
    %v2632 = vunpack.c.h.b16 %v1537
    %v2633 = vunpack.c.l.b16 %v1538
    %v2634 = vunpack.c.h.b16 %v1538
    %v2635 = vunpack.c.l.b16 %v1539
    %v2636 = vunpack.c.h.b16 %v1539
    %v2637 = vunpack.c.l.b16 %v1540
    %v2638 = vunpack.c.h.b16 %v1540
    %v2639 = vunpack.c.l.b16 %v1541
    %v2640 = vunpack.c.h.b16 %v1541
    %v2641 = vunpack.c.l.b16 %v1542
    %v2642 = vunpack.c.h.b16 %v1542
    %v2643 = vunpack.c.l.b16 %v1543
    %v2644 = vunpack.c.h.b16 %v1543
    %v2645 = vunpack.c.l.b16 %v1544
    %v2646 = vunpack.c.h.b16 %v1544
    %v2647 = vunpack.c.l.b16 %v1545
    %v2648 = vunpack.c.h.b16 %v1545
    %v2649 = vunpack.c.l.b16 %v1546
    %v2650 = vunpack.c.h.b16 %v1546
    %v2651 = vunpack.c.l.b16 %v1547
    %v2652 = vunpack.c.h.b16 %v1547
    %v2653 = vunpack.c.l.b16 %v1548
    %v2654 = vunpack.c.h.b16 %v1548
    %v2655 = vunpack.c.l.b16 %v1549
    %v2656 = vunpack.c.h.b16 %v1549
    %v2657 = vunpack.c.l.b16 %v1550
    %v2658 = vunpack.c.h.b16 %v1550
    %v2659 = vunpack.c.l.b16 %v1551
    %v2660 = vunpack.c.h.b16 %v1551
    %v2661 = vunpack.c.l.b16 %v1552
    %v2662 = vunpack.c.h.b16 %v1552
    %v2663 = vunpack.c.l.b16 %v1553
    %v2664 = vunpack.c.h.b16 %v1553
    %v2665 = vunpack.c.l.b16 %v1554
    %v2666 = vunpack.c.h.b16 %v1554
    %v2667 = vunpack.c.l.b16 %v1555
    %v2668 = vunpack.c.h.b16 %v1555
    %v2669 = vunpack.c.l.b16 %v1556
    %v2670 = vunpack.c.h.b16 %v1556
    %v2671 = vunpack.c.l.b16 %v1557
    %v2672 = vunpack.c.h.b16 %v1557
    %v2673 = vunpack.c.l.b16 %v1558
    %v2674 = vunpack.c.h.b16 %v1558
    %v2675 = vunpack.c.l.b16 %v1559
    %v2676 = vunpack.c.h.b16 %v1559
    %v2677 = vunpack.c.l.b16 %v1560
    %v2678 = vunpack.c.h.b16 %v1560
    %v2679 = vunpack.c.l.b16 %v1561
    %v2680 = vunpack.c.h.b16 %v1561
    %v2681 = vunpack.c.l.b16 %v1562
    %v2682 = vunpack.c.h.b16 %v1562
    %v2683 = vunpack.c.l.b16 %v1563
    %v2684 = vunpack.c.h.b16 %v1563
    %v2685 = vunpack.c.l.b16 %v1564
    %v2686 = vunpack.c.h.b16 %v1564
    %v2687 = vunpack.c.l.b16 %v1565
    %v2688 = vunpack.c.h.b16 %v1565
    %v2689 = vunpack.c.l.b16 %v1566
    %v2690 = vunpack.c.h.b16 %v1566
    %v2691 = vunpack.c.l.b16 %v1567
    %v2692 = vunpack.c.h.b16 %v1567
    %v2693 = vunpack.c.l.b16 %v1568
    %v2694 = vunpack.c.h.b16 %v1568
    %v2695 = vunpack.c.l.b16 %v1569
    %v2696 = vunpack.c.h.b16 %v1569
    %v2697 = vunpack.c.l.b16 %v1570
    %v2698 = vunpack.c.h.b16 %v1570
    %v2699 = vunpack.c.l.b16 %v1571
    %v2700 = vunpack.c.h.b16 %v1571
    %v2701 = vunpack.c.l.b16 %v1572
    %v2702 = vunpack.c.h.b16 %v1572
    %v2703 = vunpack.c.l.b16 %v1573
    %v2704 = vunpack.c.h.b16 %v1573
    %v2705 = vunpack.c.l.b16 %v1574
    %v2706 = vunpack.c.h.b16 %v1574
    %v2707 = vunpack.c.l.b16 %v1575
    %v2708 = vunpack.c.h.b16 %v1575
    %v2709 = vunpack.c.l.b16 %v1576
    %v2710 = vunpack.c.h.b16 %v1576
    %v2711 = vunpack.c.l.b16 %v1577
    %v2712 = vunpack.c.h.b16 %v1577
    %v2713 = vunpack.c.l.b16 %v1578
    %v2714 = vunpack.c.h.b16 %v1578
    %v2715 = vunpack.c.l.b16 %v1579
    %v2716 = vunpack.c.h.b16 %v1579
    %v2717 = vunpack.c.l.b16 %v1580
    %v2718 = vunpack.c.h.b16 %v1580
    %v2719 = vunpack.c.l.b16 %v1581
    %v2720 = vunpack.c.h.b16 %v1581
    %v2721 = vunpack.c.l.b16 %v1582
    %v2722 = vunpack.c.h.b16 %v1582
    %v2723 = vunpack.c.l.b16 %v1583
    %v2724 = vunpack.c.h.b16 %v1583
    %v2725 = vunpack.c.l.b16 %v1584
    %v2726 = vunpack.c.h.b16 %v1584
    %v2727 = vunpack.c.l.b16 %v1585
    %v2728 = vunpack.c.h.b16 %v1585
    %v2729 = vunpack.c.l.b16 %v1586
    %v2730 = vunpack.c.h.b16 %v1586
    %v2731 = vunpack.c.l.b16 %v1587
    %v2732 = vunpack.c.h.b16 %v1587
    %v2733 = vunpack.c.l.b16 %v1588
    %v2734 = vunpack.c.h.b16 %v1588
    %v2735 = vunpack.c.l.b16 %v1589
    %v2736 = vunpack.c.h.b16 %v1589
    %v2737 = vunpack.c.l.b16 %v1590
    %v2738 = vunpack.c.h.b16 %v1590
    %v2739 = vunpack.c.l.b16 %v1591
    %v2740 = vunpack.c.h.b16 %v1591
    %v2741 = vunpack.c.l.b16 %v1592
    %v2742 = vunpack.c.h.b16 %v1592
    %v2743 = vunpack.c.l.b16 %v1593
    %v2744 = vunpack.c.h.b16 %v1593
    %v2745 = vunpack.c.l.b16 %v1594
    %v2746 = vunpack.c.h.b16 %v1594
    %v2747 = vunpack.c.l.b16 %v1595
    %v2748 = vunpack.c.h.b16 %v1595
    %v2749 = vunpack.c.l.b16 %v1596
    %v2750 = vunpack.c.h.b16 %v1596
    %v2751 = vunpack.c.l.b16 %v1597
    %v2752 = vunpack.c.h.b16 %v1597
    %v2753 = vunpack.c.l.b16 %v1598
    %v2754 = vunpack.c.h.b16 %v1598
    %v2755 = vunpack.c.l.b16 %v1599
    %v2756 = vunpack.c.h.b16 %v1599
    %v2757 = vunpack.c.l.b16 %v1600
    %v2758 = vunpack.c.h.b16 %v1600
    %v2759 = vunpack.c.l.b16 %v1601
    %v2760 = vunpack.c.h.b16 %v1601
    %v2761 = vunpack.c.l.b16 %v1602
    %v2762 = vunpack.c.h.b16 %v1602
    %v2763 = vunpack.c.l.b16 %v1603
    %v2764 = vunpack.c.h.b16 %v1603
    %v2765 = vunpack.c.l.b16 %v1604
    %v2766 = vunpack.c.h.b16 %v1604
    %v2767 = vunpack.c.l.b16 %v1605
    %v2768 = vunpack.c.h.b16 %v1605
    %v2769 = vunpack.c.l.b16 %v1606
    %v2770 = vunpack.c.h.b16 %v1606
    %v2771 = vunpack.c.l.b16 %v1607
    %v2772 = vunpack.c.h.b16 %v1607
    %v2773 = vunpack.c.l.b16 %v1608
    %v2774 = vunpack.c.h.b16 %v1608
    %v2775 = vunpack.c.l.b16 %v1609
    %v2776 = vunpack.c.h.b16 %v1609
    %v2777 = vunpack.c.l.b16 %v1610
    %v2778 = vunpack.c.h.b16 %v1610
    %v2779 = vunpack.c.l.b16 %v1611
    %v2780 = vunpack.c.h.b16 %v1611
    %v2781 = vunpack.c.l.b16 %v1612
    %v2782 = vunpack.c.h.b16 %v1612
    %v2783 = vunpack.c.l.b16 %v1613
    %v2784 = vunpack.c.h.b16 %v1613
    %v2785 = vunpack.c.l.b16 %v1614
    %v2786 = vunpack.c.h.b16 %v1614
    %v2787 = vunpack.c.l.b16 %v1615
    %v2788 = vunpack.c.h.b16 %v1615
    %v2789 = vunpack.c.l.b16 %v1616
    %v2790 = vunpack.c.h.b16 %v1616
    %v2791 = vunpack.c.l.b16 %v1617
    %v2792 = vunpack.c.h.b16 %v1617
    %v2793 = vunpack.c.l.b16 %v1618
    %v2794 = vunpack.c.h.b16 %v1618
    %v2795 = vunpack.c.l.b16 %v1619
    %v2796 = vunpack.c.h.b16 %v1619
    %v2797 = vunpack.c.l.b16 %v1620
    %v2798 = vunpack.c.h.b16 %v1620
    %v2799 = vunpack.c.l.b16 %v1621
    %v2800 = vunpack.c.h.b16 %v1621
    %v2801 = vunpack.c.l.b16 %v1622
    %v2802 = vunpack.c.h.b16 %v1622
    %v2803 = vunpack.c.l.b16 %v1623
    %v2804 = vunpack.c.h.b16 %v1623
    %v2805 = vunpack.c.l.b16 %v1624
    %v2806 = vunpack.c.h.b16 %v1624
    %v2807 = vunpack.c.l.b16 %v1625
    %v2808 = vunpack.c.h.b16 %v1625
    %v2809 = vunpack.c.l.b16 %v1626
    %v2810 = vunpack.c.h.b16 %v1626
    %v2811 = vunpack.c.l.b16 %v1627
    %v2812 = vunpack.c.h.b16 %v1627
    %v2813 = vunpack.c.l.b16 %v1628
    %v2814 = vunpack.c.h.b16 %v1628
    %v2815 = vunpack.c.l.b16 %v1629
    %v2816 = vunpack.c.h.b16 %v1629
    %v2817 = vunpack.c.l.b16 %v1630
    %v2818 = vunpack.c.h.b16 %v1630
    %v2819 = vunpack.c.l.b16 %v1631
    %v2820 = vunpack.c.h.b16 %v1631
    %v2821 = vunpack.c.l.b16 %v1632
    %v2822 = vunpack.c.h.b16 %v1632
    %v2823 = vunpack.c.l.b16 %v1633
    %v2824 = vunpack.c.h.b16 %v1633
    %v2825 = vunpack.c.l.b16 %v1634
    %v2826 = vunpack.c.h.b16 %v1634
    %v2827 = vunpack.c.l.b16 %v1635
    %v2828 = vunpack.c.h.b16 %v1635
    %v2829 = vunpack.c.l.b16 %v1636
    %v2830 = vunpack.c.h.b16 %v1636
    %v2831 = vunpack.c.l.b16 %v1637
    %v2832 = vunpack.c.h.b16 %v1637
    %v2833 = vunpack.c.l.b16 %v1638
    %v2834 = vunpack.c.h.b16 %v1638
    %v2835 = vunpack.c.l.b16 %v1639
    %v2836 = vunpack.c.h.b16 %v1639
    %v2837 = vunpack.c.l.b16 %v1640
    %v2838 = vunpack.c.h.b16 %v1640
    %v2839 = vunpack.c.l.b16 %v1641
    %v2840 = vunpack.c.h.b16 %v1641
    %v2841 = vunpack.c.l.b16 %v1642
    %v2842 = vunpack.c.h.b16 %v1642
    %v2843 = vunpack.c.l.b16 %v1643
    %v2844 = vunpack.c.h.b16 %v1643
    %v2845 = vunpack.c.l.b16 %v1644
    %v2846 = vunpack.c.h.b16 %v1644
    %v2847 = vunpack.c.l.b16 %v1645
    %v2848 = vunpack.c.h.b16 %v1645
    %v2849 = vunpack.c.l.b16 %v1646
    %v2850 = vunpack.c.h.b16 %v1646
    %v2851 = vunpack.c.l.b16 %v1647
    %v2852 = vunpack.c.h.b16 %v1647
    %v2853 = vunpack.c.l.b16 %v1648
    %v2854 = vunpack.c.h.b16 %v1648
    %v2855 = vunpack.c.l.b16 %v1649
    %v2856 = vunpack.c.h.b16 %v1649
    %v2857 = vunpack.c.l.b16 %v1650
    %v2858 = vunpack.c.h.b16 %v1650
    %v2859 = vunpack.c.l.b16 %v1651
    %v2860 = vunpack.c.h.b16 %v1651
    %v2861 = vunpack.c.l.b16 %v1652
    %v2862 = vunpack.c.h.b16 %v1652
    %v2863 = vunpack.c.l.b16 %v1653
    %v2864 = vunpack.c.h.b16 %v1653
    %v2865 = vunpack.c.l.b16 %v1654
    %v2866 = vunpack.c.h.b16 %v1654
    %v2867 = vunpack.c.l.b16 %v1655
    %v2868 = vunpack.c.h.b16 %v1655
    %v2869 = vunpack.c.l.b16 %v1656
    %v2870 = vunpack.c.h.b16 %v1656
    %v2871 = vunpack.c.l.b16 %v1657
    %v2872 = vunpack.c.h.b16 %v1657
    %v2873 = vunpack.c.l.b16 %v1658
    %v2874 = vunpack.c.h.b16 %v1658
    %v2875 = vunpack.c.l.b16 %v1659
    %v2876 = vunpack.c.h.b16 %v1659
    %v2877 = vunpack.c.l.b16 %v1660
    %v2878 = vunpack.c.h.b16 %v1660
    %v2879 = vunpack.c.l.b16 %v1661
    %v2880 = vunpack.c.h.b16 %v1661
    %v2881 = vunpack.c.l.b16 %v1662
    %v2882 = vunpack.c.h.b16 %v1662
    %v2883 = vunpack.c.l.b16 %v1663
    %v2884 = vunpack.c.h.b16 %v1663
    %v2885 = vunpack.c.l.b16 %v1664
    %v2886 = vunpack.c.h.b16 %v1664
    %v2887 = vunpack.c.l.b16 %v1665
    %v2888 = vunpack.c.h.b16 %v1665
    %v2889 = vunpack.c.l.b16 %v1666
    %v2890 = vunpack.c.h.b16 %v1666
    %v2891 = vunpack.c.l.b16 %v1667
    %v2892 = vunpack.c.h.b16 %v1667
    %v2893 = vunpack.c.l.b16 %v1668
    %v2894 = vunpack.c.h.b16 %v1668
    %v2895 = vunpack.c.l.b16 %v1669
    %v2896 = vunpack.c.h.b16 %v1669
    %v2897 = vunpack.c.l.b16 %v1670
    %v2898 = vunpack.c.h.b16 %v1670
    %v2899 = vunpack.c.l.b16 %v1671
    %v2900 = vunpack.c.h.b16 %v1671
    %v2901 = vunpack.c.l.b16 %v1672
    %v2902 = vunpack.c.h.b16 %v1672
    %v2903 = vunpack.c.l.b16 %v1673
    %v2904 = vunpack.c.h.b16 %v1673
    %v2905 = vunpack.c.l.b16 %v1674
    %v2906 = vunpack.c.h.b16 %v1674
    %v2907 = vunpack.c.l.b16 %v1675
    %v2908 = vunpack.c.h.b16 %v1675
    %v2909 = vunpack.c.l.b16 %v1676
    %v2910 = vunpack.c.h.b16 %v1676
    %v2911 = vunpack.c.l.b16 %v1677
    %v2912 = vunpack.c.h.b16 %v1677
    %v2913 = vunpack.c.l.b16 %v1678
    %v2914 = vunpack.c.h.b16 %v1678
    %v2915 = vunpack.c.l.b16 %v1679
    %v2916 = vunpack.c.h.b16 %v1679
    %v2917 = vunpack.c.l.b16 %v1680
    %v2918 = vunpack.c.h.b16 %v1680
    %v2919 = vunpack.c.l.b16 %v1681
    %v2920 = vunpack.c.h.b16 %v1681
    %v2921 = vunpack.c.l.b16 %v1682
    %v2922 = vunpack.c.h.b16 %v1682
    %v2923 = vunpack.c.l.b16 %v1683
    %v2924 = vunpack.c.h.b16 %v1683
    %v2925 = vunpack.c.l.b16 %v1684
    %v2926 = vunpack.c.h.b16 %v1684
    %v2927 = vunpack.c.l.b16 %v1685
    %v2928 = vunpack.c.h.b16 %v1685
    %v2929 = vunpack.c.l.b16 %v1686
    %v2930 = vunpack.c.h.b16 %v1686
    %v2931 = vunpack.c.l.b16 %v1687
    %v2932 = vunpack.c.h.b16 %v1687
    %v2933 = vunpack.c.l.b16 %v1688
    %v2934 = vunpack.c.h.b16 %v1688
    %v2935 = vunpack.c.l.b16 %v1689
    %v2936 = vunpack.c.h.b16 %v1689
    %v2937 = vunpack.c.l.b16 %v1690
    %v2938 = vunpack.c.h.b16 %v1690
    %v2939 = vunpack.c.l.b16 %v1691
    %v2940 = vunpack.c.h.b16 %v1691
    %v2941 = vunpack.c.l.b16 %v1692
    %v2942 = vunpack.c.h.b16 %v1692
    %v2943 = vunpack.c.l.b16 %v1693
    %v2944 = vunpack.c.h.b16 %v1693
    %v2945 = vunpack.c.l.b16 %v1694
    %v2946 = vunpack.c.h.b16 %v1694
    %v2947 = vunpack.c.l.b16 %v1695
    %v2948 = vunpack.c.h.b16 %v1695
    %v2949 = vunpack.c.l.b16 %v1696
    %v2950 = vunpack.c.h.b16 %v1696
    %v2951 = vunpack.c.l.b16 %v1697
    %v2952 = vunpack.c.h.b16 %v1697
    %v2953 = vunpack.c.l.b16 %v1698
    %v2954 = vunpack.c.h.b16 %v1698
    %v2955 = vunpack.c.l.b16 %v1699
    %v2956 = vunpack.c.h.b16 %v1699
    %v2957 = vunpack.c.l.b16 %v1700
    %v2958 = vunpack.c.h.b16 %v1700
    %v2959 = vunpack.c.l.b16 %v1701
    %v2960 = vunpack.c.h.b16 %v1701
    %v2961 = vunpack.c.l.b16 %v1702
    %v2962 = vunpack.c.h.b16 %v1702
    %v2963 = vunpack.c.l.b16 %v1703
    %v2964 = vunpack.c.h.b16 %v1703
    %v2965 = vunpack.c.l.b16 %v1704
    %v2966 = vunpack.c.h.b16 %v1704
    %v2967 = vunpack.c.l.b16 %v1705
    %v2968 = vunpack.c.h.b16 %v1705
    %v2969 = vunpack.c.l.b16 %v1706
    %v2970 = vunpack.c.h.b16 %v1706
    %v2971 = vunpack.c.l.b16 %v1707
    %v2972 = vunpack.c.h.b16 %v1707
    %v2973 = vunpack.c.l.b16 %v1708
    %v2974 = vunpack.c.h.b16 %v1708
    %v2975 = vunpack.c.l.b16 %v1709
    %v2976 = vunpack.c.h.b16 %v1709
    %v2977 = vunpack.c.l.b16 %v1710
    %v2978 = vunpack.c.h.b16 %v1710
    %v2979 = vunpack.c.l.b16 %v1711
    %v2980 = vunpack.c.h.b16 %v1711
    %v2981 = vunpack.c.l.b16 %v1712
    %v2982 = vunpack.c.h.b16 %v1712
    %v2983 = vunpack.c.l.b16 %v1713
    %v2984 = vunpack.c.h.b16 %v1713
    %v2985 = vunpack.c.l.b16 %v1714
    %v2986 = vunpack.c.h.b16 %v1714
    %v2987 = vunpack.c.l.b16 %v1715
    %v2988 = vunpack.c.h.b16 %v1715
    %v2989 = vunpack.c.l.b16 %v1716
    %v2990 = vunpack.c.h.b16 %v1716
    %v2991 = vunpack.c.l.b16 %v1717
    %v2992 = vunpack.c.h.b16 %v1717
    %v2993 = vunpack.c.l.b16 %v1718
    %v2994 = vunpack.c.h.b16 %v1718
    %v2995 = vunpack.c.l.b16 %v1719
    %v2996 = vunpack.c.h.b16 %v1719
    %v2997 = vunpack.c.l.b16 %v1720
    %v2998 = vunpack.c.h.b16 %v1720
    %v2999 = vunpack.c.l.b16 %v1721
    %v3000 = vunpack.c.h.b16 %v1721
    %v3001 = vunpack.c.l.b16 %v1722
    %v3002 = vunpack.c.h.b16 %v1722
    %v3003 = vunpack.c.l.b16 %v1723
    %v3004 = vunpack.c.h.b16 %v1723
    %v3005 = vunpack.c.l.b16 %v1724
    %v3006 = vunpack.c.h.b16 %v1724
    %v3007 = vunpack.c.l.b16 %v1725
    %v3008 = vunpack.c.h.b16 %v1725
    %v3009 = vunpack.c.l.b16 %v1726
    %v3010 = vunpack.c.h.b16 %v1726
    %v3011 = vunpack.c.l.b16 %v1727
    %v3012 = vunpack.c.h.b16 %v1727
    %v3013 = vunpack.c.l.b16 %v1728
    %v3014 = vunpack.c.h.b16 %v1728
    %v3015 = vunpack.c.l.b16 %v1729
    %v3016 = vunpack.c.h.b16 %v1729
    %v3017 = vunpack.c.l.b16 %v1730
    %v3018 = vunpack.c.h.b16 %v1730
    %v3019 = vunpack.c.l.b16 %v1731
    %v3020 = vunpack.c.h.b16 %v1731
    %v3021 = vunpack.c.l.b16 %v1732
    %v3022 = vunpack.c.h.b16 %v1732
    %v3023 = vunpack.c.l.b16 %v1733
    %v3024 = vunpack.c.h.b16 %v1733
    %v3025 = vunpack.c.l.b16 %v1734
    %v3026 = vunpack.c.h.b16 %v1734
    %v3027 = vunpack.c.l.b16 %v1735
    %v3028 = vunpack.c.h.b16 %v1735
    %v3029 = vunpack.c.l.b16 %v1736
    %v3030 = vunpack.c.h.b16 %v1736
    %v3031 = vunpack.c.l.b16 %v1737
    %v3032 = vunpack.c.h.b16 %v1737
    %v3033 = vunpack.c.l.b16 %v1738
    %v3034 = vunpack.c.h.b16 %v1738
    %v3035 = vunpack.c.l.b16 %v1739
    %v3036 = vunpack.c.h.b16 %v1739
    %v3037 = vunpack.c.l.b16 %v1740
    %v3038 = vunpack.c.h.b16 %v1740
    %v3039 = vunpack.c.l.b16 %v1741
    %v3040 = vunpack.c.h.b16 %v1741
    %v3041 = vunpack.c.l.b16 %v1742
    %v3042 = vunpack.c.h.b16 %v1742
    %v3043 = vunpack.c.l.b16 %v1743
    %v3044 = vunpack.c.h.b16 %v1743
    %v3045 = vunpack.c.l.b16 %v1744
    %v3046 = vunpack.c.h.b16 %v1744
    %v3047 = vunpack.c.l.b16 %v1745
    %v3048 = vunpack.c.h.b16 %v1745
    %v3049 = vunpack.c.l.b16 %v1746
    %v3050 = vunpack.c.h.b16 %v1746
    %v3051 = vunpack.c.l.b16 %v1747
    %v3052 = vunpack.c.h.b16 %v1747
    %v3053 = vunpack.c.l.b16 %v1748
    %v3054 = vunpack.c.h.b16 %v1748
    %v3055 = vunpack.c.l.b16 %v1749
    %v3056 = vunpack.c.h.b16 %v1749
    %v3057 = vunpack.c.l.b16 %v1750
    %v3058 = vunpack.c.h.b16 %v1750
    %v3059 = vunpack.c.l.b16 %v1751
    %v3060 = vunpack.c.h.b16 %v1751
    %v3061 = vunpack.c.l.b16 %v1752
    %v3062 = vunpack.c.h.b16 %v1752
    %v3063 = vunpack.c.l.b16 %v1753
    %v3064 = vunpack.c.h.b16 %v1753
    %v3065 = vunpack.c.l.b16 %v1754
    %v3066 = vunpack.c.h.b16 %v1754
    %v3067 = vunpack.c.l.b16 %v1755
    %v3068 = vunpack.c.h.b16 %v1755
    %v3069 = vunpack.c.l.b16 %v1756
    %v3070 = vunpack.c.h.b16 %v1756
    %v3071 = vunpack.c.l.b16 %v1757
    %v3072 = vunpack.c.h.b16 %v1757
    %v3073 = vunpack.c.l.b16 %v1758
    %v3074 = vunpack.c.h.b16 %v1758
    %v3075 = vunpack.c.l.b16 %v1759
    %v3076 = vunpack.c.h.b16 %v1759
    %v3077 = vunpack.c.l.b16 %v1760
    %v3078 = vunpack.c.h.b16 %v1760
    %v3079 = vunpack.c.l.b16 %v1761
    %v3080 = vunpack.c.h.b16 %v1761
    %v3081 = vunpack.c.l.b16 %v1762
    %v3082 = vunpack.c.h.b16 %v1762
    %v3083 = vunpack.c.l.b16 %v1763
    %v3084 = vunpack.c.h.b16 %v1763
    %v3085 = vunpack.c.l.b16 %v1764
    %v3086 = vunpack.c.h.b16 %v1764
    %v3087 = vunpack.c.l.b16 %v1765
    %v3088 = vunpack.c.h.b16 %v1765
    %v3089 = vunpack.c.l.b16 %v1766
    %v3090 = vunpack.c.h.b16 %v1766
    %v3091 = vunpack.c.l.b16 %v1767
    %v3092 = vunpack.c.h.b16 %v1767
    %v3093 = vunpack.c.l.b16 %v1768
    %v3094 = vunpack.c.h.b16 %v1768
    %v3095 = vunpack.c.l.b16 %v1769
    %v3096 = vunpack.c.h.b16 %v1769
    %v3097 = vunpack.c.l.b16 %v1770
    %v3098 = vunpack.c.h.b16 %v1770
    %v3099 = vunpack.c.l.b16 %v1771
    %v3100 = vunpack.c.h.b16 %v1771
    %v3101 = vunpack.c.l.b16 %v1772
    %v3102 = vunpack.c.h.b16 %v1772
    %v3103 = vunpack.c.l.b16 %v1773
    %v3104 = vunpack.c.h.b16 %v1773
    %v3105 = vunpack.c.l.b16 %v1774
    %v3106 = vunpack.c.h.b16 %v1774
    %v3107 = vunpack.c.l.b16 %v1775
    %v3108 = vunpack.c.h.b16 %v1775
    %v3109 = vunpack.c.l.b16 %v1776
    %v3110 = vunpack.c.h.b16 %v1776
    %v3111 = vunpack.c.l.b16 %v1777
    %v3112 = vunpack.c.h.b16 %v1777
    %v3113 = vunpack.c.l.b16 %v1778
    %v3114 = vunpack.c.h.b16 %v1778
    %v3115 = vunpack.c.l.b16 %v1779
    %v3116 = vunpack.c.h.b16 %v1779
    %v3117 = vunpack.c.l.b16 %v1780
    %v3118 = vunpack.c.h.b16 %v1780
    %v3119 = vunpack.c.l.b16 %v1781
    %v3120 = vunpack.c.h.b16 %v1781
    %v3121 = vunpack.c.l.b16 %v1782
    %v3122 = vunpack.c.h.b16 %v1782
    %v3123 = vunpack.c.l.b16 %v1783
    %v3124 = vunpack.c.h.b16 %v1783
    %v3125 = vunpack.c.l.b16 %v1784
    %v3126 = vunpack.c.h.b16 %v1784
    %v3127 = vunpack.c.l.b16 %v1785
    %v3128 = vunpack.c.h.b16 %v1785
    %v3129 = vunpack.c.l.b16 %v1786
    %v3130 = vunpack.c.h.b16 %v1786
    %v3131 = vunpack.c.l.b16 %v1787
    %v3132 = vunpack.c.h.b16 %v1787
    %v3133 = vunpack.c.l.b16 %v1788
    %v3134 = vunpack.c.h.b16 %v1788
    %v3135 = vunpack.c.l.b16 %v1789
    %v3136 = vunpack.c.h.b16 %v1789
    %v3137 = vunpack.c.l.b16 %v1790
    %v3138 = vunpack.c.h.b16 %v1790
    %v3139 = vunpack.c.l.b16 %v1791
    %v3140 = vunpack.c.h.b16 %v1791
    %v3141 = vunpack.c.l.b16 %v1792
    %v3142 = vunpack.c.h.b16 %v1792
    %v3143 = vunpack.c.l.b16 %v1793
    %v3144 = vunpack.c.h.b16 %v1793
    %v3145 = vunpack.c.l.b16 %v1794
    %v3146 = vunpack.c.h.b16 %v1794
    %v3147 = vunpack.c.l.b16 %v1795
    %v3148 = vunpack.c.h.b16 %v1795
    %v3149 = vunpack.c.l.b16 %v1796
    %v3150 = vunpack.c.h.b16 %v1796
    %v3151 = vunpack.c.l.b16 %v1797
    %v3152 = vunpack.c.h.b16 %v1797
    %v3153 = vunpack.c.l.b16 %v1798
    %v3154 = vunpack.c.h.b16 %v1798
    %v3155 = vunpack.c.l.b16 %v1799
    %v3156 = vunpack.c.h.b16 %v1799
    %v3157 = vunpack.c.l.b16 %v1800
    %v3158 = vunpack.c.h.b16 %v1800
    %v3159 = vunpack.c.l.b16 %v1801
    %v3160 = vunpack.c.h.b16 %v1801
    %v3161 = vunpack.c.l.b16 %v1802
    %v3162 = vunpack.c.h.b16 %v1802
    %v3163 = vunpack.c.l.b16 %v1803
    %v3164 = vunpack.c.h.b16 %v1803
    %v3165 = vunpack.c.l.b16 %v1804
    %v3166 = vunpack.c.h.b16 %v1804
    %v3167 = vunpack.c.l.b16 %v1805
    %v3168 = vunpack.c.h.b16 %v1805
    %v3169 = vunpack.c.l.b16 %v1806
    %v3170 = vunpack.c.h.b16 %v1806
    %v3171 = vunpack.c.l.b16 %v1807
    %v3172 = vunpack.c.h.b16 %v1807
    %v3173 = vunpack.c.l.b16 %v1808
    %v3174 = vunpack.c.h.b16 %v1808
    %v3175 = vunpack.c.l.b16 %v1809
    %v3176 = vunpack.c.h.b16 %v1809
    %v3177 = vunpack.c.l.b16 %v1810
    %v3178 = vunpack.c.h.b16 %v1810
    %v3179 = vunpack.c.l.b16 %v1811
    %v3180 = vunpack.c.h.b16 %v1811
    %v3181 = vunpack.c.l.b16 %v1812
    %v3182 = vunpack.c.h.b16 %v1812
    %v3183 = vunpack.c.l.b16 %v1813
    %v3184 = vunpack.c.h.b16 %v1813
    %v3185 = vunpack.c.l.b16 %v1814
    %v3186 = vunpack.c.h.b16 %v1814
    %v3187 = vunpack.c.l.b16 %v1815
    %v3188 = vunpack.c.h.b16 %v1815
    %v3189 = vunpack.c.l.b16 %v1816
    %v3190 = vunpack.c.h.b16 %v1816
    %v3191 = vunpack.c.l.b16 %v1817
    %v3192 = vunpack.c.h.b16 %v1817
    %v3193 = vunpack.c.l.b16 %v1818
    %v3194 = vunpack.c.h.b16 %v1818
    %v3195 = vunpack.c.l.b16 %v1819
    %v3196 = vunpack.c.h.b16 %v1819
    %v3197 = vunpack.c.l.b16 %v1820
    %v3198 = vunpack.c.h.b16 %v1820
    %v3199 = vunpack.c.l.b16 %v1821
    %v3200 = vunpack.c.h.b16 %v1821
    %v3201 = vunpack.c.l.b16 %v1822
    %v3202 = vunpack.c.h.b16 %v1822
    %v3203 = vunpack.c.l.b16 %v1823
    %v3204 = vunpack.c.h.b16 %v1823
    %v3205 = vunpack.c.l.b16 %v1824
    %v3206 = vunpack.c.h.b16 %v1824
    %v3207 = vunpack.c.l.b16 %v1825
    %v3208 = vunpack.c.h.b16 %v1825
    %v3209 = vunpack.c.l.b16 %v1826
    %v3210 = vunpack.c.h.b16 %v1826
    %v3211 = vunpack.c.l.b16 %v1827
    %v3212 = vunpack.c.h.b16 %v1827
    %v3213 = vunpack.c.l.b16 %v1828
    %v3214 = vunpack.c.h.b16 %v1828
    %v3215 = vunpack.c.l.b16 %v1829
    %v3216 = vunpack.c.h.b16 %v1829
    %v3217 = vunpack.c.l.b16 %v1830
    %v3218 = vunpack.c.h.b16 %v1830
    %v3219 = vunpack.c.l.b16 %v1831
    %v3220 = vunpack.c.h.b16 %v1831
    %v3221 = vunpack.c.l.b16 %v1832
    %v3222 = vunpack.c.h.b16 %v1832
    %v3223 = vunpack.c.l.b16 %v1833
    %v3224 = vunpack.c.h.b16 %v1833
    %v3225 = vunpack.c.l.b16 %v1834
    %v3226 = vunpack.c.h.b16 %v1834
    %v3227 = vunpack.c.l.b16 %v1835
    %v3228 = vunpack.c.h.b16 %v1835
    %v3229 = vunpack.c.l.b16 %v1836
    %v3230 = vunpack.c.h.b16 %v1836
    %v3231 = vunpack.c.l.b16 %v1837
    %v3232 = vunpack.c.h.b16 %v1837
    %v3233 = vunpack.c.l.b16 %v1838
    %v3234 = vunpack.c.h.b16 %v1838
    %v3235 = vunpack.c.l.b16 %v1839
    %v3236 = vunpack.c.h.b16 %v1839
    %v3237 = vunpack.c.l.b16 %v1840
    %v3238 = vunpack.c.h.b16 %v1840
    %v3239 = vunpack.c.l.b16 %v1841
    %v3240 = vunpack.c.h.b16 %v1841
    %v3241 = vunpack.c.l.b16 %v1842
    %v3242 = vunpack.c.h.b16 %v1842
    %v3243 = vunpack.c.l.b16 %v1843
    %v3244 = vunpack.c.h.b16 %v1843
    %v3245 = vunpack.c.l.b16 %v1844
    %v3246 = vunpack.c.h.b16 %v1844
    %v3247 = vunpack.c.l.b16 %v1845
    %v3248 = vunpack.c.h.b16 %v1845
    %v3249 = vunpack.c.l.b16 %v1846
    %v3250 = vunpack.c.h.b16 %v1846
    %v3251 = vunpack.c.l.b16 %v1847
    %v3252 = vunpack.c.h.b16 %v1847
    %v3253 = vunpack.c.l.b16 %v1848
    %v3254 = vunpack.c.h.b16 %v1848
    %v3255 = vunpack.c.l.b16 %v1849
    %v3256 = vunpack.c.h.b16 %v1849
    %v3257 = vunpack.c.l.b16 %v1850
    %v3258 = vunpack.c.h.b16 %v1850
    %v3259 = vunpack.c.l.b16 %v1851
    %v3260 = vunpack.c.h.b16 %v1851
    %v3261 = vunpack.c.l.b16 %v1852
    %v3262 = vunpack.c.h.b16 %v1852
    %v3263 = vunpack.c.l.b16 %v1853
    %v3264 = vunpack.c.h.b16 %v1853
    %v3265 = vunpack.c.l.b16 %v1854
    %v3266 = vunpack.c.h.b16 %v1854
    %v3267 = vunpack.c.l.b16 %v1855
    %v3268 = vunpack.c.h.b16 %v1855
    %v3269 = vunpack.c.l.b16 %v1856
    %v3270 = vunpack.c.h.b16 %v1856
    %v3271 = vunpack.c.l.b16 %v1857
    %v3272 = vunpack.c.h.b16 %v1857
    %v3273 = vunpack.c.l.b16 %v1858
    %v3274 = vunpack.c.h.b16 %v1858
    %v3275 = vunpack.c.l.b16 %v1859
    %v3276 = vunpack.c.h.b16 %v1859
    %v3277 = vunpack.c.l.b16 %v1860
    %v3278 = vunpack.c.h.b16 %v1860
    %v3279 = vunpack.c.l.b16 %v1861
    %v3280 = vunpack.c.h.b16 %v1861
    %v3281 = vunpack.c.l.b16 %v1862
    %v3282 = vunpack.c.h.b16 %v1862
    %v3283 = vunpack.c.l.b16 %v1863
    %v3284 = vunpack.c.h.b16 %v1863
    %v3285 = vunpack.c.l.b16 %v1864
    %v3286 = vunpack.c.h.b16 %v1864
    %v3287 = vunpack.c.l.b16 %v1865
    %v3288 = vunpack.c.h.b16 %v1865
    %v3289 = vunpack.c.l.b16 %v1866
    %v3290 = vunpack.c.h.b16 %v1866
    %v3291 = vunpack.c.l.b16 %v1867
    %v3292 = vunpack.c.h.b16 %v1867
    %v3293 = vunpack.c.l.b16 %v1868
    %v3294 = vunpack.c.h.b16 %v1868
    %v3295 = vunpack.c.l.b16 %v1869
    %v3296 = vunpack.c.h.b16 %v1869
    %v3297 = vunpack.c.l.b16 %v1870
    %v3298 = vunpack.c.h.b16 %v1870
    %v3299 = vunpack.c.l.b16 %v1871
    %v3300 = vunpack.c.h.b16 %v1871
    %v3301 = vunpack.c.l.b16 %v1872
    %v3302 = vunpack.c.h.b16 %v1872
    %v3303 = vunpack.c.l.b16 %v1873
    %v3304 = vunpack.c.h.b16 %v1873
    %v3305 = vunpack.c.l.b16 %v1874
    %v3306 = vunpack.c.h.b16 %v1874
    %v3307 = vunpack.c.l.b16 %v1875
    %v3308 = vunpack.c.h.b16 %v1875
    %v3309 = vunpack.c.l.b16 %v1876
    %v3310 = vunpack.c.h.b16 %v1876
    %v3311 = vunpack.c.l.b16 %v1877
    %v3312 = vunpack.c.h.b16 %v1877
    %v3313 = vunpack.c.l.b16 %v1878
    %v3314 = vunpack.c.h.b16 %v1878
    %v3315 = vunpack.c.l.b16 %v1879
    %v3316 = vunpack.c.h.b16 %v1879
    %v3317 = vunpack.c.l.b16 %v1880
    %v3318 = vunpack.c.h.b16 %v1880
    %v3319 = vunpack.c.l.b16 %v1881
    %v3320 = vunpack.c.h.b16 %v1881
    %v3321 = vunpack.c.l.b16 %v1882
    %v3322 = vunpack.c.h.b16 %v1882
    %v3323 = vunpack.c.l.b16 %v1883
    %v3324 = vunpack.c.h.b16 %v1883
    %v3325 = vunpack.c.l.b16 %v1884
    %v3326 = vunpack.c.h.b16 %v1884
    %v3327 = vunpack.c.l.b16 %v1885
    %v3328 = vunpack.c.h.b16 %v1885
    %v3329 = vunpack.c.l.b16 %v1886
    %v3330 = vunpack.c.h.b16 %v1886
    %v3331 = vunpack.c.l.b16 %v1887
    %v3332 = vunpack.c.h.b16 %v1887
    %v3333 = vunpack.c.l.b16 %v1888
    %v3334 = vunpack.c.h.b16 %v1888
    %v3335 = vunpack.c.l.b16 %v1889
    %v3336 = vunpack.c.h.b16 %v1889
    %v3337 = vunpack.c.l.b16 %v1890
    %v3338 = vunpack.c.h.b16 %v1890
    %v3339 = vunpack.c.l.b16 %v1891
    %v3340 = vunpack.c.h.b16 %v1891
    %v3341 = vunpack.c.l.b16 %v1892
    %v3342 = vunpack.c.h.b16 %v1892
    %v3343 = vunpack.c.l.b16 %v1893
    %v3344 = vunpack.c.h.b16 %v1893
    %v3345 = vunpack.c.l.b16 %v1894
    %v3346 = vunpack.c.h.b16 %v1894
    %v3347 = vunpack.c.l.b16 %v1895
    %v3348 = vunpack.c.h.b16 %v1895
    %v3349 = vunpack.c.l.b16 %v1896
    %v3350 = vunpack.c.h.b16 %v1896
    %v3351 = vunpack.c.l.b16 %v1897
    %v3352 = vunpack.c.h.b16 %v1897
    %v3353 = vunpack.c.l.b16 %v1898
    %v3354 = vunpack.c.h.b16 %v1898
    %v3355 = vunpack.c.l.b16 %v1899
    %v3356 = vunpack.c.h.b16 %v1899
    %v3357 = vunpack.c.l.b16 %v1900
    %v3358 = vunpack.c.h.b16 %v1900
    %v3359 = vunpack.c.l.b16 %v1901
    %v3360 = vunpack.c.h.b16 %v1901
    %v3361 = vunpack.c.l.b16 %v1902
    %v3362 = vunpack.c.h.b16 %v1902
    %v3363 = vunpack.c.l.b16 %v1903
    %v3364 = vunpack.c.h.b16 %v1903
    %v3365 = vunpack.c.l.b16 %v1904
    %v3366 = vunpack.c.h.b16 %v1904
    %v3367 = vunpack.c.l.b16 %v1905
    %v3368 = vunpack.c.h.b16 %v1905
    %v3369 = vunpack.c.l.b16 %v1906
    %v3370 = vunpack.c.h.b16 %v1906
    %v3371 = vunpack.c.l.b16 %v1907
    %v3372 = vunpack.c.h.b16 %v1907
    %v3373 = vunpack.c.l.b16 %v1908
    %v3374 = vunpack.c.h.b16 %v1908
    %v3375 = vunpack.c.l.b16 %v1909
    %v3376 = vunpack.c.h.b16 %v1909
    %v3377 = vunpack.c.l.b16 %v1910
    %v3378 = vunpack.c.h.b16 %v1910
    %v3379 = vunpack.c.l.b16 %v1911
    %v3380 = vunpack.c.h.b16 %v1911
    %v3381 = vunpack.c.l.b16 %v1912
    %v3382 = vunpack.c.h.b16 %v1912
    %v3383 = vunpack.c.l.b16 %v1913
    %v3384 = vunpack.c.h.b16 %v1913
    %v3385 = vunpack.c.l.b16 %v1914
    %v3386 = vunpack.c.h.b16 %v1914
    %v3387 = vunpack.c.l.b16 %v1915
    %v3388 = vunpack.c.h.b16 %v1915
    %v3389 = vunpack.c.l.b16 %v1916
    %v3390 = vunpack.c.h.b16 %v1916
    %v3391 = vunpack.c.l.b16 %v1917
    %v3392 = vunpack.c.h.b16 %v1917
    %v3393 = vunpack.c.l.b16 %v1918
    %v3394 = vunpack.c.h.b16 %v1918
    %v3395 = vunpack.c.l.b16 %v1919
    %v3396 = vunpack.c.h.b16 %v1919
    %v3397 = vunpack.c.l.b16 %v1920
    %v3398 = vunpack.c.h.b16 %v1920
    %v3399 = vunpack.c.l.b16 %v1921
    %v3400 = vunpack.c.h.b16 %v1921
    %v3401 = vunpack.c.l.b16 %v1922
    %v3402 = vunpack.c.h.b16 %v1922
    %v3403 = vunpack.c.l.b16 %v1923
    %v3404 = vunpack.c.h.b16 %v1923
    %v3405 = vunpack.c.l.b16 %v1924
    %v3406 = vunpack.c.h.b16 %v1924
    %v3407 = vunpack.c.l.b16 %v1925
    %v3408 = vunpack.c.h.b16 %v1925
    %v3409 = vunpack.c.l.b16 %v1926
    %v3410 = vunpack.c.h.b16 %v1926
    %v3411 = vunpack.c.l.b16 %v1927
    %v3412 = vunpack.c.h.b16 %v1927
    %v3413 = vunpack.c.l.b16 %v1928
    %v3414 = vunpack.c.h.b16 %v1928
    %v3415 = vunpack.c.l.b16 %v1929
    %v3416 = vunpack.c.h.b16 %v1929
    %v3417 = vunpack.c.l.b16 %v1930
    %v3418 = vunpack.c.h.b16 %v1930
    %v3419 = vunpack.c.l.b16 %v1931
    %v3420 = vunpack.c.h.b16 %v1931
    %v3421 = vunpack.c.l.b16 %v1932
    %v3422 = vunpack.c.h.b16 %v1932
    %v3423 = vunpack.c.l.b16 %v1933
    %v3424 = vunpack.c.h.b16 %v1933
    %v3425 = vunpack.c.l.b16 %v1934
    %v3426 = vunpack.c.h.b16 %v1934
    %v3427 = vunpack.c.l.b16 %v1935
    %v3428 = vunpack.c.h.b16 %v1935
    %v3429 = vunpack.c.l.b16 %v1936
    %v3430 = vunpack.c.h.b16 %v1936
    %v3431 = vunpack.c.l.b16 %v1937
    %v3432 = vunpack.c.h.b16 %v1937
    %v3433 = vunpack.c.l.b16 %v1938
    %v3434 = vunpack.c.h.b16 %v1938
    %v3435 = vunpack.c.l.b16 %v1939
    %v3436 = vunpack.c.h.b16 %v1939
    %v3437 = vunpack.c.l.b16 %v1940
    %v3438 = vunpack.c.h.b16 %v1940
    %v3439 = vunpack.c.l.b16 %v1941
    %v3440 = vunpack.c.h.b16 %v1941
    %v3441 = vunpack.c.l.b16 %v1942
    %v3442 = vunpack.c.h.b16 %v1942
    %v3443 = vunpack.c.l.b16 %v1943
    %v3444 = vunpack.c.h.b16 %v1943
    %v3445 = vunpack.c.l.b16 %v1944
    %v3446 = vunpack.c.h.b16 %v1944
    %v3447 = vunpack.c.l.b16 %v1945
    %v3448 = vunpack.c.h.b16 %v1945
    %v3449 = vunpack.c.l.b16 %v1946
    %v3450 = vunpack.c.h.b16 %v1946
    %v3451 = vunpack.c.l.b16 %v1947
    %v3452 = vunpack.c.h.b16 %v1947
    %v3453 = vunpack.c.l.b16 %v1948
    %v3454 = vunpack.c.h.b16 %v1948
    %v3455 = vunpack.c.l.b16 %v1949
    %v3456 = vunpack.c.h.b16 %v1949
    %v3457 = vunpack.c.l.b16 %v1950
    %v3458 = vunpack.c.h.b16 %v1950
    %v3459 = vunpack.c.l.b16 %v1951
    %v3460 = vunpack.c.h.b16 %v1951
    %v3461 = vunpack.c.l.b16 %v1952
    %v3462 = vunpack.c.h.b16 %v1952
    %v3463 = vunpack.c.l.b16 %v1953
    %v3464 = vunpack.c.h.b16 %v1953
    %v3465 = vunpack.c.l.b16 %v1954
    %v3466 = vunpack.c.h.b16 %v1954
    %v3467 = vunpack.c.l.b16 %v1955
    %v3468 = vunpack.c.h.b16 %v1955
    %v3469 = vunpack.c.l.b16 %v1956
    %v3470 = vunpack.c.h.b16 %v1956
    %v3471 = vunpack.c.l.b16 %v1957
    %v3472 = vunpack.c.h.b16 %v1957
    %v3473 = vunpack.c.l.b16 %v1958
    %v3474 = vunpack.c.h.b16 %v1958
    %v3475 = vunpack.c.l.b16 %v1959
    %v3476 = vunpack.c.h.b16 %v1959
    %v3477 = vunpack.c.l.b16 %v1960
    %v3478 = vunpack.c.h.b16 %v1960
    %v3479 = vunpack.c.l.b16 %v1961
    %v3480 = vunpack.c.h.b16 %v1961
    %v3481 = vunpack.c.l.b16 %v1962
    %v3482 = vunpack.c.h.b16 %v1962
    %v3483 = vunpack.c.l.b16 %v1963
    %v3484 = vunpack.c.h.b16 %v1963
    %v3485 = vunpack.c.l.b16 %v1964
    %v3486 = vunpack.c.h.b16 %v1964
    %v3487 = vunpack.c.l.b16 %v1965
    %v3488 = vunpack.c.h.b16 %v1965
    %v3489 = vunpack.c.l.b16 %v1966
    %v3490 = vunpack.c.h.b16 %v1966
    %v3491 = vunpack.c.l.b16 %v1967
    %v3492 = vunpack.c.h.b16 %v1967
    %v3493 = vunpack.c.l.b16 %v1968
    %v3494 = vunpack.c.h.b16 %v1968
    %v3495 = vunpack.c.l.b16 %v1969
    %v3496 = vunpack.c.h.b16 %v1969
    %v3497 = vunpack.c.l.b16 %v1970
    %v3498 = vunpack.c.h.b16 %v1970
    %v3499 = vpack.c.b16 %v2543, %v2539
    %v3500 = vpack.c.b16 %v2544, %v2540
    %v3501 = vpack.c.b16 %v2545, %v2541
    %v3502 = vpack.c.b16 %v2546, %v2542
    %v3503 = vpack.c.b16 %v2551, %v2547
    %v3504 = vpack.c.b16 %v2552, %v2548
    %v3505 = vpack.c.b16 %v2553, %v2549
    %v3506 = vpack.c.b16 %v2554, %v2550
    %v3507 = vpack.c.b16 %v2559, %v2555
    %v3508 = vpack.c.b16 %v2560, %v2556
    %v3509 = vpack.c.b16 %v2561, %v2557
    %v3510 = vpack.c.b16 %v2562, %v2558
    %v3511 = vpack.c.b16 %v2567, %v2563
    %v3512 = vpack.c.b16 %v2568, %v2564
    %v3513 = vpack.c.b16 %v2569, %v2565
    %v3514 = vpack.c.b16 %v2570, %v2566
    %v3515 = vpack.c.b16 %v2575, %v2571
    %v3516 = vpack.c.b16 %v2576, %v2572
    %v3517 = vpack.c.b16 %v2577, %v2573
    %v3518 = vpack.c.b16 %v2578, %v2574
    %v3519 = vpack.c.b16 %v2583, %v2579
    %v3520 = vpack.c.b16 %v2584, %v2580
    %v3521 = vpack.c.b16 %v2585, %v2581
    %v3522 = vpack.c.b16 %v2586, %v2582
    %v3523 = vpack.c.b16 %v2591, %v2587
    %v3524 = vpack.c.b16 %v2592, %v2588
    %v3525 = vpack.c.b16 %v2593, %v2589
    %v3526 = vpack.c.b16 %v2594, %v2590
    %v3527 = vpack.c.b16 %v2599, %v2595
    %v3528 = vpack.c.b16 %v2600, %v2596
    %v3529 = vpack.c.b16 %v2601, %v2597
    %v3530 = vpack.c.b16 %v2602, %v2598
    %v3531 = vpack.c.b16 %v2607, %v2603
    %v3532 = vpack.c.b16 %v2608, %v2604
    %v3533 = vpack.c.b16 %v2609, %v2605
    %v3534 = vpack.c.b16 %v2610, %v2606
    %v3535 = vpack.c.b16 %v2615, %v2611
    %v3536 = vpack.c.b16 %v2616, %v2612
    %v3537 = vpack.c.b16 %v2617, %v2613
    %v3538 = vpack.c.b16 %v2618, %v2614
    %v3539 = vpack.c.b16 %v2623, %v2619
    %v3540 = vpack.c.b16 %v2624, %v2620
    %v3541 = vpack.c.b16 %v2625, %v2621
    %v3542 = vpack.c.b16 %v2626, %v2622
    %v3543 = vpack.c.b16 %v2631, %v2627
    %v3544 = vpack.c.b16 %v2632, %v2628
    %v3545 = vpack.c.b16 %v2633, %v2629
    %v3546 = vpack.c.b16 %v2634, %v2630
    %v3547 = vpack.c.b16 %v2639, %v2635
    %v3548 = vpack.c.b16 %v2640, %v2636
    %v3549 = vpack.c.b16 %v2641, %v2637
    %v3550 = vpack.c.b16 %v2642, %v2638
    %v3551 = vpack.c.b16 %v2647, %v2643
    %v3552 = vpack.c.b16 %v2648, %v2644
    %v3553 = vpack.c.b16 %v2649, %v2645
    %v3554 = vpack.c.b16 %v2650, %v2646
    %v3555 = vpack.c.b16 %v2655, %v2651
    %v3556 = vpack.c.b16 %v2656, %v2652
    %v3557 = vpack.c.b16 %v2657, %v2653
    %v3558 = vpack.c.b16 %v2658, %v2654
    %v3559 = vpack.c.b16 %v2663, %v2659
    %v3560 = vpack.c.b16 %v2664, %v2660
    %v3561 = vpack.c.b16 %v2665, %v2661
    %v3562 = vpack.c.b16 %v2666, %v2662
    %v3563 = vpack.c.b16 %v2671, %v2667
    %v3564 = vpack.c.b16 %v2672, %v2668
    %v3565 = vpack.c.b16 %v2673, %v2669
    %v3566 = vpack.c.b16 %v2674, %v2670
    %v3567 = vpack.c.b16 %v2679, %v2675
    %v3568 = vpack.c.b16 %v2680, %v2676
    %v3569 = vpack.c.b16 %v2681, %v2677
    %v3570 = vpack.c.b16 %v2682, %v2678
    %v3571 = vpack.c.b16 %v2687, %v2683
    %v3572 = vpack.c.b16 %v2688, %v2684
    %v3573 = vpack.c.b16 %v2689, %v2685
    %v3574 = vpack.c.b16 %v2690, %v2686
    %v3575 = vpack.c.b16 %v2695, %v2691
    %v3576 = vpack.c.b16 %v2696, %v2692
    %v3577 = vpack.c.b16 %v2697, %v2693
    %v3578 = vpack.c.b16 %v2698, %v2694
    %v3579 = vpack.c.b16 %v2703, %v2699
    %v3580 = vpack.c.b16 %v2704, %v2700
    %v3581 = vpack.c.b16 %v2705, %v2701
    %v3582 = vpack.c.b16 %v2706, %v2702
    %v3583 = vpack.c.b16 %v2711, %v2707
    %v3584 = vpack.c.b16 %v2712, %v2708
    %v3585 = vpack.c.b16 %v2713, %v2709
    %v3586 = vpack.c.b16 %v2714, %v2710
    %v3587 = vpack.c.b16 %v2719, %v2715
    %v3588 = vpack.c.b16 %v2720, %v2716
    %v3589 = vpack.c.b16 %v2721, %v2717
    %v3590 = vpack.c.b16 %v2722, %v2718
    %v3591 = vpack.c.b16 %v2727, %v2723
    %v3592 = vpack.c.b16 %v2728, %v2724
    %v3593 = vpack.c.b16 %v2729, %v2725
    %v3594 = vpack.c.b16 %v2730, %v2726
    %v3595 = vpack.c.b16 %v2735, %v2731
    %v3596 = vpack.c.b16 %v2736, %v2732
    %v3597 = vpack.c.b16 %v2737, %v2733
    %v3598 = vpack.c.b16 %v2738, %v2734
    %v3599 = vpack.c.b16 %v2743, %v2739
    %v3600 = vpack.c.b16 %v2744, %v2740
    %v3601 = vpack.c.b16 %v2745, %v2741
    %v3602 = vpack.c.b16 %v2746, %v2742
    %v3603 = vpack.c.b16 %v2751, %v2747
    %v3604 = vpack.c.b16 %v2752, %v2748
    %v3605 = vpack.c.b16 %v2753, %v2749
    %v3606 = vpack.c.b16 %v2754, %v2750
    %v3607 = vpack.c.b16 %v2759, %v2755
    %v3608 = vpack.c.b16 %v2760, %v2756
    %v3609 = vpack.c.b16 %v2761, %v2757
    %v3610 = vpack.c.b16 %v2762, %v2758
    %v3611 = vpack.c.b16 %v2767, %v2763
    %v3612 = vpack.c.b16 %v2768, %v2764
    %v3613 = vpack.c.b16 %v2769, %v2765
    %v3614 = vpack.c.b16 %v2770, %v2766
    %v3615 = vpack.c.b16 %v2775, %v2771
    %v3616 = vpack.c.b16 %v2776, %v2772
    %v3617 = vpack.c.b16 %v2777, %v2773
    %v3618 = vpack.c.b16 %v2778, %v2774
    %v3619 = vpack.c.b16 %v2783, %v2779
    %v3620 = vpack.c.b16 %v2784, %v2780
    %v3621 = vpack.c.b16 %v2785, %v2781
    %v3622 = vpack.c.b16 %v2786, %v2782
    %v3623 = vpack.c.b16 %v2791, %v2787
    %v3624 = vpack.c.b16 %v2792, %v2788
    %v3625 = vpack.c.b16 %v2793, %v2789
    %v3626 = vpack.c.b16 %v2794, %v2790
    %v3627 = vpack.c.b16 %v2799, %v2795
    %v3628 = vpack.c.b16 %v2800, %v2796
    %v3629 = vpack.c.b16 %v2801, %v2797
    %v3630 = vpack.c.b16 %v2802, %v2798
    %v3631 = vpack.c.b16 %v2807, %v2803
    %v3632 = vpack.c.b16 %v2808, %v2804
    %v3633 = vpack.c.b16 %v2809, %v2805
    %v3634 = vpack.c.b16 %v2810, %v2806
    %v3635 = vpack.c.b16 %v2815, %v2811
    %v3636 = vpack.c.b16 %v2816, %v2812
    %v3637 = vpack.c.b16 %v2817, %v2813
    %v3638 = vpack.c.b16 %v2818, %v2814
    %v3639 = vpack.c.b16 %v2823, %v2819
    %v3640 = vpack.c.b16 %v2824, %v2820
    %v3641 = vpack.c.b16 %v2825, %v2821
    %v3642 = vpack.c.b16 %v2826, %v2822
    %v3643 = vpack.c.b16 %v2831, %v2827
    %v3644 = vpack.c.b16 %v2832, %v2828
    %v3645 = vpack.c.b16 %v2833, %v2829
    %v3646 = vpack.c.b16 %v2834, %v2830
    %v3647 = vpack.c.b16 %v2839, %v2835
    %v3648 = vpack.c.b16 %v2840, %v2836
    %v3649 = vpack.c.b16 %v2841, %v2837
    %v3650 = vpack.c.b16 %v2842, %v2838
    %v3651 = vpack.c.b16 %v2847, %v2843
    %v3652 = vpack.c.b16 %v2848, %v2844
    %v3653 = vpack.c.b16 %v2849, %v2845
    %v3654 = vpack.c.b16 %v2850, %v2846
    %v3655 = vpack.c.b16 %v2855, %v2851
    %v3656 = vpack.c.b16 %v2856, %v2852
    %v3657 = vpack.c.b16 %v2857, %v2853
    %v3658 = vpack.c.b16 %v2858, %v2854
    %v3659 = vpack.c.b16 %v2863, %v2859
    %v3660 = vpack.c.b16 %v2864, %v2860
    %v3661 = vpack.c.b16 %v2865, %v2861
    %v3662 = vpack.c.b16 %v2866, %v2862
    %v3663 = vpack.c.b16 %v2871, %v2867
    %v3664 = vpack.c.b16 %v2872, %v2868
    %v3665 = vpack.c.b16 %v2873, %v2869
    %v3666 = vpack.c.b16 %v2874, %v2870
    %v3667 = vpack.c.b16 %v2879, %v2875
    %v3668 = vpack.c.b16 %v2880, %v2876
    %v3669 = vpack.c.b16 %v2881, %v2877
    %v3670 = vpack.c.b16 %v2882, %v2878
    %v3671 = vpack.c.b16 %v2887, %v2883
    %v3672 = vpack.c.b16 %v2888, %v2884
    %v3673 = vpack.c.b16 %v2889, %v2885
    %v3674 = vpack.c.b16 %v2890, %v2886
    %v3675 = vpack.c.b16 %v2895, %v2891
    %v3676 = vpack.c.b16 %v2896, %v2892
    %v3677 = vpack.c.b16 %v2897, %v2893
    %v3678 = vpack.c.b16 %v2898, %v2894
    %v3679 = vpack.c.b16 %v2903, %v2899
    %v3680 = vpack.c.b16 %v2904, %v2900
    %v3681 = vpack.c.b16 %v2905, %v2901
    %v3682 = vpack.c.b16 %v2906, %v2902
    %v3683 = vpack.c.b16 %v2911, %v2907
    %v3684 = vpack.c.b16 %v2912, %v2908
    %v3685 = vpack.c.b16 %v2913, %v2909
    %v3686 = vpack.c.b16 %v2914, %v2910
    %v3687 = vpack.c.b16 %v2919, %v2915
    %v3688 = vpack.c.b16 %v2920, %v2916
    %v3689 = vpack.c.b16 %v2921, %v2917
    %v3690 = vpack.c.b16 %v2922, %v2918
    %v3691 = vpack.c.b16 %v2927, %v2923
    %v3692 = vpack.c.b16 %v2928, %v2924
    %v3693 = vpack.c.b16 %v2929, %v2925
    %v3694 = vpack.c.b16 %v2930, %v2926
    %v3695 = vpack.c.b16 %v2935, %v2931
    %v3696 = vpack.c.b16 %v2936, %v2932
    %v3697 = vpack.c.b16 %v2937, %v2933
    %v3698 = vpack.c.b16 %v2938, %v2934
    %v3699 = vpack.c.b16 %v2943, %v2939
    %v3700 = vpack.c.b16 %v2944, %v2940
    %v3701 = vpack.c.b16 %v2945, %v2941
    %v3702 = vpack.c.b16 %v2946, %v2942
    %v3703 = vpack.c.b16 %v2951, %v2947
    %v3704 = vpack.c.b16 %v2952, %v2948
    %v3705 = vpack.c.b16 %v2953, %v2949
    %v3706 = vpack.c.b16 %v2954, %v2950
    %v3707 = vpack.c.b16 %v2959, %v2955
    %v3708 = vpack.c.b16 %v2960, %v2956
    %v3709 = vpack.c.b16 %v2961, %v2957
    %v3710 = vpack.c.b16 %v2962, %v2958
    %v3711 = vpack.c.b16 %v2967, %v2963
    %v3712 = vpack.c.b16 %v2968, %v2964
    %v3713 = vpack.c.b16 %v2969, %v2965
    %v3714 = vpack.c.b16 %v2970, %v2966
    %v3715 = vpack.c.b16 %v2975, %v2971
    %v3716 = vpack.c.b16 %v2976, %v2972
    %v3717 = vpack.c.b16 %v2977, %v2973
    %v3718 = vpack.c.b16 %v2978, %v2974
    %v3719 = vpack.c.b16 %v2983, %v2979
    %v3720 = vpack.c.b16 %v2984, %v2980
    %v3721 = vpack.c.b16 %v2985, %v2981
    %v3722 = vpack.c.b16 %v2986, %v2982
    %v3723 = vpack.c.b16 %v2991, %v2987
    %v3724 = vpack.c.b16 %v2992, %v2988
    %v3725 = vpack.c.b16 %v2993, %v2989
    %v3726 = vpack.c.b16 %v2994, %v2990
    %v3727 = vpack.c.b16 %v2999, %v2995
    %v3728 = vpack.c.b16 %v3000, %v2996
    %v3729 = vpack.c.b16 %v3001, %v2997
    %v3730 = vpack.c.b16 %v3002, %v2998
    %v3731 = vpack.c.b16 %v3007, %v3003
    %v3732 = vpack.c.b16 %v3008, %v3004
    %v3733 = vpack.c.b16 %v3009, %v3005
    %v3734 = vpack.c.b16 %v3010, %v3006
    %v3735 = vpack.c.b16 %v3015, %v3011
    %v3736 = vpack.c.b16 %v3016, %v3012
    %v3737 = vpack.c.b16 %v3017, %v3013
    %v3738 = vpack.c.b16 %v3018, %v3014
    %v3739 = vpack.c.b16 %v3023, %v3019
    %v3740 = vpack.c.b16 %v3024, %v3020
    %v3741 = vpack.c.b16 %v3025, %v3021
    %v3742 = vpack.c.b16 %v3026, %v3022
    %v3743 = vpack.c.b16 %v3031, %v3027
    %v3744 = vpack.c.b16 %v3032, %v3028
    %v3745 = vpack.c.b16 %v3033, %v3029
    %v3746 = vpack.c.b16 %v3034, %v3030
    %v3747 = vpack.c.b16 %v3039, %v3035
    %v3748 = vpack.c.b16 %v3040, %v3036
    %v3749 = vpack.c.b16 %v3041, %v3037
    %v3750 = vpack.c.b16 %v3042, %v3038
    %v3751 = vpack.c.b16 %v3047, %v3043
    %v3752 = vpack.c.b16 %v3048, %v3044
    %v3753 = vpack.c.b16 %v3049, %v3045
    %v3754 = vpack.c.b16 %v3050, %v3046
    %v3755 = vpack.c.b16 %v3055, %v3051
    %v3756 = vpack.c.b16 %v3056, %v3052
    %v3757 = vpack.c.b16 %v3057, %v3053
    %v3758 = vpack.c.b16 %v3058, %v3054
    %v3759 = vpack.c.b16 %v3063, %v3059
    %v3760 = vpack.c.b16 %v3064, %v3060
    %v3761 = vpack.c.b16 %v3065, %v3061
    %v3762 = vpack.c.b16 %v3066, %v3062
    %v3763 = vpack.c.b16 %v3071, %v3067
    %v3764 = vpack.c.b16 %v3072, %v3068
    %v3765 = vpack.c.b16 %v3073, %v3069
    %v3766 = vpack.c.b16 %v3074, %v3070
    %v3767 = vpack.c.b16 %v3079, %v3075
    %v3768 = vpack.c.b16 %v3080, %v3076
    %v3769 = vpack.c.b16 %v3081, %v3077
    %v3770 = vpack.c.b16 %v3082, %v3078
    %v3771 = vpack.c.b16 %v3087, %v3083
    %v3772 = vpack.c.b16 %v3088, %v3084
    %v3773 = vpack.c.b16 %v3089, %v3085
    %v3774 = vpack.c.b16 %v3090, %v3086
    %v3775 = vpack.c.b16 %v3095, %v3091
    %v3776 = vpack.c.b16 %v3096, %v3092
    %v3777 = vpack.c.b16 %v3097, %v3093
    %v3778 = vpack.c.b16 %v3098, %v3094
    %v3779 = vpack.c.b16 %v3103, %v3099
    %v3780 = vpack.c.b16 %v3104, %v3100
    %v3781 = vpack.c.b16 %v3105, %v3101
    %v3782 = vpack.c.b16 %v3106, %v3102
    %v3783 = vpack.c.b16 %v3111, %v3107
    %v3784 = vpack.c.b16 %v3112, %v3108
    %v3785 = vpack.c.b16 %v3113, %v3109
    %v3786 = vpack.c.b16 %v3114, %v3110
    %v3787 = vpack.c.b16 %v3119, %v3115
    %v3788 = vpack.c.b16 %v3120, %v3116
    %v3789 = vpack.c.b16 %v3121, %v3117
    %v3790 = vpack.c.b16 %v3122, %v3118
    %v3791 = vpack.c.b16 %v3127, %v3123
    %v3792 = vpack.c.b16 %v3128, %v3124
    %v3793 = vpack.c.b16 %v3129, %v3125
    %v3794 = vpack.c.b16 %v3130, %v3126
    %v3795 = vpack.c.b16 %v3135, %v3131
    %v3796 = vpack.c.b16 %v3136, %v3132
    %v3797 = vpack.c.b16 %v3137, %v3133
    %v3798 = vpack.c.b16 %v3138, %v3134
    %v3799 = vpack.c.b16 %v3143, %v3139
    %v3800 = vpack.c.b16 %v3144, %v3140
    %v3801 = vpack.c.b16 %v3145, %v3141
    %v3802 = vpack.c.b16 %v3146, %v3142
    %v3803 = vpack.c.b16 %v3151, %v3147
    %v3804 = vpack.c.b16 %v3152, %v3148
    %v3805 = vpack.c.b16 %v3153, %v3149
    %v3806 = vpack.c.b16 %v3154, %v3150
    %v3807 = vpack.c.b16 %v3159, %v3155
    %v3808 = vpack.c.b16 %v3160, %v3156
    %v3809 = vpack.c.b16 %v3161, %v3157
    %v3810 = vpack.c.b16 %v3162, %v3158
    %v3811 = vpack.c.b16 %v3167, %v3163
    %v3812 = vpack.c.b16 %v3168, %v3164
    %v3813 = vpack.c.b16 %v3169, %v3165
    %v3814 = vpack.c.b16 %v3170, %v3166
    %v3815 = vpack.c.b16 %v3175, %v3171
    %v3816 = vpack.c.b16 %v3176, %v3172
    %v3817 = vpack.c.b16 %v3177, %v3173
    %v3818 = vpack.c.b16 %v3178, %v3174
    %v3819 = vpack.c.b16 %v3183, %v3179
    %v3820 = vpack.c.b16 %v3184, %v3180
    %v3821 = vpack.c.b16 %v3185, %v3181
    %v3822 = vpack.c.b16 %v3186, %v3182
    %v3823 = vpack.c.b16 %v3191, %v3187
    %v3824 = vpack.c.b16 %v3192, %v3188
    %v3825 = vpack.c.b16 %v3193, %v3189
    %v3826 = vpack.c.b16 %v3194, %v3190
    %v3827 = vpack.c.b16 %v3199, %v3195
    %v3828 = vpack.c.b16 %v3200, %v3196
    %v3829 = vpack.c.b16 %v3201, %v3197
    %v3830 = vpack.c.b16 %v3202, %v3198
    %v3831 = vpack.c.b16 %v3207, %v3203
    %v3832 = vpack.c.b16 %v3208, %v3204
    %v3833 = vpack.c.b16 %v3209, %v3205
    %v3834 = vpack.c.b16 %v3210, %v3206
    %v3835 = vpack.c.b16 %v3215, %v3211
    %v3836 = vpack.c.b16 %v3216, %v3212
    %v3837 = vpack.c.b16 %v3217, %v3213
    %v3838 = vpack.c.b16 %v3218, %v3214
    %v3839 = vpack.c.b16 %v3223, %v3219
    %v3840 = vpack.c.b16 %v3224, %v3220
    %v3841 = vpack.c.b16 %v3225, %v3221
    %v3842 = vpack.c.b16 %v3226, %v3222
    %v3843 = vpack.c.b16 %v3231, %v3227
    %v3844 = vpack.c.b16 %v3232, %v3228
    %v3845 = vpack.c.b16 %v3233, %v3229
    %v3846 = vpack.c.b16 %v3234, %v3230
    %v3847 = vpack.c.b16 %v3239, %v3235
    %v3848 = vpack.c.b16 %v3240, %v3236
    %v3849 = vpack.c.b16 %v3241, %v3237
    %v3850 = vpack.c.b16 %v3242, %v3238
    %v3851 = vpack.c.b16 %v3247, %v3243
    %v3852 = vpack.c.b16 %v3248, %v3244
    %v3853 = vpack.c.b16 %v3249, %v3245
    %v3854 = vpack.c.b16 %v3250, %v3246
    %v3855 = vpack.c.b16 %v3255, %v3251
    %v3856 = vpack.c.b16 %v3256, %v3252
    %v3857 = vpack.c.b16 %v3257, %v3253
    %v3858 = vpack.c.b16 %v3258, %v3254
    %v3859 = vpack.c.b16 %v3263, %v3259
    %v3860 = vpack.c.b16 %v3264, %v3260
    %v3861 = vpack.c.b16 %v3265, %v3261
    %v3862 = vpack.c.b16 %v3266, %v3262
    %v3863 = vpack.c.b16 %v3271, %v3267
    %v3864 = vpack.c.b16 %v3272, %v3268
    %v3865 = vpack.c.b16 %v3273, %v3269
    %v3866 = vpack.c.b16 %v3274, %v3270
    %v3867 = vpack.c.b16 %v3279, %v3275
    %v3868 = vpack.c.b16 %v3280, %v3276
    %v3869 = vpack.c.b16 %v3281, %v3277
    %v3870 = vpack.c.b16 %v3282, %v3278
    %v3871 = vpack.c.b16 %v3287, %v3283
    %v3872 = vpack.c.b16 %v3288, %v3284
    %v3873 = vpack.c.b16 %v3289, %v3285
    %v3874 = vpack.c.b16 %v3290, %v3286
    %v3875 = vpack.c.b16 %v3295, %v3291
    %v3876 = vpack.c.b16 %v3296, %v3292
    %v3877 = vpack.c.b16 %v3297, %v3293
    %v3878 = vpack.c.b16 %v3298, %v3294
    %v3879 = vpack.c.b16 %v3303, %v3299
    %v3880 = vpack.c.b16 %v3304, %v3300
    %v3881 = vpack.c.b16 %v3305, %v3301
    %v3882 = vpack.c.b16 %v3306, %v3302
    %v3883 = vpack.c.b16 %v3311, %v3307
    %v3884 = vpack.c.b16 %v3312, %v3308
    %v3885 = vpack.c.b16 %v3313, %v3309
    %v3886 = vpack.c.b16 %v3314, %v3310
    %v3887 = vpack.c.b16 %v3319, %v3315
    %v3888 = vpack.c.b16 %v3320, %v3316
    %v3889 = vpack.c.b16 %v3321, %v3317
    %v3890 = vpack.c.b16 %v3322, %v3318
    %v3891 = vpack.c.b16 %v3327, %v3323
    %v3892 = vpack.c.b16 %v3328, %v3324
    %v3893 = vpack.c.b16 %v3329, %v3325
    %v3894 = vpack.c.b16 %v3330, %v3326
    %v3895 = vpack.c.b16 %v3335, %v3331
    %v3896 = vpack.c.b16 %v3336, %v3332
    %v3897 = vpack.c.b16 %v3337, %v3333
    %v3898 = vpack.c.b16 %v3338, %v3334
    %v3899 = vpack.c.b16 %v3343, %v3339
    %v3900 = vpack.c.b16 %v3344, %v3340
    %v3901 = vpack.c.b16 %v3345, %v3341
    %v3902 = vpack.c.b16 %v3346, %v3342
    %v3903 = vpack.c.b16 %v3351, %v3347
    %v3904 = vpack.c.b16 %v3352, %v3348
    %v3905 = vpack.c.b16 %v3353, %v3349
    %v3906 = vpack.c.b16 %v3354, %v3350
    %v3907 = vpack.c.b16 %v3359, %v3355
    %v3908 = vpack.c.b16 %v3360, %v3356
    %v3909 = vpack.c.b16 %v3361, %v3357
    %v3910 = vpack.c.b16 %v3362, %v3358
    %v3911 = vpack.c.b16 %v3367, %v3363
    %v3912 = vpack.c.b16 %v3368, %v3364
    %v3913 = vpack.c.b16 %v3369, %v3365
    %v3914 = vpack.c.b16 %v3370, %v3366
    %v3915 = vpack.c.b16 %v3375, %v3371
    %v3916 = vpack.c.b16 %v3376, %v3372
    %v3917 = vpack.c.b16 %v3377, %v3373
    %v3918 = vpack.c.b16 %v3378, %v3374
    %v3919 = vpack.c.b16 %v3383, %v3379
    %v3920 = vpack.c.b16 %v3384, %v3380
    %v3921 = vpack.c.b16 %v3385, %v3381
    %v3922 = vpack.c.b16 %v3386, %v3382
    %v3923 = vpack.c.b16 %v3391, %v3387
    %v3924 = vpack.c.b16 %v3392, %v3388
    %v3925 = vpack.c.b16 %v3393, %v3389
    %v3926 = vpack.c.b16 %v3394, %v3390
    %v3927 = vpack.c.b16 %v3399, %v3395
    %v3928 = vpack.c.b16 %v3400, %v3396
    %v3929 = vpack.c.b16 %v3401, %v3397
    %v3930 = vpack.c.b16 %v3402, %v3398
    %v3931 = vpack.c.b16 %v3407, %v3403
    %v3932 = vpack.c.b16 %v3408, %v3404
    %v3933 = vpack.c.b16 %v3409, %v3405
    %v3934 = vpack.c.b16 %v3410, %v3406
    %v3935 = vpack.c.b16 %v3415, %v3411
    %v3936 = vpack.c.b16 %v3416, %v3412
    %v3937 = vpack.c.b16 %v3417, %v3413
    %v3938 = vpack.c.b16 %v3418, %v3414
    %v3939 = vpack.c.b16 %v3423, %v3419
    %v3940 = vpack.c.b16 %v3424, %v3420
    %v3941 = vpack.c.b16 %v3425, %v3421
    %v3942 = vpack.c.b16 %v3426, %v3422
    %v3943 = vpack.c.b16 %v3431, %v3427
    %v3944 = vpack.c.b16 %v3432, %v3428
    %v3945 = vpack.c.b16 %v3433, %v3429
    %v3946 = vpack.c.b16 %v3434, %v3430
    %v3947 = vpack.c.b16 %v3439, %v3435
    %v3948 = vpack.c.b16 %v3440, %v3436
    %v3949 = vpack.c.b16 %v3441, %v3437
    %v3950 = vpack.c.b16 %v3442, %v3438
    %v3951 = vpack.c.b16 %v3447, %v3443
    %v3952 = vpack.c.b16 %v3448, %v3444
    %v3953 = vpack.c.b16 %v3449, %v3445
    %v3954 = vpack.c.b16 %v3450, %v3446
    %v3955 = vpack.c.b16 %v3455, %v3451
    %v3956 = vpack.c.b16 %v3456, %v3452
    %v3957 = vpack.c.b16 %v3457, %v3453
    %v3958 = vpack.c.b16 %v3458, %v3454
    %v3959 = vpack.c.b16 %v3463, %v3459
    %v3960 = vpack.c.b16 %v3464, %v3460
    %v3961 = vpack.c.b16 %v3465, %v3461
    %v3962 = vpack.c.b16 %v3466, %v3462
    %v3963 = vpack.c.b16 %v3471, %v3467
    %v3964 = vpack.c.b16 %v3472, %v3468
    %v3965 = vpack.c.b16 %v3473, %v3469
    %v3966 = vpack.c.b16 %v3474, %v3470
    %v3967 = vpack.c.b16 %v3479, %v3475
    %v3968 = vpack.c.b16 %v3480, %v3476
    %v3969 = vpack.c.b16 %v3481, %v3477
    %v3970 = vpack.c.b16 %v3482, %v3478
    %v3971 = vpack.c.b16 %v3487, %v3483
    %v3972 = vpack.c.b16 %v3488, %v3484
    %v3973 = vpack.c.b16 %v3489, %v3485
    %v3974 = vpack.c.b16 %v3490, %v3486
    %v3975 = vpack.c.b16 %v3495, %v3491
    %v3976 = vpack.c.b16 %v3496, %v3492
    %v3977 = vpack.c.b16 %v3497, %v3493
    %v3978 = vpack.c.b16 %v3498, %v3494
    %4459 = vmatprep.subr.bf16.mxu0 %v3528
    %4460 = vmatpush1.bf16.msra.mxu0 %v3527
    %4461 = vmatprep.subr.bf16.mxu0 %v3524
    %4462 = vmatpush1.bf16.msra.mxu0 %v3523
    %4463 = vmatprep.subr.bf16.mxu0 %v3520
    %4464 = vmatpush1.bf16.msra.mxu0 %v3519
    %4465 = vmatprep.subr.bf16.mxu0 %v3516
    %4466 = vmatpush1.bf16.msra.mxu0 %v3515
    %4467 = vmatprep.subr.bf16.mxu0 %v3512
    %4468 = vmatpush1.bf16.msra.mxu0 %v3511
    %4469 = vmatprep.subr.bf16.mxu0 %v3508
    %4470 = vmatpush1.bf16.msra.mxu0 %v3507
    %4471 = vmatprep.subr.bf16.mxu0 %v3504
    %4472 = vmatpush1.bf16.msra.mxu0 %v3503
    %4473 = vmatprep.subr.bf16.mxu0 %v3500
    %4474 = vmatpush1.bf16.msra.mxu0 %v3499
    %4475 = vmatprep.subr.bf16.mxu0 %v3560
    %4476 = vmatpush2.bf16.msra.mxu0 %v3559
    %4477 = vmatprep.subr.bf16.mxu0 %v3556
    %4478 = vmatpush2.bf16.msra.mxu0 %v3555
    %4479 = vmatprep.subr.bf16.mxu0 %v3552
    %4480 = vmatpush2.bf16.msra.mxu0 %v3551
    %4481 = vmatprep.subr.bf16.mxu0 %v3548
    %4482 = vmatpush2.bf16.msra.mxu0 %v3547
    %4483 = vmatprep.subr.bf16.mxu0 %v3544
    %4484 = vmatpush2.bf16.msra.mxu0 %v3543
    %4485 = vmatprep.subr.bf16.mxu0 %v3540
    %4486 = vmatpush2.bf16.msra.mxu0 %v3539
    %4487 = vmatprep.subr.bf16.mxu0 %v3536
    %4488 = vmatpush2.bf16.msra.mxu0 %v3535
    %4489 = vmatprep.subr.bf16.mxu0 %v3532
    %4490 = vmatpush2.bf16.msra.mxu0 %v3531
    %4491 = vmatprep.mubr.bf16.mxu0 %v1994
    %4492 = vmatmul.mubr.bf16.gmra.mxu0 %v1993
    %v4493 = vpop.f32.mrf.mxu0
    %v4494 = vadd.f32 %v1976, %v4493
    %v4495 = vpop.f32.mrf.mxu0
    %v4496 = vadd.f32 %v1980, %v4495
    %v4497 = vpop.f32.mrf.mxu0
    %v4498 = vadd.f32 %v1976, %v4497
    %v4499 = vpop.f32.mrf.mxu0
    %v4500 = vadd.f32 %v1980, %v4499
    %4501 = vmatprep.mubr.bf16.mxu0 %v2000
    %4502 = vmatmul.mubr.bf16.gmra.mxu0 %v1999
    %v4503 = vpop.f32.mrf.mxu0
    %v4504 = vadd.f32 %v1976, %v4503
    %v4505 = vpop.f32.mrf.mxu0
    %v4506 = vadd.f32 %v1980, %v4505
    %v4507 = vpop.f32.mrf.mxu0
    %v4508 = vadd.f32 %v1976, %v4507
    %v4509 = vpop.f32.mrf.mxu0
    %v4510 = vadd.f32 %v1980, %v4509
    %4511 = vmatprep.mubr.bf16.mxu0 %v2006
    %4512 = vmatmul.mubr.bf16.gmra.mxu0 %v2005
    %v4513 = vpop.f32.mrf.mxu0
    %v4514 = vadd.f32 %v1976, %v4513
    %v4515 = vpop.f32.mrf.mxu0
    %v4516 = vadd.f32 %v1980, %v4515
    %v4517 = vpop.f32.mrf.mxu0
    %v4518 = vadd.f32 %v1976, %v4517
    %v4519 = vpop.f32.mrf.mxu0
    %v4520 = vadd.f32 %v1980, %v4519
    %4521 = vmatprep.mubr.bf16.mxu0 %v2012
    %4522 = vmatmul.mubr.bf16.gmra.mxu0 %v2011
    %v4523 = vpop.f32.mrf.mxu0
    %v4524 = vadd.f32 %v1976, %v4523
    %v4525 = vpop.f32.mrf.mxu0
    %v4526 = vadd.f32 %v1980, %v4525
    %v4527 = vpop.f32.mrf.mxu0
    %v4528 = vadd.f32 %v1976, %v4527
    %v4529 = vpop.f32.mrf.mxu0
    %v4530 = vadd.f32 %v1980, %v4529
    %4531 = vdwg.mxu0
    %4532 = vmatprep.subr.bf16.mxu0 %v3592
    %4533 = vmatpush1.bf16.msra.mxu0 %v3591
    %4534 = vmatprep.subr.bf16.mxu0 %v3588
    %4535 = vmatpush1.bf16.msra.mxu0 %v3587
    %4536 = vmatprep.subr.bf16.mxu0 %v3584
    %4537 = vmatpush1.bf16.msra.mxu0 %v3583
    %4538 = vmatprep.subr.bf16.mxu0 %v3580
    %4539 = vmatpush1.bf16.msra.mxu0 %v3579
    %4540 = vmatprep.subr.bf16.mxu0 %v3576
    %4541 = vmatpush1.bf16.msra.mxu0 %v3575
    %4542 = vmatprep.subr.bf16.mxu0 %v3572
    %4543 = vmatpush1.bf16.msra.mxu0 %v3571
    %4544 = vmatprep.subr.bf16.mxu0 %v3568
    %4545 = vmatpush1.bf16.msra.mxu0 %v3567
    %4546 = vmatprep.subr.bf16.mxu0 %v3564
    %4547 = vmatpush1.bf16.msra.mxu0 %v3563
    %4548 = vmatprep.subr.bf16.mxu0 %v3624
    %4549 = vmatpush2.bf16.msra.mxu0 %v3623
    %4550 = vmatprep.subr.bf16.mxu0 %v3620
    %4551 = vmatpush2.bf16.msra.mxu0 %v3619
    %4552 = vmatprep.subr.bf16.mxu0 %v3616
    %4553 = vmatpush2.bf16.msra.mxu0 %v3615
    %4554 = vmatprep.subr.bf16.mxu0 %v3612
    %4555 = vmatpush2.bf16.msra.mxu0 %v3611
    %4556 = vmatprep.subr.bf16.mxu0 %v3608
    %4557 = vmatpush2.bf16.msra.mxu0 %v3607
    %4558 = vmatprep.subr.bf16.mxu0 %v3604
    %4559 = vmatpush2.bf16.msra.mxu0 %v3603
    %4560 = vmatprep.subr.bf16.mxu0 %v3600
    %4561 = vmatpush2.bf16.msra.mxu0 %v3599
    %4562 = vmatprep.subr.bf16.mxu0 %v3596
    %4563 = vmatpush2.bf16.msra.mxu0 %v3595
    %4564 = vmatprep.mubr.bf16.mxu0 %v1996
    %4565 = vmatmul.mubr.bf16.gmra.mxu0 %v1995
    %v4566 = vpop.f32.mrf.mxu0
    %v4567 = vadd.f32 %v4494, %v4566
    %v4568 = vpop.f32.mrf.mxu0
    %v4569 = vadd.f32 %v4496, %v4568
    %v4570 = vpop.f32.mrf.mxu0
    %v4571 = vadd.f32 %v4498, %v4570
    %v4572 = vpop.f32.mrf.mxu0
    %v4573 = vadd.f32 %v4500, %v4572
    %4574 = vmatprep.mubr.bf16.mxu0 %v2002
    %4575 = vmatmul.mubr.bf16.gmra.mxu0 %v2001
    %v4576 = vpop.f32.mrf.mxu0
    %v4577 = vadd.f32 %v4504, %v4576
    %v4578 = vpop.f32.mrf.mxu0
    %v4579 = vadd.f32 %v4506, %v4578
    %v4580 = vpop.f32.mrf.mxu0
    %v4581 = vadd.f32 %v4508, %v4580
    %v4582 = vpop.f32.mrf.mxu0
    %v4583 = vadd.f32 %v4510, %v4582
    %4584 = vmatprep.mubr.bf16.mxu0 %v2008
    %4585 = vmatmul.mubr.bf16.gmra.mxu0 %v2007
    %v4586 = vpop.f32.mrf.mxu0
    %v4587 = vadd.f32 %v4514, %v4586
    %v4588 = vpop.f32.mrf.mxu0
    %v4589 = vadd.f32 %v4516, %v4588
    %v4590 = vpop.f32.mrf.mxu0
    %v4591 = vadd.f32 %v4518, %v4590
    %v4592 = vpop.f32.mrf.mxu0
    %v4593 = vadd.f32 %v4520, %v4592
    %4594 = vmatprep.mubr.bf16.mxu0 %v2014
    %4595 = vmatmul.mubr.bf16.gmra.mxu0 %v2013
    %v4596 = vpop.f32.mrf.mxu0
    %v4597 = vadd.f32 %v4524, %v4596
    %v4598 = vpop.f32.mrf.mxu0
    %v4599 = vadd.f32 %v4526, %v4598
    %v4600 = vpop.f32.mrf.mxu0
    %v4601 = vadd.f32 %v4528, %v4600
    %v4602 = vpop.f32.mrf.mxu0
    %v4603 = vadd.f32 %v4530, %v4602
    %4604 = vdwg.mxu0
    %4605 = vmatprep.subr.bf16.mxu0 %v3656
    %4606 = vmatpush1.bf16.msra.mxu0 %v3655
    %4607 = vmatprep.subr.bf16.mxu0 %v3652
    %4608 = vmatpush1.bf16.msra.mxu0 %v3651
    %4609 = vmatprep.subr.bf16.mxu0 %v3648
    %4610 = vmatpush1.bf16.msra.mxu0 %v3647
    %4611 = vmatprep.subr.bf16.mxu0 %v3644
    %4612 = vmatpush1.bf16.msra.mxu0 %v3643
    %4613 = vmatprep.subr.bf16.mxu0 %v3640
    %4614 = vmatpush1.bf16.msra.mxu0 %v3639
    %4615 = vmatprep.subr.bf16.mxu0 %v3636
    %4616 = vmatpush1.bf16.msra.mxu0 %v3635
    %4617 = vmatprep.subr.bf16.mxu0 %v3632
    %4618 = vmatpush1.bf16.msra.mxu0 %v3631
    %4619 = vmatprep.subr.bf16.mxu0 %v3628
    %4620 = vmatpush1.bf16.msra.mxu0 %v3627
    %4621 = vmatprep.subr.bf16.mxu0 %v3688
    %4622 = vmatpush2.bf16.msra.mxu0 %v3687
    %4623 = vmatprep.subr.bf16.mxu0 %v3684
    %4624 = vmatpush2.bf16.msra.mxu0 %v3683
    %4625 = vmatprep.subr.bf16.mxu0 %v3680
    %4626 = vmatpush2.bf16.msra.mxu0 %v3679
    %4627 = vmatprep.subr.bf16.mxu0 %v3676
    %4628 = vmatpush2.bf16.msra.mxu0 %v3675
    %4629 = vmatprep.subr.bf16.mxu0 %v3672
    %4630 = vmatpush2.bf16.msra.mxu0 %v3671
    %4631 = vmatprep.subr.bf16.mxu0 %v3668
    %4632 = vmatpush2.bf16.msra.mxu0 %v3667
    %4633 = vmatprep.subr.bf16.mxu0 %v3664
    %4634 = vmatpush2.bf16.msra.mxu0 %v3663
    %4635 = vmatprep.subr.bf16.mxu0 %v3660
    %4636 = vmatpush2.bf16.msra.mxu0 %v3659
    %4637 = vmatprep.mubr.bf16.mxu0 %v1998
    %4638 = vmatmul.mubr.bf16.gmra.mxu0 %v1997
    %v4639 = vpop.f32.mrf.mxu0
    %v4640 = vadd.f32 %v4567, %v4639
    %v4641 = vpop.f32.mrf.mxu0
    %v4642 = vadd.f32 %v4569, %v4641
    %v4643 = vpop.f32.mrf.mxu0
    %v4644 = vadd.f32 %v4571, %v4643
    %v4645 = vpop.f32.mrf.mxu0
    %v4646 = vadd.f32 %v4573, %v4645
    %4647 = vmatprep.mubr.bf16.mxu0 %v2004
    %4648 = vmatmul.mubr.bf16.gmra.mxu0 %v2003
    %v4649 = vpop.f32.mrf.mxu0
    %v4650 = vadd.f32 %v4577, %v4649
    %v4651 = vpop.f32.mrf.mxu0
    %v4652 = vadd.f32 %v4579, %v4651
    %v4653 = vpop.f32.mrf.mxu0
    %v4654 = vadd.f32 %v4581, %v4653
    %v4655 = vpop.f32.mrf.mxu0
    %v4656 = vadd.f32 %v4583, %v4655
    %4657 = vmatprep.mubr.bf16.mxu0 %v2010
    %4658 = vmatmul.mubr.bf16.gmra.mxu0 %v2009
    %v4659 = vpop.f32.mrf.mxu0
    %v4660 = vadd.f32 %v4587, %v4659
    %v4661 = vpop.f32.mrf.mxu0
    %v4662 = vadd.f32 %v4589, %v4661
    %v4663 = vpop.f32.mrf.mxu0
    %v4664 = vadd.f32 %v4591, %v4663
    %v4665 = vpop.f32.mrf.mxu0
    %v4666 = vadd.f32 %v4593, %v4665
    %4667 = vmatprep.mubr.bf16.mxu0 %v2016
    %4668 = vmatmul.mubr.bf16.gmra.mxu0 %v2015
    %v4669 = vpop.f32.mrf.mxu0
    %v4670 = vadd.f32 %v4597, %v4669
    %v4671 = vpop.f32.mrf.mxu0
    %v4672 = vadd.f32 %v4599, %v4671
    %v4673 = vpop.f32.mrf.mxu0
    %v4674 = vadd.f32 %v4601, %v4673
    %v4675 = vpop.f32.mrf.mxu0
    %v4676 = vadd.f32 %v4603, %v4675
    %4677 = vdwg.mxu0
    %4678 = vmatprep.subr.bf16.mxu0 %v3720
    %4679 = vmatpush1.bf16.msra.mxu0 %v3719
    %4680 = vmatprep.subr.bf16.mxu0 %v3716
    %4681 = vmatpush1.bf16.msra.mxu0 %v3715
    %4682 = vmatprep.subr.bf16.mxu0 %v3712
    %4683 = vmatpush1.bf16.msra.mxu0 %v3711
    %4684 = vmatprep.subr.bf16.mxu0 %v3708
    %4685 = vmatpush1.bf16.msra.mxu0 %v3707
    %4686 = vmatprep.subr.bf16.mxu0 %v3704
    %4687 = vmatpush1.bf16.msra.mxu0 %v3703
    %4688 = vmatprep.subr.bf16.mxu0 %v3700
    %4689 = vmatpush1.bf16.msra.mxu0 %v3699
    %4690 = vmatprep.subr.bf16.mxu0 %v3696
    %4691 = vmatpush1.bf16.msra.mxu0 %v3695
    %4692 = vmatprep.subr.bf16.mxu0 %v3692
    %4693 = vmatpush1.bf16.msra.mxu0 %v3691
    %4694 = vmatprep.subr.bf16.mxu0 %v3752
    %4695 = vmatpush2.bf16.msra.mxu0 %v3751
    %4696 = vmatprep.subr.bf16.mxu0 %v3748
    %4697 = vmatpush2.bf16.msra.mxu0 %v3747
    %4698 = vmatprep.subr.bf16.mxu0 %v3744
    %4699 = vmatpush2.bf16.msra.mxu0 %v3743
    %4700 = vmatprep.subr.bf16.mxu0 %v3740
    %4701 = vmatpush2.bf16.msra.mxu0 %v3739
    %4702 = vmatprep.subr.bf16.mxu0 %v3736
    %4703 = vmatpush2.bf16.msra.mxu0 %v3735
    %4704 = vmatprep.subr.bf16.mxu0 %v3732
    %4705 = vmatpush2.bf16.msra.mxu0 %v3731
    %4706 = vmatprep.subr.bf16.mxu0 %v3728
    %4707 = vmatpush2.bf16.msra.mxu0 %v3727
    %4708 = vmatprep.subr.bf16.mxu0 %v3724
    %4709 = vmatpush2.bf16.msra.mxu0 %v3723
    %4710 = vmatprep.mubr.bf16.mxu0 %v2000
    %4711 = vmatmul.mubr.bf16.gmra.mxu0 %v1999
    %v4712 = vpop.f32.mrf.mxu0
    %v4713 = vadd.f32 %v4640, %v4712
    %v4714 = vpop.f32.mrf.mxu0
    %v4715 = vadd.f32 %v4642, %v4714
    %v4716 = vpop.f32.mrf.mxu0
    %v4717 = vadd.f32 %v4644, %v4716
    %v4718 = vpop.f32.mrf.mxu0
    %v4719 = vadd.f32 %v4646, %v4718
    %4720 = vmatprep.mubr.bf16.mxu0 %v2006
    %4721 = vmatmul.mubr.bf16.gmra.mxu0 %v2005
    %v4722 = vpop.f32.mrf.mxu0
    %v4723 = vadd.f32 %v4650, %v4722
    %v4724 = vpop.f32.mrf.mxu0
    %v4725 = vadd.f32 %v4652, %v4724
    %v4726 = vpop.f32.mrf.mxu0
    %v4727 = vadd.f32 %v4654, %v4726
    %v4728 = vpop.f32.mrf.mxu0
    %v4729 = vadd.f32 %v4656, %v4728
    %4730 = vmatprep.mubr.bf16.mxu0 %v2012
    %4731 = vmatmul.mubr.bf16.gmra.mxu0 %v2011
    %v4732 = vpop.f32.mrf.mxu0
    %v4733 = vadd.f32 %v4660, %v4732
    %v4734 = vpop.f32.mrf.mxu0
    %v4735 = vadd.f32 %v4662, %v4734
    %v4736 = vpop.f32.mrf.mxu0
    %v4737 = vadd.f32 %v4664, %v4736
    %v4738 = vpop.f32.mrf.mxu0
    %v4739 = vadd.f32 %v4666, %v4738
    %4740 = vmatprep.mubr.bf16.mxu0 %v2018
    %4741 = vmatmul.mubr.bf16.gmra.mxu0 %v2017
    %v4742 = vpop.f32.mrf.mxu0
    %v4743 = vadd.f32 %v4670, %v4742
    %v4744 = vpop.f32.mrf.mxu0
    %v4745 = vadd.f32 %v4672, %v4744
    %v4746 = vpop.f32.mrf.mxu0
    %v4747 = vadd.f32 %v4674, %v4746
    %v4748 = vpop.f32.mrf.mxu0
    %v4749 = vadd.f32 %v4676, %v4748
    %4750 = vdwg.mxu0
    %4751 = vmatprep.subr.bf16.mxu0 %v3784
    %4752 = vmatpush1.bf16.msra.mxu0 %v3783
    %4753 = vmatprep.subr.bf16.mxu0 %v3780
    %4754 = vmatpush1.bf16.msra.mxu0 %v3779
    %4755 = vmatprep.subr.bf16.mxu0 %v3776
    %4756 = vmatpush1.bf16.msra.mxu0 %v3775
    %4757 = vmatprep.subr.bf16.mxu0 %v3772
    %4758 = vmatpush1.bf16.msra.mxu0 %v3771
    %4759 = vmatprep.subr.bf16.mxu0 %v3768
    %4760 = vmatpush1.bf16.msra.mxu0 %v3767
    %4761 = vmatprep.subr.bf16.mxu0 %v3764
    %4762 = vmatpush1.bf16.msra.mxu0 %v3763
    %4763 = vmatprep.subr.bf16.mxu0 %v3760
    %4764 = vmatpush1.bf16.msra.mxu0 %v3759
    %4765 = vmatprep.subr.bf16.mxu0 %v3756
    %4766 = vmatpush1.bf16.msra.mxu0 %v3755
    %4767 = vmatprep.subr.bf16.mxu0 %v3816
    %4768 = vmatpush2.bf16.msra.mxu0 %v3815
    %4769 = vmatprep.subr.bf16.mxu0 %v3812
    %4770 = vmatpush2.bf16.msra.mxu0 %v3811
    %4771 = vmatprep.subr.bf16.mxu0 %v3808
    %4772 = vmatpush2.bf16.msra.mxu0 %v3807
    %4773 = vmatprep.subr.bf16.mxu0 %v3804
    %4774 = vmatpush2.bf16.msra.mxu0 %v3803
    %4775 = vmatprep.subr.bf16.mxu0 %v3800
    %4776 = vmatpush2.bf16.msra.mxu0 %v3799
    %4777 = vmatprep.subr.bf16.mxu0 %v3796
    %4778 = vmatpush2.bf16.msra.mxu0 %v3795
    %4779 = vmatprep.subr.bf16.mxu0 %v3792
    %4780 = vmatpush2.bf16.msra.mxu0 %v3791
    %4781 = vmatprep.subr.bf16.mxu0 %v3788
    %4782 = vmatpush2.bf16.msra.mxu0 %v3787
    %4783 = vmatprep.mubr.bf16.mxu0 %v2002
    %4784 = vmatmul.mubr.bf16.gmra.mxu0 %v2001
    %v4785 = vpop.f32.mrf.mxu0
    %v4786 = vadd.f32 %v4713, %v4785
    %v4787 = vpop.f32.mrf.mxu0
    %v4788 = vadd.f32 %v4715, %v4787
    %v4789 = vpop.f32.mrf.mxu0
    %v4790 = vadd.f32 %v4717, %v4789
    %v4791 = vpop.f32.mrf.mxu0
    %v4792 = vadd.f32 %v4719, %v4791
    %4793 = vmatprep.mubr.bf16.mxu0 %v2008
    %4794 = vmatmul.mubr.bf16.gmra.mxu0 %v2007
    %v4795 = vpop.f32.mrf.mxu0
    %v4796 = vadd.f32 %v4723, %v4795
    %v4797 = vpop.f32.mrf.mxu0
    %v4798 = vadd.f32 %v4725, %v4797
    %v4799 = vpop.f32.mrf.mxu0
    %v4800 = vadd.f32 %v4727, %v4799
    %v4801 = vpop.f32.mrf.mxu0
    %v4802 = vadd.f32 %v4729, %v4801
    %4803 = vmatprep.mubr.bf16.mxu0 %v2014
    %4804 = vmatmul.mubr.bf16.gmra.mxu0 %v2013
    %v4805 = vpop.f32.mrf.mxu0
    %v4806 = vadd.f32 %v4733, %v4805
    %v4807 = vpop.f32.mrf.mxu0
    %v4808 = vadd.f32 %v4735, %v4807
    %v4809 = vpop.f32.mrf.mxu0
    %v4810 = vadd.f32 %v4737, %v4809
    %v4811 = vpop.f32.mrf.mxu0
    %v4812 = vadd.f32 %v4739, %v4811
    %4813 = vmatprep.mubr.bf16.mxu0 %v2020
    %4814 = vmatmul.mubr.bf16.gmra.mxu0 %v2019
    %v4815 = vpop.f32.mrf.mxu0
    %v4816 = vadd.f32 %v4743, %v4815
    %v4817 = vpop.f32.mrf.mxu0
    %v4818 = vadd.f32 %v4745, %v4817
    %v4819 = vpop.f32.mrf.mxu0
    %v4820 = vadd.f32 %v4747, %v4819
    %v4821 = vpop.f32.mrf.mxu0
    %v4822 = vadd.f32 %v4749, %v4821
    %4823 = vdwg.mxu0
    %4824 = vmatprep.subr.bf16.mxu0 %v3848
    %4825 = vmatpush1.bf16.msra.mxu0 %v3847
    %4826 = vmatprep.subr.bf16.mxu0 %v3844
    %4827 = vmatpush1.bf16.msra.mxu0 %v3843
    %4828 = vmatprep.subr.bf16.mxu0 %v3840
    %4829 = vmatpush1.bf16.msra.mxu0 %v3839
    %4830 = vmatprep.subr.bf16.mxu0 %v3836
    %4831 = vmatpush1.bf16.msra.mxu0 %v3835
    %4832 = vmatprep.subr.bf16.mxu0 %v3832
    %4833 = vmatpush1.bf16.msra.mxu0 %v3831
    %4834 = vmatprep.subr.bf16.mxu0 %v3828
    %4835 = vmatpush1.bf16.msra.mxu0 %v3827
    %4836 = vmatprep.subr.bf16.mxu0 %v3824
    %4837 = vmatpush1.bf16.msra.mxu0 %v3823
    %4838 = vmatprep.subr.bf16.mxu0 %v3820
    %4839 = vmatpush1.bf16.msra.mxu0 %v3819
    %4840 = vmatprep.subr.bf16.mxu0 %v3880
    %4841 = vmatpush2.bf16.msra.mxu0 %v3879
    %4842 = vmatprep.subr.bf16.mxu0 %v3876
    %4843 = vmatpush2.bf16.msra.mxu0 %v3875
    %4844 = vmatprep.subr.bf16.mxu0 %v3872
    %4845 = vmatpush2.bf16.msra.mxu0 %v3871
    %4846 = vmatprep.subr.bf16.mxu0 %v3868
    %4847 = vmatpush2.bf16.msra.mxu0 %v3867
    %4848 = vmatprep.subr.bf16.mxu0 %v3864
    %4849 = vmatpush2.bf16.msra.mxu0 %v3863
    %4850 = vmatprep.subr.bf16.mxu0 %v3860
    %4851 = vmatpush2.bf16.msra.mxu0 %v3859
    %4852 = vmatprep.subr.bf16.mxu0 %v3856
    %4853 = vmatpush2.bf16.msra.mxu0 %v3855
    %4854 = vmatprep.subr.bf16.mxu0 %v3852
    %4855 = vmatpush2.bf16.msra.mxu0 %v3851
    %4856 = vmatprep.mubr.bf16.mxu0 %v2004
    %4857 = vmatmul.mubr.bf16.gmra.mxu0 %v2003
    %v4858 = vpop.f32.mrf.mxu0
    %v4859 = vadd.f32 %v4786, %v4858
    %v4860 = vpop.f32.mrf.mxu0
    %v4861 = vadd.f32 %v4788, %v4860
    %v4862 = vpop.f32.mrf.mxu0
    %v4863 = vadd.f32 %v4790, %v4862
    %v4864 = vpop.f32.mrf.mxu0
    %v4865 = vadd.f32 %v4792, %v4864
    %4866 = vmatprep.mubr.bf16.mxu0 %v2010
    %4867 = vmatmul.mubr.bf16.gmra.mxu0 %v2009
    %v4868 = vpop.f32.mrf.mxu0
    %v4869 = vadd.f32 %v4796, %v4868
    %v4870 = vpop.f32.mrf.mxu0
    %v4871 = vadd.f32 %v4798, %v4870
    %v4872 = vpop.f32.mrf.mxu0
    %v4873 = vadd.f32 %v4800, %v4872
    %v4874 = vpop.f32.mrf.mxu0
    %v4875 = vadd.f32 %v4802, %v4874
    %4876 = vmatprep.mubr.bf16.mxu0 %v2016
    %4877 = vmatmul.mubr.bf16.gmra.mxu0 %v2015
    %v4878 = vpop.f32.mrf.mxu0
    %v4879 = vadd.f32 %v4806, %v4878
    %v4880 = vpop.f32.mrf.mxu0
    %v4881 = vadd.f32 %v4808, %v4880
    %v4882 = vpop.f32.mrf.mxu0
    %v4883 = vadd.f32 %v4810, %v4882
    %v4884 = vpop.f32.mrf.mxu0
    %v4885 = vadd.f32 %v4812, %v4884
    %4886 = vmatprep.mubr.bf16.mxu0 %v2022
    %4887 = vmatmul.mubr.bf16.gmra.mxu0 %v2021
    %v4888 = vpop.f32.mrf.mxu0
    %v4889 = vadd.f32 %v4816, %v4888
    %v4890 = vpop.f32.mrf.mxu0
    %v4891 = vadd.f32 %v4818, %v4890
    %v4892 = vpop.f32.mrf.mxu0
    %v4893 = vadd.f32 %v4820, %v4892
    %v4894 = vpop.f32.mrf.mxu0
    %v4895 = vadd.f32 %v4822, %v4894
    %4896 = vdwg.mxu0
    %4897 = vmatprep.subr.bf16.mxu0 %v3912
    %4898 = vmatpush1.bf16.msra.mxu0 %v3911
    %4899 = vmatprep.subr.bf16.mxu0 %v3908
    %4900 = vmatpush1.bf16.msra.mxu0 %v3907
    %4901 = vmatprep.subr.bf16.mxu0 %v3904
    %4902 = vmatpush1.bf16.msra.mxu0 %v3903
    %4903 = vmatprep.subr.bf16.mxu0 %v3900
    %4904 = vmatpush1.bf16.msra.mxu0 %v3899
    %4905 = vmatprep.subr.bf16.mxu0 %v3896
    %4906 = vmatpush1.bf16.msra.mxu0 %v3895
    %4907 = vmatprep.subr.bf16.mxu0 %v3892
    %4908 = vmatpush1.bf16.msra.mxu0 %v3891
    %4909 = vmatprep.subr.bf16.mxu0 %v3888
    %4910 = vmatpush1.bf16.msra.mxu0 %v3887
    %4911 = vmatprep.subr.bf16.mxu0 %v3884
    %4912 = vmatpush1.bf16.msra.mxu0 %v3883
    %4913 = vmatprep.subr.bf16.mxu0 %v3944
    %4914 = vmatpush2.bf16.msra.mxu0 %v3943
    %4915 = vmatprep.subr.bf16.mxu0 %v3940
    %4916 = vmatpush2.bf16.msra.mxu0 %v3939
    %4917 = vmatprep.subr.bf16.mxu0 %v3936
    %4918 = vmatpush2.bf16.msra.mxu0 %v3935
    %4919 = vmatprep.subr.bf16.mxu0 %v3932
    %4920 = vmatpush2.bf16.msra.mxu0 %v3931
    %4921 = vmatprep.subr.bf16.mxu0 %v3928
    %4922 = vmatpush2.bf16.msra.mxu0 %v3927
    %4923 = vmatprep.subr.bf16.mxu0 %v3924
    %4924 = vmatpush2.bf16.msra.mxu0 %v3923
    %4925 = vmatprep.subr.bf16.mxu0 %v3920
    %4926 = vmatpush2.bf16.msra.mxu0 %v3919
    %4927 = vmatprep.subr.bf16.mxu0 %v3916
    %4928 = vmatpush2.bf16.msra.mxu0 %v3915
    %4929 = vmatprep.mubr.bf16.mxu0 %v2006
    %4930 = vmatmul.mubr.bf16.gmra.mxu0 %v2005
    %v4931 = vpop.f32.mrf.mxu0
    %v4932 = vadd.f32 %v4859, %v4931
    %v4933 = vpop.f32.mrf.mxu0
    %v4934 = vadd.f32 %v4861, %v4933
    %v4935 = vpop.f32.mrf.mxu0
    %v4936 = vadd.f32 %v4863, %v4935
    %v4937 = vpop.f32.mrf.mxu0
    %v4938 = vadd.f32 %v4865, %v4937
    %4939 = vmatprep.mubr.bf16.mxu0 %v2012
    %4940 = vmatmul.mubr.bf16.gmra.mxu0 %v2011
    %v4941 = vpop.f32.mrf.mxu0
    %v4942 = vadd.f32 %v4869, %v4941
    %v4943 = vpop.f32.mrf.mxu0
    %v4944 = vadd.f32 %v4871, %v4943
    %v4945 = vpop.f32.mrf.mxu0
    %v4946 = vadd.f32 %v4873, %v4945
    %v4947 = vpop.f32.mrf.mxu0
    %v4948 = vadd.f32 %v4875, %v4947
    %4949 = vmatprep.mubr.bf16.mxu0 %v2018
    %4950 = vmatmul.mubr.bf16.gmra.mxu0 %v2017
    %v4951 = vpop.f32.mrf.mxu0
    %v4952 = vadd.f32 %v4879, %v4951
    %v4953 = vpop.f32.mrf.mxu0
    %v4954 = vadd.f32 %v4881, %v4953
    %v4955 = vpop.f32.mrf.mxu0
    %v4956 = vadd.f32 %v4883, %v4955
    %v4957 = vpop.f32.mrf.mxu0
    %v4958 = vadd.f32 %v4885, %v4957
    %4959 = vmatprep.mubr.bf16.mxu0 %v2024
    %4960 = vmatmul.mubr.bf16.gmra.mxu0 %v2023
    %v4961 = vpop.f32.mrf.mxu0
    %v4962 = vadd.f32 %v4889, %v4961
    %v4963 = vpop.f32.mrf.mxu0
    %v4964 = vadd.f32 %v4891, %v4963
    %v4965 = vpop.f32.mrf.mxu0
    %v4966 = vadd.f32 %v4893, %v4965
    %v4967 = vpop.f32.mrf.mxu0
    %v4968 = vadd.f32 %v4895, %v4967
    %4969 = vdwg.mxu0
    %4970 = vmatprep.subr.bf16.mxu0 %v3976
    %4971 = vmatpush1.bf16.msra.mxu0 %v3975
    %4972 = vmatprep.subr.bf16.mxu0 %v3972
    %4973 = vmatpush1.bf16.msra.mxu0 %v3971
    %4974 = vmatprep.subr.bf16.mxu0 %v3968
    %4975 = vmatpush1.bf16.msra.mxu0 %v3967
    %4976 = vmatprep.subr.bf16.mxu0 %v3964
    %4977 = vmatpush1.bf16.msra.mxu0 %v3963
    %4978 = vmatprep.subr.bf16.mxu0 %v3960
    %4979 = vmatpush1.bf16.msra.mxu0 %v3959
    %4980 = vmatprep.subr.bf16.mxu0 %v3956
    %4981 = vmatpush1.bf16.msra.mxu0 %v3955
    %4982 = vmatprep.subr.bf16.mxu0 %v3952
    %4983 = vmatpush1.bf16.msra.mxu0 %v3951
    %4984 = vmatprep.subr.bf16.mxu0 %v3948
    %4985 = vmatpush1.bf16.msra.mxu0 %v3947
    %4986 = vmatprep.subr.bf16.mxu0 0
    %4987 = vmatpush2.bf16.msra.mxu0 0
    %4988 = vmatprep.subr.bf16.mxu0 0
    %4989 = vmatpush2.bf16.msra.mxu0 0
    %4990 = vmatprep.subr.bf16.mxu0 0
    %4991 = vmatpush2.bf16.msra.mxu0 0
    %4992 = vmatprep.subr.bf16.mxu0 0
    %4993 = vmatpush2.bf16.msra.mxu0 0
    %4994 = vmatprep.subr.bf16.mxu0 0
    %4995 = vmatpush2.bf16.msra.mxu0 0
    %4996 = vmatprep.subr.bf16.mxu0 0
    %4997 = vmatpush2.bf16.msra.mxu0 0
    %4998 = vmatprep.subr.bf16.mxu0 0
    %4999 = vmatpush2.bf16.msra.mxu0 0
    %5000 = vmatprep.subr.bf16.mxu0 0
    %5001 = vmatpush2.bf16.msra.mxu0 0
    %5002 = vmatprep.mubr.bf16.mxu0 0
    %5003 = vmatmul.mubr.bf16.gmra.mxu0 %v2007
    %v5004 = vpop.f32.mrf.mxu0
    %v5005 = vadd.f32 %v4932, %v5004
    %v5006 = vpop.f32.mrf.mxu0
    %v5007 = vadd.f32 %v4934, %v5006
    %v5008 = vpop.f32.mrf.mxu0
    %v5009 = vadd.f32 %v4936, %v5008
    %v5010 = vpop.f32.mrf.mxu0
    %v5011 = vadd.f32 %v4938, %v5010
    %5012 = vmatprep.mubr.bf16.mxu0 0
    %5013 = vmatmul.mubr.bf16.gmra.mxu0 %v2013
    %v5014 = vpop.f32.mrf.mxu0
    %v5015 = vadd.f32 %v4942, %v5014
    %v5016 = vpop.f32.mrf.mxu0
    %v5017 = vadd.f32 %v4944, %v5016
    %v5018 = vpop.f32.mrf.mxu0
    %v5019 = vadd.f32 %v4946, %v5018
    %v5020 = vpop.f32.mrf.mxu0
    %v5021 = vadd.f32 %v4948, %v5020
    %5022 = vmatprep.mubr.bf16.mxu0 0
    %5023 = vmatmul.mubr.bf16.gmra.mxu0 %v2019
    %v5024 = vpop.f32.mrf.mxu0
    %v5025 = vadd.f32 %v4952, %v5024
    %v5026 = vpop.f32.mrf.mxu0
    %v5027 = vadd.f32 %v4954, %v5026
    %v5028 = vpop.f32.mrf.mxu0
    %v5029 = vadd.f32 %v4956, %v5028
    %v5030 = vpop.f32.mrf.mxu0
    %v5031 = vadd.f32 %v4958, %v5030
    %5032 = vmatprep.mubr.bf16.mxu0 0
    %5033 = vmatmul.mubr.bf16.gmra.mxu0 %v2025
    %v5034 = vpop.f32.mrf.mxu0
    %v5035 = vadd.f32 %v4962, %v5034
    %v5036 = vpop.f32.mrf.mxu0
    %v5037 = vadd.f32 %v4964, %v5036
    %v5038 = vpop.f32.mrf.mxu0
    %v5039 = vadd.f32 %v4966, %v5038
    %v5040 = vpop.f32.mrf.mxu0
    %v5041 = vadd.f32 %v4968, %v5040
    %5042 = vdwg.mxu0
    %5043 = vmatprep.subr.bf16.mxu0 %v3530
    %5044 = vmatpush1.bf16.msra.mxu0 %v3529
    %5045 = vmatprep.subr.bf16.mxu0 %v3526
    %5046 = vmatpush1.bf16.msra.mxu0 %v3525
    %5047 = vmatprep.subr.bf16.mxu0 %v3522
    %5048 = vmatpush1.bf16.msra.mxu0 %v3521
    %5049 = vmatprep.subr.bf16.mxu0 %v3518
    %5050 = vmatpush1.bf16.msra.mxu0 %v3517
    %5051 = vmatprep.subr.bf16.mxu0 %v3514
    %5052 = vmatpush1.bf16.msra.mxu0 %v3513
    %5053 = vmatprep.subr.bf16.mxu0 %v3510
    %5054 = vmatpush1.bf16.msra.mxu0 %v3509
    %5055 = vmatprep.subr.bf16.mxu0 %v3506
    %5056 = vmatpush1.bf16.msra.mxu0 %v3505
    %5057 = vmatprep.subr.bf16.mxu0 %v3502
    %5058 = vmatpush1.bf16.msra.mxu0 %v3501
    %5059 = vmatprep.subr.bf16.mxu0 %v3562
    %5060 = vmatpush2.bf16.msra.mxu0 %v3561
    %5061 = vmatprep.subr.bf16.mxu0 %v3558
    %5062 = vmatpush2.bf16.msra.mxu0 %v3557
    %5063 = vmatprep.subr.bf16.mxu0 %v3554
    %5064 = vmatpush2.bf16.msra.mxu0 %v3553
    %5065 = vmatprep.subr.bf16.mxu0 %v3550
    %5066 = vmatpush2.bf16.msra.mxu0 %v3549
    %5067 = vmatprep.subr.bf16.mxu0 %v3546
    %5068 = vmatpush2.bf16.msra.mxu0 %v3545
    %5069 = vmatprep.subr.bf16.mxu0 %v3542
    %5070 = vmatpush2.bf16.msra.mxu0 %v3541
    %5071 = vmatprep.subr.bf16.mxu0 %v3538
    %5072 = vmatpush2.bf16.msra.mxu0 %v3537
    %5073 = vmatprep.subr.bf16.mxu0 %v3534
    %5074 = vmatpush2.bf16.msra.mxu0 %v3533
    %5075 = vmatprep.mubr.bf16.mxu0 %v1994
    %5076 = vmatmul.mubr.bf16.gmra.mxu0 %v1993
    %v5077 = vpop.f32.mrf.mxu0
    %v5078 = vadd.f32 %v1984, %v5077
    %v5079 = vpop.f32.mrf.mxu0
    %v5080 = vadd.f32 %v1988, %v5079
    %v5081 = vpop.f32.mrf.mxu0
    %v5082 = vadd.f32 %v1984, %v5081
    %v5083 = vpop.f32.mrf.mxu0
    %v5084 = vadd.f32 %v1988, %v5083
    %5085 = vmatprep.mubr.bf16.mxu0 %v2000
    %5086 = vmatmul.mubr.bf16.gmra.mxu0 %v1999
    %v5087 = vpop.f32.mrf.mxu0
    %v5088 = vadd.f32 %v1984, %v5087
    %v5089 = vpop.f32.mrf.mxu0
    %v5090 = vadd.f32 %v1988, %v5089
    %v5091 = vpop.f32.mrf.mxu0
    %v5092 = vadd.f32 %v1984, %v5091
    %v5093 = vpop.f32.mrf.mxu0
    %v5094 = vadd.f32 %v1988, %v5093
    %5095 = vmatprep.mubr.bf16.mxu0 %v2006
    %5096 = vmatmul.mubr.bf16.gmra.mxu0 %v2005
    %v5097 = vpop.f32.mrf.mxu0
    %v5098 = vadd.f32 %v1984, %v5097
    %v5099 = vpop.f32.mrf.mxu0
    %v5100 = vadd.f32 %v1988, %v5099
    %v5101 = vpop.f32.mrf.mxu0
    %v5102 = vadd.f32 %v1984, %v5101
    %v5103 = vpop.f32.mrf.mxu0
    %v5104 = vadd.f32 %v1988, %v5103
    %5105 = vmatprep.mubr.bf16.mxu0 %v2012
    %5106 = vmatmul.mubr.bf16.gmra.mxu0 %v2011
    %v5107 = vpop.f32.mrf.mxu0
    %v5108 = vadd.f32 %v1984, %v5107
    %v5109 = vpop.f32.mrf.mxu0
    %v5110 = vadd.f32 %v1988, %v5109
    %v5111 = vpop.f32.mrf.mxu0
    %v5112 = vadd.f32 %v1984, %v5111
    %v5113 = vpop.f32.mrf.mxu0
    %v5114 = vadd.f32 %v1988, %v5113
    %5115 = vdwg.mxu0
    %5116 = vmatprep.subr.bf16.mxu0 %v3594
    %5117 = vmatpush1.bf16.msra.mxu0 %v3593
    %5118 = vmatprep.subr.bf16.mxu0 %v3590
    %5119 = vmatpush1.bf16.msra.mxu0 %v3589
    %5120 = vmatprep.subr.bf16.mxu0 %v3586
    %5121 = vmatpush1.bf16.msra.mxu0 %v3585
    %5122 = vmatprep.subr.bf16.mxu0 %v3582
    %5123 = vmatpush1.bf16.msra.mxu0 %v3581
    %5124 = vmatprep.subr.bf16.mxu0 %v3578
    %5125 = vmatpush1.bf16.msra.mxu0 %v3577
    %5126 = vmatprep.subr.bf16.mxu0 %v3574
    %5127 = vmatpush1.bf16.msra.mxu0 %v3573
    %5128 = vmatprep.subr.bf16.mxu0 %v3570
    %5129 = vmatpush1.bf16.msra.mxu0 %v3569
    %5130 = vmatprep.subr.bf16.mxu0 %v3566
    %5131 = vmatpush1.bf16.msra.mxu0 %v3565
    %5132 = vmatprep.subr.bf16.mxu0 %v3626
    %5133 = vmatpush2.bf16.msra.mxu0 %v3625
    %5134 = vmatprep.subr.bf16.mxu0 %v3622
    %5135 = vmatpush2.bf16.msra.mxu0 %v3621
    %5136 = vmatprep.subr.bf16.mxu0 %v3618
    %5137 = vmatpush2.bf16.msra.mxu0 %v3617
    %5138 = vmatprep.subr.bf16.mxu0 %v3614
    %5139 = vmatpush2.bf16.msra.mxu0 %v3613
    %5140 = vmatprep.subr.bf16.mxu0 %v3610
    %5141 = vmatpush2.bf16.msra.mxu0 %v3609
    %5142 = vmatprep.subr.bf16.mxu0 %v3606
    %5143 = vmatpush2.bf16.msra.mxu0 %v3605
    %5144 = vmatprep.subr.bf16.mxu0 %v3602
    %5145 = vmatpush2.bf16.msra.mxu0 %v3601
    %5146 = vmatprep.subr.bf16.mxu0 %v3598
    %5147 = vmatpush2.bf16.msra.mxu0 %v3597
    %5148 = vmatprep.mubr.bf16.mxu0 %v1996
    %5149 = vmatmul.mubr.bf16.gmra.mxu0 %v1995
    %v5150 = vpop.f32.mrf.mxu0
    %v5151 = vadd.f32 %v5078, %v5150
    %v5152 = vpop.f32.mrf.mxu0
    %v5153 = vadd.f32 %v5080, %v5152
    %v5154 = vpop.f32.mrf.mxu0
    %v5155 = vadd.f32 %v5082, %v5154
    %v5156 = vpop.f32.mrf.mxu0
    %v5157 = vadd.f32 %v5084, %v5156
    %5158 = vmatprep.mubr.bf16.mxu0 %v2002
    %5159 = vmatmul.mubr.bf16.gmra.mxu0 %v2001
    %v5160 = vpop.f32.mrf.mxu0
    %v5161 = vadd.f32 %v5088, %v5160
    %v5162 = vpop.f32.mrf.mxu0
    %v5163 = vadd.f32 %v5090, %v5162
    %v5164 = vpop.f32.mrf.mxu0
    %v5165 = vadd.f32 %v5092, %v5164
    %v5166 = vpop.f32.mrf.mxu0
    %v5167 = vadd.f32 %v5094, %v5166
    %5168 = vmatprep.mubr.bf16.mxu0 %v2008
    %5169 = vmatmul.mubr.bf16.gmra.mxu0 %v2007
    %v5170 = vpop.f32.mrf.mxu0
    %v5171 = vadd.f32 %v5098, %v5170
    %v5172 = vpop.f32.mrf.mxu0
    %v5173 = vadd.f32 %v5100, %v5172
    %v5174 = vpop.f32.mrf.mxu0
    %v5175 = vadd.f32 %v5102, %v5174
    %v5176 = vpop.f32.mrf.mxu0
    %v5177 = vadd.f32 %v5104, %v5176
    %5178 = vmatprep.mubr.bf16.mxu0 %v2014
    %5179 = vmatmul.mubr.bf16.gmra.mxu0 %v2013
    %v5180 = vpop.f32.mrf.mxu0
    %v5181 = vadd.f32 %v5108, %v5180
    %v5182 = vpop.f32.mrf.mxu0
    %v5183 = vadd.f32 %v5110, %v5182
    %v5184 = vpop.f32.mrf.mxu0
    %v5185 = vadd.f32 %v5112, %v5184
    %v5186 = vpop.f32.mrf.mxu0
    %v5187 = vadd.f32 %v5114, %v5186
    %5188 = vdwg.mxu0
    %5189 = vmatprep.subr.bf16.mxu0 %v3658
    %5190 = vmatpush1.bf16.msra.mxu0 %v3657
    %5191 = vmatprep.subr.bf16.mxu0 %v3654
    %5192 = vmatpush1.bf16.msra.mxu0 %v3653
    %5193 = vmatprep.subr.bf16.mxu0 %v3650
    %5194 = vmatpush1.bf16.msra.mxu0 %v3649
    %5195 = vmatprep.subr.bf16.mxu0 %v3646
    %5196 = vmatpush1.bf16.msra.mxu0 %v3645
    %5197 = vmatprep.subr.bf16.mxu0 %v3642
    %5198 = vmatpush1.bf16.msra.mxu0 %v3641
    %5199 = vmatprep.subr.bf16.mxu0 %v3638
    %5200 = vmatpush1.bf16.msra.mxu0 %v3637
    %5201 = vmatprep.subr.bf16.mxu0 %v3634
    %5202 = vmatpush1.bf16.msra.mxu0 %v3633
    %5203 = vmatprep.subr.bf16.mxu0 %v3630
    %5204 = vmatpush1.bf16.msra.mxu0 %v3629
    %5205 = vmatprep.subr.bf16.mxu0 %v3690
    %5206 = vmatpush2.bf16.msra.mxu0 %v3689
    %5207 = vmatprep.subr.bf16.mxu0 %v3686
    %5208 = vmatpush2.bf16.msra.mxu0 %v3685
    %5209 = vmatprep.subr.bf16.mxu0 %v3682
    %5210 = vmatpush2.bf16.msra.mxu0 %v3681
    %5211 = vmatprep.subr.bf16.mxu0 %v3678
    %5212 = vmatpush2.bf16.msra.mxu0 %v3677
    %5213 = vmatprep.subr.bf16.mxu0 %v3674
    %5214 = vmatpush2.bf16.msra.mxu0 %v3673
    %5215 = vmatprep.subr.bf16.mxu0 %v3670
    %5216 = vmatpush2.bf16.msra.mxu0 %v3669
    %5217 = vmatprep.subr.bf16.mxu0 %v3666
    %5218 = vmatpush2.bf16.msra.mxu0 %v3665
    %5219 = vmatprep.subr.bf16.mxu0 %v3662
    %5220 = vmatpush2.bf16.msra.mxu0 %v3661
    %5221 = vmatprep.mubr.bf16.mxu0 %v1998
    %5222 = vmatmul.mubr.bf16.gmra.mxu0 %v1997
    %v5223 = vpop.f32.mrf.mxu0
    %v5224 = vadd.f32 %v5151, %v5223
    %v5225 = vpop.f32.mrf.mxu0
    %v5226 = vadd.f32 %v5153, %v5225
    %v5227 = vpop.f32.mrf.mxu0
    %v5228 = vadd.f32 %v5155, %v5227
    %v5229 = vpop.f32.mrf.mxu0
    %v5230 = vadd.f32 %v5157, %v5229
    %5231 = vmatprep.mubr.bf16.mxu0 %v2004
    %5232 = vmatmul.mubr.bf16.gmra.mxu0 %v2003
    %v5233 = vpop.f32.mrf.mxu0
    %v5234 = vadd.f32 %v5161, %v5233
    %v5235 = vpop.f32.mrf.mxu0
    %v5236 = vadd.f32 %v5163, %v5235
    %v5237 = vpop.f32.mrf.mxu0
    %v5238 = vadd.f32 %v5165, %v5237
    %v5239 = vpop.f32.mrf.mxu0
    %v5240 = vadd.f32 %v5167, %v5239
    %5241 = vmatprep.mubr.bf16.mxu0 %v2010
    %5242 = vmatmul.mubr.bf16.gmra.mxu0 %v2009
    %v5243 = vpop.f32.mrf.mxu0
    %v5244 = vadd.f32 %v5171, %v5243
    %v5245 = vpop.f32.mrf.mxu0
    %v5246 = vadd.f32 %v5173, %v5245
    %v5247 = vpop.f32.mrf.mxu0
    %v5248 = vadd.f32 %v5175, %v5247
    %v5249 = vpop.f32.mrf.mxu0
    %v5250 = vadd.f32 %v5177, %v5249
    %5251 = vmatprep.mubr.bf16.mxu0 %v2016
    %5252 = vmatmul.mubr.bf16.gmra.mxu0 %v2015
    %v5253 = vpop.f32.mrf.mxu0
    %v5254 = vadd.f32 %v5181, %v5253
    %v5255 = vpop.f32.mrf.mxu0
    %v5256 = vadd.f32 %v5183, %v5255
    %v5257 = vpop.f32.mrf.mxu0
    %v5258 = vadd.f32 %v5185, %v5257
    %v5259 = vpop.f32.mrf.mxu0
    %v5260 = vadd.f32 %v5187, %v5259
    %5261 = vdwg.mxu0
    %5262 = vmatprep.subr.bf16.mxu0 %v3722
    %5263 = vmatpush1.bf16.msra.mxu0 %v3721
    %5264 = vmatprep.subr.bf16.mxu0 %v3718
    %5265 = vmatpush1.bf16.msra.mxu0 %v3717
    %5266 = vmatprep.subr.bf16.mxu0 %v3714
    %5267 = vmatpush1.bf16.msra.mxu0 %v3713
    %5268 = vmatprep.subr.bf16.mxu0 %v3710
    %5269 = vmatpush1.bf16.msra.mxu0 %v3709
    %5270 = vmatprep.subr.bf16.mxu0 %v3706
    %5271 = vmatpush1.bf16.msra.mxu0 %v3705
    %5272 = vmatprep.subr.bf16.mxu0 %v3702
    %5273 = vmatpush1.bf16.msra.mxu0 %v3701
    %5274 = vmatprep.subr.bf16.mxu0 %v3698
    %5275 = vmatpush1.bf16.msra.mxu0 %v3697
    %5276 = vmatprep.subr.bf16.mxu0 %v3694
    %5277 = vmatpush1.bf16.msra.mxu0 %v3693
    %5278 = vmatprep.subr.bf16.mxu0 %v3754
    %5279 = vmatpush2.bf16.msra.mxu0 %v3753
    %5280 = vmatprep.subr.bf16.mxu0 %v3750
    %5281 = vmatpush2.bf16.msra.mxu0 %v3749
    %5282 = vmatprep.subr.bf16.mxu0 %v3746
    %5283 = vmatpush2.bf16.msra.mxu0 %v3745
    %5284 = vmatprep.subr.bf16.mxu0 %v3742
    %5285 = vmatpush2.bf16.msra.mxu0 %v3741
    %5286 = vmatprep.subr.bf16.mxu0 %v3738
    %5287 = vmatpush2.bf16.msra.mxu0 %v3737
    %5288 = vmatprep.subr.bf16.mxu0 %v3734
    %5289 = vmatpush2.bf16.msra.mxu0 %v3733
    %5290 = vmatprep.subr.bf16.mxu0 %v3730
    %5291 = vmatpush2.bf16.msra.mxu0 %v3729
    %5292 = vmatprep.subr.bf16.mxu0 %v3726
    %5293 = vmatpush2.bf16.msra.mxu0 %v3725
    %5294 = vmatprep.mubr.bf16.mxu0 %v2000
    %5295 = vmatmul.mubr.bf16.gmra.mxu0 %v1999
    %v5296 = vpop.f32.mrf.mxu0
    %v5297 = vadd.f32 %v5224, %v5296
    %v5298 = vpop.f32.mrf.mxu0
    %v5299 = vadd.f32 %v5226, %v5298
    %v5300 = vpop.f32.mrf.mxu0
    %v5301 = vadd.f32 %v5228, %v5300
    %v5302 = vpop.f32.mrf.mxu0
    %v5303 = vadd.f32 %v5230, %v5302
    %5304 = vmatprep.mubr.bf16.mxu0 %v2006
    %5305 = vmatmul.mubr.bf16.gmra.mxu0 %v2005
    %v5306 = vpop.f32.mrf.mxu0
    %v5307 = vadd.f32 %v5234, %v5306
    %v5308 = vpop.f32.mrf.mxu0
    %v5309 = vadd.f32 %v5236, %v5308
    %v5310 = vpop.f32.mrf.mxu0
    %v5311 = vadd.f32 %v5238, %v5310
    %v5312 = vpop.f32.mrf.mxu0
    %v5313 = vadd.f32 %v5240, %v5312
    %5314 = vmatprep.mubr.bf16.mxu0 %v2012
    %5315 = vmatmul.mubr.bf16.gmra.mxu0 %v2011
    %v5316 = vpop.f32.mrf.mxu0
    %v5317 = vadd.f32 %v5244, %v5316
    %v5318 = vpop.f32.mrf.mxu0
    %v5319 = vadd.f32 %v5246, %v5318
    %v5320 = vpop.f32.mrf.mxu0
    %v5321 = vadd.f32 %v5248, %v5320
    %v5322 = vpop.f32.mrf.mxu0
    %v5323 = vadd.f32 %v5250, %v5322
    %5324 = vmatprep.mubr.bf16.mxu0 %v2018
    %5325 = vmatmul.mubr.bf16.gmra.mxu0 %v2017
    %v5326 = vpop.f32.mrf.mxu0
    %v5327 = vadd.f32 %v5254, %v5326
    %v5328 = vpop.f32.mrf.mxu0
    %v5329 = vadd.f32 %v5256, %v5328
    %v5330 = vpop.f32.mrf.mxu0
    %v5331 = vadd.f32 %v5258, %v5330
    %v5332 = vpop.f32.mrf.mxu0
    %v5333 = vadd.f32 %v5260, %v5332
    %5334 = vdwg.mxu0
    %5335 = vmatprep.subr.bf16.mxu0 %v3786
    %5336 = vmatpush1.bf16.msra.mxu0 %v3785
    %5337 = vmatprep.subr.bf16.mxu0 %v3782
    %5338 = vmatpush1.bf16.msra.mxu0 %v3781
    %5339 = vmatprep.subr.bf16.mxu0 %v3778
    %5340 = vmatpush1.bf16.msra.mxu0 %v3777
    %5341 = vmatprep.subr.bf16.mxu0 %v3774
    %5342 = vmatpush1.bf16.msra.mxu0 %v3773
    %5343 = vmatprep.subr.bf16.mxu0 %v3770
    %5344 = vmatpush1.bf16.msra.mxu0 %v3769
    %5345 = vmatprep.subr.bf16.mxu0 %v3766
    %5346 = vmatpush1.bf16.msra.mxu0 %v3765
    %5347 = vmatprep.subr.bf16.mxu0 %v3762
    %5348 = vmatpush1.bf16.msra.mxu0 %v3761
    %5349 = vmatprep.subr.bf16.mxu0 %v3758
    %5350 = vmatpush1.bf16.msra.mxu0 %v3757
    %5351 = vmatprep.subr.bf16.mxu0 %v3818
    %5352 = vmatpush2.bf16.msra.mxu0 %v3817
    %5353 = vmatprep.subr.bf16.mxu0 %v3814
    %5354 = vmatpush2.bf16.msra.mxu0 %v3813
    %5355 = vmatprep.subr.bf16.mxu0 %v3810
    %5356 = vmatpush2.bf16.msra.mxu0 %v3809
    %5357 = vmatprep.subr.bf16.mxu0 %v3806
    %5358 = vmatpush2.bf16.msra.mxu0 %v3805
    %5359 = vmatprep.subr.bf16.mxu0 %v3802
    %5360 = vmatpush2.bf16.msra.mxu0 %v3801
    %5361 = vmatprep.subr.bf16.mxu0 %v3798
    %5362 = vmatpush2.bf16.msra.mxu0 %v3797
    %5363 = vmatprep.subr.bf16.mxu0 %v3794
    %5364 = vmatpush2.bf16.msra.mxu0 %v3793
    %5365 = vmatprep.subr.bf16.mxu0 %v3790
    %5366 = vmatpush2.bf16.msra.mxu0 %v3789
    %5367 = vmatprep.mubr.bf16.mxu0 %v2002
    %5368 = vmatmul.mubr.bf16.gmra.mxu0 %v2001
    %v5369 = vpop.f32.mrf.mxu0
    %v5370 = vadd.f32 %v5297, %v5369
    %v5371 = vpop.f32.mrf.mxu0
    %v5372 = vadd.f32 %v5299, %v5371
    %v5373 = vpop.f32.mrf.mxu0
    %v5374 = vadd.f32 %v5301, %v5373
    %v5375 = vpop.f32.mrf.mxu0
    %v5376 = vadd.f32 %v5303, %v5375
    %5377 = vmatprep.mubr.bf16.mxu0 %v2008
    %5378 = vmatmul.mubr.bf16.gmra.mxu0 %v2007
    %v5379 = vpop.f32.mrf.mxu0
    %v5380 = vadd.f32 %v5307, %v5379
    %v5381 = vpop.f32.mrf.mxu0
    %v5382 = vadd.f32 %v5309, %v5381
    %v5383 = vpop.f32.mrf.mxu0
    %v5384 = vadd.f32 %v5311, %v5383
    %v5385 = vpop.f32.mrf.mxu0
    %v5386 = vadd.f32 %v5313, %v5385
    %5387 = vmatprep.mubr.bf16.mxu0 %v2014
    %5388 = vmatmul.mubr.bf16.gmra.mxu0 %v2013
    %v5389 = vpop.f32.mrf.mxu0
    %v5390 = vadd.f32 %v5317, %v5389
    %v5391 = vpop.f32.mrf.mxu0
    %v5392 = vadd.f32 %v5319, %v5391
    %v5393 = vpop.f32.mrf.mxu0
    %v5394 = vadd.f32 %v5321, %v5393
    %v5395 = vpop.f32.mrf.mxu0
    %v5396 = vadd.f32 %v5323, %v5395
    %5397 = vmatprep.mubr.bf16.mxu0 %v2020
    %5398 = vmatmul.mubr.bf16.gmra.mxu0 %v2019
    %v5399 = vpop.f32.mrf.mxu0
    %v5400 = vadd.f32 %v5327, %v5399
    %v5401 = vpop.f32.mrf.mxu0
    %v5402 = vadd.f32 %v5329, %v5401
    %v5403 = vpop.f32.mrf.mxu0
    %v5404 = vadd.f32 %v5331, %v5403
    %v5405 = vpop.f32.mrf.mxu0
    %v5406 = vadd.f32 %v5333, %v5405
    %5407 = vdwg.mxu0
    %5408 = vmatprep.subr.bf16.mxu0 %v3850
    %5409 = vmatpush1.bf16.msra.mxu0 %v3849
    %5410 = vmatprep.subr.bf16.mxu0 %v3846
    %5411 = vmatpush1.bf16.msra.mxu0 %v3845
    %5412 = vmatprep.subr.bf16.mxu0 %v3842
    %5413 = vmatpush1.bf16.msra.mxu0 %v3841
    %5414 = vmatprep.subr.bf16.mxu0 %v3838
    %5415 = vmatpush1.bf16.msra.mxu0 %v3837
    %5416 = vmatprep.subr.bf16.mxu0 %v3834
    %5417 = vmatpush1.bf16.msra.mxu0 %v3833
    %5418 = vmatprep.subr.bf16.mxu0 %v3830
    %5419 = vmatpush1.bf16.msra.mxu0 %v3829
    %5420 = vmatprep.subr.bf16.mxu0 %v3826
    %5421 = vmatpush1.bf16.msra.mxu0 %v3825
    %5422 = vmatprep.subr.bf16.mxu0 %v3822
    %5423 = vmatpush1.bf16.msra.mxu0 %v3821
    %5424 = vmatprep.subr.bf16.mxu0 %v3882
    %5425 = vmatpush2.bf16.msra.mxu0 %v3881
    %5426 = vmatprep.subr.bf16.mxu0 %v3878
    %5427 = vmatpush2.bf16.msra.mxu0 %v3877
    %5428 = vmatprep.subr.bf16.mxu0 %v3874
    %5429 = vmatpush2.bf16.msra.mxu0 %v3873
    %5430 = vmatprep.subr.bf16.mxu0 %v3870
    %5431 = vmatpush2.bf16.msra.mxu0 %v3869
    %5432 = vmatprep.subr.bf16.mxu0 %v3866
    %5433 = vmatpush2.bf16.msra.mxu0 %v3865
    %5434 = vmatprep.subr.bf16.mxu0 %v3862
    %5435 = vmatpush2.bf16.msra.mxu0 %v3861
    %5436 = vmatprep.subr.bf16.mxu0 %v3858
    %5437 = vmatpush2.bf16.msra.mxu0 %v3857
    %5438 = vmatprep.subr.bf16.mxu0 %v3854
    %5439 = vmatpush2.bf16.msra.mxu0 %v3853
    %5440 = vmatprep.mubr.bf16.mxu0 %v2004
    %5441 = vmatmul.mubr.bf16.gmra.mxu0 %v2003
    %v5442 = vpop.f32.mrf.mxu0
    %v5443 = vadd.f32 %v5370, %v5442
    %v5444 = vpop.f32.mrf.mxu0
    %v5445 = vadd.f32 %v5372, %v5444
    %v5446 = vpop.f32.mrf.mxu0
    %v5447 = vadd.f32 %v5374, %v5446
    %v5448 = vpop.f32.mrf.mxu0
    %v5449 = vadd.f32 %v5376, %v5448
    %5450 = vmatprep.mubr.bf16.mxu0 %v2010
    %5451 = vmatmul.mubr.bf16.gmra.mxu0 %v2009
    %v5452 = vpop.f32.mrf.mxu0
    %v5453 = vadd.f32 %v5380, %v5452
    %v5454 = vpop.f32.mrf.mxu0
    %v5455 = vadd.f32 %v5382, %v5454
    %v5456 = vpop.f32.mrf.mxu0
    %v5457 = vadd.f32 %v5384, %v5456
    %v5458 = vpop.f32.mrf.mxu0
    %v5459 = vadd.f32 %v5386, %v5458
    %5460 = vmatprep.mubr.bf16.mxu0 %v2016
    %5461 = vmatmul.mubr.bf16.gmra.mxu0 %v2015
    %v5462 = vpop.f32.mrf.mxu0
    %v5463 = vadd.f32 %v5390, %v5462
    %v5464 = vpop.f32.mrf.mxu0
    %v5465 = vadd.f32 %v5392, %v5464
    %v5466 = vpop.f32.mrf.mxu0
    %v5467 = vadd.f32 %v5394, %v5466
    %v5468 = vpop.f32.mrf.mxu0
    %v5469 = vadd.f32 %v5396, %v5468
    %5470 = vmatprep.mubr.bf16.mxu0 %v2022
    %5471 = vmatmul.mubr.bf16.gmra.mxu0 %v2021
    %v5472 = vpop.f32.mrf.mxu0
    %v5473 = vadd.f32 %v5400, %v5472
    %v5474 = vpop.f32.mrf.mxu0
    %v5475 = vadd.f32 %v5402, %v5474
    %v5476 = vpop.f32.mrf.mxu0
    %v5477 = vadd.f32 %v5404, %v5476
    %v5478 = vpop.f32.mrf.mxu0
    %v5479 = vadd.f32 %v5406, %v5478
    %5480 = vdwg.mxu0
    %5481 = vmatprep.subr.bf16.mxu0 %v3914
    %5482 = vmatpush1.bf16.msra.mxu0 %v3913
    %5483 = vmatprep.subr.bf16.mxu0 %v3910
    %5484 = vmatpush1.bf16.msra.mxu0 %v3909
    %5485 = vmatprep.subr.bf16.mxu0 %v3906
    %5486 = vmatpush1.bf16.msra.mxu0 %v3905
    %5487 = vmatprep.subr.bf16.mxu0 %v3902
    %5488 = vmatpush1.bf16.msra.mxu0 %v3901
    %5489 = vmatprep.subr.bf16.mxu0 %v3898
    %5490 = vmatpush1.bf16.msra.mxu0 %v3897
    %5491 = vmatprep.subr.bf16.mxu0 %v3894
    %5492 = vmatpush1.bf16.msra.mxu0 %v3893
    %5493 = vmatprep.subr.bf16.mxu0 %v3890
    %5494 = vmatpush1.bf16.msra.mxu0 %v3889
    %5495 = vmatprep.subr.bf16.mxu0 %v3886
    %5496 = vmatpush1.bf16.msra.mxu0 %v3885
    %5497 = vmatprep.subr.bf16.mxu0 %v3946
    %5498 = vmatpush2.bf16.msra.mxu0 %v3945
    %5499 = vmatprep.subr.bf16.mxu0 %v3942
    %5500 = vmatpush2.bf16.msra.mxu0 %v3941
    %5501 = vmatprep.subr.bf16.mxu0 %v3938
    %5502 = vmatpush2.bf16.msra.mxu0 %v3937
    %5503 = vmatprep.subr.bf16.mxu0 %v3934
    %5504 = vmatpush2.bf16.msra.mxu0 %v3933
    %5505 = vmatprep.subr.bf16.mxu0 %v3930
    %5506 = vmatpush2.bf16.msra.mxu0 %v3929
    %5507 = vmatprep.subr.bf16.mxu0 %v3926
    %5508 = vmatpush2.bf16.msra.mxu0 %v3925
    %5509 = vmatprep.subr.bf16.mxu0 %v3922
    %5510 = vmatpush2.bf16.msra.mxu0 %v3921
    %5511 = vmatprep.subr.bf16.mxu0 %v3918
    %5512 = vmatpush2.bf16.msra.mxu0 %v3917
    %5513 = vmatprep.mubr.bf16.mxu0 %v2006
    %5514 = vmatmul.mubr.bf16.gmra.mxu0 %v2005
    %v5515 = vpop.f32.mrf.mxu0
    %v5516 = vadd.f32 %v5443, %v5515
    %v5517 = vpop.f32.mrf.mxu0
    %v5518 = vadd.f32 %v5445, %v5517
    %v5519 = vpop.f32.mrf.mxu0
    %v5520 = vadd.f32 %v5447, %v5519
    %v5521 = vpop.f32.mrf.mxu0
    %v5522 = vadd.f32 %v5449, %v5521
    %5523 = vmatprep.mubr.bf16.mxu0 %v2012
    %5524 = vmatmul.mubr.bf16.gmra.mxu0 %v2011
    %v5525 = vpop.f32.mrf.mxu0
    %v5526 = vadd.f32 %v5453, %v5525
    %v5527 = vpop.f32.mrf.mxu0
    %v5528 = vadd.f32 %v5455, %v5527
    %v5529 = vpop.f32.mrf.mxu0
    %v5530 = vadd.f32 %v5457, %v5529
    %v5531 = vpop.f32.mrf.mxu0
    %v5532 = vadd.f32 %v5459, %v5531
    %5533 = vmatprep.mubr.bf16.mxu0 %v2018
    %5534 = vmatmul.mubr.bf16.gmra.mxu0 %v2017
    %v5535 = vpop.f32.mrf.mxu0
    %v5536 = vadd.f32 %v5463, %v5535
    %v5537 = vpop.f32.mrf.mxu0
    %v5538 = vadd.f32 %v5465, %v5537
    %v5539 = vpop.f32.mrf.mxu0
    %v5540 = vadd.f32 %v5467, %v5539
    %v5541 = vpop.f32.mrf.mxu0
    %v5542 = vadd.f32 %v5469, %v5541
    %5543 = vmatprep.mubr.bf16.mxu0 %v2024
    %5544 = vmatmul.mubr.bf16.gmra.mxu0 %v2023
    %v5545 = vpop.f32.mrf.mxu0
    %v5546 = vadd.f32 %v5473, %v5545
    %v5547 = vpop.f32.mrf.mxu0
    %v5548 = vadd.f32 %v5475, %v5547
    %v5549 = vpop.f32.mrf.mxu0
    %v5550 = vadd.f32 %v5477, %v5549
    %v5551 = vpop.f32.mrf.mxu0
    %v5552 = vadd.f32 %v5479, %v5551
    %5553 = vdwg.mxu0
    %5554 = vmatprep.subr.bf16.mxu0 %v3978
    %5555 = vmatpush1.bf16.msra.mxu0 %v3977
    %5556 = vmatprep.subr.bf16.mxu0 %v3974
    %5557 = vmatpush1.bf16.msra.mxu0 %v3973
    %5558 = vmatprep.subr.bf16.mxu0 %v3970
    %5559 = vmatpush1.bf16.msra.mxu0 %v3969
    %5560 = vmatprep.subr.bf16.mxu0 %v3966
    %5561 = vmatpush1.bf16.msra.mxu0 %v3965
    %5562 = vmatprep.subr.bf16.mxu0 %v3962
    %5563 = vmatpush1.bf16.msra.mxu0 %v3961
    %5564 = vmatprep.subr.bf16.mxu0 %v3958
    %5565 = vmatpush1.bf16.msra.mxu0 %v3957
    %5566 = vmatprep.subr.bf16.mxu0 %v3954
    %5567 = vmatpush1.bf16.msra.mxu0 %v3953
    %5568 = vmatprep.subr.bf16.mxu0 %v3950
    %5569 = vmatpush1.bf16.msra.mxu0 %v3949
    %5570 = vmatprep.subr.bf16.mxu0 0
    %5571 = vmatpush2.bf16.msra.mxu0 0
    %5572 = vmatprep.subr.bf16.mxu0 0
    %5573 = vmatpush2.bf16.msra.mxu0 0
    %5574 = vmatprep.subr.bf16.mxu0 0
    %5575 = vmatpush2.bf16.msra.mxu0 0
    %5576 = vmatprep.subr.bf16.mxu0 0
    %5577 = vmatpush2.bf16.msra.mxu0 0
    %5578 = vmatprep.subr.bf16.mxu0 0
    %5579 = vmatpush2.bf16.msra.mxu0 0
    %5580 = vmatprep.subr.bf16.mxu0 0
    %5581 = vmatpush2.bf16.msra.mxu0 0
    %5582 = vmatprep.subr.bf16.mxu0 0
    %5583 = vmatpush2.bf16.msra.mxu0 0
    %5584 = vmatprep.subr.bf16.mxu0 0
    %5585 = vmatpush2.bf16.msra.mxu0 0
    %5586 = vmatprep.mubr.bf16.mxu0 0
    %5587 = vmatmul.mubr.bf16.gmra.mxu0 %v2007
    %v5588 = vpop.f32.mrf.mxu0
    %v5589 = vadd.f32 %v5516, %v5588
    %v5590 = vpop.f32.mrf.mxu0
    %v5591 = vadd.f32 %v5518, %v5590
    %v5592 = vpop.f32.mrf.mxu0
    %v5593 = vadd.f32 %v5520, %v5592
    %v5594 = vpop.f32.mrf.mxu0
    %v5595 = vadd.f32 %v5522, %v5594
    %5596 = vmatprep.mubr.bf16.mxu0 0
    %5597 = vmatmul.mubr.bf16.gmra.mxu0 %v2013
    %v5598 = vpop.f32.mrf.mxu0
    %v5599 = vadd.f32 %v5526, %v5598
    %v5600 = vpop.f32.mrf.mxu0
    %v5601 = vadd.f32 %v5528, %v5600
    %v5602 = vpop.f32.mrf.mxu0
    %v5603 = vadd.f32 %v5530, %v5602
    %v5604 = vpop.f32.mrf.mxu0
    %v5605 = vadd.f32 %v5532, %v5604
    %5606 = vmatprep.mubr.bf16.mxu0 0
    %5607 = vmatmul.mubr.bf16.gmra.mxu0 %v2019
    %v5608 = vpop.f32.mrf.mxu0
    %v5609 = vadd.f32 %v5536, %v5608
    %v5610 = vpop.f32.mrf.mxu0
    %v5611 = vadd.f32 %v5538, %v5610
    %v5612 = vpop.f32.mrf.mxu0
    %v5613 = vadd.f32 %v5540, %v5612
    %v5614 = vpop.f32.mrf.mxu0
    %v5615 = vadd.f32 %v5542, %v5614
    %5616 = vmatprep.mubr.bf16.mxu0 0
    %5617 = vmatmul.mubr.bf16.gmra.mxu0 %v2025
    %v5618 = vpop.f32.mrf.mxu0
    %v5619 = vadd.f32 %v5546, %v5618
    %v5620 = vpop.f32.mrf.mxu0
    %v5621 = vadd.f32 %v5548, %v5620
    %v5622 = vpop.f32.mrf.mxu0
    %v5623 = vadd.f32 %v5550, %v5622
    %v5624 = vpop.f32.mrf.mxu0
    %v5625 = vadd.f32 %v5552, %v5624
    %5626 = vdwg.mxu0
    %v5627 = vmax.f32 %v5005, 0.0
    %v5628 = vmax.f32 %v5007, 0.0
    %v5629 = vmax.f32 %v5589, 0.0
    %v5630 = vmax.f32 %v5591, 0.0
    %v5631 = vmax.f32 %v5009, 0.0
    %v5632 = vmax.f32 %v5011, 0.0
    %v5633 = vmax.f32 %v5593, 0.0
    %v5634 = vmax.f32 %v5595, 0.0
    %v5635 = vmax.f32 %v5015, 0.0
    %v5636 = vmax.f32 %v5017, 0.0
    %v5637 = vmax.f32 %v5599, 0.0
    %v5638 = vmax.f32 %v5601, 0.0
    %v5639 = vmax.f32 %v5019, 0.0
    %v5640 = vmax.f32 %v5021, 0.0
    %v5641 = vmax.f32 %v5603, 0.0
    %v5642 = vmax.f32 %v5605, 0.0
    %v5643 = vmax.f32 %v5025, 0.0
    %v5644 = vmax.f32 %v5027, 0.0
    %v5645 = vmax.f32 %v5609, 0.0
    %v5646 = vmax.f32 %v5611, 0.0
    %v5647 = vmax.f32 %v5029, 0.0
    %v5648 = vmax.f32 %v5031, 0.0
    %v5649 = vmax.f32 %v5613, 0.0
    %v5650 = vmax.f32 %v5615, 0.0
    %v5651 = vmax.f32 %v5035, 0.0
    %v5652 = vmax.f32 %v5037, 0.0
    %v5653 = vmax.f32 %v5619, 0.0
    %v5654 = vmax.f32 %v5621, 0.0
    %v5655 = vmax.f32 %v5039, 0.0
    %v5656 = vmax.f32 %v5041, 0.0
    %v5657 = vmax.f32 %v5623, 0.0
    %v5658 = vmax.f32 %v5625, 0.0
    %v5659 = vmax.f32 %v5627, %v5631
    %v5660 = vmax.f32 %v5628, %v5632
    %v5661 = vmax.f32 %v5629, %v5633
    %v5662 = vmax.f32 %v5630, %v5634
    %v5663 = vmax.f32 %v5635, %v5639
    %v5664 = vmax.f32 %v5636, %v5640
    %v5665 = vmax.f32 %v5637, %v5641
    %v5666 = vmax.f32 %v5638, %v5642
    %v5667 = vmax.f32 %v5643, %v5647
    %v5668 = vmax.f32 %v5644, %v5648
    %v5669 = vmax.f32 %v5645, %v5649
    %v5670 = vmax.f32 %v5646, %v5650
    %v5671 = vmax.f32 %v5651, %v5655
    %v5672 = vmax.f32 %v5652, %v5656
    %v5673 = vmax.f32 %v5653, %v5657
    %v5674 = vmax.f32 %v5654, %v5658
    %v5675 = vmax.f32 %v5659, %v5661
    %v5676 = vmax.f32 %v5660, %v5662
    %v5677 = vmax.f32 %v5663, %v5665
    %v5678 = vmax.f32 %v5664, %v5666
    %v5679 = vmax.f32 %v5667, %v5669
    %v5680 = vmax.f32 %v5668, %v5670
    %v5681 = vmax.f32 %v5671, %v5673
    %v5682 = vmax.f32 %v5672, %v5674
    %v5683 = vpack.c.bf16 %v5675, %v5675
    %v5684 = vpack.c.bf16 %v5676, %v5676
    %v5685 = vpack.c.bf16 %v5677, %v5677
    %v5686 = vpack.c.bf16 %v5678, %v5678
    %v5687 = vpack.c.bf16 %v5679, %v5679
    %v5688 = vpack.c.bf16 %v5680, %v5680
    %v5689 = vpack.c.bf16 %v5681, %v5681
    %v5690 = vpack.c.bf16 %v5682, %v5682
    %v5691 = vld [vmem:[#allocation9] sm:$0xff]
    %v5692 = vld [vmem:[#allocation9 + $0x8] sm:$0xff]
    %v5693 = vld [vmem:[#allocation9 + $0x10] sm:$0xff]
    %v5694 = vld [vmem:[#allocation9 + $0x18] sm:$0xff]
    %v5695 = vld [vmem:[#allocation9 + $0x20] sm:$0xff]
    %v5696 = vld [vmem:[#allocation9 + $0x28] sm:$0xff]
    %v5697 = vld [vmem:[#allocation9 + $0x30] sm:$0xff]
    %v5698 = vld [vmem:[#allocation9 + $0x38] sm:$0xff]
    %v5699 = vld [vmem:[#allocation9 + $0x40] sm:$0xff]
    %v5700 = vld [vmem:[#allocation9 + $0x48] sm:$0xff]
    %v5701 = vld [vmem:[#allocation9 + $0x50] sm:$0xff]
    %v5702 = vld [vmem:[#allocation9 + $0x58] sm:$0xff]
    %v5703 = vld [vmem:[#allocation9 + $0x60] sm:$0xff]
    %v5704 = vld [vmem:[#allocation9 + $0x68] sm:$0xff]
    %v5705 = vld [vmem:[#allocation9 + $0x70] sm:$0xff]
    %v5706 = vld [vmem:[#allocation9 + $0x78] sm:$0xff]
    %v5707 = vld [vmem:[#allocation9 + $0x80] sm:$0xff]
    %v5708 = vld [vmem:[#allocation9 + $0x88] sm:$0xff]
    %v5709 = vld [vmem:[#allocation9 + $0x90] sm:$0xff]
    %v5710 = vld [vmem:[#allocation9 + $0x98] sm:$0xff]
    %v5711 = vld [vmem:[#allocation9 + $0xa0] sm:$0xff]
    %v5712 = vld [vmem:[#allocation9 + $0xa8] sm:$0xff]
    %v5713 = vld [vmem:[#allocation9 + $0xb0] sm:$0xff]
    %v5714 = vld [vmem:[#allocation9 + $0xb8] sm:$0xff]
    %v5715 = vld [vmem:[#allocation9 + $0xc0] sm:$0xff]
    %v5716 = vld [vmem:[#allocation9 + $0xc8] sm:$0xff]
    %v5717 = vld [vmem:[#allocation9 + $0xd0] sm:$0xff]
    %v5718 = vld [vmem:[#allocation9 + $0xd8] sm:$0xff]
    %v5719 = vld [vmem:[#allocation9 + $0xe0] sm:$0xff]
    %v5720 = vld [vmem:[#allocation9 + $0xe8] sm:$0xff]
    %v5721 = vld [vmem:[#allocation9 + $0xf0] sm:$0xff]
    %v5722 = vld [vmem:[#allocation9 + $0xf8] sm:$0xff]
    %v5723 = vld [vmem:[#allocation9 + $0x100] sm:$0xff]
    %v5724 = vld [vmem:[#allocation9 + $0x108] sm:$0xff]
    %v5725 = vld [vmem:[#allocation9 + $0x110] sm:$0xff]
    %v5726 = vld [vmem:[#allocation9 + $0x118] sm:$0xff]
    %v5727 = vld [vmem:[#allocation9 + $0x120] sm:$0xff]
    %v5728 = vld [vmem:[#allocation9 + $0x128] sm:$0xff]
    %v5729 = vld [vmem:[#allocation9 + $0x130] sm:$0xff]
    %v5730 = vld [vmem:[#allocation9 + $0x138] sm:$0xff]
    %v5731 = vld [vmem:[#allocation9 + $0x140] sm:$0xff]
    %v5732 = vld [vmem:[#allocation9 + $0x148] sm:$0xff]
    %v5733 = vld [vmem:[#allocation9 + $0x150] sm:$0xff]
    %v5734 = vld [vmem:[#allocation9 + $0x158] sm:$0xff]
    %v5735 = vld [vmem:[#allocation9 + $0x160] sm:$0xff]
    %v5736 = vld [vmem:[#allocation9 + $0x168] sm:$0xff]
    %v5737 = vld [vmem:[#allocation9 + $0x170] sm:$0xff]
    %v5738 = vld [vmem:[#allocation9 + $0x178] sm:$0xff]
    %v5739 = vld [vmem:[#allocation9 + $0x180] sm:$0xff]
    %v5740 = vld [vmem:[#allocation9 + $0x188] sm:$0xff]
    %v5741 = vld [vmem:[#allocation9 + $0x190] sm:$0xff]
    %v5742 = vld [vmem:[#allocation9 + $0x198] sm:$0xff]
    %v5743 = vld [vmem:[#allocation9 + $0x1a0] sm:$0xff]
    %v5744 = vld [vmem:[#allocation9 + $0x1a8] sm:$0xff]
    %v5745 = vld [vmem:[#allocation9 + $0x1b0] sm:$0xff]
    %v5746 = vld [vmem:[#allocation9 + $0x1b8] sm:$0xff]
    %v5747 = vld [vmem:[#allocation9 + $0x1c0] sm:$0xff]
    %v5748 = vld [vmem:[#allocation9 + $0x1c8] sm:$0xff]
    %v5749 = vld [vmem:[#allocation9 + $0x1d0] sm:$0xff]
    %v5750 = vld [vmem:[#allocation9 + $0x1d8] sm:$0xff]
    %v5751 = vld [vmem:[#allocation9 + $0x1e0] sm:$0xff]
    %v5752 = vld [vmem:[#allocation9 + $0x1e8] sm:$0xff]
    %v5753 = vld [vmem:[#allocation9 + $0x1f0] sm:$0xff]
    %v5754 = vld [vmem:[#allocation9 + $0x1f8] sm:$0xff]
    %v5755 = vld [vmem:[#allocation9 + $0x200] sm:$0xff]
    %v5756 = vld [vmem:[#allocation9 + $0x208] sm:$0xff]
    %v5757 = vld [vmem:[#allocation9 + $0x210] sm:$0xff]
    %v5758 = vld [vmem:[#allocation9 + $0x218] sm:$0xff]
    %v5759 = vld [vmem:[#allocation9 + $0x220] sm:$0xff]
    %v5760 = vld [vmem:[#allocation9 + $0x228] sm:$0xff]
    %v5761 = vld [vmem:[#allocation9 + $0x230] sm:$0xff]
    %v5762 = vld [vmem:[#allocation9 + $0x238] sm:$0xff]
    %v5763 = vld [vmem:[#allocation9 + $0x240] sm:$0xff]
    %v5764 = vld [vmem:[#allocation9 + $0x248] sm:$0xff]
    %v5765 = vld [vmem:[#allocation9 + $0x250] sm:$0xff]
    %v5766 = vld [vmem:[#allocation9 + $0x258] sm:$0xff]
    %v5767 = vld [vmem:[#allocation9 + $0x260] sm:$0xff]
    %v5768 = vld [vmem:[#allocation9 + $0x268] sm:$0xff]
    %v5769 = vld [vmem:[#allocation9 + $0x270] sm:$0xff]
    %v5770 = vld [vmem:[#allocation9 + $0x278] sm:$0xff]
    %v5771 = vld [vmem:[#allocation9 + $0x280] sm:$0xff]
    %v5772 = vld [vmem:[#allocation9 + $0x288] sm:$0xff]
    %v5773 = vld [vmem:[#allocation9 + $0x290] sm:$0xff]
    %v5774 = vld [vmem:[#allocation9 + $0x298] sm:$0xff]
    %v5775 = vld [vmem:[#allocation9 + $0x2a0] sm:$0xff]
    %v5776 = vld [vmem:[#allocation9 + $0x2a8] sm:$0xff]
    %v5777 = vld [vmem:[#allocation9 + $0x2b0] sm:$0xff]
    %v5778 = vld [vmem:[#allocation9 + $0x2b8] sm:$0xff]
    %v5779 = vld [vmem:[#allocation9 + $0x2c0] sm:$0xff]
    %v5780 = vld [vmem:[#allocation9 + $0x2c8] sm:$0xff]
    %v5781 = vld [vmem:[#allocation9 + $0x2d0] sm:$0xff]
    %v5782 = vld [vmem:[#allocation9 + $0x2d8] sm:$0xff]
    %v5783 = vld [vmem:[#allocation9 + $0x2e0] sm:$0xff]
    %v5784 = vld [vmem:[#allocation9 + $0x2e8] sm:$0xff]
    %v5785 = vld [vmem:[#allocation9 + $0x2f0] sm:$0xff]
    %v5786 = vld [vmem:[#allocation9 + $0x2f8] sm:$0xff]
    %v5787 = vld [vmem:[#allocation9 + $0x300] sm:$0xff]
    %v5788 = vld [vmem:[#allocation9 + $0x308] sm:$0xff]
    %v5789 = vld [vmem:[#allocation9 + $0x310] sm:$0xff]
    %v5790 = vld [vmem:[#allocation9 + $0x318] sm:$0xff]
    %v5791 = vld [vmem:[#allocation9 + $0x320] sm:$0xff]
    %v5792 = vld [vmem:[#allocation9 + $0x328] sm:$0xff]
    %v5793 = vld [vmem:[#allocation9 + $0x330] sm:$0xff]
    %v5794 = vld [vmem:[#allocation9 + $0x338] sm:$0xff]
    %v5795 = vld [vmem:[#allocation9 + $0x340] sm:$0xff]
    %v5796 = vld [vmem:[#allocation9 + $0x348] sm:$0xff]
    %v5797 = vld [vmem:[#allocation9 + $0x350] sm:$0xff]
    %v5798 = vld [vmem:[#allocation9 + $0x358] sm:$0xff]
    %v5799 = vld [vmem:[#allocation9 + $0x360] sm:$0xff]
    %v5800 = vld [vmem:[#allocation9 + $0x368] sm:$0xff]
    %v5801 = vld [vmem:[#allocation9 + $0x370] sm:$0xff]
    %v5802 = vld [vmem:[#allocation9 + $0x378] sm:$0xff]
    %v5803 = vld [vmem:[#allocation9 + $0x380] sm:$0xff]
    %v5804 = vld [vmem:[#allocation9 + $0x388] sm:$0xff]
    %v5805 = vld [vmem:[#allocation9 + $0x390] sm:$0xff]
    %v5806 = vld [vmem:[#allocation9 + $0x398] sm:$0xff]
    %v5807 = vld [vmem:[#allocation9 + $0x3a0] sm:$0xff]
    %v5808 = vld [vmem:[#allocation9 + $0x3a8] sm:$0xff]
    %v5809 = vld [vmem:[#allocation9 + $0x3b0] sm:$0xff]
    %v5810 = vld [vmem:[#allocation9 + $0x3b8] sm:$0xff]
    %v5811 = vld [vmem:[#allocation9 + $0x3c0] sm:$0xff]
    %v5812 = vld [vmem:[#allocation9 + $0x3c8] sm:$0xff]
    %v5813 = vld [vmem:[#allocation9 + $0x3d0] sm:$0xff]
    %v5814 = vld [vmem:[#allocation9 + $0x3d8] sm:$0xff]
    %v5815 = vld [vmem:[#allocation9 + $0x3e0] sm:$0xff]
    %v5816 = vld [vmem:[#allocation9 + $0x3e8] sm:$0xff]
    %v5817 = vld [vmem:[#allocation9 + $0x3f0] sm:$0xff]
    %v5818 = vld [vmem:[#allocation9 + $0x3f8] sm:$0xff]
    %v5819 = vld [vmem:[#allocation9 + $0x400] sm:$0xff]
    %v5820 = vld [vmem:[#allocation9 + $0x408] sm:$0xff]
    %v5821 = vld [vmem:[#allocation9 + $0x410] sm:$0xff]
    %v5822 = vld [vmem:[#allocation9 + $0x418] sm:$0xff]
    %v5823 = vld [vmem:[#allocation9 + $0x420] sm:$0xff]
    %v5824 = vld [vmem:[#allocation9 + $0x428] sm:$0xff]
    %v5825 = vld [vmem:[#allocation9 + $0x430] sm:$0xff]
    %v5826 = vld [vmem:[#allocation9 + $0x438] sm:$0xff]
    %v5827 = vld [vmem:[#allocation9 + $0x440] sm:$0xff]
    %v5828 = vld [vmem:[#allocation9 + $0x448] sm:$0xff]
    %v5829 = vld [vmem:[#allocation9 + $0x450] sm:$0xff]
    %v5830 = vld [vmem:[#allocation9 + $0x458] sm:$0xff]
    %v5831 = vld [vmem:[#allocation9 + $0x460] sm:$0xff]
    %v5832 = vld [vmem:[#allocation9 + $0x468] sm:$0xff]
    %v5833 = vld [vmem:[#allocation9 + $0x470] sm:$0xff]
    %v5834 = vld [vmem:[#allocation9 + $0x478] sm:$0xff]
    %v5835 = vld [vmem:[#allocation9 + $0x480] sm:$0xff]
    %v5836 = vld [vmem:[#allocation9 + $0x488] sm:$0xff]
    %v5837 = vld [vmem:[#allocation9 + $0x490] sm:$0xff]
    %v5838 = vld [vmem:[#allocation9 + $0x498] sm:$0xff]
    %v5839 = vld [vmem:[#allocation9 + $0x4a0] sm:$0xff]
    %v5840 = vld [vmem:[#allocation9 + $0x4a8] sm:$0xff]
    %v5841 = vld [vmem:[#allocation9 + $0x4b0] sm:$0xff]
    %v5842 = vld [vmem:[#allocation9 + $0x4b8] sm:$0xff]
    %v5843 = vld [vmem:[#allocation9 + $0x4c0] sm:$0xff]
    %v5844 = vld [vmem:[#allocation9 + $0x4c8] sm:$0xff]
    %v5845 = vld [vmem:[#allocation9 + $0x4d0] sm:$0xff]
    %v5846 = vld [vmem:[#allocation9 + $0x4d8] sm:$0xff]
    %v5847 = vld [vmem:[#allocation9 + $0x4e0] sm:$0xff]
    %v5848 = vld [vmem:[#allocation9 + $0x4e8] sm:$0xff]
    %v5849 = vld [vmem:[#allocation9 + $0x4f0] sm:$0xff]
    %v5850 = vld [vmem:[#allocation9 + $0x4f8] sm:$0xff]
    %v5851 = vld [vmem:[#allocation9 + $0x500] sm:$0xff]
    %v5852 = vld [vmem:[#allocation9 + $0x508] sm:$0xff]
    %v5853 = vld [vmem:[#allocation9 + $0x510] sm:$0xff]
    %v5854 = vld [vmem:[#allocation9 + $0x518] sm:$0xff]
    %v5855 = vld [vmem:[#allocation9 + $0x520] sm:$0xff]
    %v5856 = vld [vmem:[#allocation9 + $0x528] sm:$0xff]
    %v5857 = vld [vmem:[#allocation9 + $0x530] sm:$0xff]
    %v5858 = vld [vmem:[#allocation9 + $0x538] sm:$0xff]
    %v5859 = vld [vmem:[#allocation9 + $0x540] sm:$0xff]
    %v5860 = vld [vmem:[#allocation9 + $0x548] sm:$0xff]
    %v5861 = vld [vmem:[#allocation9 + $0x550] sm:$0xff]
    %v5862 = vld [vmem:[#allocation9 + $0x558] sm:$0xff]
    %v5863 = vld [vmem:[#allocation9 + $0x560] sm:$0xff]
    %v5864 = vld [vmem:[#allocation9 + $0x568] sm:$0xff]
    %v5865 = vld [vmem:[#allocation9 + $0x570] sm:$0xff]
    %v5866 = vld [vmem:[#allocation9 + $0x578] sm:$0xff]
    %v5867 = vld [vmem:[#allocation9 + $0x580] sm:$0xff]
    %v5868 = vld [vmem:[#allocation9 + $0x588] sm:$0xff]
    %v5869 = vld [vmem:[#allocation9 + $0x590] sm:$0xff]
    %v5870 = vld [vmem:[#allocation9 + $0x598] sm:$0xff]
    %v5871 = vld [vmem:[#allocation9 + $0x5a0] sm:$0xff]
    %v5872 = vld [vmem:[#allocation9 + $0x5a8] sm:$0xff]
    %v5873 = vld [vmem:[#allocation9 + $0x5b0] sm:$0xff]
    %v5874 = vld [vmem:[#allocation9 + $0x5b8] sm:$0xff]
    %v5875 = vld [vmem:[#allocation9 + $0x5c0] sm:$0xff]
    %v5876 = vld [vmem:[#allocation9 + $0x5c8] sm:$0xff]
    %v5877 = vld [vmem:[#allocation9 + $0x5d0] sm:$0xff]
    %v5878 = vld [vmem:[#allocation9 + $0x5d8] sm:$0xff]
    %v5879 = vld [vmem:[#allocation9 + $0x5e0] sm:$0xff]
    %v5880 = vld [vmem:[#allocation9 + $0x5e8] sm:$0xff]
    %v5881 = vld [vmem:[#allocation9 + $0x5f0] sm:$0xff]
    %v5882 = vld [vmem:[#allocation9 + $0x5f8] sm:$0xff]
    %v5883 = vld [vmem:[#allocation9 + $0x600] sm:$0xff]
    %v5884 = vld [vmem:[#allocation9 + $0x608] sm:$0xff]
    %v5885 = vld [vmem:[#allocation9 + $0x610] sm:$0xff]
    %v5886 = vld [vmem:[#allocation9 + $0x618] sm:$0xff]
    %v5887 = vld [vmem:[#allocation9 + $0x620] sm:$0xff]
    %v5888 = vld [vmem:[#allocation9 + $0x628] sm:$0xff]
    %v5889 = vld [vmem:[#allocation9 + $0x630] sm:$0xff]
    %v5890 = vld [vmem:[#allocation9 + $0x638] sm:$0xff]
    %v5891 = vld [vmem:[#allocation9 + $0x640] sm:$0xff]
    %v5892 = vld [vmem:[#allocation9 + $0x648] sm:$0xff]
    %v5893 = vld [vmem:[#allocation9 + $0x650] sm:$0xff]
    %v5894 = vld [vmem:[#allocation9 + $0x658] sm:$0xff]
    %v5895 = vld [vmem:[#allocation9 + $0x660] sm:$0xff]
    %v5896 = vld [vmem:[#allocation9 + $0x668] sm:$0xff]
    %v5897 = vld [vmem:[#allocation9 + $0x670] sm:$0xff]
    %v5898 = vld [vmem:[#allocation9 + $0x678] sm:$0xff]
    %v5899 = vld [vmem:[#allocation9 + $0x680] sm:$0xff]
    %v5900 = vld [vmem:[#allocation9 + $0x688] sm:$0xff]
    %v5901 = vld [vmem:[#allocation9 + $0x690] sm:$0xff]
    %v5902 = vld [vmem:[#allocation9 + $0x698] sm:$0xff]
    %v5903 = vld [vmem:[#allocation9 + $0x6a0] sm:$0xff]
    %v5904 = vld [vmem:[#allocation9 + $0x6a8] sm:$0xff]
    %v5905 = vld [vmem:[#allocation9 + $0x6b0] sm:$0xff]
    %v5906 = vld [vmem:[#allocation9 + $0x6b8] sm:$0xff]
    %v5907 = vld [vmem:[#allocation9 + $0x6c0] sm:$0xff]
    %v5908 = vld [vmem:[#allocation9 + $0x6c8] sm:$0xff]
    %v5909 = vld [vmem:[#allocation9 + $0x6d0] sm:$0xff]
    %v5910 = vld [vmem:[#allocation9 + $0x6d8] sm:$0xff]
    %v5911 = vld [vmem:[#allocation9 + $0x6e0] sm:$0xff]
    %v5912 = vld [vmem:[#allocation9 + $0x6e8] sm:$0xff]
    %v5913 = vld [vmem:[#allocation9 + $0x6f0] sm:$0xff]
    %v5914 = vld [vmem:[#allocation9 + $0x6f8] sm:$0xff]
    %v5915 = vld [vmem:[#allocation9 + $0x700] sm:$0xff]
    %v5916 = vld [vmem:[#allocation9 + $0x708] sm:$0xff]
    %v5917 = vld [vmem:[#allocation9 + $0x710] sm:$0xff]
    %v5918 = vld [vmem:[#allocation9 + $0x718] sm:$0xff]
    %v5919 = vld [vmem:[#allocation9 + $0x720] sm:$0xff]
    %v5920 = vld [vmem:[#allocation9 + $0x728] sm:$0xff]
    %v5921 = vld [vmem:[#allocation9 + $0x730] sm:$0xff]
    %v5922 = vld [vmem:[#allocation9 + $0x738] sm:$0xff]
    %v5923 = vld [vmem:[#allocation9 + $0x740] sm:$0xff]
    %v5924 = vld [vmem:[#allocation9 + $0x748] sm:$0xff]
    %v5925 = vld [vmem:[#allocation9 + $0x750] sm:$0xff]
    %v5926 = vld [vmem:[#allocation9 + $0x758] sm:$0xff]
    %v5927 = vld [vmem:[#allocation9 + $0x760] sm:$0xff]
    %v5928 = vld [vmem:[#allocation9 + $0x768] sm:$0xff]
    %v5929 = vld [vmem:[#allocation9 + $0x770] sm:$0xff]
    %v5930 = vld [vmem:[#allocation9 + $0x778] sm:$0xff]
    %v5931 = vld [vmem:[#allocation9 + $0x780] sm:$0xff]
    %v5932 = vld [vmem:[#allocation9 + $0x788] sm:$0xff]
    %v5933 = vld [vmem:[#allocation9 + $0x790] sm:$0xff]
    %v5934 = vld [vmem:[#allocation9 + $0x798] sm:$0xff]
    %v5935 = vld [vmem:[#allocation9 + $0x7a0] sm:$0xff]
    %v5936 = vld [vmem:[#allocation9 + $0x7a8] sm:$0xff]
    %v5937 = vld [vmem:[#allocation9 + $0x7b0] sm:$0xff]
    %v5938 = vld [vmem:[#allocation9 + $0x7b8] sm:$0xff]
    %v5939 = vld [vmem:[#allocation9 + $0x7c0] sm:$0xff]
    %v5940 = vld [vmem:[#allocation9 + $0x7c8] sm:$0xff]
    %v5941 = vld [vmem:[#allocation9 + $0x7d0] sm:$0xff]
    %v5942 = vld [vmem:[#allocation9 + $0x7d8] sm:$0xff]
    %v5943 = vld [vmem:[#allocation9 + $0x7e0] sm:$0xff]
    %v5944 = vld [vmem:[#allocation9 + $0x7e8] sm:$0xff]
    %v5945 = vld [vmem:[#allocation9 + $0x7f0] sm:$0xff]
    %v5946 = vld [vmem:[#allocation9 + $0x7f8] sm:$0xff]
    %v5947 = vld [vmem:[#allocation10] sm:$0xf]
    %v5949 = vlaneseq
    %v5950 = vshrl.u32 %v5949, 7
    %v5951 = vsub.s32 0, %v5950
    %v5952 = vrot.slane %v5947, %v5951
    %v5953 = vlaneseq
    %v5954 = vshrl.u32 %v5953, 7
    %v5955 = vsub.s32 1, %v5954
    %v5956 = vrot.slane %v5947, %v5955
    %v5957 = vlaneseq
    %v5958 = vshrl.u32 %v5957, 7
    %v5959 = vsub.s32 2, %v5958
    %v5960 = vrot.slane %v5947, %v5959
    %v5961 = vlaneseq
    %v5962 = vshrl.u32 %v5961, 7
    %v5963 = vsub.s32 3, %v5962
    %v5964 = vrot.slane %v5947, %v5963
    %v6225 = vunpack.c.l.b16 %v5691
    %v6226 = vunpack.c.h.b16 %v5691
    %v6227 = vunpack.c.l.b16 %v5692
    %v6228 = vunpack.c.h.b16 %v5692
    %v6229 = vunpack.c.l.b16 %v5693
    %v6230 = vunpack.c.h.b16 %v5693
    %v6231 = vunpack.c.l.b16 %v5694
    %v6232 = vunpack.c.h.b16 %v5694
    %v6233 = vunpack.c.l.b16 %v5695
    %v6234 = vunpack.c.h.b16 %v5695
    %v6235 = vunpack.c.l.b16 %v5696
    %v6236 = vunpack.c.h.b16 %v5696
    %v6237 = vunpack.c.l.b16 %v5697
    %v6238 = vunpack.c.h.b16 %v5697
    %v6239 = vunpack.c.l.b16 %v5698
    %v6240 = vunpack.c.h.b16 %v5698
    %v6241 = vunpack.c.l.b16 %v5699
    %v6242 = vunpack.c.h.b16 %v5699
    %v6243 = vunpack.c.l.b16 %v5700
    %v6244 = vunpack.c.h.b16 %v5700
    %v6245 = vunpack.c.l.b16 %v5701
    %v6246 = vunpack.c.h.b16 %v5701
    %v6247 = vunpack.c.l.b16 %v5702
    %v6248 = vunpack.c.h.b16 %v5702
    %v6249 = vunpack.c.l.b16 %v5703
    %v6250 = vunpack.c.h.b16 %v5703
    %v6251 = vunpack.c.l.b16 %v5704
    %v6252 = vunpack.c.h.b16 %v5704
    %v6253 = vunpack.c.l.b16 %v5705
    %v6254 = vunpack.c.h.b16 %v5705
    %v6255 = vunpack.c.l.b16 %v5706
    %v6256 = vunpack.c.h.b16 %v5706
    %v6257 = vunpack.c.l.b16 %v5707
    %v6258 = vunpack.c.h.b16 %v5707
    %v6259 = vunpack.c.l.b16 %v5708
    %v6260 = vunpack.c.h.b16 %v5708
    %v6261 = vunpack.c.l.b16 %v5709
    %v6262 = vunpack.c.h.b16 %v5709
    %v6263 = vunpack.c.l.b16 %v5710
    %v6264 = vunpack.c.h.b16 %v5710
    %v6265 = vunpack.c.l.b16 %v5711
    %v6266 = vunpack.c.h.b16 %v5711
    %v6267 = vunpack.c.l.b16 %v5712
    %v6268 = vunpack.c.h.b16 %v5712
    %v6269 = vunpack.c.l.b16 %v5713
    %v6270 = vunpack.c.h.b16 %v5713
    %v6271 = vunpack.c.l.b16 %v5714
    %v6272 = vunpack.c.h.b16 %v5714
    %v6273 = vunpack.c.l.b16 %v5715
    %v6274 = vunpack.c.h.b16 %v5715
    %v6275 = vunpack.c.l.b16 %v5716
    %v6276 = vunpack.c.h.b16 %v5716
    %v6277 = vunpack.c.l.b16 %v5717
    %v6278 = vunpack.c.h.b16 %v5717
    %v6279 = vunpack.c.l.b16 %v5718
    %v6280 = vunpack.c.h.b16 %v5718
    %v6281 = vunpack.c.l.b16 %v5719
    %v6282 = vunpack.c.h.b16 %v5719
    %v6283 = vunpack.c.l.b16 %v5720
    %v6284 = vunpack.c.h.b16 %v5720
    %v6285 = vunpack.c.l.b16 %v5721
    %v6286 = vunpack.c.h.b16 %v5721
    %v6287 = vunpack.c.l.b16 %v5722
    %v6288 = vunpack.c.h.b16 %v5722
    %v6289 = vunpack.c.l.b16 %v5723
    %v6290 = vunpack.c.h.b16 %v5723
    %v6291 = vunpack.c.l.b16 %v5724
    %v6292 = vunpack.c.h.b16 %v5724
    %v6293 = vunpack.c.l.b16 %v5725
    %v6294 = vunpack.c.h.b16 %v5725
    %v6295 = vunpack.c.l.b16 %v5726
    %v6296 = vunpack.c.h.b16 %v5726
    %v6297 = vunpack.c.l.b16 %v5727
    %v6298 = vunpack.c.h.b16 %v5727
    %v6299 = vunpack.c.l.b16 %v5728
    %v6300 = vunpack.c.h.b16 %v5728
    %v6301 = vunpack.c.l.b16 %v5729
    %v6302 = vunpack.c.h.b16 %v5729
    %v6303 = vunpack.c.l.b16 %v5730
    %v6304 = vunpack.c.h.b16 %v5730
    %v6305 = vunpack.c.l.b16 %v5731
    %v6306 = vunpack.c.h.b16 %v5731
    %v6307 = vunpack.c.l.b16 %v5732
    %v6308 = vunpack.c.h.b16 %v5732
    %v6309 = vunpack.c.l.b16 %v5733
    %v6310 = vunpack.c.h.b16 %v5733
    %v6311 = vunpack.c.l.b16 %v5734
    %v6312 = vunpack.c.h.b16 %v5734
    %v6313 = vunpack.c.l.b16 %v5735
    %v6314 = vunpack.c.h.b16 %v5735
    %v6315 = vunpack.c.l.b16 %v5736
    %v6316 = vunpack.c.h.b16 %v5736
    %v6317 = vunpack.c.l.b16 %v5737
    %v6318 = vunpack.c.h.b16 %v5737
    %v6319 = vunpack.c.l.b16 %v5738
    %v6320 = vunpack.c.h.b16 %v5738
    %v6321 = vunpack.c.l.b16 %v5739
    %v6322 = vunpack.c.h.b16 %v5739
    %v6323 = vunpack.c.l.b16 %v5740
    %v6324 = vunpack.c.h.b16 %v5740
    %v6325 = vunpack.c.l.b16 %v5741
    %v6326 = vunpack.c.h.b16 %v5741
    %v6327 = vunpack.c.l.b16 %v5742
    %v6328 = vunpack.c.h.b16 %v5742
    %v6329 = vunpack.c.l.b16 %v5743
    %v6330 = vunpack.c.h.b16 %v5743
    %v6331 = vunpack.c.l.b16 %v5744
    %v6332 = vunpack.c.h.b16 %v5744
    %v6333 = vunpack.c.l.b16 %v5745
    %v6334 = vunpack.c.h.b16 %v5745
    %v6335 = vunpack.c.l.b16 %v5746
    %v6336 = vunpack.c.h.b16 %v5746
    %v6337 = vunpack.c.l.b16 %v5747
    %v6338 = vunpack.c.h.b16 %v5747
    %v6339 = vunpack.c.l.b16 %v5748
    %v6340 = vunpack.c.h.b16 %v5748
    %v6341 = vunpack.c.l.b16 %v5749
    %v6342 = vunpack.c.h.b16 %v5749
    %v6343 = vunpack.c.l.b16 %v5750
    %v6344 = vunpack.c.h.b16 %v5750
    %v6345 = vunpack.c.l.b16 %v5751
    %v6346 = vunpack.c.h.b16 %v5751
    %v6347 = vunpack.c.l.b16 %v5752
    %v6348 = vunpack.c.h.b16 %v5752
    %v6349 = vunpack.c.l.b16 %v5753
    %v6350 = vunpack.c.h.b16 %v5753
    %v6351 = vunpack.c.l.b16 %v5754
    %v6352 = vunpack.c.h.b16 %v5754
    %v6353 = vunpack.c.l.b16 %v5755
    %v6354 = vunpack.c.h.b16 %v5755
    %v6355 = vunpack.c.l.b16 %v5756
    %v6356 = vunpack.c.h.b16 %v5756
    %v6357 = vunpack.c.l.b16 %v5757
    %v6358 = vunpack.c.h.b16 %v5757
    %v6359 = vunpack.c.l.b16 %v5758
    %v6360 = vunpack.c.h.b16 %v5758
    %v6361 = vunpack.c.l.b16 %v5759
    %v6362 = vunpack.c.h.b16 %v5759
    %v6363 = vunpack.c.l.b16 %v5760
    %v6364 = vunpack.c.h.b16 %v5760
    %v6365 = vunpack.c.l.b16 %v5761
    %v6366 = vunpack.c.h.b16 %v5761
    %v6367 = vunpack.c.l.b16 %v5762
    %v6368 = vunpack.c.h.b16 %v5762
    %v6369 = vunpack.c.l.b16 %v5763
    %v6370 = vunpack.c.h.b16 %v5763
    %v6371 = vunpack.c.l.b16 %v5764
    %v6372 = vunpack.c.h.b16 %v5764
    %v6373 = vunpack.c.l.b16 %v5765
    %v6374 = vunpack.c.h.b16 %v5765
    %v6375 = vunpack.c.l.b16 %v5766
    %v6376 = vunpack.c.h.b16 %v5766
    %v6377 = vunpack.c.l.b16 %v5767
    %v6378 = vunpack.c.h.b16 %v5767
    %v6379 = vunpack.c.l.b16 %v5768
    %v6380 = vunpack.c.h.b16 %v5768
    %v6381 = vunpack.c.l.b16 %v5769
    %v6382 = vunpack.c.h.b16 %v5769
    %v6383 = vunpack.c.l.b16 %v5770
    %v6384 = vunpack.c.h.b16 %v5770
    %v6385 = vunpack.c.l.b16 %v5771
    %v6386 = vunpack.c.h.b16 %v5771
    %v6387 = vunpack.c.l.b16 %v5772
    %v6388 = vunpack.c.h.b16 %v5772
    %v6389 = vunpack.c.l.b16 %v5773
    %v6390 = vunpack.c.h.b16 %v5773
    %v6391 = vunpack.c.l.b16 %v5774
    %v6392 = vunpack.c.h.b16 %v5774
    %v6393 = vunpack.c.l.b16 %v5775
    %v6394 = vunpack.c.h.b16 %v5775
    %v6395 = vunpack.c.l.b16 %v5776
    %v6396 = vunpack.c.h.b16 %v5776
    %v6397 = vunpack.c.l.b16 %v5777
    %v6398 = vunpack.c.h.b16 %v5777
    %v6399 = vunpack.c.l.b16 %v5778
    %v6400 = vunpack.c.h.b16 %v5778
    %v6401 = vunpack.c.l.b16 %v5779
    %v6402 = vunpack.c.h.b16 %v5779
    %v6403 = vunpack.c.l.b16 %v5780
    %v6404 = vunpack.c.h.b16 %v5780
    %v6405 = vunpack.c.l.b16 %v5781
    %v6406 = vunpack.c.h.b16 %v5781
    %v6407 = vunpack.c.l.b16 %v5782
    %v6408 = vunpack.c.h.b16 %v5782
    %v6409 = vunpack.c.l.b16 %v5783
    %v6410 = vunpack.c.h.b16 %v5783
    %v6411 = vunpack.c.l.b16 %v5784
    %v6412 = vunpack.c.h.b16 %v5784
    %v6413 = vunpack.c.l.b16 %v5785
    %v6414 = vunpack.c.h.b16 %v5785
    %v6415 = vunpack.c.l.b16 %v5786
    %v6416 = vunpack.c.h.b16 %v5786
    %v6417 = vunpack.c.l.b16 %v5787
    %v6418 = vunpack.c.h.b16 %v5787
    %v6419 = vunpack.c.l.b16 %v5788
    %v6420 = vunpack.c.h.b16 %v5788
    %v6421 = vunpack.c.l.b16 %v5789
    %v6422 = vunpack.c.h.b16 %v5789
    %v6423 = vunpack.c.l.b16 %v5790
    %v6424 = vunpack.c.h.b16 %v5790
    %v6425 = vunpack.c.l.b16 %v5791
    %v6426 = vunpack.c.h.b16 %v5791
    %v6427 = vunpack.c.l.b16 %v5792
    %v6428 = vunpack.c.h.b16 %v5792
    %v6429 = vunpack.c.l.b16 %v5793
    %v6430 = vunpack.c.h.b16 %v5793
    %v6431 = vunpack.c.l.b16 %v5794
    %v6432 = vunpack.c.h.b16 %v5794
    %v6433 = vunpack.c.l.b16 %v5795
    %v6434 = vunpack.c.h.b16 %v5795
    %v6435 = vunpack.c.l.b16 %v5796
    %v6436 = vunpack.c.h.b16 %v5796
    %v6437 = vunpack.c.l.b16 %v5797
    %v6438 = vunpack.c.h.b16 %v5797
    %v6439 = vunpack.c.l.b16 %v5798
    %v6440 = vunpack.c.h.b16 %v5798
    %v6441 = vunpack.c.l.b16 %v5799
    %v6442 = vunpack.c.h.b16 %v5799
    %v6443 = vunpack.c.l.b16 %v5800
    %v6444 = vunpack.c.h.b16 %v5800
    %v6445 = vunpack.c.l.b16 %v5801
    %v6446 = vunpack.c.h.b16 %v5801
    %v6447 = vunpack.c.l.b16 %v5802
    %v6448 = vunpack.c.h.b16 %v5802
    %v6449 = vunpack.c.l.b16 %v5803
    %v6450 = vunpack.c.h.b16 %v5803
    %v6451 = vunpack.c.l.b16 %v5804
    %v6452 = vunpack.c.h.b16 %v5804
    %v6453 = vunpack.c.l.b16 %v5805
    %v6454 = vunpack.c.h.b16 %v5805
    %v6455 = vunpack.c.l.b16 %v5806
    %v6456 = vunpack.c.h.b16 %v5806
    %v6457 = vunpack.c.l.b16 %v5807
    %v6458 = vunpack.c.h.b16 %v5807
    %v6459 = vunpack.c.l.b16 %v5808
    %v6460 = vunpack.c.h.b16 %v5808
    %v6461 = vunpack.c.l.b16 %v5809
    %v6462 = vunpack.c.h.b16 %v5809
    %v6463 = vunpack.c.l.b16 %v5810
    %v6464 = vunpack.c.h.b16 %v5810
    %v6465 = vunpack.c.l.b16 %v5811
    %v6466 = vunpack.c.h.b16 %v5811
    %v6467 = vunpack.c.l.b16 %v5812
    %v6468 = vunpack.c.h.b16 %v5812
    %v6469 = vunpack.c.l.b16 %v5813
    %v6470 = vunpack.c.h.b16 %v5813
    %v6471 = vunpack.c.l.b16 %v5814
    %v6472 = vunpack.c.h.b16 %v5814
    %v6473 = vunpack.c.l.b16 %v5815
    %v6474 = vunpack.c.h.b16 %v5815
    %v6475 = vunpack.c.l.b16 %v5816
    %v6476 = vunpack.c.h.b16 %v5816
    %v6477 = vunpack.c.l.b16 %v5817
    %v6478 = vunpack.c.h.b16 %v5817
    %v6479 = vunpack.c.l.b16 %v5818
    %v6480 = vunpack.c.h.b16 %v5818
    %v6481 = vunpack.c.l.b16 %v5819
    %v6482 = vunpack.c.h.b16 %v5819
    %v6483 = vunpack.c.l.b16 %v5820
    %v6484 = vunpack.c.h.b16 %v5820
    %v6485 = vunpack.c.l.b16 %v5821
    %v6486 = vunpack.c.h.b16 %v5821
    %v6487 = vunpack.c.l.b16 %v5822
    %v6488 = vunpack.c.h.b16 %v5822
    %v6489 = vunpack.c.l.b16 %v5823
    %v6490 = vunpack.c.h.b16 %v5823
    %v6491 = vunpack.c.l.b16 %v5824
    %v6492 = vunpack.c.h.b16 %v5824
    %v6493 = vunpack.c.l.b16 %v5825
    %v6494 = vunpack.c.h.b16 %v5825
    %v6495 = vunpack.c.l.b16 %v5826
    %v6496 = vunpack.c.h.b16 %v5826
    %v6497 = vunpack.c.l.b16 %v5827
    %v6498 = vunpack.c.h.b16 %v5827
    %v6499 = vunpack.c.l.b16 %v5828
    %v6500 = vunpack.c.h.b16 %v5828
    %v6501 = vunpack.c.l.b16 %v5829
    %v6502 = vunpack.c.h.b16 %v5829
    %v6503 = vunpack.c.l.b16 %v5830
    %v6504 = vunpack.c.h.b16 %v5830
    %v6505 = vunpack.c.l.b16 %v5831
    %v6506 = vunpack.c.h.b16 %v5831
    %v6507 = vunpack.c.l.b16 %v5832
    %v6508 = vunpack.c.h.b16 %v5832
    %v6509 = vunpack.c.l.b16 %v5833
    %v6510 = vunpack.c.h.b16 %v5833
    %v6511 = vunpack.c.l.b16 %v5834
    %v6512 = vunpack.c.h.b16 %v5834
    %v6513 = vunpack.c.l.b16 %v5835
    %v6514 = vunpack.c.h.b16 %v5835
    %v6515 = vunpack.c.l.b16 %v5836
    %v6516 = vunpack.c.h.b16 %v5836
    %v6517 = vunpack.c.l.b16 %v5837
    %v6518 = vunpack.c.h.b16 %v5837
    %v6519 = vunpack.c.l.b16 %v5838
    %v6520 = vunpack.c.h.b16 %v5838
    %v6521 = vunpack.c.l.b16 %v5839
    %v6522 = vunpack.c.h.b16 %v5839
    %v6523 = vunpack.c.l.b16 %v5840
    %v6524 = vunpack.c.h.b16 %v5840
    %v6525 = vunpack.c.l.b16 %v5841
    %v6526 = vunpack.c.h.b16 %v5841
    %v6527 = vunpack.c.l.b16 %v5842
    %v6528 = vunpack.c.h.b16 %v5842
    %v6529 = vunpack.c.l.b16 %v5843
    %v6530 = vunpack.c.h.b16 %v5843
    %v6531 = vunpack.c.l.b16 %v5844
    %v6532 = vunpack.c.h.b16 %v5844
    %v6533 = vunpack.c.l.b16 %v5845
    %v6534 = vunpack.c.h.b16 %v5845
    %v6535 = vunpack.c.l.b16 %v5846
    %v6536 = vunpack.c.h.b16 %v5846
    %v6537 = vunpack.c.l.b16 %v5847
    %v6538 = vunpack.c.h.b16 %v5847
    %v6539 = vunpack.c.l.b16 %v5848
    %v6540 = vunpack.c.h.b16 %v5848
    %v6541 = vunpack.c.l.b16 %v5849
    %v6542 = vunpack.c.h.b16 %v5849
    %v6543 = vunpack.c.l.b16 %v5850
    %v6544 = vunpack.c.h.b16 %v5850
    %v6545 = vunpack.c.l.b16 %v5851
    %v6546 = vunpack.c.h.b16 %v5851
    %v6547 = vunpack.c.l.b16 %v5852
    %v6548 = vunpack.c.h.b16 %v5852
    %v6549 = vunpack.c.l.b16 %v5853
    %v6550 = vunpack.c.h.b16 %v5853
    %v6551 = vunpack.c.l.b16 %v5854
    %v6552 = vunpack.c.h.b16 %v5854
    %v6553 = vunpack.c.l.b16 %v5855
    %v6554 = vunpack.c.h.b16 %v5855
    %v6555 = vunpack.c.l.b16 %v5856
    %v6556 = vunpack.c.h.b16 %v5856
    %v6557 = vunpack.c.l.b16 %v5857
    %v6558 = vunpack.c.h.b16 %v5857
    %v6559 = vunpack.c.l.b16 %v5858
    %v6560 = vunpack.c.h.b16 %v5858
    %v6561 = vunpack.c.l.b16 %v5859
    %v6562 = vunpack.c.h.b16 %v5859
    %v6563 = vunpack.c.l.b16 %v5860
    %v6564 = vunpack.c.h.b16 %v5860
    %v6565 = vunpack.c.l.b16 %v5861
    %v6566 = vunpack.c.h.b16 %v5861
    %v6567 = vunpack.c.l.b16 %v5862
    %v6568 = vunpack.c.h.b16 %v5862
    %v6569 = vunpack.c.l.b16 %v5863
    %v6570 = vunpack.c.h.b16 %v5863
    %v6571 = vunpack.c.l.b16 %v5864
    %v6572 = vunpack.c.h.b16 %v5864
    %v6573 = vunpack.c.l.b16 %v5865
    %v6574 = vunpack.c.h.b16 %v5865
    %v6575 = vunpack.c.l.b16 %v5866
    %v6576 = vunpack.c.h.b16 %v5866
    %v6577 = vunpack.c.l.b16 %v5867
    %v6578 = vunpack.c.h.b16 %v5867
    %v6579 = vunpack.c.l.b16 %v5868
    %v6580 = vunpack.c.h.b16 %v5868
    %v6581 = vunpack.c.l.b16 %v5869
    %v6582 = vunpack.c.h.b16 %v5869
    %v6583 = vunpack.c.l.b16 %v5870
    %v6584 = vunpack.c.h.b16 %v5870
    %v6585 = vunpack.c.l.b16 %v5871
    %v6586 = vunpack.c.h.b16 %v5871
    %v6587 = vunpack.c.l.b16 %v5872
    %v6588 = vunpack.c.h.b16 %v5872
    %v6589 = vunpack.c.l.b16 %v5873
    %v6590 = vunpack.c.h.b16 %v5873
    %v6591 = vunpack.c.l.b16 %v5874
    %v6592 = vunpack.c.h.b16 %v5874
    %v6593 = vunpack.c.l.b16 %v5875
    %v6594 = vunpack.c.h.b16 %v5875
    %v6595 = vunpack.c.l.b16 %v5876
    %v6596 = vunpack.c.h.b16 %v5876
    %v6597 = vunpack.c.l.b16 %v5877
    %v6598 = vunpack.c.h.b16 %v5877
    %v6599 = vunpack.c.l.b16 %v5878
    %v6600 = vunpack.c.h.b16 %v5878
    %v6601 = vunpack.c.l.b16 %v5879
    %v6602 = vunpack.c.h.b16 %v5879
    %v6603 = vunpack.c.l.b16 %v5880
    %v6604 = vunpack.c.h.b16 %v5880
    %v6605 = vunpack.c.l.b16 %v5881
    %v6606 = vunpack.c.h.b16 %v5881
    %v6607 = vunpack.c.l.b16 %v5882
    %v6608 = vunpack.c.h.b16 %v5882
    %v6609 = vunpack.c.l.b16 %v5883
    %v6610 = vunpack.c.h.b16 %v5883
    %v6611 = vunpack.c.l.b16 %v5884
    %v6612 = vunpack.c.h.b16 %v5884
    %v6613 = vunpack.c.l.b16 %v5885
    %v6614 = vunpack.c.h.b16 %v5885
    %v6615 = vunpack.c.l.b16 %v5886
    %v6616 = vunpack.c.h.b16 %v5886
    %v6617 = vunpack.c.l.b16 %v5887
    %v6618 = vunpack.c.h.b16 %v5887
    %v6619 = vunpack.c.l.b16 %v5888
    %v6620 = vunpack.c.h.b16 %v5888
    %v6621 = vunpack.c.l.b16 %v5889
    %v6622 = vunpack.c.h.b16 %v5889
    %v6623 = vunpack.c.l.b16 %v5890
    %v6624 = vunpack.c.h.b16 %v5890
    %v6625 = vunpack.c.l.b16 %v5891
    %v6626 = vunpack.c.h.b16 %v5891
    %v6627 = vunpack.c.l.b16 %v5892
    %v6628 = vunpack.c.h.b16 %v5892
    %v6629 = vunpack.c.l.b16 %v5893
    %v6630 = vunpack.c.h.b16 %v5893
    %v6631 = vunpack.c.l.b16 %v5894
    %v6632 = vunpack.c.h.b16 %v5894
    %v6633 = vunpack.c.l.b16 %v5895
    %v6634 = vunpack.c.h.b16 %v5895
    %v6635 = vunpack.c.l.b16 %v5896
    %v6636 = vunpack.c.h.b16 %v5896
    %v6637 = vunpack.c.l.b16 %v5897
    %v6638 = vunpack.c.h.b16 %v5897
    %v6639 = vunpack.c.l.b16 %v5898
    %v6640 = vunpack.c.h.b16 %v5898
    %v6641 = vunpack.c.l.b16 %v5899
    %v6642 = vunpack.c.h.b16 %v5899
    %v6643 = vunpack.c.l.b16 %v5900
    %v6644 = vunpack.c.h.b16 %v5900
    %v6645 = vunpack.c.l.b16 %v5901
    %v6646 = vunpack.c.h.b16 %v5901
    %v6647 = vunpack.c.l.b16 %v5902
    %v6648 = vunpack.c.h.b16 %v5902
    %v6649 = vunpack.c.l.b16 %v5903
    %v6650 = vunpack.c.h.b16 %v5903
    %v6651 = vunpack.c.l.b16 %v5904
    %v6652 = vunpack.c.h.b16 %v5904
    %v6653 = vunpack.c.l.b16 %v5905
    %v6654 = vunpack.c.h.b16 %v5905
    %v6655 = vunpack.c.l.b16 %v5906
    %v6656 = vunpack.c.h.b16 %v5906
    %v6657 = vunpack.c.l.b16 %v5907
    %v6658 = vunpack.c.h.b16 %v5907
    %v6659 = vunpack.c.l.b16 %v5908
    %v6660 = vunpack.c.h.b16 %v5908
    %v6661 = vunpack.c.l.b16 %v5909
    %v6662 = vunpack.c.h.b16 %v5909
    %v6663 = vunpack.c.l.b16 %v5910
    %v6664 = vunpack.c.h.b16 %v5910
    %v6665 = vunpack.c.l.b16 %v5911
    %v6666 = vunpack.c.h.b16 %v5911
    %v6667 = vunpack.c.l.b16 %v5912
    %v6668 = vunpack.c.h.b16 %v5912
    %v6669 = vunpack.c.l.b16 %v5913
    %v6670 = vunpack.c.h.b16 %v5913
    %v6671 = vunpack.c.l.b16 %v5914
    %v6672 = vunpack.c.h.b16 %v5914
    %v6673 = vunpack.c.l.b16 %v5915
    %v6674 = vunpack.c.h.b16 %v5915
    %v6675 = vunpack.c.l.b16 %v5916
    %v6676 = vunpack.c.h.b16 %v5916
    %v6677 = vunpack.c.l.b16 %v5917
    %v6678 = vunpack.c.h.b16 %v5917
    %v6679 = vunpack.c.l.b16 %v5918
    %v6680 = vunpack.c.h.b16 %v5918
    %v6681 = vunpack.c.l.b16 %v5919
    %v6682 = vunpack.c.h.b16 %v5919
    %v6683 = vunpack.c.l.b16 %v5920
    %v6684 = vunpack.c.h.b16 %v5920
    %v6685 = vunpack.c.l.b16 %v5921
    %v6686 = vunpack.c.h.b16 %v5921
    %v6687 = vunpack.c.l.b16 %v5922
    %v6688 = vunpack.c.h.b16 %v5922
    %v6689 = vunpack.c.l.b16 %v5923
    %v6690 = vunpack.c.h.b16 %v5923
    %v6691 = vunpack.c.l.b16 %v5924
    %v6692 = vunpack.c.h.b16 %v5924
    %v6693 = vunpack.c.l.b16 %v5925
    %v6694 = vunpack.c.h.b16 %v5925
    %v6695 = vunpack.c.l.b16 %v5926
    %v6696 = vunpack.c.h.b16 %v5926
    %v6697 = vunpack.c.l.b16 %v5927
    %v6698 = vunpack.c.h.b16 %v5927
    %v6699 = vunpack.c.l.b16 %v5928
    %v6700 = vunpack.c.h.b16 %v5928
    %v6701 = vunpack.c.l.b16 %v5929
    %v6702 = vunpack.c.h.b16 %v5929
    %v6703 = vunpack.c.l.b16 %v5930
    %v6704 = vunpack.c.h.b16 %v5930
    %v6705 = vunpack.c.l.b16 %v5931
    %v6706 = vunpack.c.h.b16 %v5931
    %v6707 = vunpack.c.l.b16 %v5932
    %v6708 = vunpack.c.h.b16 %v5932
    %v6709 = vunpack.c.l.b16 %v5933
    %v6710 = vunpack.c.h.b16 %v5933
    %v6711 = vunpack.c.l.b16 %v5934
    %v6712 = vunpack.c.h.b16 %v5934
    %v6713 = vunpack.c.l.b16 %v5935
    %v6714 = vunpack.c.h.b16 %v5935
    %v6715 = vunpack.c.l.b16 %v5936
    %v6716 = vunpack.c.h.b16 %v5936
    %v6717 = vunpack.c.l.b16 %v5937
    %v6718 = vunpack.c.h.b16 %v5937
    %v6719 = vunpack.c.l.b16 %v5938
    %v6720 = vunpack.c.h.b16 %v5938
    %v6721 = vunpack.c.l.b16 %v5939
    %v6722 = vunpack.c.h.b16 %v5939
    %v6723 = vunpack.c.l.b16 %v5940
    %v6724 = vunpack.c.h.b16 %v5940
    %v6725 = vunpack.c.l.b16 %v5941
    %v6726 = vunpack.c.h.b16 %v5941
    %v6727 = vunpack.c.l.b16 %v5942
    %v6728 = vunpack.c.h.b16 %v5942
    %v6729 = vunpack.c.l.b16 %v5943
    %v6730 = vunpack.c.h.b16 %v5943
    %v6731 = vunpack.c.l.b16 %v5944
    %v6732 = vunpack.c.h.b16 %v5944
    %v6733 = vunpack.c.l.b16 %v5945
    %v6734 = vunpack.c.h.b16 %v5945
    %v6735 = vunpack.c.l.b16 %v5946
    %v6736 = vunpack.c.h.b16 %v5946
    %v6737 = vpack.c.b16 %v6229, %v6225
    %v6738 = vpack.c.b16 %v6230, %v6226
    %v6739 = vpack.c.b16 %v6231, %v6227
    %v6740 = vpack.c.b16 %v6232, %v6228
    %v6741 = vpack.c.b16 %v6237, %v6233
    %v6742 = vpack.c.b16 %v6238, %v6234
    %v6743 = vpack.c.b16 %v6239, %v6235
    %v6744 = vpack.c.b16 %v6240, %v6236
    %v6745 = vpack.c.b16 %v6245, %v6241
    %v6746 = vpack.c.b16 %v6246, %v6242
    %v6747 = vpack.c.b16 %v6247, %v6243
    %v6748 = vpack.c.b16 %v6248, %v6244
    %v6749 = vpack.c.b16 %v6253, %v6249
    %v6750 = vpack.c.b16 %v6254, %v6250
    %v6751 = vpack.c.b16 %v6255, %v6251
    %v6752 = vpack.c.b16 %v6256, %v6252
    %v6753 = vpack.c.b16 %v6261, %v6257
    %v6754 = vpack.c.b16 %v6262, %v6258
    %v6755 = vpack.c.b16 %v6263, %v6259
    %v6756 = vpack.c.b16 %v6264, %v6260
    %v6757 = vpack.c.b16 %v6269, %v6265
    %v6758 = vpack.c.b16 %v6270, %v6266
    %v6759 = vpack.c.b16 %v6271, %v6267
    %v6760 = vpack.c.b16 %v6272, %v6268
    %v6761 = vpack.c.b16 %v6277, %v6273
    %v6762 = vpack.c.b16 %v6278, %v6274
    %v6763 = vpack.c.b16 %v6279, %v6275
    %v6764 = vpack.c.b16 %v6280, %v6276
    %v6765 = vpack.c.b16 %v6285, %v6281
    %v6766 = vpack.c.b16 %v6286, %v6282
    %v6767 = vpack.c.b16 %v6287, %v6283
    %v6768 = vpack.c.b16 %v6288, %v6284
    %v6769 = vpack.c.b16 %v6293, %v6289
    %v6770 = vpack.c.b16 %v6294, %v6290
    %v6771 = vpack.c.b16 %v6295, %v6291
    %v6772 = vpack.c.b16 %v6296, %v6292
    %v6773 = vpack.c.b16 %v6301, %v6297
    %v6774 = vpack.c.b16 %v6302, %v6298
    %v6775 = vpack.c.b16 %v6303, %v6299
    %v6776 = vpack.c.b16 %v6304, %v6300
    %v6777 = vpack.c.b16 %v6309, %v6305
    %v6778 = vpack.c.b16 %v6310, %v6306
    %v6779 = vpack.c.b16 %v6311, %v6307
    %v6780 = vpack.c.b16 %v6312, %v6308
    %v6781 = vpack.c.b16 %v6317, %v6313
    %v6782 = vpack.c.b16 %v6318, %v6314
    %v6783 = vpack.c.b16 %v6319, %v6315
    %v6784 = vpack.c.b16 %v6320, %v6316
    %v6785 = vpack.c.b16 %v6325, %v6321
    %v6786 = vpack.c.b16 %v6326, %v6322
    %v6787 = vpack.c.b16 %v6327, %v6323
    %v6788 = vpack.c.b16 %v6328, %v6324
    %v6789 = vpack.c.b16 %v6333, %v6329
    %v6790 = vpack.c.b16 %v6334, %v6330
    %v6791 = vpack.c.b16 %v6335, %v6331
    %v6792 = vpack.c.b16 %v6336, %v6332
    %v6793 = vpack.c.b16 %v6341, %v6337
    %v6794 = vpack.c.b16 %v6342, %v6338
    %v6795 = vpack.c.b16 %v6343, %v6339
    %v6796 = vpack.c.b16 %v6344, %v6340
    %v6797 = vpack.c.b16 %v6349, %v6345
    %v6798 = vpack.c.b16 %v6350, %v6346
    %v6799 = vpack.c.b16 %v6351, %v6347
    %v6800 = vpack.c.b16 %v6352, %v6348
    %v6801 = vpack.c.b16 %v6357, %v6353
    %v6802 = vpack.c.b16 %v6358, %v6354
    %v6803 = vpack.c.b16 %v6359, %v6355
    %v6804 = vpack.c.b16 %v6360, %v6356
    %v6805 = vpack.c.b16 %v6365, %v6361
    %v6806 = vpack.c.b16 %v6366, %v6362
    %v6807 = vpack.c.b16 %v6367, %v6363
    %v6808 = vpack.c.b16 %v6368, %v6364
    %v6809 = vpack.c.b16 %v6373, %v6369
    %v6810 = vpack.c.b16 %v6374, %v6370
    %v6811 = vpack.c.b16 %v6375, %v6371
    %v6812 = vpack.c.b16 %v6376, %v6372
    %v6813 = vpack.c.b16 %v6381, %v6377
    %v6814 = vpack.c.b16 %v6382, %v6378
    %v6815 = vpack.c.b16 %v6383, %v6379
    %v6816 = vpack.c.b16 %v6384, %v6380
    %v6817 = vpack.c.b16 %v6389, %v6385
    %v6818 = vpack.c.b16 %v6390, %v6386
    %v6819 = vpack.c.b16 %v6391, %v6387
    %v6820 = vpack.c.b16 %v6392, %v6388
    %v6821 = vpack.c.b16 %v6397, %v6393
    %v6822 = vpack.c.b16 %v6398, %v6394
    %v6823 = vpack.c.b16 %v6399, %v6395
    %v6824 = vpack.c.b16 %v6400, %v6396
    %v6825 = vpack.c.b16 %v6405, %v6401
    %v6826 = vpack.c.b16 %v6406, %v6402
    %v6827 = vpack.c.b16 %v6407, %v6403
    %v6828 = vpack.c.b16 %v6408, %v6404
    %v6829 = vpack.c.b16 %v6413, %v6409
    %v6830 = vpack.c.b16 %v6414, %v6410
    %v6831 = vpack.c.b16 %v6415, %v6411
    %v6832 = vpack.c.b16 %v6416, %v6412
    %v6833 = vpack.c.b16 %v6421, %v6417
    %v6834 = vpack.c.b16 %v6422, %v6418
    %v6835 = vpack.c.b16 %v6423, %v6419
    %v6836 = vpack.c.b16 %v6424, %v6420
    %v6837 = vpack.c.b16 %v6429, %v6425
    %v6838 = vpack.c.b16 %v6430, %v6426
    %v6839 = vpack.c.b16 %v6431, %v6427
    %v6840 = vpack.c.b16 %v6432, %v6428
    %v6841 = vpack.c.b16 %v6437, %v6433
    %v6842 = vpack.c.b16 %v6438, %v6434
    %v6843 = vpack.c.b16 %v6439, %v6435
    %v6844 = vpack.c.b16 %v6440, %v6436
    %v6845 = vpack.c.b16 %v6445, %v6441
    %v6846 = vpack.c.b16 %v6446, %v6442
    %v6847 = vpack.c.b16 %v6447, %v6443
    %v6848 = vpack.c.b16 %v6448, %v6444
    %v6849 = vpack.c.b16 %v6453, %v6449
    %v6850 = vpack.c.b16 %v6454, %v6450
    %v6851 = vpack.c.b16 %v6455, %v6451
    %v6852 = vpack.c.b16 %v6456, %v6452
    %v6853 = vpack.c.b16 %v6461, %v6457
    %v6854 = vpack.c.b16 %v6462, %v6458
    %v6855 = vpack.c.b16 %v6463, %v6459
    %v6856 = vpack.c.b16 %v6464, %v6460
    %v6857 = vpack.c.b16 %v6469, %v6465
    %v6858 = vpack.c.b16 %v6470, %v6466
    %v6859 = vpack.c.b16 %v6471, %v6467
    %v6860 = vpack.c.b16 %v6472, %v6468
    %v6861 = vpack.c.b16 %v6477, %v6473
    %v6862 = vpack.c.b16 %v6478, %v6474
    %v6863 = vpack.c.b16 %v6479, %v6475
    %v6864 = vpack.c.b16 %v6480, %v6476
    %v6865 = vpack.c.b16 %v6485, %v6481
    %v6866 = vpack.c.b16 %v6486, %v6482
    %v6867 = vpack.c.b16 %v6487, %v6483
    %v6868 = vpack.c.b16 %v6488, %v6484
    %v6869 = vpack.c.b16 %v6493, %v6489
    %v6870 = vpack.c.b16 %v6494, %v6490
    %v6871 = vpack.c.b16 %v6495, %v6491
    %v6872 = vpack.c.b16 %v6496, %v6492
    %v6873 = vpack.c.b16 %v6501, %v6497
    %v6874 = vpack.c.b16 %v6502, %v6498
    %v6875 = vpack.c.b16 %v6503, %v6499
    %v6876 = vpack.c.b16 %v6504, %v6500
    %v6877 = vpack.c.b16 %v6509, %v6505
    %v6878 = vpack.c.b16 %v6510, %v6506
    %v6879 = vpack.c.b16 %v6511, %v6507
    %v6880 = vpack.c.b16 %v6512, %v6508
    %v6881 = vpack.c.b16 %v6517, %v6513
    %v6882 = vpack.c.b16 %v6518, %v6514
    %v6883 = vpack.c.b16 %v6519, %v6515
    %v6884 = vpack.c.b16 %v6520, %v6516
    %v6885 = vpack.c.b16 %v6525, %v6521
    %v6886 = vpack.c.b16 %v6526, %v6522
    %v6887 = vpack.c.b16 %v6527, %v6523
    %v6888 = vpack.c.b16 %v6528, %v6524
    %v6889 = vpack.c.b16 %v6533, %v6529
    %v6890 = vpack.c.b16 %v6534, %v6530
    %v6891 = vpack.c.b16 %v6535, %v6531
    %v6892 = vpack.c.b16 %v6536, %v6532
    %v6893 = vpack.c.b16 %v6541, %v6537
    %v6894 = vpack.c.b16 %v6542, %v6538
    %v6895 = vpack.c.b16 %v6543, %v6539
    %v6896 = vpack.c.b16 %v6544, %v6540
    %v6897 = vpack.c.b16 %v6549, %v6545
    %v6898 = vpack.c.b16 %v6550, %v6546
    %v6899 = vpack.c.b16 %v6551, %v6547
    %v6900 = vpack.c.b16 %v6552, %v6548
    %v6901 = vpack.c.b16 %v6557, %v6553
    %v6902 = vpack.c.b16 %v6558, %v6554
    %v6903 = vpack.c.b16 %v6559, %v6555
    %v6904 = vpack.c.b16 %v6560, %v6556
    %v6905 = vpack.c.b16 %v6565, %v6561
    %v6906 = vpack.c.b16 %v6566, %v6562
    %v6907 = vpack.c.b16 %v6567, %v6563
    %v6908 = vpack.c.b16 %v6568, %v6564
    %v6909 = vpack.c.b16 %v6573, %v6569
    %v6910 = vpack.c.b16 %v6574, %v6570
    %v6911 = vpack.c.b16 %v6575, %v6571
    %v6912 = vpack.c.b16 %v6576, %v6572
    %v6913 = vpack.c.b16 %v6581, %v6577
    %v6914 = vpack.c.b16 %v6582, %v6578
    %v6915 = vpack.c.b16 %v6583, %v6579
    %v6916 = vpack.c.b16 %v6584, %v6580
    %v6917 = vpack.c.b16 %v6589, %v6585
    %v6918 = vpack.c.b16 %v6590, %v6586
    %v6919 = vpack.c.b16 %v6591, %v6587
    %v6920 = vpack.c.b16 %v6592, %v6588
    %v6921 = vpack.c.b16 %v6597, %v6593
    %v6922 = vpack.c.b16 %v6598, %v6594
    %v6923 = vpack.c.b16 %v6599, %v6595
    %v6924 = vpack.c.b16 %v6600, %v6596
    %v6925 = vpack.c.b16 %v6605, %v6601
    %v6926 = vpack.c.b16 %v6606, %v6602
    %v6927 = vpack.c.b16 %v6607, %v6603
    %v6928 = vpack.c.b16 %v6608, %v6604
    %v6929 = vpack.c.b16 %v6613, %v6609
    %v6930 = vpack.c.b16 %v6614, %v6610
    %v6931 = vpack.c.b16 %v6615, %v6611
    %v6932 = vpack.c.b16 %v6616, %v6612
    %v6933 = vpack.c.b16 %v6621, %v6617
    %v6934 = vpack.c.b16 %v6622, %v6618
    %v6935 = vpack.c.b16 %v6623, %v6619
    %v6936 = vpack.c.b16 %v6624, %v6620
    %v6937 = vpack.c.b16 %v6629, %v6625
    %v6938 = vpack.c.b16 %v6630, %v6626
    %v6939 = vpack.c.b16 %v6631, %v6627
    %v6940 = vpack.c.b16 %v6632, %v6628
    %v6941 = vpack.c.b16 %v6637, %v6633
    %v6942 = vpack.c.b16 %v6638, %v6634
    %v6943 = vpack.c.b16 %v6639, %v6635
    %v6944 = vpack.c.b16 %v6640, %v6636
    %v6945 = vpack.c.b16 %v6645, %v6641
    %v6946 = vpack.c.b16 %v6646, %v6642
    %v6947 = vpack.c.b16 %v6647, %v6643
    %v6948 = vpack.c.b16 %v6648, %v6644
    %v6949 = vpack.c.b16 %v6653, %v6649
    %v6950 = vpack.c.b16 %v6654, %v6650
    %v6951 = vpack.c.b16 %v6655, %v6651
    %v6952 = vpack.c.b16 %v6656, %v6652
    %v6953 = vpack.c.b16 %v6661, %v6657
    %v6954 = vpack.c.b16 %v6662, %v6658
    %v6955 = vpack.c.b16 %v6663, %v6659
    %v6956 = vpack.c.b16 %v6664, %v6660
    %v6957 = vpack.c.b16 %v6669, %v6665
    %v6958 = vpack.c.b16 %v6670, %v6666
    %v6959 = vpack.c.b16 %v6671, %v6667
    %v6960 = vpack.c.b16 %v6672, %v6668
    %v6961 = vpack.c.b16 %v6677, %v6673
    %v6962 = vpack.c.b16 %v6678, %v6674
    %v6963 = vpack.c.b16 %v6679, %v6675
    %v6964 = vpack.c.b16 %v6680, %v6676
    %v6965 = vpack.c.b16 %v6685, %v6681
    %v6966 = vpack.c.b16 %v6686, %v6682
    %v6967 = vpack.c.b16 %v6687, %v6683
    %v6968 = vpack.c.b16 %v6688, %v6684
    %v6969 = vpack.c.b16 %v6693, %v6689
    %v6970 = vpack.c.b16 %v6694, %v6690
    %v6971 = vpack.c.b16 %v6695, %v6691
    %v6972 = vpack.c.b16 %v6696, %v6692
    %v6973 = vpack.c.b16 %v6701, %v6697
    %v6974 = vpack.c.b16 %v6702, %v6698
    %v6975 = vpack.c.b16 %v6703, %v6699
    %v6976 = vpack.c.b16 %v6704, %v6700
    %v6977 = vpack.c.b16 %v6709, %v6705
    %v6978 = vpack.c.b16 %v6710, %v6706
    %v6979 = vpack.c.b16 %v6711, %v6707
    %v6980 = vpack.c.b16 %v6712, %v6708
    %v6981 = vpack.c.b16 %v6717, %v6713
    %v6982 = vpack.c.b16 %v6718, %v6714
    %v6983 = vpack.c.b16 %v6719, %v6715
    %v6984 = vpack.c.b16 %v6720, %v6716
    %v6985 = vpack.c.b16 %v6725, %v6721
    %v6986 = vpack.c.b16 %v6726, %v6722
    %v6987 = vpack.c.b16 %v6727, %v6723
    %v6988 = vpack.c.b16 %v6728, %v6724
    %v6989 = vpack.c.b16 %v6733, %v6729
    %v6990 = vpack.c.b16 %v6734, %v6730
    %v6991 = vpack.c.b16 %v6735, %v6731
    %v6992 = vpack.c.b16 %v6736, %v6732
    %7249 = vmatprep.subr.bf16.mxu0 %v6766
    %7250 = vmatpush1.bf16.msra.mxu0 %v6765
    %7251 = vmatprep.subr.bf16.mxu0 %v6762
    %7252 = vmatpush1.bf16.msra.mxu0 %v6761
    %7253 = vmatprep.subr.bf16.mxu0 %v6758
    %7254 = vmatpush1.bf16.msra.mxu0 %v6757
    %7255 = vmatprep.subr.bf16.mxu0 %v6754
    %7256 = vmatpush1.bf16.msra.mxu0 %v6753
    %7257 = vmatprep.subr.bf16.mxu0 %v6750
    %7258 = vmatpush1.bf16.msra.mxu0 %v6749
    %7259 = vmatprep.subr.bf16.mxu0 %v6746
    %7260 = vmatpush1.bf16.msra.mxu0 %v6745
    %7261 = vmatprep.subr.bf16.mxu0 %v6742
    %7262 = vmatpush1.bf16.msra.mxu0 %v6741
    %7263 = vmatprep.subr.bf16.mxu0 %v6738
    %7264 = vmatpush1.bf16.msra.mxu0 %v6737
    %7265 = vmatprep.subr.bf16.mxu0 %v6798
    %7266 = vmatpush2.bf16.msra.mxu0 %v6797
    %7267 = vmatprep.subr.bf16.mxu0 %v6794
    %7268 = vmatpush2.bf16.msra.mxu0 %v6793
    %7269 = vmatprep.subr.bf16.mxu0 %v6790
    %7270 = vmatpush2.bf16.msra.mxu0 %v6789
    %7271 = vmatprep.subr.bf16.mxu0 %v6786
    %7272 = vmatpush2.bf16.msra.mxu0 %v6785
    %7273 = vmatprep.subr.bf16.mxu0 %v6782
    %7274 = vmatpush2.bf16.msra.mxu0 %v6781
    %7275 = vmatprep.subr.bf16.mxu0 %v6778
    %7276 = vmatpush2.bf16.msra.mxu0 %v6777
    %7277 = vmatprep.subr.bf16.mxu0 %v6774
    %7278 = vmatpush2.bf16.msra.mxu0 %v6773
    %7279 = vmatprep.subr.bf16.mxu0 %v6770
    %7280 = vmatpush2.bf16.msra.mxu0 %v6769
    %7281 = vmatprep.mubr.bf16.mxu0 %v5684
    %7282 = vmatmul.mubr.bf16.gmra.mxu0 %v5683
    %v7283 = vpop.f32.mrf.mxu0
    %v7284 = vadd.f32 %v5952, %v7283
    %v7285 = vpop.f32.mrf.mxu0
    %v7286 = vadd.f32 %v5956, %v7285
    %v7287 = vpop.f32.mrf.mxu0
    %v7288 = vpop.f32.mrf.mxu0
    %7289 = vdwg.mxu0
    %7290 = vmatprep.subr.bf16.mxu0 %v6830
    %7291 = vmatpush1.bf16.msra.mxu0 %v6829
    %7292 = vmatprep.subr.bf16.mxu0 %v6826
    %7293 = vmatpush1.bf16.msra.mxu0 %v6825
    %7294 = vmatprep.subr.bf16.mxu0 %v6822
    %7295 = vmatpush1.bf16.msra.mxu0 %v6821
    %7296 = vmatprep.subr.bf16.mxu0 %v6818
    %7297 = vmatpush1.bf16.msra.mxu0 %v6817
    %7298 = vmatprep.subr.bf16.mxu0 %v6814
    %7299 = vmatpush1.bf16.msra.mxu0 %v6813
    %7300 = vmatprep.subr.bf16.mxu0 %v6810
    %7301 = vmatpush1.bf16.msra.mxu0 %v6809
    %7302 = vmatprep.subr.bf16.mxu0 %v6806
    %7303 = vmatpush1.bf16.msra.mxu0 %v6805
    %7304 = vmatprep.subr.bf16.mxu0 %v6802
    %7305 = vmatpush1.bf16.msra.mxu0 %v6801
    %7306 = vmatprep.subr.bf16.mxu0 %v6862
    %7307 = vmatpush2.bf16.msra.mxu0 %v6861
    %7308 = vmatprep.subr.bf16.mxu0 %v6858
    %7309 = vmatpush2.bf16.msra.mxu0 %v6857
    %7310 = vmatprep.subr.bf16.mxu0 %v6854
    %7311 = vmatpush2.bf16.msra.mxu0 %v6853
    %7312 = vmatprep.subr.bf16.mxu0 %v6850
    %7313 = vmatpush2.bf16.msra.mxu0 %v6849
    %7314 = vmatprep.subr.bf16.mxu0 %v6846
    %7315 = vmatpush2.bf16.msra.mxu0 %v6845
    %7316 = vmatprep.subr.bf16.mxu0 %v6842
    %7317 = vmatpush2.bf16.msra.mxu0 %v6841
    %7318 = vmatprep.subr.bf16.mxu0 %v6838
    %7319 = vmatpush2.bf16.msra.mxu0 %v6837
    %7320 = vmatprep.subr.bf16.mxu0 %v6834
    %7321 = vmatpush2.bf16.msra.mxu0 %v6833
    %7322 = vmatprep.mubr.bf16.mxu0 %v5686
    %7323 = vmatmul.mubr.bf16.gmra.mxu0 %v5685
    %v7324 = vpop.f32.mrf.mxu0
    %v7325 = vadd.f32 %v7284, %v7324
    %v7326 = vpop.f32.mrf.mxu0
    %v7327 = vadd.f32 %v7286, %v7326
    %v7328 = vpop.f32.mrf.mxu0
    %v7329 = vpop.f32.mrf.mxu0
    %7330 = vdwg.mxu0
    %7331 = vmatprep.subr.bf16.mxu0 %v6894
    %7332 = vmatpush1.bf16.msra.mxu0 %v6893
    %7333 = vmatprep.subr.bf16.mxu0 %v6890
    %7334 = vmatpush1.bf16.msra.mxu0 %v6889
    %7335 = vmatprep.subr.bf16.mxu0 %v6886
    %7336 = vmatpush1.bf16.msra.mxu0 %v6885
    %7337 = vmatprep.subr.bf16.mxu0 %v6882
    %7338 = vmatpush1.bf16.msra.mxu0 %v6881
    %7339 = vmatprep.subr.bf16.mxu0 %v6878
    %7340 = vmatpush1.bf16.msra.mxu0 %v6877
    %7341 = vmatprep.subr.bf16.mxu0 %v6874
    %7342 = vmatpush1.bf16.msra.mxu0 %v6873
    %7343 = vmatprep.subr.bf16.mxu0 %v6870
    %7344 = vmatpush1.bf16.msra.mxu0 %v6869
    %7345 = vmatprep.subr.bf16.mxu0 %v6866
    %7346 = vmatpush1.bf16.msra.mxu0 %v6865
    %7347 = vmatprep.subr.bf16.mxu0 %v6926
    %7348 = vmatpush2.bf16.msra.mxu0 %v6925
    %7349 = vmatprep.subr.bf16.mxu0 %v6922
    %7350 = vmatpush2.bf16.msra.mxu0 %v6921
    %7351 = vmatprep.subr.bf16.mxu0 %v6918
    %7352 = vmatpush2.bf16.msra.mxu0 %v6917
    %7353 = vmatprep.subr.bf16.mxu0 %v6914
    %7354 = vmatpush2.bf16.msra.mxu0 %v6913
    %7355 = vmatprep.subr.bf16.mxu0 %v6910
    %7356 = vmatpush2.bf16.msra.mxu0 %v6909
    %7357 = vmatprep.subr.bf16.mxu0 %v6906
    %7358 = vmatpush2.bf16.msra.mxu0 %v6905
    %7359 = vmatprep.subr.bf16.mxu0 %v6902
    %7360 = vmatpush2.bf16.msra.mxu0 %v6901
    %7361 = vmatprep.subr.bf16.mxu0 %v6898
    %7362 = vmatpush2.bf16.msra.mxu0 %v6897
    %7363 = vmatprep.mubr.bf16.mxu0 %v5688
    %7364 = vmatmul.mubr.bf16.gmra.mxu0 %v5687
    %v7365 = vpop.f32.mrf.mxu0
    %v7366 = vadd.f32 %v7325, %v7365
    %v7367 = vpop.f32.mrf.mxu0
    %v7368 = vadd.f32 %v7327, %v7367
    %v7369 = vpop.f32.mrf.mxu0
    %v7370 = vpop.f32.mrf.mxu0
    %7371 = vdwg.mxu0
    %7372 = vmatprep.subr.bf16.mxu0 %v6958
    %7373 = vmatpush1.bf16.msra.mxu0 %v6957
    %7374 = vmatprep.subr.bf16.mxu0 %v6954
    %7375 = vmatpush1.bf16.msra.mxu0 %v6953
    %7376 = vmatprep.subr.bf16.mxu0 %v6950
    %7377 = vmatpush1.bf16.msra.mxu0 %v6949
    %7378 = vmatprep.subr.bf16.mxu0 %v6946
    %7379 = vmatpush1.bf16.msra.mxu0 %v6945
    %7380 = vmatprep.subr.bf16.mxu0 %v6942
    %7381 = vmatpush1.bf16.msra.mxu0 %v6941
    %7382 = vmatprep.subr.bf16.mxu0 %v6938
    %7383 = vmatpush1.bf16.msra.mxu0 %v6937
    %7384 = vmatprep.subr.bf16.mxu0 %v6934
    %7385 = vmatpush1.bf16.msra.mxu0 %v6933
    %7386 = vmatprep.subr.bf16.mxu0 %v6930
    %7387 = vmatpush1.bf16.msra.mxu0 %v6929
    %7388 = vmatprep.subr.bf16.mxu0 %v6990
    %7389 = vmatpush2.bf16.msra.mxu0 %v6989
    %7390 = vmatprep.subr.bf16.mxu0 %v6986
    %7391 = vmatpush2.bf16.msra.mxu0 %v6985
    %7392 = vmatprep.subr.bf16.mxu0 %v6982
    %7393 = vmatpush2.bf16.msra.mxu0 %v6981
    %7394 = vmatprep.subr.bf16.mxu0 %v6978
    %7395 = vmatpush2.bf16.msra.mxu0 %v6977
    %7396 = vmatprep.subr.bf16.mxu0 %v6974
    %7397 = vmatpush2.bf16.msra.mxu0 %v6973
    %7398 = vmatprep.subr.bf16.mxu0 %v6970
    %7399 = vmatpush2.bf16.msra.mxu0 %v6969
    %7400 = vmatprep.subr.bf16.mxu0 %v6966
    %7401 = vmatpush2.bf16.msra.mxu0 %v6965
    %7402 = vmatprep.subr.bf16.mxu0 %v6962
    %7403 = vmatpush2.bf16.msra.mxu0 %v6961
    %7404 = vmatprep.mubr.bf16.mxu0 %v5690
    %7405 = vmatmul.mubr.bf16.gmra.mxu0 %v5689
    %v7406 = vpop.f32.mrf.mxu0
    %v7407 = vadd.f32 %v7366, %v7406
    %v7408 = vpop.f32.mrf.mxu0
    %v7409 = vadd.f32 %v7368, %v7408
    %v7410 = vpop.f32.mrf.mxu0
    %v7411 = vpop.f32.mrf.mxu0
    %7412 = vdwg.mxu0
    %7413 = vmatprep.subr.bf16.mxu0 %v6768
    %7414 = vmatpush1.bf16.msra.mxu0 %v6767
    %7415 = vmatprep.subr.bf16.mxu0 %v6764
    %7416 = vmatpush1.bf16.msra.mxu0 %v6763
    %7417 = vmatprep.subr.bf16.mxu0 %v6760
    %7418 = vmatpush1.bf16.msra.mxu0 %v6759
    %7419 = vmatprep.subr.bf16.mxu0 %v6756
    %7420 = vmatpush1.bf16.msra.mxu0 %v6755
    %7421 = vmatprep.subr.bf16.mxu0 %v6752
    %7422 = vmatpush1.bf16.msra.mxu0 %v6751
    %7423 = vmatprep.subr.bf16.mxu0 %v6748
    %7424 = vmatpush1.bf16.msra.mxu0 %v6747
    %7425 = vmatprep.subr.bf16.mxu0 %v6744
    %7426 = vmatpush1.bf16.msra.mxu0 %v6743
    %7427 = vmatprep.subr.bf16.mxu0 %v6740
    %7428 = vmatpush1.bf16.msra.mxu0 %v6739
    %7429 = vmatprep.subr.bf16.mxu0 %v6800
    %7430 = vmatpush2.bf16.msra.mxu0 %v6799
    %7431 = vmatprep.subr.bf16.mxu0 %v6796
    %7432 = vmatpush2.bf16.msra.mxu0 %v6795
    %7433 = vmatprep.subr.bf16.mxu0 %v6792
    %7434 = vmatpush2.bf16.msra.mxu0 %v6791
    %7435 = vmatprep.subr.bf16.mxu0 %v6788
    %7436 = vmatpush2.bf16.msra.mxu0 %v6787
    %7437 = vmatprep.subr.bf16.mxu0 %v6784
    %7438 = vmatpush2.bf16.msra.mxu0 %v6783
    %7439 = vmatprep.subr.bf16.mxu0 %v6780
    %7440 = vmatpush2.bf16.msra.mxu0 %v6779
    %7441 = vmatprep.subr.bf16.mxu0 %v6776
    %7442 = vmatpush2.bf16.msra.mxu0 %v6775
    %7443 = vmatprep.subr.bf16.mxu0 %v6772
    %7444 = vmatpush2.bf16.msra.mxu0 %v6771
    %7445 = vmatprep.mubr.bf16.mxu0 %v5684
    %7446 = vmatmul.mubr.bf16.gmra.mxu0 %v5683
    %v7447 = vpop.f32.mrf.mxu0
    %v7448 = vadd.f32 %v5960, %v7447
    %v7449 = vpop.f32.mrf.mxu0
    %v7450 = vadd.f32 %v5964, %v7449
    %v7451 = vpop.f32.mrf.mxu0
    %v7452 = vpop.f32.mrf.mxu0
    %7453 = vdwg.mxu0
    %7454 = vmatprep.subr.bf16.mxu0 %v6832
    %7455 = vmatpush1.bf16.msra.mxu0 %v6831
    %7456 = vmatprep.subr.bf16.mxu0 %v6828
    %7457 = vmatpush1.bf16.msra.mxu0 %v6827
    %7458 = vmatprep.subr.bf16.mxu0 %v6824
    %7459 = vmatpush1.bf16.msra.mxu0 %v6823
    %7460 = vmatprep.subr.bf16.mxu0 %v6820
    %7461 = vmatpush1.bf16.msra.mxu0 %v6819
    %7462 = vmatprep.subr.bf16.mxu0 %v6816
    %7463 = vmatpush1.bf16.msra.mxu0 %v6815
    %7464 = vmatprep.subr.bf16.mxu0 %v6812
    %7465 = vmatpush1.bf16.msra.mxu0 %v6811
    %7466 = vmatprep.subr.bf16.mxu0 %v6808
    %7467 = vmatpush1.bf16.msra.mxu0 %v6807
    %7468 = vmatprep.subr.bf16.mxu0 %v6804
    %7469 = vmatpush1.bf16.msra.mxu0 %v6803
    %7470 = vmatprep.subr.bf16.mxu0 %v6864
    %7471 = vmatpush2.bf16.msra.mxu0 %v6863
    %7472 = vmatprep.subr.bf16.mxu0 %v6860
    %7473 = vmatpush2.bf16.msra.mxu0 %v6859
    %7474 = vmatprep.subr.bf16.mxu0 %v6856
    %7475 = vmatpush2.bf16.msra.mxu0 %v6855
    %7476 = vmatprep.subr.bf16.mxu0 %v6852
    %7477 = vmatpush2.bf16.msra.mxu0 %v6851
    %7478 = vmatprep.subr.bf16.mxu0 %v6848
    %7479 = vmatpush2.bf16.msra.mxu0 %v6847
    %7480 = vmatprep.subr.bf16.mxu0 %v6844
    %7481 = vmatpush2.bf16.msra.mxu0 %v6843
    %7482 = vmatprep.subr.bf16.mxu0 %v6840
    %7483 = vmatpush2.bf16.msra.mxu0 %v6839
    %7484 = vmatprep.subr.bf16.mxu0 %v6836
    %7485 = vmatpush2.bf16.msra.mxu0 %v6835
    %7486 = vmatprep.mubr.bf16.mxu0 %v5686
    %7487 = vmatmul.mubr.bf16.gmra.mxu0 %v5685
    %v7488 = vpop.f32.mrf.mxu0
    %v7489 = vadd.f32 %v7448, %v7488
    %v7490 = vpop.f32.mrf.mxu0
    %v7491 = vadd.f32 %v7450, %v7490
    %v7492 = vpop.f32.mrf.mxu0
    %v7493 = vpop.f32.mrf.mxu0
    %7494 = vdwg.mxu0
    %7495 = vmatprep.subr.bf16.mxu0 %v6896
    %7496 = vmatpush1.bf16.msra.mxu0 %v6895
    %7497 = vmatprep.subr.bf16.mxu0 %v6892
    %7498 = vmatpush1.bf16.msra.mxu0 %v6891
    %7499 = vmatprep.subr.bf16.mxu0 %v6888
    %7500 = vmatpush1.bf16.msra.mxu0 %v6887
    %7501 = vmatprep.subr.bf16.mxu0 %v6884
    %7502 = vmatpush1.bf16.msra.mxu0 %v6883
    %7503 = vmatprep.subr.bf16.mxu0 %v6880
    %7504 = vmatpush1.bf16.msra.mxu0 %v6879
    %7505 = vmatprep.subr.bf16.mxu0 %v6876
    %7506 = vmatpush1.bf16.msra.mxu0 %v6875
    %7507 = vmatprep.subr.bf16.mxu0 %v6872
    %7508 = vmatpush1.bf16.msra.mxu0 %v6871
    %7509 = vmatprep.subr.bf16.mxu0 %v6868
    %7510 = vmatpush1.bf16.msra.mxu0 %v6867
    %7511 = vmatprep.subr.bf16.mxu0 %v6928
    %7512 = vmatpush2.bf16.msra.mxu0 %v6927
    %7513 = vmatprep.subr.bf16.mxu0 %v6924
    %7514 = vmatpush2.bf16.msra.mxu0 %v6923
    %7515 = vmatprep.subr.bf16.mxu0 %v6920
    %7516 = vmatpush2.bf16.msra.mxu0 %v6919
    %7517 = vmatprep.subr.bf16.mxu0 %v6916
    %7518 = vmatpush2.bf16.msra.mxu0 %v6915
    %7519 = vmatprep.subr.bf16.mxu0 %v6912
    %7520 = vmatpush2.bf16.msra.mxu0 %v6911
    %7521 = vmatprep.subr.bf16.mxu0 %v6908
    %7522 = vmatpush2.bf16.msra.mxu0 %v6907
    %7523 = vmatprep.subr.bf16.mxu0 %v6904
    %7524 = vmatpush2.bf16.msra.mxu0 %v6903
    %7525 = vmatprep.subr.bf16.mxu0 %v6900
    %7526 = vmatpush2.bf16.msra.mxu0 %v6899
    %7527 = vmatprep.mubr.bf16.mxu0 %v5688
    %7528 = vmatmul.mubr.bf16.gmra.mxu0 %v5687
    %v7529 = vpop.f32.mrf.mxu0
    %v7530 = vadd.f32 %v7489, %v7529
    %v7531 = vpop.f32.mrf.mxu0
    %v7532 = vadd.f32 %v7491, %v7531
    %v7533 = vpop.f32.mrf.mxu0
    %v7534 = vpop.f32.mrf.mxu0
    %7535 = vdwg.mxu0
    %7536 = vmatprep.subr.bf16.mxu0 %v6960
    %7537 = vmatpush1.bf16.msra.mxu0 %v6959
    %7538 = vmatprep.subr.bf16.mxu0 %v6956
    %7539 = vmatpush1.bf16.msra.mxu0 %v6955
    %7540 = vmatprep.subr.bf16.mxu0 %v6952
    %7541 = vmatpush1.bf16.msra.mxu0 %v6951
    %7542 = vmatprep.subr.bf16.mxu0 %v6948
    %7543 = vmatpush1.bf16.msra.mxu0 %v6947
    %7544 = vmatprep.subr.bf16.mxu0 %v6944
    %7545 = vmatpush1.bf16.msra.mxu0 %v6943
    %7546 = vmatprep.subr.bf16.mxu0 %v6940
    %7547 = vmatpush1.bf16.msra.mxu0 %v6939
    %7548 = vmatprep.subr.bf16.mxu0 %v6936
    %7549 = vmatpush1.bf16.msra.mxu0 %v6935
    %7550 = vmatprep.subr.bf16.mxu0 %v6932
    %7551 = vmatpush1.bf16.msra.mxu0 %v6931
    %7552 = vmatprep.subr.bf16.mxu0 %v6992
    %7553 = vmatpush2.bf16.msra.mxu0 %v6991
    %7554 = vmatprep.subr.bf16.mxu0 %v6988
    %7555 = vmatpush2.bf16.msra.mxu0 %v6987
    %7556 = vmatprep.subr.bf16.mxu0 %v6984
    %7557 = vmatpush2.bf16.msra.mxu0 %v6983
    %7558 = vmatprep.subr.bf16.mxu0 %v6980
    %7559 = vmatpush2.bf16.msra.mxu0 %v6979
    %7560 = vmatprep.subr.bf16.mxu0 %v6976
    %7561 = vmatpush2.bf16.msra.mxu0 %v6975
    %7562 = vmatprep.subr.bf16.mxu0 %v6972
    %7563 = vmatpush2.bf16.msra.mxu0 %v6971
    %7564 = vmatprep.subr.bf16.mxu0 %v6968
    %7565 = vmatpush2.bf16.msra.mxu0 %v6967
    %7566 = vmatprep.subr.bf16.mxu0 %v6964
    %7567 = vmatpush2.bf16.msra.mxu0 %v6963
    %7568 = vmatprep.mubr.bf16.mxu0 %v5690
    %7569 = vmatmul.mubr.bf16.gmra.mxu0 %v5689
    %v7570 = vpop.f32.mrf.mxu0
    %v7571 = vadd.f32 %v7530, %v7570
    %v7572 = vpop.f32.mrf.mxu0
    %v7573 = vadd.f32 %v7532, %v7572
    %v7574 = vpop.f32.mrf.mxu0
    %v7575 = vpop.f32.mrf.mxu0
    %7576 = vdwg.mxu0
    %v7577 = vmax.f32 %v7407, 0.0
    %v7578 = vmax.f32 %v7409, 0.0
    %v7579 = vmax.f32 %v7571, 0.0
    %v7580 = vmax.f32 %v7573, 0.0
    %v7581 = vpack.c.bf16 %v7577, %v7577
    %v7582 = vpack.c.bf16 %v7578, %v7578
    %v7583 = vpack.c.bf16 %v7579, %v7579
    %v7584 = vpack.c.bf16 %v7580, %v7580
    %v7585 = vld [vmem:[#allocation12] sm:$0xf]
    %v7586 = vld [vmem:[#allocation12 + $0x4] sm:$0xf]
    %v7587 = vld [vmem:[#allocation12 + $0x8] sm:$0xf]
    %v7588 = vld [vmem:[#allocation12 + $0xc] sm:$0xf]
    %v7589 = vld [vmem:[#allocation12 + $0x10] sm:$0xf]
    %v7590 = vld [vmem:[#allocation12 + $0x14] sm:$0xf]
    %v7591 = vld [vmem:[#allocation12 + $0x18] sm:$0xf]
    %v7592 = vld [vmem:[#allocation12 + $0x1c] sm:$0xf]
    %v7593 = vld [vmem:[#allocation12 + $0x20] sm:$0xf]
    %v7594 = vld [vmem:[#allocation12 + $0x24] sm:$0xf]
    %v7595 = vld [vmem:[#allocation12 + $0x28] sm:$0xf]
    %v7596 = vld [vmem:[#allocation12 + $0x2c] sm:$0xf]
    %v7597 = vld [vmem:[#allocation12 + $0x30] sm:$0xf]
    %v7598 = vld [vmem:[#allocation12 + $0x34] sm:$0xf]
    %v7599 = vld [vmem:[#allocation12 + $0x38] sm:$0xf]
    %v7600 = vld [vmem:[#allocation12 + $0x3c] sm:$0xf]
    %v7601 = vld [vmem:[#allocation12 + $0x40] sm:$0xf]
    %v7602 = vld [vmem:[#allocation12 + $0x44] sm:$0xf]
    %v7603 = vld [vmem:[#allocation12 + $0x48] sm:$0xf]
    %v7604 = vld [vmem:[#allocation12 + $0x4c] sm:$0xf]
    %v7605 = vld [vmem:[#allocation12 + $0x50] sm:$0xf]
    %v7606 = vld [vmem:[#allocation12 + $0x54] sm:$0xf]
    %v7607 = vld [vmem:[#allocation12 + $0x58] sm:$0xf]
    %v7608 = vld [vmem:[#allocation12 + $0x5c] sm:$0xf]
    %v7609 = vld [vmem:[#allocation12 + $0x60] sm:$0xf]
    %v7610 = vld [vmem:[#allocation12 + $0x64] sm:$0xf]
    %v7611 = vld [vmem:[#allocation12 + $0x68] sm:$0xf]
    %v7612 = vld [vmem:[#allocation12 + $0x6c] sm:$0xf]
    %v7613 = vld [vmem:[#allocation12 + $0x70] sm:$0xf]
    %v7614 = vld [vmem:[#allocation12 + $0x74] sm:$0xf]
    %v7615 = vld [vmem:[#allocation12 + $0x78] sm:$0xf]
    %v7616 = vld [vmem:[#allocation12 + $0x7c] sm:$0xf]
    %v7617 = vld [vmem:[#allocation12 + $0x80] sm:$0xf]
    %v7618 = vld [vmem:[#allocation12 + $0x84] sm:$0xf]
    %v7619 = vld [vmem:[#allocation12 + $0x88] sm:$0xf]
    %v7620 = vld [vmem:[#allocation12 + $0x8c] sm:$0xf]
    %v7621 = vld [vmem:[#allocation12 + $0x90] sm:$0xf]
    %v7622 = vld [vmem:[#allocation12 + $0x94] sm:$0xf]
    %v7623 = vld [vmem:[#allocation12 + $0x98] sm:$0xf]
    %v7624 = vld [vmem:[#allocation12 + $0x9c] sm:$0xf]
    %v7625 = vld [vmem:[#allocation12 + $0xa0] sm:$0xf]
    %v7626 = vld [vmem:[#allocation12 + $0xa4] sm:$0xf]
    %v7627 = vld [vmem:[#allocation12 + $0xa8] sm:$0xf]
    %v7628 = vld [vmem:[#allocation12 + $0xac] sm:$0xf]
    %v7629 = vld [vmem:[#allocation12 + $0xb0] sm:$0xf]
    %v7630 = vld [vmem:[#allocation12 + $0xb4] sm:$0xf]
    %v7631 = vld [vmem:[#allocation12 + $0xb8] sm:$0xf]
    %v7632 = vld [vmem:[#allocation12 + $0xbc] sm:$0xf]
    %v7633 = vld [vmem:[#allocation12 + $0xc0] sm:$0xf]
    %v7634 = vld [vmem:[#allocation12 + $0xc4] sm:$0xf]
    %v7635 = vld [vmem:[#allocation12 + $0xc8] sm:$0xf]
    %v7636 = vld [vmem:[#allocation12 + $0xcc] sm:$0xf]
    %v7637 = vld [vmem:[#allocation12 + $0xd0] sm:$0xf]
    %v7638 = vld [vmem:[#allocation12 + $0xd4] sm:$0xf]
    %v7639 = vld [vmem:[#allocation12 + $0xd8] sm:$0xf]
    %v7640 = vld [vmem:[#allocation12 + $0xdc] sm:$0xf]
    %v7641 = vld [vmem:[#allocation12 + $0xe0] sm:$0xf]
    %v7642 = vld [vmem:[#allocation12 + $0xe4] sm:$0xf]
    %v7643 = vld [vmem:[#allocation12 + $0xe8] sm:$0xf]
    %v7644 = vld [vmem:[#allocation12 + $0xec] sm:$0xf]
    %v7645 = vld [vmem:[#allocation12 + $0xf0] sm:$0xf]
    %v7646 = vld [vmem:[#allocation12 + $0xf4] sm:$0xf]
    %v7647 = vld [vmem:[#allocation12 + $0xf8] sm:$0xf]
    %v7648 = vld [vmem:[#allocation12 + $0xfc] sm:$0xf]
    %v7649 = vld [vmem:[#allocation13] sm:$0x1]
    %v7651 = vlaneseq
    %v7652 = vshrl.u32 %v7651, 7
    %v7653 = vsub.s32 0, %v7652
    %v7654 = vrot.slane %v7649, %v7653
    %v7720 = vunpack.c.l.b16 %v7585
    %v7721 = vunpack.c.l.b16 %v7586
    %v7722 = vunpack.c.l.b16 %v7587
    %v7723 = vunpack.c.l.b16 %v7588
    %v7724 = vunpack.c.l.b16 %v7589
    %v7725 = vunpack.c.l.b16 %v7590
    %v7726 = vunpack.c.l.b16 %v7591
    %v7727 = vunpack.c.l.b16 %v7592
    %v7728 = vunpack.c.l.b16 %v7593
    %v7729 = vunpack.c.l.b16 %v7594
    %v7730 = vunpack.c.l.b16 %v7595
    %v7731 = vunpack.c.l.b16 %v7596
    %v7732 = vunpack.c.l.b16 %v7597
    %v7733 = vunpack.c.l.b16 %v7598
    %v7734 = vunpack.c.l.b16 %v7599
    %v7735 = vunpack.c.l.b16 %v7600
    %v7736 = vunpack.c.l.b16 %v7601
    %v7737 = vunpack.c.l.b16 %v7602
    %v7738 = vunpack.c.l.b16 %v7603
    %v7739 = vunpack.c.l.b16 %v7604
    %v7740 = vunpack.c.l.b16 %v7605
    %v7741 = vunpack.c.l.b16 %v7606
    %v7742 = vunpack.c.l.b16 %v7607
    %v7743 = vunpack.c.l.b16 %v7608
    %v7744 = vunpack.c.l.b16 %v7609
    %v7745 = vunpack.c.l.b16 %v7610
    %v7746 = vunpack.c.l.b16 %v7611
    %v7747 = vunpack.c.l.b16 %v7612
    %v7748 = vunpack.c.l.b16 %v7613
    %v7749 = vunpack.c.l.b16 %v7614
    %v7750 = vunpack.c.l.b16 %v7615
    %v7751 = vunpack.c.l.b16 %v7616
    %v7752 = vunpack.c.l.b16 %v7617
    %v7753 = vunpack.c.l.b16 %v7618
    %v7754 = vunpack.c.l.b16 %v7619
    %v7755 = vunpack.c.l.b16 %v7620
    %v7756 = vunpack.c.l.b16 %v7621
    %v7757 = vunpack.c.l.b16 %v7622
    %v7758 = vunpack.c.l.b16 %v7623
    %v7759 = vunpack.c.l.b16 %v7624
    %v7760 = vunpack.c.l.b16 %v7625
    %v7761 = vunpack.c.l.b16 %v7626
    %v7762 = vunpack.c.l.b16 %v7627
    %v7763 = vunpack.c.l.b16 %v7628
    %v7764 = vunpack.c.l.b16 %v7629
    %v7765 = vunpack.c.l.b16 %v7630
    %v7766 = vunpack.c.l.b16 %v7631
    %v7767 = vunpack.c.l.b16 %v7632
    %v7768 = vunpack.c.l.b16 %v7633
    %v7769 = vunpack.c.l.b16 %v7634
    %v7770 = vunpack.c.l.b16 %v7635
    %v7771 = vunpack.c.l.b16 %v7636
    %v7772 = vunpack.c.l.b16 %v7637
    %v7773 = vunpack.c.l.b16 %v7638
    %v7774 = vunpack.c.l.b16 %v7639
    %v7775 = vunpack.c.l.b16 %v7640
    %v7776 = vunpack.c.l.b16 %v7641
    %v7777 = vunpack.c.l.b16 %v7642
    %v7778 = vunpack.c.l.b16 %v7643
    %v7779 = vunpack.c.l.b16 %v7644
    %v7780 = vunpack.c.l.b16 %v7645
    %v7781 = vunpack.c.l.b16 %v7646
    %v7782 = vunpack.c.l.b16 %v7647
    %v7783 = vunpack.c.l.b16 %v7648
    %v7784 = vpack.c.b16 %v7721, %v7720
    %v7785 = vpack.c.b16 %v7723, %v7722
    %v7786 = vpack.c.b16 %v7725, %v7724
    %v7787 = vpack.c.b16 %v7727, %v7726
    %v7788 = vpack.c.b16 %v7729, %v7728
    %v7789 = vpack.c.b16 %v7731, %v7730
    %v7790 = vpack.c.b16 %v7733, %v7732
    %v7791 = vpack.c.b16 %v7735, %v7734
    %v7792 = vpack.c.b16 %v7737, %v7736
    %v7793 = vpack.c.b16 %v7739, %v7738
    %v7794 = vpack.c.b16 %v7741, %v7740
    %v7795 = vpack.c.b16 %v7743, %v7742
    %v7796 = vpack.c.b16 %v7745, %v7744
    %v7797 = vpack.c.b16 %v7747, %v7746
    %v7798 = vpack.c.b16 %v7749, %v7748
    %v7799 = vpack.c.b16 %v7751, %v7750
    %v7800 = vpack.c.b16 %v7753, %v7752
    %v7801 = vpack.c.b16 %v7755, %v7754
    %v7802 = vpack.c.b16 %v7757, %v7756
    %v7803 = vpack.c.b16 %v7759, %v7758
    %v7804 = vpack.c.b16 %v7761, %v7760
    %v7805 = vpack.c.b16 %v7763, %v7762
    %v7806 = vpack.c.b16 %v7765, %v7764
    %v7807 = vpack.c.b16 %v7767, %v7766
    %v7808 = vpack.c.b16 %v7769, %v7768
    %v7809 = vpack.c.b16 %v7771, %v7770
    %v7810 = vpack.c.b16 %v7773, %v7772
    %v7811 = vpack.c.b16 %v7775, %v7774
    %v7812 = vpack.c.b16 %v7777, %v7776
    %v7813 = vpack.c.b16 %v7779, %v7778
    %v7814 = vpack.c.b16 %v7781, %v7780
    %v7815 = vpack.c.b16 %v7783, %v7782
    %7848 = vmatprep.subr.bf16.mxu0 0
    %7849 = vmatpush1.bf16.msra.mxu0 %v7791
    %7850 = vmatprep.subr.bf16.mxu0 0
    %7851 = vmatpush1.bf16.msra.mxu0 %v7790
    %7852 = vmatprep.subr.bf16.mxu0 0
    %7853 = vmatpush1.bf16.msra.mxu0 %v7789
    %7854 = vmatprep.subr.bf16.mxu0 0
    %7855 = vmatpush1.bf16.msra.mxu0 %v7788
    %7856 = vmatprep.subr.bf16.mxu0 0
    %7857 = vmatpush1.bf16.msra.mxu0 %v7787
    %7858 = vmatprep.subr.bf16.mxu0 0
    %7859 = vmatpush1.bf16.msra.mxu0 %v7786
    %7860 = vmatprep.subr.bf16.mxu0 0
    %7861 = vmatpush1.bf16.msra.mxu0 %v7785
    %7862 = vmatprep.subr.bf16.mxu0 0
    %7863 = vmatpush1.bf16.msra.mxu0 %v7784
    %7864 = vmatprep.subr.bf16.mxu0 0
    %7865 = vmatpush2.bf16.msra.mxu0 %v7799
    %7866 = vmatprep.subr.bf16.mxu0 0
    %7867 = vmatpush2.bf16.msra.mxu0 %v7798
    %7868 = vmatprep.subr.bf16.mxu0 0
    %7869 = vmatpush2.bf16.msra.mxu0 %v7797
    %7870 = vmatprep.subr.bf16.mxu0 0
    %7871 = vmatpush2.bf16.msra.mxu0 %v7796
    %7872 = vmatprep.subr.bf16.mxu0 0
    %7873 = vmatpush2.bf16.msra.mxu0 %v7795
    %7874 = vmatprep.subr.bf16.mxu0 0
    %7875 = vmatpush2.bf16.msra.mxu0 %v7794
    %7876 = vmatprep.subr.bf16.mxu0 0
    %7877 = vmatpush2.bf16.msra.mxu0 %v7793
    %7878 = vmatprep.subr.bf16.mxu0 0
    %7879 = vmatpush2.bf16.msra.mxu0 %v7792
    %7880 = vmatprep.mubr.bf16.mxu0 %v7582
    %7881 = vmatmul.mubr.bf16.gmra.mxu0 %v7581
    %v7882 = vpop.f32.mrf.mxu0
    %v7883 = vadd.f32 %v7654, %v7882
    %v7884 = vpop.f32.mrf.mxu0
    %v7885 = vpop.f32.mrf.mxu0
    %v7886 = vpop.f32.mrf.mxu0
    %7887 = vdwg.mxu0
    %7888 = vmatprep.subr.bf16.mxu0 0
    %7889 = vmatpush1.bf16.msra.mxu0 %v7807
    %7890 = vmatprep.subr.bf16.mxu0 0
    %7891 = vmatpush1.bf16.msra.mxu0 %v7806
    %7892 = vmatprep.subr.bf16.mxu0 0
    %7893 = vmatpush1.bf16.msra.mxu0 %v7805
    %7894 = vmatprep.subr.bf16.mxu0 0
    %7895 = vmatpush1.bf16.msra.mxu0 %v7804
    %7896 = vmatprep.subr.bf16.mxu0 0
    %7897 = vmatpush1.bf16.msra.mxu0 %v7803
    %7898 = vmatprep.subr.bf16.mxu0 0
    %7899 = vmatpush1.bf16.msra.mxu0 %v7802
    %7900 = vmatprep.subr.bf16.mxu0 0
    %7901 = vmatpush1.bf16.msra.mxu0 %v7801
    %7902 = vmatprep.subr.bf16.mxu0 0
    %7903 = vmatpush1.bf16.msra.mxu0 %v7800
    %7904 = vmatprep.subr.bf16.mxu0 0
    %7905 = vmatpush2.bf16.msra.mxu0 %v7815
    %7906 = vmatprep.subr.bf16.mxu0 0
    %7907 = vmatpush2.bf16.msra.mxu0 %v7814
    %7908 = vmatprep.subr.bf16.mxu0 0
    %7909 = vmatpush2.bf16.msra.mxu0 %v7813
    %7910 = vmatprep.subr.bf16.mxu0 0
    %7911 = vmatpush2.bf16.msra.mxu0 %v7812
    %7912 = vmatprep.subr.bf16.mxu0 0
    %7913 = vmatpush2.bf16.msra.mxu0 %v7811
    %7914 = vmatprep.subr.bf16.mxu0 0
    %7915 = vmatpush2.bf16.msra.mxu0 %v7810
    %7916 = vmatprep.subr.bf16.mxu0 0
    %7917 = vmatpush2.bf16.msra.mxu0 %v7809
    %7918 = vmatprep.subr.bf16.mxu0 0
    %7919 = vmatpush2.bf16.msra.mxu0 %v7808
    %7920 = vmatprep.mubr.bf16.mxu0 %v7584
    %7921 = vmatmul.mubr.bf16.gmra.mxu0 %v7583
    %v7922 = vpop.f32.mrf.mxu0
    %v7923 = vadd.f32 %v7883, %v7922
    %v7924 = vpop.f32.mrf.mxu0
    %v7925 = vpop.f32.mrf.mxu0
    %v7926 = vpop.f32.mrf.mxu0
    %7927 = vdwg.mxu0
    %7928 = vmax.xlane.f32.xlu0 %v7923
    %v7929 = vpop.xlane.xlu0 %7928
    %v7930 = vsub.f32 %v7923, %v7929
    %v7931 = vmul.f32 %v7930, 1.442695
    %v7932 = vpow.pop %v7931
    %7933 = vadd.xlane.f32.xlu0 %v7932
    %v7934 = vpop.xlane.xlu0 %7933
    %v7935 = vlog2.pop %v7934
    %v7936 = vmul.f32 %v7935, 0.6931472
    %v7937 = vadd.f32 %v7929, %v7936
    %v7938 = vsub.f32 %v7923, %v7937
    %7939 = vst [vmem:[%s9] sm:$0xff] %v7938
    // Predicated region
    $region70: #{cnn_forward.1} parent=1 // pred_check
      _
    $region71: #{cnn_forward.1} parent=1 // pred_check_branch
      %7941 = sbr.rel (0) target = $region73
    $region72: #{cnn_forward.1} parent=1 // pred_region
      _
    $region73: #{cnn_forward.1} parent=1 // pred_fallthru
      _
    // Predicated region
    $region74: #{cnn_forward.1} parent=1 // pred_check
      _
    $region75: #{cnn_forward.1} parent=1 // pred_check_branch
      %7943 = sbr.rel (0) target = $region77
    $region76: #{cnn_forward.1} parent=1 // pred_region
      _
    $region77: #{cnn_forward.1} parent=1 // pred_fallthru
      _
    %7944 = vsyncpa [#allocation3], 1
    %7945 = vsyncpa [#allocation5], 1
    %7946 = vsyncpa [#allocation8], 1
    %7947 = vsyncpa [#allocation11], 1
    %7948 = vsyncpa [#allocation14], 1

</llo_original>
